<compile_context>
chip_gen: v7x
topology: tpu7x:2x2x1
jax: 0.10.0
libtpu: 0.0.40
codegen_flags: <defaults>
</compile_context>

<pallas_src>
import functools
import math

import jax
import jax.numpy as jnp
from jax.experimental import pallas as pl
from jax.experimental.pallas import tpu as pltpu


# ----------------------------- helpers --------------------------------------

_PARALLEL_1D = pltpu.CompilerParams(dimension_semantics=("parallel",))
_PARALLEL_2D = pltpu.CompilerParams(dimension_semantics=("parallel", "parallel"))

_LN_EPS = 1e-5


def _pick_tile(m, target=1024):
    """Largest tile <= target that divides m and is a multiple of 8, else m."""
    if m <= target:
        return m
    t = (target // 8) * 8
    while t >= 8:
        if m % t == 0:
            return t
        t -= 8
    return m


def _resident_spec(arr, grid_rank):
    """BlockSpec for a weight that is fully resident (same block every step)."""
    nd = arr.ndim
    if grid_rank == 1:
        return pl.BlockSpec(arr.shape, lambda i: (0,) * nd)
    return pl.BlockSpec(arr.shape, lambda i, j: (0,) * nd)


# ----------------------------- in-kernel building blocks --------------------

def _ln(x, g, b, eps):
    """LayerNorm over the last axis (biased variance, matches nn.LayerNorm)."""
    mean = jnp.mean(x, axis=-1, keepdims=True)
    xc = x - mean
    var = jnp.mean(xc * xc, axis=-1, keepdims=True)
    return xc * jax.lax.rsqrt(var + eps) * g + b


def _mha_oproj(q, k, v, wo, bo, num_heads):
    """Multi-head SDPA fused with the output projection.

    q: (Tq, Ci), k/v: (Tk, Ci), wo: (Ci, C), bo: (1, C).
    Heads are contiguous channel slices.  The o-projection is applied per head
    and accumulated, so no head-concatenate / separate o-proj pass is needed.
    Softmax normalization is folded into the per-head PV output.
    """
    ci = q.shape[-1]
    dh = ci // num_heads
    scale = 1.0 / math.sqrt(dh)
    out = None
    for h in range(num_heads):
        lo = h * dh
        hi = lo + dh
        qh = q[:, lo:hi]
        kh = k[:, lo:hi]
        vh = v[:, lo:hi]
        s = jax.lax.dot_general(
            qh, kh, (((1,), (1,)), ((), ())),
            preferred_element_type=jnp.float32) * scale          # (Tq, Tk)
        m = jnp.max(s, axis=-1, keepdims=True)
        p = jnp.exp(s - m)
        denom = jnp.sum(p, axis=-1, keepdims=True)
        oh = jnp.dot(p, vh, preferred_element_type=jnp.float32)  # (Tq, Dh)
        oh = oh * pl.reciprocal(denom, approx=False)
        contrib = jnp.dot(oh, wo[lo:hi, :],
                          preferred_element_type=jnp.float32)    # (Tq, C)
        out = contrib if out is None else out + contrib
    return out + bo


# ----------------------------- Pallas kernels -------------------------------

def _keys_proj_kernel(x_ref, pe_ref, wk, bk, wv, bv, wq, bq,
                      k_out, v_out, q_out):
    """One pass over an image-token tile: K_t2i, V_t2i and Q_i2t projections."""
    f32 = jnp.float32
    x = x_ref[...].astype(f32)
    xpe = x + pe_ref[...].astype(f32)
    k_out[...] = (jnp.dot(xpe, wk[...], preferred_element_type=f32)
                  + bk[...]).astype(k_out.dtype)
    v_out[...] = (jnp.dot(x, wv[...], preferred_element_type=f32)
                  + bv[...]).astype(v_out.dtype)
    q_out[...] = (jnp.dot(xpe, wq[...], preferred_element_type=f32)
                  + bq[...]).astype(q_out.dtype)


def _kv_proj_kernel(x_ref, pe_ref, wk, bk, wv, bv, k_out, v_out):
    """K = (x+pe)@Wk+bk ; V = x@Wv+bv  (final-attention K/V over image tokens)."""
    f32 = jnp.float32
    x = x_ref[...].astype(f32)
    xpe = x + pe_ref[...].astype(f32)
    k_out[...] = (jnp.dot(xpe, wk[...], preferred_element_type=f32)
                  + bk[...]).astype(k_out.dtype)
    v_out[...] = (jnp.dot(x, wv[...], preferred_element_type=f32)
                  + bv[...]).astype(v_out.dtype)


def _queries_block_kernel(q_ref, qpe_ref, kt_ref, vt_ref,
                          wq_s, bq_s, wk_s, bk_s, wv_s, bv_s, wo_s, bo_s,
                          n1g, n1b,
                          wq_t, bq_t, wo_t, bo_t, n2g, n2b,
                          w1, b1, w2, b2, n3g, n3b,
                          wk_i, bk_i, wv_i, bv_i,
                          q_out_ref, ki_out_ref, vi_out_ref,
                          *, num_heads, eps, skip_first_layer_pe):
    """Full queries path of one TwoWayAttentionBlock for one batch element."""
    f32 = jnp.float32
    q0 = q_ref[0].astype(f32)        # (Nq, C)
    qpe = qpe_ref[0].astype(f32)     # (Nq, C)

    # --- (1) self attention of sparse inputs + norm1 ---------------------
    x_pe = q0 if skip_first_layer_pe else q0 + qpe
    qs = jnp.dot(x_pe, wq_s[...], preferred_element_type=f32) + bq_s[...]
    ks = jnp.dot(x_pe, wk_s[...], preferred_element_type=f32) + bk_s[...]
    vs = jnp.dot(q0, wv_s[...], preferred_element_type=f32) + bv_s[...]
    attn = _mha_oproj(qs, ks, vs, wo_s[...], bo_s[...], num_heads)
    res = attn if skip_first_layer_pe else q0 + attn
    q1 = _ln(res, n1g[...], n1b[...], eps)

    # --- (2) cross attention: tokens -> image + norm2 --------------------
    qt = jnp.dot(q1 + qpe, wq_t[...], preferred_element_type=f32) + bq_t[...]
    kt = kt_ref[0].astype(f32)       # (Nk, Ci)  = (keys+key_pe) @ Wk_t2i
    vt = vt_ref[0].astype(f32)       # (Nk, Ci)  =  keys @ Wv_t2i
    attn = _mha_oproj(qt, kt, vt, wo_t[...], bo_t[...], num_heads)
    q2 = _ln(q1 + attn, n2g[...], n2b[...], eps)

    # --- (3) MLP (Linear -> ReLU -> Linear) + norm3 -----------------------
    h = jnp.maximum(jnp.dot(q2, w1[...], preferred_element_type=f32)
                    + b1[...], 0.0)
    mo = jnp.dot(h, w2[...], preferred_element_type=f32) + b2[...]
    q3 = _ln(q2 + mo, n3g[...], n3b[...], eps)
    q_out_ref[0] = q3.astype(q_out_ref.dtype)

    # --- (4) K/V projections of the updated queries for image->token attn -
    ki = jnp.dot(q3 + qpe, wk_i[...], preferred_element_type=f32) + bk_i[...]
    vi = jnp.dot(q3, wv_i[...], preferred_element_type=f32) + bv_i[...]
    ki_out_ref[0] = ki.astype(ki_out_ref.dtype)
    vi_out_ref[0] = vi.astype(vi_out_ref.dtype)


def _i2t_attn_kernel(qi_ref, ki_ref, vi_ref, keys_ref, wo, bo, g, b, o_ref,
                     *, num_heads, eps):
    """Image->token attention + o-proj + residual(keys) + norm4, per Nk tile."""
    f32 = jnp.float32
    q = qi_ref[0].astype(f32)        # (T, Ci)
    k = ki_ref[0].astype(f32)        # (Nq, Ci)
    v = vi_ref[0].astype(f32)        # (Nq, Ci)
    attn = _mha_oproj(q, k, v, wo[...], bo[...], num_heads)      # (T, C)
    x = keys_ref[0].astype(f32) + attn
    o_ref[0] = _ln(x, g[...], b[...], eps).astype(o_ref.dtype)


def _final_attn_kernel(q_ref, qpe_ref, kf_ref, vf_ref,
                       wq, bq, wo, bo, g, b, o_ref, *, num_heads, eps):
    """Final token->image attention + o-proj + residual + norm_final."""
    f32 = jnp.float32
    q0 = q_ref[0].astype(f32)
    qpe = qpe_ref[0].astype(f32)
    qp = jnp.dot(q0 + qpe, wq[...], preferred_element_type=f32) + bq[...]
    k = kf_ref[0].astype(f32)
    v = vf_ref[0].astype(f32)
    attn = _mha_oproj(qp, k, v, wo[...], bo[...], num_heads)
    o_ref[0] = _ln(q0 + attn, g[...], b[...], eps).astype(o_ref.dtype)


# ----------------------------- kernel wrappers ------------------------------

def keys_proj(keys, key_pe, t2i, i2t):
    """Single pass over `keys`: K/V for token->image attn and Q for image->token."""
    B, Nk, C = keys.shape
    Ci = t2i["k_w"].shape[-1]
    m = B * Nk
    tm = _pick_tile(m)
    weights = [t2i["k_w"], t2i["k_b"].reshape(1, -1),
               t2i["v_w"], t2i["v_b"].reshape(1, -1),
               i2t["q_w"], i2t["q_b"].reshape(1, -1)]
    k, v, q = pl.pallas_call(
        _keys_proj_kernel,
        out_shape=tuple(jax.ShapeDtypeStruct((m, Ci), keys.dtype)
                        for _ in range(3)),
        grid=(m // tm,),
        in_specs=[pl.BlockSpec((tm, C), lambda i: (i, 0)),
                  pl.BlockSpec((tm, C), lambda i: (i, 0))]
                 + [_resident_spec(w, 1) for w in weights],
        out_specs=tuple(pl.BlockSpec((tm, Ci), lambda i: (i, 0))
                        for _ in range(3)),
        compiler_params=_PARALLEL_1D,
    )(keys.reshape(m, C), key_pe.reshape(m, C), *weights)
    return (k.reshape(B, Nk, Ci), v.reshape(B, Nk, Ci), q.reshape(B, Nk, Ci))


def kv_proj(keys, key_pe, attn_p):
    """K/V projection over image tokens for the final attention."""
    B, Nk, C = keys.shape
    Ci = attn_p["k_w"].shape[-1]
    m = B * Nk
    tm = _pick_tile(m)
    weights = [attn_p["k_w"], attn_p["k_b"].reshape(1, -1),
               attn_p["v_w"], attn_p["v_b"].reshape(1, -1)]
    k, v = pl.pallas_call(
        _kv_proj_kernel,
        out_shape=(jax.ShapeDtypeStruct((m, Ci), keys.dtype),
                   jax.ShapeDtypeStruct((m, Ci), keys.dtype)),
        grid=(m // tm,),
        in_specs=[pl.BlockSpec((tm, C), lambda i: (i, 0)),
                  pl.BlockSpec((tm, C), lambda i: (i, 0))]
                 + [_resident_spec(w, 1) for w in weights],
        out_specs=(pl.BlockSpec((tm, Ci), lambda i: (i, 0)),
                   pl.BlockSpec((tm, Ci), lambda i: (i, 0))),
        compiler_params=_PARALLEL_1D,
    )(keys.reshape(m, C), key_pe.reshape(m, C), *weights)
    return k.reshape(B, Nk, Ci), v.reshape(B, Nk, Ci)


def queries_block(queries, query_pe, k_t2i, v_t2i, lp, num_heads,
                  skip_first_layer_pe):
    """Fused queries path of one layer (steps 1-3 + i2t K/V projections)."""
    B, Nq, C = queries.shape
    Nk, Ci = k_t2i.shape[1], k_t2i.shape[2]
    sa, t2i, i2t = lp["self_attn"], lp["cross_t2i"], lp["cross_i2t"]
    weights = [
        sa["q_w"], sa["q_b"].reshape(1, -1), sa["k_w"], sa["k_b"].reshape(1, -1),
        sa["v_w"], sa["v_b"].reshape(1, -1), sa["o_w"], sa["o_b"].reshape(1, -1),
        lp["norm1_g"].reshape(1, -1), lp["norm1_b"].reshape(1, -1),
        t2i["q_w"], t2i["q_b"].reshape(1, -1),
        t2i["o_w"], t2i["o_b"].reshape(1, -1),
        lp["norm2_g"].reshape(1, -1), lp["norm2_b"].reshape(1, -1),
        lp["mlp_w1"], lp["mlp_b1"].reshape(1, -1),
        lp["mlp_w2"], lp["mlp_b2"].reshape(1, -1),
        lp["norm3_g"].reshape(1, -1), lp["norm3_b"].reshape(1, -1),
        i2t["k_w"], i2t["k_b"].reshape(1, -1),
        i2t["v_w"], i2t["v_b"].reshape(1, -1),
    ]
    kernel = functools.partial(_queries_block_kernel, num_heads=num_heads,
                               eps=_LN_EPS,
                               skip_first_layer_pe=skip_first_layer_pe)
    q_out, ki, vi = pl.pallas_call(
        kernel,
        out_shape=(jax.ShapeDtypeStruct((B, Nq, C), queries.dtype),
                   jax.ShapeDtypeStruct((B, Nq, Ci), queries.dtype),
                   jax.ShapeDtypeStruct((B, Nq, Ci), queries.dtype)),
        grid=(B,),
        in_specs=[pl.BlockSpec((1, Nq, C), lambda b: (b, 0, 0)),
                  pl.BlockSpec((1, Nq, C), lambda b: (b, 0, 0)),
                  pl.BlockSpec((1, Nk, Ci), lambda b: (b, 0, 0)),
                  pl.BlockSpec((1, Nk, Ci), lambda b: (b, 0, 0))]
                 + [_resident_spec(w, 1) for w in weights],
        out_specs=(pl.BlockSpec((1, Nq, C), lambda b: (b, 0, 0)),
                   pl.BlockSpec((1, Nq, Ci), lambda b: (b, 0, 0)),
                   pl.BlockSpec((1, Nq, Ci), lambda b: (b, 0, 0))),
        compiler_params=_PARALLEL_1D,
    )(queries, query_pe, k_t2i, v_t2i, *weights)
    return q_out, ki, vi


def i2t_attention(q_i2t, k_i2t, v_i2t, keys, i2t, n4g, n4b, num_heads):
    """Image->token attention, o-proj, residual add on keys and norm4 fused."""
    B, Nk, Ci = q_i2t.shape
    C = keys.shape[-1]
    Nq = k_i2t.shape[1]
    tk = _pick_tile(Nk)
    weights = [i2t["o_w"], i2t["o_b"].reshape(1, -1),
               n4g.reshape(1, -1), n4b.reshape(1, -1)]
    return pl.pallas_call(
        functools.partial(_i2t_attn_kernel, num_heads=num_heads, eps=_LN_EPS),
        out_shape=jax.ShapeDtypeStruct((B, Nk, C), keys.dtype),
        grid=(B, Nk // tk),
        in_specs=[pl.BlockSpec((1, tk, Ci), lambda b, t: (b, t, 0)),
                  pl.BlockSpec((1, Nq, Ci), lambda b, t: (b, 0, 0)),
                  pl.BlockSpec((1, Nq, Ci), lambda b, t: (b, 0, 0)),
                  pl.BlockSpec((1, tk, C), lambda b, t: (b, t, 0))]
                 + [_resident_spec(w, 2) for w in weights],
        out_specs=pl.BlockSpec((1, tk, C), lambda b, t: (b, t, 0)),
        compiler_params=_PARALLEL_2D,
    )(q_i2t, k_i2t, v_i2t, keys, *weights)


def final_attn_block(queries, query_pe, k_f, v_f, attn_p, g, b, num_heads):
    """Final token->image attention + o-proj + residual + norm_final fused."""
    B, Nq, C = queries.shape
    Nk, Ci = k_f.shape[1], k_f.shape[2]
    weights = [attn_p["q_w"], attn_p["q_b"].reshape(1, -1),
               attn_p["o_w"], attn_p["o_b"].reshape(1, -1),
               g.reshape(1, -1), b.reshape(1, -1)]
    return pl.pallas_call(
        functools.partial(_final_attn_kernel, num_heads=num_heads, eps=_LN_EPS),
        out_shape=jax.ShapeDtypeStruct((B, Nq, C), queries.dtype),
        grid=(B,),
        in_specs=[pl.BlockSpec((1, Nq, C), lambda i: (i, 0, 0)),
                  pl.BlockSpec((1, Nq, C), lambda i: (i, 0, 0)),
                  pl.BlockSpec((1, Nk, Ci), lambda i: (i, 0, 0)),
                  pl.BlockSpec((1, Nk, Ci), lambda i: (i, 0, 0))]
                 + [_resident_spec(w, 1) for w in weights],
        out_specs=pl.BlockSpec((1, Nq, C), lambda i: (i, 0, 0)),
        compiler_params=_PARALLEL_1D,
    )(queries, query_pe, k_f, v_f, *weights)


# ----------------------------- module forward ------------------------------

def two_way_transformer(params, image_embedding, image_pe, point_embedding,
                        num_heads):
    B, C, H, W = image_embedding.shape
    # flatten(2).permute(0, 2, 1): (B, C, H, W) -> (B, H*W, C)
    image_embedding = image_embedding.reshape(B, C, H * W).transpose(0, 2, 1)
    image_pe = image_pe.reshape(B, C, H * W).transpose(0, 2, 1)

    queries = point_embedding
    keys = image_embedding
    for i, lp in enumerate(params["layers"]):
        # One pass over the image tokens: K/V for token->image attention and
        # Q for image->token attention (keys is unchanged between the two).
        k_t2i, v_t2i, q_i2t = keys_proj(keys, image_pe,
                                        lp["cross_t2i"], lp["cross_i2t"])
        # Fused queries path: self-attn+norm1, t2i attn+norm2, MLP+norm3,
        # plus the i2t K/V projections of the updated queries.
        queries, k_i2t, v_i2t = queries_block(
            queries, point_embedding, k_t2i, v_t2i, lp, num_heads,
            skip_first_layer_pe=(i == 0))
        # Image->token attention + o-proj + residual + norm4, tiled over Nk.
        keys = i2t_attention(q_i2t, k_i2t, v_i2t, keys, lp["cross_i2t"],
                             lp["norm4_g"], lp["norm4_b"], num_heads)

    # Final attention: tokens -> image, fused with o-proj/residual/norm_final.
    fa = params["final_attn"]
    k_f, v_f = kv_proj(keys, image_pe, fa)
    queries = final_attn_block(queries, point_embedding, k_f, v_f, fa,
                               params["norm_final_g"], params["norm_final_b"],
                               num_heads)
    return queries, keys


# ----------------------------- param init ----------------------------------

def _init_linear(key, din, dout):
    kw, kb = jax.random.split(key)
    return (jax.random.normal(kw, (din, dout), jnp.float32) * 0.02,
            jax.random.normal(kb, (dout,), jnp.float32) * 0.02)


def _init_attention(key, embedding_dim, num_heads, downsample_rate=1,
                    kv_in_dim=None):
    kv_in_dim = embedding_dim if kv_in_dim is None else kv_in_dim
    internal_dim = embedding_dim // downsample_rate
    assert internal_dim % num_heads == 0
    ks = jax.random.split(key, 4)
    qw, qb = _init_linear(ks[0], embedding_dim, internal_dim)
    kw, kb = _init_linear(ks[1], kv_in_dim, internal_dim)
    vw, vb = _init_linear(ks[2], kv_in_dim, internal_dim)
    ow, ob = _init_linear(ks[3], internal_dim, embedding_dim)
    return {"q_w": qw, "q_b": qb, "k_w": kw, "k_b": kb,
            "v_w": vw, "v_b": vb, "o_w": ow, "o_b": ob}


def _init_layernorm(c):
    return jnp.ones((c,), jnp.float32), jnp.zeros((c,), jnp.float32)


def init_params(key, depth, embedding_dim, num_heads, mlp_dim,
                attention_downsample_rate=2):
    layers = []
    for i in range(depth):
        k = jax.random.fold_in(key, i)
        ks = jax.random.split(k, 8)
        n1g, n1b = _init_layernorm(embedding_dim)
        n2g, n2b = _init_layernorm(embedding_dim)
        n3g, n3b = _init_layernorm(embedding_dim)
        n4g, n4b = _init_layernorm(embedding_dim)
        w1, b1 = _init_linear(ks[3], embedding_dim, mlp_dim)
        w2, b2 = _init_linear(ks[4], mlp_dim, embedding_dim)
        layers.append({
            "self_attn": _init_attention(ks[0], embedding_dim, num_heads),
            "cross_t2i": _init_attention(ks[1], embedding_dim, num_heads,
                                         attention_downsample_rate),
            "cross_i2t": _init_attention(ks[2], embedding_dim, num_heads,
                                         attention_downsample_rate),
            "mlp_w1": w1, "mlp_b1": b1, "mlp_w2": w2, "mlp_b2": b2,
            "norm1_g": n1g, "norm1_b": n1b, "norm2_g": n2g, "norm2_b": n2b,
            "norm3_g": n3g, "norm3_b": n3b, "norm4_g": n4g, "norm4_b": n4b,
        })
    kf = jax.random.fold_in(key, depth + 100)
    nfg, nfb = _init_layernorm(embedding_dim)
    return {
        "layers": layers,
        "final_attn": _init_attention(kf, embedding_dim, num_heads,
                                      attention_downsample_rate),
        "norm_final_g": nfg, "norm_final_b": nfb,
    }


# ----------------------------- main -----------------------------------------

if __name__ == "__main__":
    depth = 2
    embedding_dim = 32
    num_heads = 2
    mlp_dim = 64
    B, H, W = 2, 4, 4          # image tokens = 16
    N_points = 8

    root = jax.random.PRNGKey(0)
    k_img, k_pe, k_pts, k_par = jax.random.split(root, 4)

    image_embedding = jax.random.normal(k_img, (B, embedding_dim, H, W),
                                        jnp.float32)
    image_pe = jax.random.normal(k_pe, (B, embedding_dim, H, W), jnp.float32)
    point_embedding = jax.random.normal(k_pts, (B, N_points, embedding_dim),
                                        jnp.float32)

    params = init_params(k_par, depth, embedding_dim, num_heads, mlp_dim,
                         attention_downsample_rate=2)

    fwd = jax.jit(functools.partial(two_way_transformer, num_heads=num_heads))
    queries, keys = fwd(params, image_embedding, image_pe, point_embedding)
    jax.block_until_ready((queries, keys))

    assert queries.shape == (B, N_points, embedding_dim)
    assert keys.shape == (B, H * W, embedding_dim)
    print("KERNEL_OK")
</pallas_src>

<mosaic_0001>
module attributes {stable_mosaic.version = 11 : i64} {
  func.func @_keys_proj_kernel(%arg0: i32, %arg1: memref<32x32xf32, #tpu.memory_space<vmem>>, %arg2: memref<32x32xf32, #tpu.memory_space<vmem>>, %arg3: memref<32x16xf32, #tpu.memory_space<vmem>>, %arg4: memref<1x16xf32, #tpu.memory_space<vmem>>, %arg5: memref<32x16xf32, #tpu.memory_space<vmem>>, %arg6: memref<1x16xf32, #tpu.memory_space<vmem>>, %arg7: memref<32x16xf32, #tpu.memory_space<vmem>>, %arg8: memref<1x16xf32, #tpu.memory_space<vmem>>, %arg9: memref<32x16xf32, #tpu.memory_space<vmem>>, %arg10: memref<32x16xf32, #tpu.memory_space<vmem>>, %arg11: memref<32x16xf32, #tpu.memory_space<vmem>>) attributes {dimension_semantics = [#tpu.dimension_semantics<parallel>], iteration_bounds = array<i64: 1>, scalar_prefetch = 0 : i64, scratch_operands = 0 : i64, tpu.core_type = #tpu.core_type<tc>, window_params = [{transform_indices = @transform_0, window_bounds = array<i64: 32, 32>}, {transform_indices = @transform_1, window_bounds = array<i64: 32, 32>}, {pipeline_mode = #tpu.pipeline_mode<synchronous>, transform_indices = @transform_2, window_bounds = array<i64: 32, 16>}, {pipeline_mode = #tpu.pipeline_mode<synchronous>, transform_indices = @transform_3, window_bounds = array<i64: 1, 16>}, {pipeline_mode = #tpu.pipeline_mode<synchronous>, transform_indices = @transform_4, window_bounds = array<i64: 32, 16>}, {pipeline_mode = #tpu.pipeline_mode<synchronous>, transform_indices = @transform_5, window_bounds = array<i64: 1, 16>}, {pipeline_mode = #tpu.pipeline_mode<synchronous>, transform_indices = @transform_6, window_bounds = array<i64: 32, 16>}, {pipeline_mode = #tpu.pipeline_mode<synchronous>, transform_indices = @transform_7, window_bounds = array<i64: 1, 16>}, {transform_indices = @transform_8, window_bounds = array<i64: 32, 16>}, {transform_indices = @transform_9, window_bounds = array<i64: 32, 16>}, {transform_indices = @transform_10, window_bounds = array<i64: 32, 16>}]} {
    %c0 = arith.constant 0 : index
    %c0_0 = arith.constant 0 : index
    %0 = vector.load %arg1[%c0, %c0_0] : memref<32x32xf32, #tpu.memory_space<vmem>>, vector<32x32xf32>
    %c0_1 = arith.constant 0 : index
    %c0_2 = arith.constant 0 : index
    %1 = vector.load %arg2[%c0_1, %c0_2] : memref<32x32xf32, #tpu.memory_space<vmem>>, vector<32x32xf32>
    %2 = arith.addf %0, %1 : vector<32x32xf32>
    %c0_3 = arith.constant 0 : index
    %c0_4 = arith.constant 0 : index
    %3 = vector.load %arg3[%c0_3, %c0_4] : memref<32x16xf32, #tpu.memory_space<vmem>>, vector<32x16xf32>
    %cst = arith.constant dense<0.000000e+00> : vector<32x16xf32>
    %4 = tpu.matmul %2, %3, %cst {dimension_numbers = #tpu.dot_dimension_numbers<[1], [0], [0], [1], [0, 0, 1, 1], [], []>} : vector<32x32xf32>, vector<32x16xf32>, vector<32x16xf32> -> vector<32x16xf32>
    %c0_5 = arith.constant 0 : index
    %c0_6 = arith.constant 0 : index
    %5 = vector.load %arg4[%c0_5, %c0_6] : memref<1x16xf32, #tpu.memory_space<vmem>>, vector<1x16xf32>
    %6 = vector.broadcast %5 : vector<1x16xf32> to vector<32x16xf32>
    %7 = arith.addf %4, %6 : vector<32x16xf32>
    %c0_7 = arith.constant 0 : index
    %c0_8 = arith.constant 0 : index
    %8 = vector.load %arg9[%c0_7, %c0_8] : memref<32x16xf32, #tpu.memory_space<vmem>>, vector<32x16xf32>
    tpu.vector_store %arg9[%c0_7, %c0_8], %7 {strides = array<i32>} : memref<32x16xf32, #tpu.memory_space<vmem>>, vector<32x16xf32>,
    %c0_9 = arith.constant 0 : index
    %c0_10 = arith.constant 0 : index
    %9 = vector.load %arg5[%c0_9, %c0_10] : memref<32x16xf32, #tpu.memory_space<vmem>>, vector<32x16xf32>
    %cst_11 = arith.constant dense<0.000000e+00> : vector<32x16xf32>
    %10 = tpu.matmul %0, %9, %cst_11 {dimension_numbers = #tpu.dot_dimension_numbers<[1], [0], [0], [1], [0, 0, 1, 1], [], []>} : vector<32x32xf32>, vector<32x16xf32>, vector<32x16xf32> -> vector<32x16xf32>
    %c0_12 = arith.constant 0 : index
    %c0_13 = arith.constant 0 : index
    %11 = vector.load %arg6[%c0_12, %c0_13] : memref<1x16xf32, #tpu.memory_space<vmem>>, vector<1x16xf32>
    %12 = vector.broadcast %11 : vector<1x16xf32> to vector<32x16xf32>
    %13 = arith.addf %10, %12 : vector<32x16xf32>
    %c0_14 = arith.constant 0 : index
    %c0_15 = arith.constant 0 : index
    %14 = vector.load %arg10[%c0_14, %c0_15] : memref<32x16xf32, #tpu.memory_space<vmem>>, vector<32x16xf32>
    tpu.vector_store %arg10[%c0_14, %c0_15], %13 {strides = array<i32>} : memref<32x16xf32, #tpu.memory_space<vmem>>, vector<32x16xf32>,
    %c0_16 = arith.constant 0 : index
    %c0_17 = arith.constant 0 : index
    %15 = vector.load %arg7[%c0_16, %c0_17] : memref<32x16xf32, #tpu.memory_space<vmem>>, vector<32x16xf32>
    %cst_18 = arith.constant dense<0.000000e+00> : vector<32x16xf32>
    %16 = tpu.matmul %2, %15, %cst_18 {dimension_numbers = #tpu.dot_dimension_numbers<[1], [0], [0], [1], [0, 0, 1, 1], [], []>} : vector<32x32xf32>, vector<32x16xf32>, vector<32x16xf32> -> vector<32x16xf32>
    %c0_19 = arith.constant 0 : index
    %c0_20 = arith.constant 0 : index
    %17 = vector.load %arg8[%c0_19, %c0_20] : memref<1x16xf32, #tpu.memory_space<vmem>>, vector<1x16xf32>
    %18 = vector.broadcast %17 : vector<1x16xf32> to vector<32x16xf32>
    %19 = arith.addf %16, %18 : vector<32x16xf32>
    %c0_21 = arith.constant 0 : index
    %c0_22 = arith.constant 0 : index
    %20 = vector.load %arg11[%c0_21, %c0_22] : memref<32x16xf32, #tpu.memory_space<vmem>>, vector<32x16xf32>
    tpu.vector_store %arg11[%c0_21, %c0_22], %19 {strides = array<i32>} : memref<32x16xf32, #tpu.memory_space<vmem>>, vector<32x16xf32>,
    return
  }
  func.func @transform_0(%arg0: i32) -> (i32, i32) {
    %c0_i32 = arith.constant 0 : i32
    %c0_i32_0 = arith.constant 0 : i32
    return %arg0, %c0_i32 : i32, i32
  }
  func.func @transform_1(%arg0: i32) -> (i32, i32) {
    %c0_i32 = arith.constant 0 : i32
    %c0_i32_0 = arith.constant 0 : i32
    return %arg0, %c0_i32 : i32, i32
  }
  func.func @transform_2(%arg0: i32) -> (i32, i32) {
    %c0_i32 = arith.constant 0 : i32
    %c0_i32_0 = arith.constant 0 : i32
    %c0_i32_1 = arith.constant 0 : i32
    return %c0_i32, %c0_i32_0 : i32, i32
  }
  func.func @transform_3(%arg0: i32) -> (i32, i32) {
    %c0_i32 = arith.constant 0 : i32
    %c0_i32_0 = arith.constant 0 : i32
    %c0_i32_1 = arith.constant 0 : i32
    return %c0_i32, %c0_i32_0 : i32, i32
  }
  func.func @transform_4(%arg0: i32) -> (i32, i32) {
    %c0_i32 = arith.constant 0 : i32
    %c0_i32_0 = arith.constant 0 : i32
    %c0_i32_1 = arith.constant 0 : i32
    return %c0_i32, %c0_i32_0 : i32, i32
  }
  func.func @transform_5(%arg0: i32) -> (i32, i32) {
    %c0_i32 = arith.constant 0 : i32
    %c0_i32_0 = arith.constant 0 : i32
    %c0_i32_1 = arith.constant 0 : i32
    return %c0_i32, %c0_i32_0 : i32, i32
  }
  func.func @transform_6(%arg0: i32) -> (i32, i32) {
    %c0_i32 = arith.constant 0 : i32
    %c0_i32_0 = arith.constant 0 : i32
    %c0_i32_1 = arith.constant 0 : i32
    return %c0_i32, %c0_i32_0 : i32, i32
  }
  func.func @transform_7(%arg0: i32) -> (i32, i32) {
    %c0_i32 = arith.constant 0 : i32
    %c0_i32_0 = arith.constant 0 : i32
    %c0_i32_1 = arith.constant 0 : i32
    return %c0_i32, %c0_i32_0 : i32, i32
  }
  func.func @transform_8(%arg0: i32) -> (i32, i32) {
    %c0_i32 = arith.constant 0 : i32
    %c0_i32_0 = arith.constant 0 : i32
    return %arg0, %c0_i32 : i32, i32
  }
  func.func @transform_9(%arg0: i32) -> (i32, i32) {
    %c0_i32 = arith.constant 0 : i32
    %c0_i32_0 = arith.constant 0 : i32
    return %arg0, %c0_i32 : i32, i32
  }
  func.func @transform_10(%arg0: i32) -> (i32, i32) {
    %c0_i32 = arith.constant 0 : i32
    %c0_i32_0 = arith.constant 0 : i32
    return %arg0, %c0_i32 : i32, i32
  }
}

module attributes {stable_mosaic.version = 11 : i64} {
  func.func @_queries_block_kernel(%arg0: i32, %arg1: memref<1x8x32xf32, #tpu.memory_space<vmem>>, %arg2: memref<1x8x32xf32, #tpu.memory_space<vmem>>, %arg3: memref<1x16x16xf32, #tpu.memory_space<vmem>>, %arg4: memref<1x16x16xf32, #tpu.memory_space<vmem>>, %arg5: memref<32x32xf32, #tpu.memory_space<vmem>>, %arg6: memref<1x32xf32, #tpu.memory_space<vmem>>, %arg7: memref<32x32xf32, #tpu.memory_space<vmem>>, %arg8: memref<1x32xf32, #tpu.memory_space<vmem>>, %arg9: memref<32x32xf32, #tpu.memory_space<vmem>>, %arg10: memref<1x32xf32, #tpu.memory_space<vmem>>, %arg11: memref<32x32xf32, #tpu.memory_space<vmem>>, %arg12: memref<1x32xf32, #tpu.memory_space<vmem>>, %arg13: memref<1x32xf32, #tpu.memory_space<vmem>>, %arg14: memref<1x32xf32, #tpu.memory_space<vmem>>, %arg15: memref<32x16xf32, #tpu.memory_space<vmem>>, %arg16: memref<1x16xf32, #tpu.memory_space<vmem>>, %arg17: memref<16x32xf32, #tpu.memory_space<vmem>>, %arg18: memref<1x32xf32, #tpu.memory_space<vmem>>, %arg19: memref<1x32xf32, #tpu.memory_space<vmem>>, %arg20: memref<1x32xf32, #tpu.memory_space<vmem>>, %arg21: memref<32x64xf32, #tpu.memory_space<vmem>>, %arg22: memref<1x64xf32, #tpu.memory_space<vmem>>, %arg23: memref<64x32xf32, #tpu.memory_space<vmem>>, %arg24: memref<1x32xf32, #tpu.memory_space<vmem>>, %arg25: memref<1x32xf32, #tpu.memory_space<vmem>>, %arg26: memref<1x32xf32, #tpu.memory_space<vmem>>, %arg27: memref<32x16xf32, #tpu.memory_space<vmem>>, %arg28: memref<1x16xf32, #tpu.memory_space<vmem>>, %arg29: memref<32x16xf32, #tpu.memory_space<vmem>>, %arg30: memref<1x16xf32, #tpu.memory_space<vmem>>, %arg31: memref<1x8x32xf32, #tpu.memory_space<vmem>>, %arg32: memref<1x8x16xf32, #tpu.memory_space<vmem>>, %arg33: memref<1x8x16xf32, #tpu.memory_space<vmem>>) attributes {dimension_semantics = [#tpu.dimension_semantics<parallel>], iteration_bounds = array<i64: 2>, scalar_prefetch = 0 : i64, scratch_operands = 0 : i64, tpu.core_type = #tpu.core_type<tc>, window_params = [{transform_indices = @transform_0, window_bounds = array<i64: 1, 8, 32>}, {transform_indices = @transform_1, window_bounds = array<i64: 1, 8, 32>}, {transform_indices = @transform_2, window_bounds = array<i64: 1, 16, 16>}, {transform_indices = @transform_3, window_bounds = array<i64: 1, 16, 16>}, {pipeline_mode = #tpu.pipeline_mode<synchronous>, transform_indices = @transform_4, window_bounds = array<i64: 32, 32>}, {pipeline_mode = #tpu.pipeline_mode<synchronous>, transform_indices = @transform_5, window_bounds = array<i64: 1, 32>}, {pipeline_mode = #tpu.pipeline_mode<synchronous>, transform_indices = @transform_6, window_bounds = array<i64: 32, 32>}, {pipeline_mode = #tpu.pipeline_mode<synchronous>, transform_indices = @transform_7, window_bounds = array<i64: 1, 32>}, {pipeline_mode = #tpu.pipeline_mode<synchronous>, transform_indices = @transform_8, window_bounds = array<i64: 32, 32>}, {pipeline_mode = #tpu.pipeline_mode<synchronous>, transform_indices = @transform_9, window_bounds = array<i64: 1, 32>}, {pipeline_mode = #tpu.pipeline_mode<synchronous>, transform_indices = @transform_10, window_bounds = array<i64: 32, 32>}, {pipeline_mode = #tpu.pipeline_mode<synchronous>, transform_indices = @transform_11, window_bounds = array<i64: 1, 32>}, {pipeline_mode = #tpu.pipeline_mode<synchronous>, transform_indices = @transform_12, window_bounds = array<i64: 1, 32>}, {pipeline_mode = #tpu.pipeline_mode<synchronous>, transform_indices = @transform_13, window_bounds = array<i64: 1, 32>}, {pipeline_mode = #tpu.pipeline_mode<synchronous>, transform_indices = @transform_14, window_bounds = array<i64: 32, 16>}, {pipeline_mode = #tpu.pipeline_mode<synchronous>, transform_indices = @transform_15, window_bounds = array<i64: 1, 16>}, {pipeline_mode = #tpu.pipeline_mode<synchronous>, transform_indices = @transform_16, window_bounds = array<i64: 16, 32>}, {pipeline_mode = #tpu.pipeline_mode<synchronous>, transform_indices = @transform_17, window_bounds = array<i64: 1, 32>}, {pipeline_mode = #tpu.pipeline_mode<synchronous>, transform_indices = @transform_18, window_bounds = array<i64: 1, 32>}, {pipeline_mode = #tpu.pipeline_mode<synchronous>, transform_indices = @transform_19, window_bounds = array<i64: 1, 32>}, {pipeline_mode = #tpu.pipeline_mode<synchronous>, transform_indices = @transform_20, window_bounds = array<i64: 32, 64>}, {pipeline_mode = #tpu.pipeline_mode<synchronous>, transform_indices = @transform_21, window_bounds = array<i64: 1, 64>}, {pipeline_mode = #tpu.pipeline_mode<synchronous>, transform_indices = @transform_22, window_bounds = array<i64: 64, 32>}, {pipeline_mode = #tpu.pipeline_mode<synchronous>, transform_indices = @transform_23, window_bounds = array<i64: 1, 32>}, {pipeline_mode = #tpu.pipeline_mode<synchronous>, transform_indices = @transform_24, window_bounds = array<i64: 1, 32>}, {pipeline_mode = #tpu.pipeline_mode<synchronous>, transform_indices = @transform_25, window_bounds = array<i64: 1, 32>}, {pipeline_mode = #tpu.pipeline_mode<synchronous>, transform_indices = @transform_26, window_bounds = array<i64: 32, 16>}, {pipeline_mode = #tpu.pipeline_mode<synchronous>, transform_indices = @transform_27, window_bounds = array<i64: 1, 16>}, {pipeline_mode = #tpu.pipeline_mode<synchronous>, transform_indices = @transform_28, window_bounds = array<i64: 32, 16>}, {pipeline_mode = #tpu.pipeline_mode<synchronous>, transform_indices = @transform_29, window_bounds = array<i64: 1, 16>}, {transform_indices = @transform_30, window_bounds = array<i64: 1, 8, 32>}, {transform_indices = @transform_31, window_bounds = array<i64: 1, 8, 16>}, {transform_indices = @transform_32, window_bounds = array<i64: 1, 8, 16>}]} {
    %c0 = arith.constant 0 : index
    %c0_0 = arith.constant 0 : index
    %c0_1 = arith.constant 0 : index
    %0 = vector.load %arg1[%c0, %c0_0, %c0_1] : memref<1x8x32xf32, #tpu.memory_space<vmem>>, vector<1x8x32xf32>
    %1 = vector.shape_cast %0 : vector<1x8x32xf32> to vector<8x32xf32>
    %c0_2 = arith.constant 0 : index
    %c0_3 = arith.constant 0 : index
    %c0_4 = arith.constant 0 : index
    %2 = vector.load %arg2[%c0_2, %c0_3, %c0_4] : memref<1x8x32xf32, #tpu.memory_space<vmem>>, vector<1x8x32xf32>
    %3 = vector.shape_cast %2 : vector<1x8x32xf32> to vector<8x32xf32>
    %c0_5 = arith.constant 0 : index
    %c0_6 = arith.constant 0 : index
    %4 = vector.load %arg5[%c0_5, %c0_6] : memref<32x32xf32, #tpu.memory_space<vmem>>, vector<32x32xf32>
    %cst = arith.constant dense<0.000000e+00> : vector<8x32xf32>
    %5 = tpu.matmul %1, %4, %cst {dimension_numbers = #tpu.dot_dimension_numbers<[1], [0], [0], [1], [0, 0, 1, 1], [], []>} : vector<8x32xf32>, vector<32x32xf32>, vector<8x32xf32> -> vector<8x32xf32>
    %c0_7 = arith.constant 0 : index
    %c0_8 = arith.constant 0 : index
    %6 = vector.load %arg6[%c0_7, %c0_8] : memref<1x32xf32, #tpu.memory_space<vmem>>, vector<1x32xf32>
    %7 = vector.broadcast %6 : vector<1x32xf32> to vector<8x32xf32>
    %8 = arith.addf %5, %7 : vector<8x32xf32>
    %c0_9 = arith.constant 0 : index
    %c0_10 = arith.constant 0 : index
    %9 = vector.load %arg7[%c0_9, %c0_10] : memref<32x32xf32, #tpu.memory_space<vmem>>, vector<32x32xf32>
    %cst_11 = arith.constant dense<0.000000e+00> : vector<8x32xf32>
    %10 = tpu.matmul %1, %9, %cst_11 {dimension_numbers = #tpu.dot_dimension_numbers<[1], [0], [0], [1], [0, 0, 1, 1], [], []>} : vector<8x32xf32>, vector<32x32xf32>, vector<8x32xf32> -> vector<8x32xf32>
    %c0_12 = arith.constant 0 : index
    %c0_13 = arith.constant 0 : index
    %11 = vector.load %arg8[%c0_12, %c0_13] : memref<1x32xf32, #tpu.memory_space<vmem>>, vector<1x32xf32>
    %12 = vector.broadcast %11 : vector<1x32xf32> to vector<8x32xf32>
    %13 = arith.addf %10, %12 : vector<8x32xf32>
    %c0_14 = arith.constant 0 : index
    %c0_15 = arith.constant 0 : index
    %14 = vector.load %arg9[%c0_14, %c0_15] : memref<32x32xf32, #tpu.memory_space<vmem>>, vector<32x32xf32>
    %cst_16 = arith.constant dense<0.000000e+00> : vector<8x32xf32>
    %15 = tpu.matmul %1, %14, %cst_16 {dimension_numbers = #tpu.dot_dimension_numbers<[1], [0], [0], [1], [0, 0, 1, 1], [], []>} : vector<8x32xf32>, vector<32x32xf32>, vector<8x32xf32> -> vector<8x32xf32>
    %c0_17 = arith.constant 0 : index
    %c0_18 = arith.constant 0 : index
    %16 = vector.load %arg10[%c0_17, %c0_18] : memref<1x32xf32, #tpu.memory_space<vmem>>, vector<1x32xf32>
    %17 = vector.broadcast %16 : vector<1x32xf32> to vector<8x32xf32>
    %18 = arith.addf %15, %17 : vector<8x32xf32>
    %c0_19 = arith.constant 0 : index
    %c0_20 = arith.constant 0 : index
    %19 = vector.load %arg11[%c0_19, %c0_20] : memref<32x32xf32, #tpu.memory_space<vmem>>, vector<32x32xf32>
    %c0_21 = arith.constant 0 : index
    %c0_22 = arith.constant 0 : index
    %20 = vector.load %arg12[%c0_21, %c0_22] : memref<1x32xf32, #tpu.memory_space<vmem>>, vector<1x32xf32>
    %21 = vector.extract_strided_slice %8 {offsets = [0, 0], sizes = [8, 16], strides = [1, 1]} : vector<8x32xf32> to vector<8x16xf32>
    %22 = vector.extract_strided_slice %13 {offsets = [0, 0], sizes = [8, 16], strides = [1, 1]} : vector<8x32xf32> to vector<8x16xf32>
    %23 = vector.extract_strided_slice %18 {offsets = [0, 0], sizes = [8, 16], strides = [1, 1]} : vector<8x32xf32> to vector<8x16xf32>
    %cst_23 = arith.constant dense<0.000000e+00> : vector<8x8xf32>
    %24 = tpu.matmul %21, %22, %cst_23 {dimension_numbers = #tpu.dot_dimension_numbers<[1], [1], [0], [0], [0, 0, 1, 0], [], []>} : vector<8x16xf32>, vector<8x16xf32>, vector<8x8xf32> -> vector<8x8xf32>
    %cst_24 = arith.constant 2.500000e-01 : f32
    %25 = vector.broadcast %cst_24 : f32 to vector<8x8xf32>
    %26 = arith.mulf %24, %25 : vector<8x8xf32>
    %cst_25 = arith.constant dense<0xFF800000> : vector<8xf32>
    %27 = vector.multi_reduction <maximumf>, %26, %cst_25 [1] : vector<8x8xf32> to vector<8xf32>
    %28 = vector.shape_cast %27 : vector<8xf32> to vector<8x1xf32>
    %29 = vector.broadcast %28 : vector<8x1xf32> to vector<8x8xf32>
    %30 = arith.subf %26, %29 : vector<8x8xf32>
    %31 = math.exp %30 : vector<8x8xf32>
    %cst_26 = arith.constant dense<0.000000e+00> : vector<8xf32>
    %32 = vector.multi_reduction <add>, %31, %cst_26 [1] : vector<8x8xf32> to vector<8xf32>
    %33 = vector.shape_cast %32 : vector<8xf32> to vector<8x1xf32>
    %cst_27 = arith.constant dense<0.000000e+00> : vector<8x16xf32>
    %34 = tpu.matmul %31, %23, %cst_27 {dimension_numbers = #tpu.dot_dimension_numbers<[1], [0], [0], [1], [0, 0, 1, 1], [], []>} : vector<8x8xf32>, vector<8x16xf32>, vector<8x16xf32> -> vector<8x16xf32>
    %35 = tpu.reciprocal %33 : vector<8x1xf32> -> vector<8x1xf32>
    %36 = vector.broadcast %35 : vector<8x1xf32> to vector<8x16xf32>
    %37 = arith.mulf %34, %36 : vector<8x16xf32>
    %38 = vector.extract_strided_slice %19 {offsets = [0, 0], sizes = [16, 32], strides = [1, 1]} : vector<32x32xf32> to vector<16x32xf32>
    %cst_28 = arith.constant dense<0.000000e+00> : vector<8x32xf32>
    %39 = tpu.matmul %37, %38, %cst_28 {dimension_numbers = #tpu.dot_dimension_numbers<[1], [0], [0], [1], [0, 0, 1, 1], [], []>} : vector<8x16xf32>, vector<16x32xf32>, vector<8x32xf32> -> vector<8x32xf32>
    %40 = vector.extract_strided_slice %8 {offsets = [0, 16], sizes = [8, 16], strides = [1, 1]} : vector<8x32xf32> to vector<8x16xf32>
    %41 = vector.extract_strided_slice %13 {offsets = [0, 16], sizes = [8, 16], strides = [1, 1]} : vector<8x32xf32> to vector<8x16xf32>
    %42 = vector.extract_strided_slice %18 {offsets = [0, 16], sizes = [8, 16], strides = [1, 1]} : vector<8x32xf32> to vector<8x16xf32>
    %cst_29 = arith.constant dense<0.000000e+00> : vector<8x8xf32>
    %43 = tpu.matmul %40, %41, %cst_29 {dimension_numbers = #tpu.dot_dimension_numbers<[1], [1], [0], [0], [0, 0, 1, 0], [], []>} : vector<8x16xf32>, vector<8x16xf32>, vector<8x8xf32> -> vector<8x8xf32>
    %cst_30 = arith.constant 2.500000e-01 : f32
    %44 = vector.broadcast %cst_30 : f32 to vector<8x8xf32>
    %45 = arith.mulf %43, %44 : vector<8x8xf32>
    %cst_31 = arith.constant dense<0xFF800000> : vector<8xf32>
    %46 = vector.multi_reduction <maximumf>, %45, %cst_31 [1] : vector<8x8xf32> to vector<8xf32>
    %47 = vector.shape_cast %46 : vector<8xf32> to vector<8x1xf32>
    %48 = vector.broadcast %47 : vector<8x1xf32> to vector<8x8xf32>
    %49 = arith.subf %45, %48 : vector<8x8xf32>
    %50 = math.exp %49 : vector<8x8xf32>
    %cst_32 = arith.constant dense<0.000000e+00> : vector<8xf32>
    %51 = vector.multi_reduction <add>, %50, %cst_32 [1] : vector<8x8xf32> to vector<8xf32>
    %52 = vector.shape_cast %51 : vector<8xf32> to vector<8x1xf32>
    %cst_33 = arith.constant dense<0.000000e+00> : vector<8x16xf32>
    %53 = tpu.matmul %50, %42, %cst_33 {dimension_numbers = #tpu.dot_dimension_numbers<[1], [0], [0], [1], [0, 0, 1, 1], [], []>} : vector<8x8xf32>, vector<8x16xf32>, vector<8x16xf32> -> vector<8x16xf32>
    %54 = tpu.reciprocal %52 : vector<8x1xf32> -> vector<8x1xf32>
    %55 = vector.broadcast %54 : vector<8x1xf32> to vector<8x16xf32>
    %56 = arith.mulf %53, %55 : vector<8x16xf32>
    %57 = vector.extract_strided_slice %19 {offsets = [16, 0], sizes = [16, 32], strides = [1, 1]} : vector<32x32xf32> to vector<16x32xf32>
    %cst_34 = arith.constant dense<0.000000e+00> : vector<8x32xf32>
    %58 = tpu.matmul %56, %57, %cst_34 {dimension_numbers = #tpu.dot_dimension_numbers<[1], [0], [0], [1], [0, 0, 1, 1], [], []>} : vector<8x16xf32>, vector<16x32xf32>, vector<8x32xf32> -> vector<8x32xf32>
    %59 = arith.addf %39, %58 : vector<8x32xf32>
    %60 = vector.broadcast %20 : vector<1x32xf32> to vector<8x32xf32>
    %61 = arith.addf %59, %60 : vector<8x32xf32>
    %c0_35 = arith.constant 0 : index
    %c0_36 = arith.constant 0 : index
    %62 = vector.load %arg13[%c0_35, %c0_36] : memref<1x32xf32, #tpu.memory_space<vmem>>, vector<1x32xf32>
    %c0_37 = arith.constant 0 : index
    %c0_38 = arith.constant 0 : index
    %63 = vector.load %arg14[%c0_37, %c0_38] : memref<1x32xf32, #tpu.memory_space<vmem>>, vector<1x32xf32>
    %cst_39 = arith.constant dense<0.000000e+00> : vector<8xf32>
    %64 = vector.multi_reduction <add>, %61, %cst_39 [1] : vector<8x32xf32> to vector<8xf32>
    %65 = vector.shape_cast %64 : vector<8xf32> to vector<8x1xf32>
    %cst_40 = arith.constant 3.200000e+01 : f32
    %66 = vector.broadcast %cst_40 : f32 to vector<8x1xf32>
    %67 = arith.divf %65, %66 : vector<8x1xf32>
    %68 = vector.broadcast %67 : vector<8x1xf32> to vector<8x32xf32>
    %69 = arith.subf %61, %68 : vector<8x32xf32>
    %70 = arith.mulf %69, %69 : vector<8x32xf32>
    %cst_41 = arith.constant dense<0.000000e+00> : vector<8xf32>
    %71 = vector.multi_reduction <add>, %70, %cst_41 [1] : vector<8x32xf32> to vector<8xf32>
    %72 = vector.shape_cast %71 : vector<8xf32> to vector<8x1xf32>
    %cst_42 = arith.constant 3.200000e+01 : f32
    %73 = vector.broadcast %cst_42 : f32 to vector<8x1xf32>
    %74 = arith.divf %72, %73 : vector<8x1xf32>
    %cst_43 = arith.constant 9.99999974E-6 : f32
    %75 = vector.broadcast %cst_43 : f32 to vector<8x1xf32>
    %76 = arith.addf %74, %75 : vector<8x1xf32>
    %77 = math.rsqrt %76 : vector<8x1xf32>
    %78 = vector.broadcast %77 : vector<8x1xf32> to vector<8x32xf32>
    %79 = arith.mulf %69, %78 : vector<8x32xf32>
    %80 = vector.broadcast %62 : vector<1x32xf32> to vector<8x32xf32>
    %81 = arith.mulf %79, %80 : vector<8x32xf32>
    %82 = vector.broadcast %63 : vector<1x32xf32> to vector<8x32xf32>
    %83 = arith.addf %81, %82 : vector<8x32xf32>
    %84 = arith.addf %83, %3 : vector<8x32xf32>
    %c0_44 = arith.constant 0 : index
    %c0_45 = arith.constant 0 : index
    %85 = vector.load %arg15[%c0_44, %c0_45] : memref<32x16xf32, #tpu.memory_space<vmem>>, vector<32x16xf32>
    %cst_46 = arith.constant dense<0.000000e+00> : vector<8x16xf32>
    %86 = tpu.matmul %84, %85, %cst_46 {dimension_numbers = #tpu.dot_dimension_numbers<[1], [0], [0], [1], [0, 0, 1, 1], [], []>} : vector<8x32xf32>, vector<32x16xf32>, vector<8x16xf32> -> vector<8x16xf32>
    %c0_47 = arith.constant 0 : index
    %c0_48 = arith.constant 0 : index
    %87 = vector.load %arg16[%c0_47, %c0_48] : memref<1x16xf32, #tpu.memory_space<vmem>>, vector<1x16xf32>
    %88 = vector.broadcast %87 : vector<1x16xf32> to vector<8x16xf32>
    %89 = arith.addf %86, %88 : vector<8x16xf32>
    %c0_49 = arith.constant 0 : index
    %c0_50 = arith.constant 0 : index
    %c0_51 = arith.constant 0 : index
    %90 = vector.load %arg3[%c0_49, %c0_50, %c0_51] : memref<1x16x16xf32, #tpu.memory_space<vmem>>, vector<1x16x16xf32>
    %91 = vector.shape_cast %90 : vector<1x16x16xf32> to vector<16x16xf32>
    %c0_52 = arith.constant 0 : index
    %c0_53 = arith.constant 0 : index
    %c0_54 = arith.constant 0 : index
    %92 = vector.load %arg4[%c0_52, %c0_53, %c0_54] : memref<1x16x16xf32, #tpu.memory_space<vmem>>, vector<1x16x16xf32>
    %93 = vector.shape_cast %92 : vector<1x16x16xf32> to vector<16x16xf32>
    %c0_55 = arith.constant 0 : index
    %c0_56 = arith.constant 0 : index
    %94 = vector.load %arg17[%c0_55, %c0_56] : memref<16x32xf32, #tpu.memory_space<vmem>>, vector<16x32xf32>
    %c0_57 = arith.constant 0 : index
    %c0_58 = arith.constant 0 : index
    %95 = vector.load %arg18[%c0_57, %c0_58] : memref<1x32xf32, #tpu.memory_space<vmem>>, vector<1x32xf32>
    %96 = vector.extract_strided_slice %89 {offsets = [0, 0], sizes = [8, 8], strides = [1, 1]} : vector<8x16xf32> to vector<8x8xf32>
    %97 = vector.extract_strided_slice %91 {offsets = [0, 0], sizes = [16, 8], strides = [1, 1]} : vector<16x16xf32> to vector<16x8xf32>
    %98 = vector.extract_strided_slice %93 {offsets = [0, 0], sizes = [16, 8], strides = [1, 1]} : vector<16x16xf32> to vector<16x8xf32>
    %cst_59 = arith.constant dense<0.000000e+00> : vector<8x16xf32>
    %99 = tpu.matmul %96, %97, %cst_59 {dimension_numbers = #tpu.dot_dimension_numbers<[1], [1], [0], [0], [0, 0, 1, 0], [], []>} : vector<8x8xf32>, vector<16x8xf32>, vector<8x16xf32> -> vector<8x16xf32>
    %cst_60 = arith.constant 0.353553385 : f32
    %100 = vector.broadcast %cst_60 : f32 to vector<8x16xf32>
    %101 = arith.mulf %99, %100 : vector<8x16xf32>
    %cst_61 = arith.constant dense<0xFF800000> : vector<8xf32>
    %102 = vector.multi_reduction <maximumf>, %101, %cst_61 [1] : vector<8x16xf32> to vector<8xf32>
    %103 = vector.shape_cast %102 : vector<8xf32> to vector<8x1xf32>
    %104 = vector.broadcast %103 : vector<8x1xf32> to vector<8x16xf32>
    %105 = arith.subf %101, %104 : vector<8x16xf32>
    %106 = math.exp %105 : vector<8x16xf32>
    %cst_62 = arith.constant dense<0.000000e+00> : vector<8xf32>
    %107 = vector.multi_reduction <add>, %106, %cst_62 [1] : vector<8x16xf32> to vector<8xf32>
    %108 = vector.shape_cast %107 : vector<8xf32> to vector<8x1xf32>
    %cst_63 = arith.constant dense<0.000000e+00> : vector<8x8xf32>
    %109 = tpu.matmul %106, %98, %cst_63 {dimension_numbers = #tpu.dot_dimension_numbers<[1], [0], [0], [1], [0, 0, 1, 1], [], []>} : vector<8x16xf32>, vector<16x8xf32>, vector<8x8xf32> -> vector<8x8xf32>
    %110 = tpu.reciprocal %108 : vector<8x1xf32> -> vector<8x1xf32>
    %111 = vector.broadcast %110 : vector<8x1xf32> to vector<8x8xf32>
    %112 = arith.mulf %109, %111 : vector<8x8xf32>
    %113 = vector.extract_strided_slice %94 {offsets = [0, 0], sizes = [8, 32], strides = [1, 1]} : vector<16x32xf32> to vector<8x32xf32>
    %cst_64 = arith.constant dense<0.000000e+00> : vector<8x32xf32>
    %114 = tpu.matmul %112, %113, %cst_64 {dimension_numbers = #tpu.dot_dimension_numbers<[1], [0], [0], [1], [0, 0, 1, 1], [], []>} : vector<8x8xf32>, vector<8x32xf32>, vector<8x32xf32> -> vector<8x32xf32>
    %115 = vector.extract_strided_slice %89 {offsets = [0, 8], sizes = [8, 8], strides = [1, 1]} : vector<8x16xf32> to vector<8x8xf32>
    %116 = vector.extract_strided_slice %91 {offsets = [0, 8], sizes = [16, 8], strides = [1, 1]} : vector<16x16xf32> to vector<16x8xf32>
    %117 = vector.extract_strided_slice %93 {offsets = [0, 8], sizes = [16, 8], strides = [1, 1]} : vector<16x16xf32> to vector<16x8xf32>
    %cst_65 = arith.constant dense<0.000000e+00> : vector<8x16xf32>
    %118 = tpu.matmul %115, %116, %cst_65 {dimension_numbers = #tpu.dot_dimension_numbers<[1], [1], [0], [0], [0, 0, 1, 0], [], []>} : vector<8x8xf32>, vector<16x8xf32>, vector<8x16xf32> -> vector<8x16xf32>
    %cst_66 = arith.constant 0.353553385 : f32
    %119 = vector.broadcast %cst_66 : f32 to vector<8x16xf32>
    %120 = arith.mulf %118, %119 : vector<8x16xf32>
    %cst_67 = arith.constant dense<0xFF800000> : vector<8xf32>
    %121 = vector.multi_reduction <maximumf>, %120, %cst_67 [1] : vector<8x16xf32> to vector<8xf32>
    %122 = vector.shape_cast %121 : vector<8xf32> to vector<8x1xf32>
    %123 = vector.broadcast %122 : vector<8x1xf32> to vector<8x16xf32>
    %124 = arith.subf %120, %123 : vector<8x16xf32>
    %125 = math.exp %124 : vector<8x16xf32>
    %cst_68 = arith.constant dense<0.000000e+00> : vector<8xf32>
    %126 = vector.multi_reduction <add>, %125, %cst_68 [1] : vector<8x16xf32> to vector<8xf32>
    %127 = vector.shape_cast %126 : vector<8xf32> to vector<8x1xf32>
    %cst_69 = arith.constant dense<0.000000e+00> : vector<8x8xf32>
    %128 = tpu.matmul %125, %117, %cst_69 {dimension_numbers = #tpu.dot_dimension_numbers<[1], [0], [0], [1], [0, 0, 1, 1], [], []>} : vector<8x16xf32>, vector<16x8xf32>, vector<8x8xf32> -> vector<8x8xf32>
    %129 = tpu.reciprocal %127 : vector<8x1xf32> -> vector<8x1xf32>
    %130 = vector.broadcast %129 : vector<8x1xf32> to vector<8x8xf32>
    %131 = arith.mulf %128, %130 : vector<8x8xf32>
    %132 = vector.extract_strided_slice %94 {offsets = [8, 0], sizes = [8, 32], strides = [1, 1]} : vector<16x32xf32> to vector<8x32xf32>
    %cst_70 = arith.constant dense<0.000000e+00> : vector<8x32xf32>
    %133 = tpu.matmul %131, %132, %cst_70 {dimension_numbers = #tpu.dot_dimension_numbers<[1], [0], [0], [1], [0, 0, 1, 1], [], []>} : vector<8x8xf32>, vector<8x32xf32>, vector<8x32xf32> -> vector<8x32xf32>
    %134 = arith.addf %114, %133 : vector<8x32xf32>
    %135 = vector.broadcast %95 : vector<1x32xf32> to vector<8x32xf32>
    %136 = arith.addf %134, %135 : vector<8x32xf32>
    %137 = arith.addf %83, %136 : vector<8x32xf32>
    %c0_71 = arith.constant 0 : index
    %c0_72 = arith.constant 0 : index
    %138 = vector.load %arg19[%c0_71, %c0_72] : memref<1x32xf32, #tpu.memory_space<vmem>>, vector<1x32xf32>
    %c0_73 = arith.constant 0 : index
    %c0_74 = arith.constant 0 : index
    %139 = vector.load %arg20[%c0_73, %c0_74] : memref<1x32xf32, #tpu.memory_space<vmem>>, vector<1x32xf32>
    %cst_75 = arith.constant dense<0.000000e+00> : vector<8xf32>
    %140 = vector.multi_reduction <add>, %137, %cst_75 [1] : vector<8x32xf32> to vector<8xf32>
    %141 = vector.shape_cast %140 : vector<8xf32> to vector<8x1xf32>
    %cst_76 = arith.constant 3.200000e+01 : f32
    %142 = vector.broadcast %cst_76 : f32 to vector<8x1xf32>
    %143 = arith.divf %141, %142 : vector<8x1xf32>
    %144 = vector.broadcast %143 : vector<8x1xf32> to vector<8x32xf32>
    %145 = arith.subf %137, %144 : vector<8x32xf32>
    %146 = arith.mulf %145, %145 : vector<8x32xf32>
    %cst_77 = arith.constant dense<0.000000e+00> : vector<8xf32>
    %147 = vector.multi_reduction <add>, %146, %cst_77 [1] : vector<8x32xf32> to vector<8xf32>
    %148 = vector.shape_cast %147 : vector<8xf32> to vector<8x1xf32>
    %cst_78 = arith.constant 3.200000e+01 : f32
    %149 = vector.broadcast %cst_78 : f32 to vector<8x1xf32>
    %150 = arith.divf %148, %149 : vector<8x1xf32>
    %cst_79 = arith.constant 9.99999974E-6 : f32
    %151 = vector.broadcast %cst_79 : f32 to vector<8x1xf32>
    %152 = arith.addf %150, %151 : vector<8x1xf32>
    %153 = math.rsqrt %152 : vector<8x1xf32>
    %154 = vector.broadcast %153 : vector<8x1xf32> to vector<8x32xf32>
    %155 = arith.mulf %145, %154 : vector<8x32xf32>
    %156 = vector.broadcast %138 : vector<1x32xf32> to vector<8x32xf32>
    %157 = arith.mulf %155, %156 : vector<8x32xf32>
    %158 = vector.broadcast %139 : vector<1x32xf32> to vector<8x32xf32>
    %159 = arith.addf %157, %158 : vector<8x32xf32>
    %c0_80 = arith.constant 0 : index
    %c0_81 = arith.constant 0 : index
    %160 = vector.load %arg21[%c0_80, %c0_81] : memref<32x64xf32, #tpu.memory_space<vmem>>, vector<32x64xf32>
    %cst_82 = arith.constant dense<0.000000e+00> : vector<8x64xf32>
    %161 = tpu.matmul %159, %160, %cst_82 {dimension_numbers = #tpu.dot_dimension_numbers<[1], [0], [0], [1], [0, 0, 1, 1], [], []>} : vector<8x32xf32>, vector<32x64xf32>, vector<8x64xf32> -> vector<8x64xf32>
    %c0_83 = arith.constant 0 : index
    %c0_84 = arith.constant 0 : index
    %162 = vector.load %arg22[%c0_83, %c0_84] : memref<1x64xf32, #tpu.memory_space<vmem>>, vector<1x64xf32>
    %163 = vector.broadcast %162 : vector<1x64xf32> to vector<8x64xf32>
    %164 = arith.addf %161, %163 : vector<8x64xf32>
    %cst_85 = arith.constant 0.000000e+00 : f32
    %165 = vector.broadcast %cst_85 : f32 to vector<8x64xf32>
    %166 = arith.maximumf %164, %165 : vector<8x64xf32>
    %c0_86 = arith.constant 0 : index
    %c0_87 = arith.constant 0 : index
    %167 = vector.load %arg23[%c0_86, %c0_87] : memref<64x32xf32, #tpu.memory_space<vmem>>, vector<64x32xf32>
    %cst_88 = arith.constant dense<0.000000e+00> : vector<8x32xf32>
    %168 = tpu.matmul %166, %167, %cst_88 {dimension_numbers = #tpu.dot_dimension_numbers<[1], [0], [0], [1], [0, 0, 1, 1], [], []>} : vector<8x64xf32>, vector<64x32xf32>, vector<8x32xf32> -> vector<8x32xf32>
    %c0_89 = arith.constant 0 : index
    %c0_90 = arith.constant 0 : index
    %169 = vector.load %arg24[%c0_89, %c0_90] : memref<1x32xf32, #tpu.memory_space<vmem>>, vector<1x32xf32>
    %170 = vector.broadcast %169 : vector<1x32xf32> to vector<8x32xf32>
    %171 = arith.addf %168, %170 : vector<8x32xf32>
    %172 = arith.addf %159, %171 : vector<8x32xf32>
    %c0_91 = arith.constant 0 : index
    %c0_92 = arith.constant 0 : index
    %173 = vector.load %arg25[%c0_91, %c0_92] : memref<1x32xf32, #tpu.memory_space<vmem>>, vector<1x32xf32>
    %c0_93 = arith.constant 0 : index
    %c0_94 = arith.constant 0 : index
    %174 = vector.load %arg26[%c0_93, %c0_94] : memref<1x32xf32, #tpu.memory_space<vmem>>, vector<1x32xf32>
    %cst_95 = arith.constant dense<0.000000e+00> : vector<8xf32>
    %175 = vector.multi_reduction <add>, %172, %cst_95 [1] : vector<8x32xf32> to vector<8xf32>
    %176 = vector.shape_cast %175 : vector<8xf32> to vector<8x1xf32>
    %cst_96 = arith.constant 3.200000e+01 : f32
    %177 = vector.broadcast %cst_96 : f32 to vector<8x1xf32>
    %178 = arith.divf %176, %177 : vector<8x1xf32>
    %179 = vector.broadcast %178 : vector<8x1xf32> to vector<8x32xf32>
    %180 = arith.subf %172, %179 : vector<8x32xf32>
    %181 = arith.mulf %180, %180 : vector<8x32xf32>
    %cst_97 = arith.constant dense<0.000000e+00> : vector<8xf32>
    %182 = vector.multi_reduction <add>, %181, %cst_97 [1] : vector<8x32xf32> to vector<8xf32>
    %183 = vector.shape_cast %182 : vector<8xf32> to vector<8x1xf32>
    %cst_98 = arith.constant 3.200000e+01 : f32
    %184 = vector.broadcast %cst_98 : f32 to vector<8x1xf32>
    %185 = arith.divf %183, %184 : vector<8x1xf32>
    %cst_99 = arith.constant 9.99999974E-6 : f32
    %186 = vector.broadcast %cst_99 : f32 to vector<8x1xf32>
    %187 = arith.addf %185, %186 : vector<8x1xf32>
    %188 = math.rsqrt %187 : vector<8x1xf32>
    %189 = vector.broadcast %188 : vector<8x1xf32> to vector<8x32xf32>
    %190 = arith.mulf %180, %189 : vector<8x32xf32>
    %191 = vector.broadcast %173 : vector<1x32xf32> to vector<8x32xf32>
    %192 = arith.mulf %190, %191 : vector<8x32xf32>
    %193 = vector.broadcast %174 : vector<1x32xf32> to vector<8x32xf32>
    %194 = arith.addf %192, %193 : vector<8x32xf32>
    %c0_100 = arith.constant 0 : index
    %c0_101 = arith.constant 0 : index
    %c0_102 = arith.constant 0 : index
    %195 = vector.load %arg31[%c0_100, %c0_101, %c0_102] : memref<1x8x32xf32, #tpu.memory_space<vmem>>, vector<1x8x32xf32>
    %196 = vector.shape_cast %195 : vector<1x8x32xf32> to vector<8x32xf32>
    %197 = vector.shape_cast %194 : vector<8x32xf32> to vector<1x8x32xf32>
    tpu.vector_store %arg31[%c0_100, %c0_101, %c0_102], %197 {strides = array<i32>} : memref<1x8x32xf32, #tpu.memory_space<vmem>>, vector<1x8x32xf32>,
    %198 = arith.addf %194, %3 : vector<8x32xf32>
    %c0_103 = arith.constant 0 : index
    %c0_104 = arith.constant 0 : index
    %199 = vector.load %arg27[%c0_103, %c0_104] : memref<32x16xf32, #tpu.memory_space<vmem>>, vector<32x16xf32>
    %cst_105 = arith.constant dense<0.000000e+00> : vector<8x16xf32>
    %200 = tpu.matmul %198, %199, %cst_105 {dimension_numbers = #tpu.dot_dimension_numbers<[1], [0], [0], [1], [0, 0, 1, 1], [], []>} : vector<8x32xf32>, vector<32x16xf32>, vector<8x16xf32> -> vector<8x16xf32>
    %c0_106 = arith.constant 0 : index
    %c0_107 = arith.constant 0 : index
    %201 = vector.load %arg28[%c0_106, %c0_107] : memref<1x16xf32, #tpu.memory_space<vmem>>, vector<1x16xf32>
    %202 = vector.broadcast %201 : vector<1x16xf32> to vector<8x16xf32>
    %203 = arith.addf %200, %202 : vector<8x16xf32>
    %c0_108 = arith.constant 0 : index
    %c0_109 = arith.constant 0 : index
    %204 = vector.load %arg29[%c0_108, %c0_109] : memref<32x16xf32, #tpu.memory_space<vmem>>, vector<32x16xf32>
    %cst_110 = arith.constant dense<0.000000e+00> : vector<8x16xf32>
    %205 = tpu.matmul %194, %204, %cst_110 {dimension_numbers = #tpu.dot_dimension_numbers<[1], [0], [0], [1], [0, 0, 1, 1], [], []>} : vector<8x32xf32>, vector<32x16xf32>, vector<8x16xf32> -> vector<8x16xf32>
    %c0_111 = arith.constant 0 : index
    %c0_112 = arith.constant 0 : index
    %206 = vector.load %arg30[%c0_111, %c0_112] : memref<1x16xf32, #tpu.memory_space<vmem>>, vector<1x16xf32>
    %207 = vector.broadcast %206 : vector<1x16xf32> to vector<8x16xf32>
    %208 = arith.addf %205, %207 : vector<8x16xf32>
    %c0_113 = arith.constant 0 : index
    %c0_114 = arith.constant 0 : index
    %c0_115 = arith.constant 0 : index
    %209 = vector.load %arg32[%c0_113, %c0_114, %c0_115] : memref<1x8x16xf32, #tpu.memory_space<vmem>>, vector<1x8x16xf32>
    %210 = vector.shape_cast %209 : vector<1x8x16xf32> to vector<8x16xf32>
    %211 = vector.shape_cast %203 : vector<8x16xf32> to vector<1x8x16xf32>
    tpu.vector_store %arg32[%c0_113, %c0_114, %c0_115], %211 {strides = array<i32>} : memref<1x8x16xf32, #tpu.memory_space<vmem>>, vector<1x8x16xf32>,
    %c0_116 = arith.constant 0 : index
    %c0_117 = arith.constant 0 : index
    %c0_118 = arith.constant 0 : index
    %212 = vector.load %arg33[%c0_116, %c0_117, %c0_118] : memref<1x8x16xf32, #tpu.memory_space<vmem>>, vector<1x8x16xf32>
    %213 = vector.shape_cast %212 : vector<1x8x16xf32> to vector<8x16xf32>
    %214 = vector.shape_cast %208 : vector<8x16xf32> to vector<1x8x16xf32>
    tpu.vector_store %arg33[%c0_116, %c0_117, %c0_118], %214 {strides = array<i32>} : memref<1x8x16xf32, #tpu.memory_space<vmem>>, vector<1x8x16xf32>,
    return
  }
  func.func @transform_0(%arg0: i32) -> (i32, i32, i32) {
    %c0_i32 = arith.constant 0 : i32
    %c0_i32_0 = arith.constant 0 : i32
    %c0_i32_1 = arith.constant 0 : i32
    return %arg0, %c0_i32, %c0_i32_0 : i32, i32, i32
  }
  func.func @transform_1(%arg0: i32) -> (i32, i32, i32) {
    %c0_i32 = arith.constant 0 : i32
    %c0_i32_0 = arith.constant 0 : i32
    %c0_i32_1 = arith.constant 0 : i32
    return %arg0, %c0_i32, %c0_i32_0 : i32, i32, i32
  }
  func.func @transform_2(%arg0: i32) -> (i32, i32, i32) {
    %c0_i32 = arith.constant 0 : i32
    %c0_i32_0 = arith.constant 0 : i32
    %c0_i32_1 = arith.constant 0 : i32
    return %arg0, %c0_i32, %c0_i32_0 : i32, i32, i32
  }
  func.func @transform_3(%arg0: i32) -> (i32, i32, i32) {
    %c0_i32 = arith.constant 0 : i32
    %c0_i32_0 = arith.constant 0 : i32
    %c0_i32_1 = arith.constant 0 : i32
    return %arg0, %c0_i32, %c0_i32_0 : i32, i32, i32
  }
  func.func @transform_4(%arg0: i32) -> (i32, i32) {
    %c0_i32 = arith.constant 0 : i32
    %c0_i32_0 = arith.constant 0 : i32
    %c0_i32_1 = arith.constant 0 : i32
    return %c0_i32, %c0_i32_0 : i32, i32
  }
  func.func @transform_5(%arg0: i32) -> (i32, i32) {
    %c0_i32 = arith.constant 0 : i32
    %c0_i32_0 = arith.constant 0 : i32
    %c0_i32_1 = arith.constant 0 : i32
    return %c0_i32, %c0_i32_0 : i32, i32
  }
  func.func @transform_6(%arg0: i32) -> (i32, i32) {
    %c0_i32 = arith.constant 0 : i32
    %c0_i32_0 = arith.constant 0 : i32
    %c0_i32_1 = arith.constant 0 : i32
    return %c0_i32, %c0_i32_0 : i32, i32
  }
  func.func @transform_7(%arg0: i32) -> (i32, i32) {
    %c0_i32 = arith.constant 0 : i32
    %c0_i32_0 = arith.constant 0 : i32
    %c0_i32_1 = arith.constant 0 : i32
    return %c0_i32, %c0_i32_0 : i32, i32
  }
  func.func @transform_8(%arg0: i32) -> (i32, i32) {
    %c0_i32 = arith.constant 0 : i32
    %c0_i32_0 = arith.constant 0 : i32
    %c0_i32_1 = arith.constant 0 : i32
    return %c0_i32, %c0_i32_0 : i32, i32
  }
  func.func @transform_9(%arg0: i32) -> (i32, i32) {
    %c0_i32 = arith.constant 0 : i32
    %c0_i32_0 = arith.constant 0 : i32
    %c0_i32_1 = arith.constant 0 : i32
    return %c0_i32, %c0_i32_0 : i32, i32
  }
  func.func @transform_10(%arg0: i32) -> (i32, i32) {
    %c0_i32 = arith.constant 0 : i32
    %c0_i32_0 = arith.constant 0 : i32
    %c0_i32_1 = arith.constant 0 : i32
    return %c0_i32, %c0_i32_0 : i32, i32
  }
  func.func @transform_11(%arg0: i32) -> (i32, i32) {
    %c0_i32 = arith.constant 0 : i32
    %c0_i32_0 = arith.constant 0 : i32
    %c0_i32_1 = arith.constant 0 : i32
    return %c0_i32, %c0_i32_0 : i32, i32
  }
  func.func @transform_12(%arg0: i32) -> (i32, i32) {
    %c0_i32 = arith.constant 0 : i32
    %c0_i32_0 = arith.constant 0 : i32
    %c0_i32_1 = arith.constant 0 : i32
    return %c0_i32, %c0_i32_0 : i32, i32
  }
  func.func @transform_13(%arg0: i32) -> (i32, i32) {
    %c0_i32 = arith.constant 0 : i32
    %c0_i32_0 = arith.constant 0 : i32
    %c0_i32_1 = arith.constant 0 : i32
    return %c0_i32, %c0_i32_0 : i32, i32
  }
  func.func @transform_14(%arg0: i32) -> (i32, i32) {
    %c0_i32 = arith.constant 0 : i32
    %c0_i32_0 = arith.constant 0 : i32
    %c0_i32_1 = arith.constant 0 : i32
    return %c0_i32, %c0_i32_0 : i32, i32
  }
  func.func @transform_15(%arg0: i32) -> (i32, i32) {
    %c0_i32 = arith.constant 0 : i32
    %c0_i32_0 = arith.constant 0 : i32
    %c0_i32_1 = arith.constant 0 : i32
    return %c0_i32, %c0_i32_0 : i32, i32
  }
  func.func @transform_16(%arg0: i32) -> (i32, i32) {
    %c0_i32 = arith.constant 0 : i32
    %c0_i32_0 = arith.constant 0 : i32
    %c0_i32_1 = arith.constant 0 : i32
    return %c0_i32, %c0_i32_0 : i32, i32
  }
  func.func @transform_17(%arg0: i32) -> (i32, i32) {
    %c0_i32 = arith.constant 0 : i32
    %c0_i32_0 = arith.constant 0 : i32
    %c0_i32_1 = arith.constant 0 : i32
    return %c0_i32, %c0_i32_0 : i32, i32
  }
  func.func @transform_18(%arg0: i32) -> (i32, i32) {
    %c0_i32 = arith.constant 0 : i32
    %c0_i32_0 = arith.constant 0 : i32
    %c0_i32_1 = arith.constant 0 : i32
    return %c0_i32, %c0_i32_0 : i32, i32
  }
  func.func @transform_19(%arg0: i32) -> (i32, i32) {
    %c0_i32 = arith.constant 0 : i32
    %c0_i32_0 = arith.constant 0 : i32
    %c0_i32_1 = arith.constant 0 : i32
    return %c0_i32, %c0_i32_0 : i32, i32
  }
  func.func @transform_20(%arg0: i32) -> (i32, i32) {
    %c0_i32 = arith.constant 0 : i32
    %c0_i32_0 = arith.constant 0 : i32
    %c0_i32_1 = arith.constant 0 : i32
    return %c0_i32, %c0_i32_0 : i32, i32
  }
  func.func @transform_21(%arg0: i32) -> (i32, i32) {
    %c0_i32 = arith.constant 0 : i32
    %c0_i32_0 = arith.constant 0 : i32
    %c0_i32_1 = arith.constant 0 : i32
    return %c0_i32, %c0_i32_0 : i32, i32
  }
  func.func @transform_22(%arg0: i32) -> (i32, i32) {
    %c0_i32 = arith.constant 0 : i32
    %c0_i32_0 = arith.constant 0 : i32
    %c0_i32_1 = arith.constant 0 : i32
    return %c0_i32, %c0_i32_0 : i32, i32
  }
  func.func @transform_23(%arg0: i32) -> (i32, i32) {
    %c0_i32 = arith.constant 0 : i32
    %c0_i32_0 = arith.constant 0 : i32
    %c0_i32_1 = arith.constant 0 : i32
    return %c0_i32, %c0_i32_0 : i32, i32
  }
  func.func @transform_24(%arg0: i32) -> (i32, i32) {
    %c0_i32 = arith.constant 0 : i32
    %c0_i32_0 = arith.constant 0 : i32
    %c0_i32_1 = arith.constant 0 : i32
    return %c0_i32, %c0_i32_0 : i32, i32
  }
  func.func @transform_25(%arg0: i32) -> (i32, i32) {
    %c0_i32 = arith.constant 0 : i32
    %c0_i32_0 = arith.constant 0 : i32
    %c0_i32_1 = arith.constant 0 : i32
    return %c0_i32, %c0_i32_0 : i32, i32
  }
  func.func @transform_26(%arg0: i32) -> (i32, i32) {
    %c0_i32 = arith.constant 0 : i32
    %c0_i32_0 = arith.constant 0 : i32
    %c0_i32_1 = arith.constant 0 : i32
    return %c0_i32, %c0_i32_0 : i32, i32
  }
  func.func @transform_27(%arg0: i32) -> (i32, i32) {
    %c0_i32 = arith.constant 0 : i32
    %c0_i32_0 = arith.constant 0 : i32
    %c0_i32_1 = arith.constant 0 : i32
    return %c0_i32, %c0_i32_0 : i32, i32
  }
  func.func @transform_28(%arg0: i32) -> (i32, i32) {
    %c0_i32 = arith.constant 0 : i32
    %c0_i32_0 = arith.constant 0 : i32
    %c0_i32_1 = arith.constant 0 : i32
    return %c0_i32, %c0_i32_0 : i32, i32
  }
  func.func @transform_29(%arg0: i32) -> (i32, i32) {
    %c0_i32 = arith.constant 0 : i32
    %c0_i32_0 = arith.constant 0 : i32
    %c0_i32_1 = arith.constant 0 : i32
    return %c0_i32, %c0_i32_0 : i32, i32
  }
  func.func @transform_30(%arg0: i32) -> (i32, i32, i32) {
    %c0_i32 = arith.constant 0 : i32
    %c0_i32_0 = arith.constant 0 : i32
    %c0_i32_1 = arith.constant 0 : i32
    return %arg0, %c0_i32, %c0_i32_0 : i32, i32, i32
  }
  func.func @transform_31(%arg0: i32) -> (i32, i32, i32) {
    %c0_i32 = arith.constant 0 : i32
    %c0_i32_0 = arith.constant 0 : i32
    %c0_i32_1 = arith.constant 0 : i32
    return %arg0, %c0_i32, %c0_i32_0 : i32, i32, i32
  }
  func.func @transform_32(%arg0: i32) -> (i32, i32, i32) {
    %c0_i32 = arith.constant 0 : i32
    %c0_i32_0 = arith.constant 0 : i32
    %c0_i32_1 = arith.constant 0 : i32
    return %arg0, %c0_i32, %c0_i32_0 : i32, i32, i32
  }
}

module attributes {stable_mosaic.version = 11 : i64} {
  func.func @_i2t_attn_kernel(%arg0: i32, %arg1: i32, %arg2: memref<1x16x16xf32, #tpu.memory_space<vmem>>, %arg3: memref<1x8x16xf32, #tpu.memory_space<vmem>>, %arg4: memref<1x8x16xf32, #tpu.memory_space<vmem>>, %arg5: memref<1x16x32xf32, #tpu.memory_space<vmem>>, %arg6: memref<16x32xf32, #tpu.memory_space<vmem>>, %arg7: memref<1x32xf32, #tpu.memory_space<vmem>>, %arg8: memref<1x32xf32, #tpu.memory_space<vmem>>, %arg9: memref<1x32xf32, #tpu.memory_space<vmem>>, %arg10: memref<1x16x32xf32, #tpu.memory_space<vmem>>) attributes {dimension_semantics = [#tpu.dimension_semantics<parallel>, #tpu.dimension_semantics<parallel>], iteration_bounds = array<i64: 2, 1>, scalar_prefetch = 0 : i64, scratch_operands = 0 : i64, tpu.core_type = #tpu.core_type<tc>, window_params = [{transform_indices = @transform_0, window_bounds = array<i64: 1, 16, 16>}, {transform_indices = @transform_1, window_bounds = array<i64: 1, 8, 16>}, {transform_indices = @transform_2, window_bounds = array<i64: 1, 8, 16>}, {transform_indices = @transform_3, window_bounds = array<i64: 1, 16, 32>}, {pipeline_mode = #tpu.pipeline_mode<synchronous>, transform_indices = @transform_4, window_bounds = array<i64: 16, 32>}, {pipeline_mode = #tpu.pipeline_mode<synchronous>, transform_indices = @transform_5, window_bounds = array<i64: 1, 32>}, {pipeline_mode = #tpu.pipeline_mode<synchronous>, transform_indices = @transform_6, window_bounds = array<i64: 1, 32>}, {pipeline_mode = #tpu.pipeline_mode<synchronous>, transform_indices = @transform_7, window_bounds = array<i64: 1, 32>}, {transform_indices = @transform_8, window_bounds = array<i64: 1, 16, 32>}]} {
    %c0 = arith.constant 0 : index
    %c0_0 = arith.constant 0 : index
    %c0_1 = arith.constant 0 : index
    %0 = vector.load %arg2[%c0, %c0_0, %c0_1] : memref<1x16x16xf32, #tpu.memory_space<vmem>>, vector<1x16x16xf32>
    %1 = vector.shape_cast %0 : vector<1x16x16xf32> to vector<16x16xf32>
    %c0_2 = arith.constant 0 : index
    %c0_3 = arith.constant 0 : index
    %c0_4 = arith.constant 0 : index
    %2 = vector.load %arg3[%c0_2, %c0_3, %c0_4] : memref<1x8x16xf32, #tpu.memory_space<vmem>>, vector<1x8x16xf32>
    %3 = vector.shape_cast %2 : vector<1x8x16xf32> to vector<8x16xf32>
    %c0_5 = arith.constant 0 : index
    %c0_6 = arith.constant 0 : index
    %c0_7 = arith.constant 0 : index
    %4 = vector.load %arg4[%c0_5, %c0_6, %c0_7] : memref<1x8x16xf32, #tpu.memory_space<vmem>>, vector<1x8x16xf32>
    %5 = vector.shape_cast %4 : vector<1x8x16xf32> to vector<8x16xf32>
    %c0_8 = arith.constant 0 : index
    %c0_9 = arith.constant 0 : index
    %6 = vector.load %arg6[%c0_8, %c0_9] : memref<16x32xf32, #tpu.memory_space<vmem>>, vector<16x32xf32>
    %c0_10 = arith.constant 0 : index
    %c0_11 = arith.constant 0 : index
    %7 = vector.load %arg7[%c0_10, %c0_11] : memref<1x32xf32, #tpu.memory_space<vmem>>, vector<1x32xf32>
    %8 = vector.extract_strided_slice %1 {offsets = [0, 0], sizes = [16, 8], strides = [1, 1]} : vector<16x16xf32> to vector<16x8xf32>
    %9 = vector.extract_strided_slice %3 {offsets = [0, 0], sizes = [8, 8], strides = [1, 1]} : vector<8x16xf32> to vector<8x8xf32>
    %10 = vector.extract_strided_slice %5 {offsets = [0, 0], sizes = [8, 8], strides = [1, 1]} : vector<8x16xf32> to vector<8x8xf32>
    %cst = arith.constant dense<0.000000e+00> : vector<16x8xf32>
    %11 = tpu.matmul %8, %9, %cst {dimension_numbers = #tpu.dot_dimension_numbers<[1], [1], [0], [0], [0, 0, 1, 0], [], []>} : vector<16x8xf32>, vector<8x8xf32>, vector<16x8xf32> -> vector<16x8xf32>
    %cst_12 = arith.constant 0.353553385 : f32
    %12 = vector.broadcast %cst_12 : f32 to vector<16x8xf32>
    %13 = arith.mulf %11, %12 : vector<16x8xf32>
    %cst_13 = arith.constant dense<0xFF800000> : vector<16xf32>
    %14 = vector.multi_reduction <maximumf>, %13, %cst_13 [1] : vector<16x8xf32> to vector<16xf32>
    %15 = vector.shape_cast %14 : vector<16xf32> to vector<16x1xf32>
    %16 = vector.broadcast %15 : vector<16x1xf32> to vector<16x8xf32>
    %17 = arith.subf %13, %16 : vector<16x8xf32>
    %18 = math.exp %17 : vector<16x8xf32>
    %cst_14 = arith.constant dense<0.000000e+00> : vector<16xf32>
    %19 = vector.multi_reduction <add>, %18, %cst_14 [1] : vector<16x8xf32> to vector<16xf32>
    %20 = vector.shape_cast %19 : vector<16xf32> to vector<16x1xf32>
    %cst_15 = arith.constant dense<0.000000e+00> : vector<16x8xf32>
    %21 = tpu.matmul %18, %10, %cst_15 {dimension_numbers = #tpu.dot_dimension_numbers<[1], [0], [0], [1], [0, 0, 1, 1], [], []>} : vector<16x8xf32>, vector<8x8xf32>, vector<16x8xf32> -> vector<16x8xf32>
    %22 = tpu.reciprocal %20 : vector<16x1xf32> -> vector<16x1xf32>
    %23 = vector.broadcast %22 : vector<16x1xf32> to vector<16x8xf32>
    %24 = arith.mulf %21, %23 : vector<16x8xf32>
    %25 = vector.extract_strided_slice %6 {offsets = [0, 0], sizes = [8, 32], strides = [1, 1]} : vector<16x32xf32> to vector<8x32xf32>
    %cst_16 = arith.constant dense<0.000000e+00> : vector<16x32xf32>
    %26 = tpu.matmul %24, %25, %cst_16 {dimension_numbers = #tpu.dot_dimension_numbers<[1], [0], [0], [1], [0, 0, 1, 1], [], []>} : vector<16x8xf32>, vector<8x32xf32>, vector<16x32xf32> -> vector<16x32xf32>
    %27 = vector.extract_strided_slice %1 {offsets = [0, 8], sizes = [16, 8], strides = [1, 1]} : vector<16x16xf32> to vector<16x8xf32>
    %28 = vector.extract_strided_slice %3 {offsets = [0, 8], sizes = [8, 8], strides = [1, 1]} : vector<8x16xf32> to vector<8x8xf32>
    %29 = vector.extract_strided_slice %5 {offsets = [0, 8], sizes = [8, 8], strides = [1, 1]} : vector<8x16xf32> to vector<8x8xf32>
    %cst_17 = arith.constant dense<0.000000e+00> : vector<16x8xf32>
    %30 = tpu.matmul %27, %28, %cst_17 {dimension_numbers = #tpu.dot_dimension_numbers<[1], [1], [0], [0], [0, 0, 1, 0], [], []>} : vector<16x8xf32>, vector<8x8xf32>, vector<16x8xf32> -> vector<16x8xf32>
    %cst_18 = arith.constant 0.353553385 : f32
    %31 = vector.broadcast %cst_18 : f32 to vector<16x8xf32>
    %32 = arith.mulf %30, %31 : vector<16x8xf32>
    %cst_19 = arith.constant dense<0xFF800000> : vector<16xf32>
    %33 = vector.multi_reduction <maximumf>, %32, %cst_19 [1] : vector<16x8xf32> to vector<16xf32>
    %34 = vector.shape_cast %33 : vector<16xf32> to vector<16x1xf32>
    %35 = vector.broadcast %34 : vector<16x1xf32> to vector<16x8xf32>
    %36 = arith.subf %32, %35 : vector<16x8xf32>
    %37 = math.exp %36 : vector<16x8xf32>
    %cst_20 = arith.constant dense<0.000000e+00> : vector<16xf32>
    %38 = vector.multi_reduction <add>, %37, %cst_20 [1] : vector<16x8xf32> to vector<16xf32>
    %39 = vector.shape_cast %38 : vector<16xf32> to vector<16x1xf32>
    %cst_21 = arith.constant dense<0.000000e+00> : vector<16x8xf32>
    %40 = tpu.matmul %37, %29, %cst_21 {dimension_numbers = #tpu.dot_dimension_numbers<[1], [0], [0], [1], [0, 0, 1, 1], [], []>} : vector<16x8xf32>, vector<8x8xf32>, vector<16x8xf32> -> vector<16x8xf32>
    %41 = tpu.reciprocal %39 : vector<16x1xf32> -> vector<16x1xf32>
    %42 = vector.broadcast %41 : vector<16x1xf32> to vector<16x8xf32>
    %43 = arith.mulf %40, %42 : vector<16x8xf32>
    %44 = vector.extract_strided_slice %6 {offsets = [8, 0], sizes = [8, 32], strides = [1, 1]} : vector<16x32xf32> to vector<8x32xf32>
    %cst_22 = arith.constant dense<0.000000e+00> : vector<16x32xf32>
    %45 = tpu.matmul %43, %44, %cst_22 {dimension_numbers = #tpu.dot_dimension_numbers<[1], [0], [0], [1], [0, 0, 1, 1], [], []>} : vector<16x8xf32>, vector<8x32xf32>, vector<16x32xf32> -> vector<16x32xf32>
    %46 = arith.addf %26, %45 : vector<16x32xf32>
    %47 = vector.broadcast %7 : vector<1x32xf32> to vector<16x32xf32>
    %48 = arith.addf %46, %47 : vector<16x32xf32>
    %c0_23 = arith.constant 0 : index
    %c0_24 = arith.constant 0 : index
    %c0_25 = arith.constant 0 : index
    %49 = vector.load %arg5[%c0_23, %c0_24, %c0_25] : memref<1x16x32xf32, #tpu.memory_space<vmem>>, vector<1x16x32xf32>
    %50 = vector.shape_cast %49 : vector<1x16x32xf32> to vector<16x32xf32>
    %51 = arith.addf %50, %48 : vector<16x32xf32>
    %c0_26 = arith.constant 0 : index
    %c0_27 = arith.constant 0 : index
    %52 = vector.load %arg8[%c0_26, %c0_27] : memref<1x32xf32, #tpu.memory_space<vmem>>, vector<1x32xf32>
    %c0_28 = arith.constant 0 : index
    %c0_29 = arith.constant 0 : index
    %53 = vector.load %arg9[%c0_28, %c0_29] : memref<1x32xf32, #tpu.memory_space<vmem>>, vector<1x32xf32>
    %cst_30 = arith.constant dense<0.000000e+00> : vector<16xf32>
    %54 = vector.multi_reduction <add>, %51, %cst_30 [1] : vector<16x32xf32> to vector<16xf32>
    %55 = vector.shape_cast %54 : vector<16xf32> to vector<16x1xf32>
    %cst_31 = arith.constant 3.200000e+01 : f32
    %56 = vector.broadcast %cst_31 : f32 to vector<16x1xf32>
    %57 = arith.divf %55, %56 : vector<16x1xf32>
    %58 = vector.broadcast %57 : vector<16x1xf32> to vector<16x32xf32>
    %59 = arith.subf %51, %58 : vector<16x32xf32>
    %60 = arith.mulf %59, %59 : vector<16x32xf32>
    %cst_32 = arith.constant dense<0.000000e+00> : vector<16xf32>
    %61 = vector.multi_reduction <add>, %60, %cst_32 [1] : vector<16x32xf32> to vector<16xf32>
    %62 = vector.shape_cast %61 : vector<16xf32> to vector<16x1xf32>
    %cst_33 = arith.constant 3.200000e+01 : f32
    %63 = vector.broadcast %cst_33 : f32 to vector<16x1xf32>
    %64 = arith.divf %62, %63 : vector<16x1xf32>
    %cst_34 = arith.constant 9.99999974E-6 : f32
    %65 = vector.broadcast %cst_34 : f32 to vector<16x1xf32>
    %66 = arith.addf %64, %65 : vector<16x1xf32>
    %67 = math.rsqrt %66 : vector<16x1xf32>
    %68 = vector.broadcast %67 : vector<16x1xf32> to vector<16x32xf32>
    %69 = arith.mulf %59, %68 : vector<16x32xf32>
    %70 = vector.broadcast %52 : vector<1x32xf32> to vector<16x32xf32>
    %71 = arith.mulf %69, %70 : vector<16x32xf32>
    %72 = vector.broadcast %53 : vector<1x32xf32> to vector<16x32xf32>
    %73 = arith.addf %71, %72 : vector<16x32xf32>
    %c0_35 = arith.constant 0 : index
    %c0_36 = arith.constant 0 : index
    %c0_37 = arith.constant 0 : index
    %74 = vector.load %arg10[%c0_35, %c0_36, %c0_37] : memref<1x16x32xf32, #tpu.memory_space<vmem>>, vector<1x16x32xf32>
    %75 = vector.shape_cast %74 : vector<1x16x32xf32> to vector<16x32xf32>
    %76 = vector.shape_cast %73 : vector<16x32xf32> to vector<1x16x32xf32>
    tpu.vector_store %arg10[%c0_35, %c0_36, %c0_37], %76 {strides = array<i32>} : memref<1x16x32xf32, #tpu.memory_space<vmem>>, vector<1x16x32xf32>,
    return
  }
  func.func @transform_0(%arg0: i32, %arg1: i32) -> (i32, i32, i32) {
    %c0_i32 = arith.constant 0 : i32
    %c0_i32_0 = arith.constant 0 : i32
    return %arg0, %arg1, %c0_i32 : i32, i32, i32
  }
  func.func @transform_1(%arg0: i32, %arg1: i32) -> (i32, i32, i32) {
    %c0_i32 = arith.constant 0 : i32
    %c0_i32_0 = arith.constant 0 : i32
    %c0_i32_1 = arith.constant 0 : i32
    return %arg0, %c0_i32, %c0_i32_0 : i32, i32, i32
  }
  func.func @transform_2(%arg0: i32, %arg1: i32) -> (i32, i32, i32) {
    %c0_i32 = arith.constant 0 : i32
    %c0_i32_0 = arith.constant 0 : i32
    %c0_i32_1 = arith.constant 0 : i32
    return %arg0, %c0_i32, %c0_i32_0 : i32, i32, i32
  }
  func.func @transform_3(%arg0: i32, %arg1: i32) -> (i32, i32, i32) {
    %c0_i32 = arith.constant 0 : i32
    %c0_i32_0 = arith.constant 0 : i32
    return %arg0, %arg1, %c0_i32 : i32, i32, i32
  }
  func.func @transform_4(%arg0: i32, %arg1: i32) -> (i32, i32) {
    %c0_i32 = arith.constant 0 : i32
    %c0_i32_0 = arith.constant 0 : i32
    %c0_i32_1 = arith.constant 0 : i32
    return %c0_i32, %c0_i32_0 : i32, i32
  }
  func.func @transform_5(%arg0: i32, %arg1: i32) -> (i32, i32) {
    %c0_i32 = arith.constant 0 : i32
    %c0_i32_0 = arith.constant 0 : i32
    %c0_i32_1 = arith.constant 0 : i32
    return %c0_i32, %c0_i32_0 : i32, i32
  }
  func.func @transform_6(%arg0: i32, %arg1: i32) -> (i32, i32) {
    %c0_i32 = arith.constant 0 : i32
    %c0_i32_0 = arith.constant 0 : i32
    %c0_i32_1 = arith.constant 0 : i32
    return %c0_i32, %c0_i32_0 : i32, i32
  }
  func.func @transform_7(%arg0: i32, %arg1: i32) -> (i32, i32) {
    %c0_i32 = arith.constant 0 : i32
    %c0_i32_0 = arith.constant 0 : i32
    %c0_i32_1 = arith.constant 0 : i32
    return %c0_i32, %c0_i32_0 : i32, i32
  }
  func.func @transform_8(%arg0: i32, %arg1: i32) -> (i32, i32, i32) {
    %c0_i32 = arith.constant 0 : i32
    %c0_i32_0 = arith.constant 0 : i32
    return %arg0, %arg1, %c0_i32 : i32, i32, i32
  }
}

module attributes {stable_mosaic.version = 11 : i64} {
  func.func @_queries_block_kernel(%arg0: i32, %arg1: memref<1x8x32xf32, #tpu.memory_space<vmem>>, %arg2: memref<1x8x32xf32, #tpu.memory_space<vmem>>, %arg3: memref<1x16x16xf32, #tpu.memory_space<vmem>>, %arg4: memref<1x16x16xf32, #tpu.memory_space<vmem>>, %arg5: memref<32x32xf32, #tpu.memory_space<vmem>>, %arg6: memref<1x32xf32, #tpu.memory_space<vmem>>, %arg7: memref<32x32xf32, #tpu.memory_space<vmem>>, %arg8: memref<1x32xf32, #tpu.memory_space<vmem>>, %arg9: memref<32x32xf32, #tpu.memory_space<vmem>>, %arg10: memref<1x32xf32, #tpu.memory_space<vmem>>, %arg11: memref<32x32xf32, #tpu.memory_space<vmem>>, %arg12: memref<1x32xf32, #tpu.memory_space<vmem>>, %arg13: memref<1x32xf32, #tpu.memory_space<vmem>>, %arg14: memref<1x32xf32, #tpu.memory_space<vmem>>, %arg15: memref<32x16xf32, #tpu.memory_space<vmem>>, %arg16: memref<1x16xf32, #tpu.memory_space<vmem>>, %arg17: memref<16x32xf32, #tpu.memory_space<vmem>>, %arg18: memref<1x32xf32, #tpu.memory_space<vmem>>, %arg19: memref<1x32xf32, #tpu.memory_space<vmem>>, %arg20: memref<1x32xf32, #tpu.memory_space<vmem>>, %arg21: memref<32x64xf32, #tpu.memory_space<vmem>>, %arg22: memref<1x64xf32, #tpu.memory_space<vmem>>, %arg23: memref<64x32xf32, #tpu.memory_space<vmem>>, %arg24: memref<1x32xf32, #tpu.memory_space<vmem>>, %arg25: memref<1x32xf32, #tpu.memory_space<vmem>>, %arg26: memref<1x32xf32, #tpu.memory_space<vmem>>, %arg27: memref<32x16xf32, #tpu.memory_space<vmem>>, %arg28: memref<1x16xf32, #tpu.memory_space<vmem>>, %arg29: memref<32x16xf32, #tpu.memory_space<vmem>>, %arg30: memref<1x16xf32, #tpu.memory_space<vmem>>, %arg31: memref<1x8x32xf32, #tpu.memory_space<vmem>>, %arg32: memref<1x8x16xf32, #tpu.memory_space<vmem>>, %arg33: memref<1x8x16xf32, #tpu.memory_space<vmem>>) attributes {dimension_semantics = [#tpu.dimension_semantics<parallel>], iteration_bounds = array<i64: 2>, scalar_prefetch = 0 : i64, scratch_operands = 0 : i64, tpu.core_type = #tpu.core_type<tc>, window_params = [{transform_indices = @transform_0, window_bounds = array<i64: 1, 8, 32>}, {transform_indices = @transform_1, window_bounds = array<i64: 1, 8, 32>}, {transform_indices = @transform_2, window_bounds = array<i64: 1, 16, 16>}, {transform_indices = @transform_3, window_bounds = array<i64: 1, 16, 16>}, {pipeline_mode = #tpu.pipeline_mode<synchronous>, transform_indices = @transform_4, window_bounds = array<i64: 32, 32>}, {pipeline_mode = #tpu.pipeline_mode<synchronous>, transform_indices = @transform_5, window_bounds = array<i64: 1, 32>}, {pipeline_mode = #tpu.pipeline_mode<synchronous>, transform_indices = @transform_6, window_bounds = array<i64: 32, 32>}, {pipeline_mode = #tpu.pipeline_mode<synchronous>, transform_indices = @transform_7, window_bounds = array<i64: 1, 32>}, {pipeline_mode = #tpu.pipeline_mode<synchronous>, transform_indices = @transform_8, window_bounds = array<i64: 32, 32>}, {pipeline_mode = #tpu.pipeline_mode<synchronous>, transform_indices = @transform_9, window_bounds = array<i64: 1, 32>}, {pipeline_mode = #tpu.pipeline_mode<synchronous>, transform_indices = @transform_10, window_bounds = array<i64: 32, 32>}, {pipeline_mode = #tpu.pipeline_mode<synchronous>, transform_indices = @transform_11, window_bounds = array<i64: 1, 32>}, {pipeline_mode = #tpu.pipeline_mode<synchronous>, transform_indices = @transform_12, window_bounds = array<i64: 1, 32>}, {pipeline_mode = #tpu.pipeline_mode<synchronous>, transform_indices = @transform_13, window_bounds = array<i64: 1, 32>}, {pipeline_mode = #tpu.pipeline_mode<synchronous>, transform_indices = @transform_14, window_bounds = array<i64: 32, 16>}, {pipeline_mode = #tpu.pipeline_mode<synchronous>, transform_indices = @transform_15, window_bounds = array<i64: 1, 16>}, {pipeline_mode = #tpu.pipeline_mode<synchronous>, transform_indices = @transform_16, window_bounds = array<i64: 16, 32>}, {pipeline_mode = #tpu.pipeline_mode<synchronous>, transform_indices = @transform_17, window_bounds = array<i64: 1, 32>}, {pipeline_mode = #tpu.pipeline_mode<synchronous>, transform_indices = @transform_18, window_bounds = array<i64: 1, 32>}, {pipeline_mode = #tpu.pipeline_mode<synchronous>, transform_indices = @transform_19, window_bounds = array<i64: 1, 32>}, {pipeline_mode = #tpu.pipeline_mode<synchronous>, transform_indices = @transform_20, window_bounds = array<i64: 32, 64>}, {pipeline_mode = #tpu.pipeline_mode<synchronous>, transform_indices = @transform_21, window_bounds = array<i64: 1, 64>}, {pipeline_mode = #tpu.pipeline_mode<synchronous>, transform_indices = @transform_22, window_bounds = array<i64: 64, 32>}, {pipeline_mode = #tpu.pipeline_mode<synchronous>, transform_indices = @transform_23, window_bounds = array<i64: 1, 32>}, {pipeline_mode = #tpu.pipeline_mode<synchronous>, transform_indices = @transform_24, window_bounds = array<i64: 1, 32>}, {pipeline_mode = #tpu.pipeline_mode<synchronous>, transform_indices = @transform_25, window_bounds = array<i64: 1, 32>}, {pipeline_mode = #tpu.pipeline_mode<synchronous>, transform_indices = @transform_26, window_bounds = array<i64: 32, 16>}, {pipeline_mode = #tpu.pipeline_mode<synchronous>, transform_indices = @transform_27, window_bounds = array<i64: 1, 16>}, {pipeline_mode = #tpu.pipeline_mode<synchronous>, transform_indices = @transform_28, window_bounds = array<i64: 32, 16>}, {pipeline_mode = #tpu.pipeline_mode<synchronous>, transform_indices = @transform_29, window_bounds = array<i64: 1, 16>}, {transform_indices = @transform_30, window_bounds = array<i64: 1, 8, 32>}, {transform_indices = @transform_31, window_bounds = array<i64: 1, 8, 16>}, {transform_indices = @transform_32, window_bounds = array<i64: 1, 8, 16>}]} {
    %c0 = arith.constant 0 : index
    %c0_0 = arith.constant 0 : index
    %c0_1 = arith.constant 0 : index
    %0 = vector.load %arg1[%c0, %c0_0, %c0_1] : memref<1x8x32xf32, #tpu.memory_space<vmem>>, vector<1x8x32xf32>
    %1 = vector.shape_cast %0 : vector<1x8x32xf32> to vector<8x32xf32>
    %c0_2 = arith.constant 0 : index
    %c0_3 = arith.constant 0 : index
    %c0_4 = arith.constant 0 : index
    %2 = vector.load %arg2[%c0_2, %c0_3, %c0_4] : memref<1x8x32xf32, #tpu.memory_space<vmem>>, vector<1x8x32xf32>
    %3 = vector.shape_cast %2 : vector<1x8x32xf32> to vector<8x32xf32>
    %4 = arith.addf %1, %3 : vector<8x32xf32>
    %c0_5 = arith.constant 0 : index
    %c0_6 = arith.constant 0 : index
    %5 = vector.load %arg5[%c0_5, %c0_6] : memref<32x32xf32, #tpu.memory_space<vmem>>, vector<32x32xf32>
    %cst = arith.constant dense<0.000000e+00> : vector<8x32xf32>
    %6 = tpu.matmul %4, %5, %cst {dimension_numbers = #tpu.dot_dimension_numbers<[1], [0], [0], [1], [0, 0, 1, 1], [], []>} : vector<8x32xf32>, vector<32x32xf32>, vector<8x32xf32> -> vector<8x32xf32>
    %c0_7 = arith.constant 0 : index
    %c0_8 = arith.constant 0 : index
    %7 = vector.load %arg6[%c0_7, %c0_8] : memref<1x32xf32, #tpu.memory_space<vmem>>, vector<1x32xf32>
    %8 = vector.broadcast %7 : vector<1x32xf32> to vector<8x32xf32>
    %9 = arith.addf %6, %8 : vector<8x32xf32>
    %c0_9 = arith.constant 0 : index
    %c0_10 = arith.constant 0 : index
    %10 = vector.load %arg7[%c0_9, %c0_10] : memref<32x32xf32, #tpu.memory_space<vmem>>, vector<32x32xf32>
    %cst_11 = arith.constant dense<0.000000e+00> : vector<8x32xf32>
    %11 = tpu.matmul %4, %10, %cst_11 {dimension_numbers = #tpu.dot_dimension_numbers<[1], [0], [0], [1], [0, 0, 1, 1], [], []>} : vector<8x32xf32>, vector<32x32xf32>, vector<8x32xf32> -> vector<8x32xf32>
    %c0_12 = arith.constant 0 : index
    %c0_13 = arith.constant 0 : index
    %12 = vector.load %arg8[%c0_12, %c0_13] : memref<1x32xf32, #tpu.memory_space<vmem>>, vector<1x32xf32>
    %13 = vector.broadcast %12 : vector<1x32xf32> to vector<8x32xf32>
    %14 = arith.addf %11, %13 : vector<8x32xf32>
    %c0_14 = arith.constant 0 : index
    %c0_15 = arith.constant 0 : index
    %15 = vector.load %arg9[%c0_14, %c0_15] : memref<32x32xf32, #tpu.memory_space<vmem>>, vector<32x32xf32>
    %cst_16 = arith.constant dense<0.000000e+00> : vector<8x32xf32>
    %16 = tpu.matmul %1, %15, %cst_16 {dimension_numbers = #tpu.dot_dimension_numbers<[1], [0], [0], [1], [0, 0, 1, 1], [], []>} : vector<8x32xf32>, vector<32x32xf32>, vector<8x32xf32> -> vector<8x32xf32>
    %c0_17 = arith.constant 0 : index
    %c0_18 = arith.constant 0 : index
    %17 = vector.load %arg10[%c0_17, %c0_18] : memref<1x32xf32, #tpu.memory_space<vmem>>, vector<1x32xf32>
    %18 = vector.broadcast %17 : vector<1x32xf32> to vector<8x32xf32>
    %19 = arith.addf %16, %18 : vector<8x32xf32>
    %c0_19 = arith.constant 0 : index
    %c0_20 = arith.constant 0 : index
    %20 = vector.load %arg11[%c0_19, %c0_20] : memref<32x32xf32, #tpu.memory_space<vmem>>, vector<32x32xf32>
    %c0_21 = arith.constant 0 : index
    %c0_22 = arith.constant 0 : index
    %21 = vector.load %arg12[%c0_21, %c0_22] : memref<1x32xf32, #tpu.memory_space<vmem>>, vector<1x32xf32>
    %22 = vector.extract_strided_slice %9 {offsets = [0, 0], sizes = [8, 16], strides = [1, 1]} : vector<8x32xf32> to vector<8x16xf32>
    %23 = vector.extract_strided_slice %14 {offsets = [0, 0], sizes = [8, 16], strides = [1, 1]} : vector<8x32xf32> to vector<8x16xf32>
    %24 = vector.extract_strided_slice %19 {offsets = [0, 0], sizes = [8, 16], strides = [1, 1]} : vector<8x32xf32> to vector<8x16xf32>
    %cst_23 = arith.constant dense<0.000000e+00> : vector<8x8xf32>
    %25 = tpu.matmul %22, %23, %cst_23 {dimension_numbers = #tpu.dot_dimension_numbers<[1], [1], [0], [0], [0, 0, 1, 0], [], []>} : vector<8x16xf32>, vector<8x16xf32>, vector<8x8xf32> -> vector<8x8xf32>
    %cst_24 = arith.constant 2.500000e-01 : f32
    %26 = vector.broadcast %cst_24 : f32 to vector<8x8xf32>
    %27 = arith.mulf %25, %26 : vector<8x8xf32>
    %cst_25 = arith.constant dense<0xFF800000> : vector<8xf32>
    %28 = vector.multi_reduction <maximumf>, %27, %cst_25 [1] : vector<8x8xf32> to vector<8xf32>
    %29 = vector.shape_cast %28 : vector<8xf32> to vector<8x1xf32>
    %30 = vector.broadcast %29 : vector<8x1xf32> to vector<8x8xf32>
    %31 = arith.subf %27, %30 : vector<8x8xf32>
    %32 = math.exp %31 : vector<8x8xf32>
    %cst_26 = arith.constant dense<0.000000e+00> : vector<8xf32>
    %33 = vector.multi_reduction <add>, %32, %cst_26 [1] : vector<8x8xf32> to vector<8xf32>
    %34 = vector.shape_cast %33 : vector<8xf32> to vector<8x1xf32>
    %cst_27 = arith.constant dense<0.000000e+00> : vector<8x16xf32>
    %35 = tpu.matmul %32, %24, %cst_27 {dimension_numbers = #tpu.dot_dimension_numbers<[1], [0], [0], [1], [0, 0, 1, 1], [], []>} : vector<8x8xf32>, vector<8x16xf32>, vector<8x16xf32> -> vector<8x16xf32>
    %36 = tpu.reciprocal %34 : vector<8x1xf32> -> vector<8x1xf32>
    %37 = vector.broadcast %36 : vector<8x1xf32> to vector<8x16xf32>
    %38 = arith.mulf %35, %37 : vector<8x16xf32>
    %39 = vector.extract_strided_slice %20 {offsets = [0, 0], sizes = [16, 32], strides = [1, 1]} : vector<32x32xf32> to vector<16x32xf32>
    %cst_28 = arith.constant dense<0.000000e+00> : vector<8x32xf32>
    %40 = tpu.matmul %38, %39, %cst_28 {dimension_numbers = #tpu.dot_dimension_numbers<[1], [0], [0], [1], [0, 0, 1, 1], [], []>} : vector<8x16xf32>, vector<16x32xf32>, vector<8x32xf32> -> vector<8x32xf32>
    %41 = vector.extract_strided_slice %9 {offsets = [0, 16], sizes = [8, 16], strides = [1, 1]} : vector<8x32xf32> to vector<8x16xf32>
    %42 = vector.extract_strided_slice %14 {offsets = [0, 16], sizes = [8, 16], strides = [1, 1]} : vector<8x32xf32> to vector<8x16xf32>
    %43 = vector.extract_strided_slice %19 {offsets = [0, 16], sizes = [8, 16], strides = [1, 1]} : vector<8x32xf32> to vector<8x16xf32>
    %cst_29 = arith.constant dense<0.000000e+00> : vector<8x8xf32>
    %44 = tpu.matmul %41, %42, %cst_29 {dimension_numbers = #tpu.dot_dimension_numbers<[1], [1], [0], [0], [0, 0, 1, 0], [], []>} : vector<8x16xf32>, vector<8x16xf32>, vector<8x8xf32> -> vector<8x8xf32>
    %cst_30 = arith.constant 2.500000e-01 : f32
    %45 = vector.broadcast %cst_30 : f32 to vector<8x8xf32>
    %46 = arith.mulf %44, %45 : vector<8x8xf32>
    %cst_31 = arith.constant dense<0xFF800000> : vector<8xf32>
    %47 = vector.multi_reduction <maximumf>, %46, %cst_31 [1] : vector<8x8xf32> to vector<8xf32>
    %48 = vector.shape_cast %47 : vector<8xf32> to vector<8x1xf32>
    %49 = vector.broadcast %48 : vector<8x1xf32> to vector<8x8xf32>
    %50 = arith.subf %46, %49 : vector<8x8xf32>
    %51 = math.exp %50 : vector<8x8xf32>
    %cst_32 = arith.constant dense<0.000000e+00> : vector<8xf32>
    %52 = vector.multi_reduction <add>, %51, %cst_32 [1] : vector<8x8xf32> to vector<8xf32>
    %53 = vector.shape_cast %52 : vector<8xf32> to vector<8x1xf32>
    %cst_33 = arith.constant dense<0.000000e+00> : vector<8x16xf32>
    %54 = tpu.matmul %51, %43, %cst_33 {dimension_numbers = #tpu.dot_dimension_numbers<[1], [0], [0], [1], [0, 0, 1, 1], [], []>} : vector<8x8xf32>, vector<8x16xf32>, vector<8x16xf32> -> vector<8x16xf32>
    %55 = tpu.reciprocal %53 : vector<8x1xf32> -> vector<8x1xf32>
    %56 = vector.broadcast %55 : vector<8x1xf32> to vector<8x16xf32>
    %57 = arith.mulf %54, %56 : vector<8x16xf32>
    %58 = vector.extract_strided_slice %20 {offsets = [16, 0], sizes = [16, 32], strides = [1, 1]} : vector<32x32xf32> to vector<16x32xf32>
    %cst_34 = arith.constant dense<0.000000e+00> : vector<8x32xf32>
    %59 = tpu.matmul %57, %58, %cst_34 {dimension_numbers = #tpu.dot_dimension_numbers<[1], [0], [0], [1], [0, 0, 1, 1], [], []>} : vector<8x16xf32>, vector<16x32xf32>, vector<8x32xf32> -> vector<8x32xf32>
    %60 = arith.addf %40, %59 : vector<8x32xf32>
    %61 = vector.broadcast %21 : vector<1x32xf32> to vector<8x32xf32>
    %62 = arith.addf %60, %61 : vector<8x32xf32>
    %63 = arith.addf %1, %62 : vector<8x32xf32>
    %c0_35 = arith.constant 0 : index
    %c0_36 = arith.constant 0 : index
    %64 = vector.load %arg13[%c0_35, %c0_36] : memref<1x32xf32, #tpu.memory_space<vmem>>, vector<1x32xf32>
    %c0_37 = arith.constant 0 : index
    %c0_38 = arith.constant 0 : index
    %65 = vector.load %arg14[%c0_37, %c0_38] : memref<1x32xf32, #tpu.memory_space<vmem>>, vector<1x32xf32>
    %cst_39 = arith.constant dense<0.000000e+00> : vector<8xf32>
    %66 = vector.multi_reduction <add>, %63, %cst_39 [1] : vector<8x32xf32> to vector<8xf32>
    %67 = vector.shape_cast %66 : vector<8xf32> to vector<8x1xf32>
    %cst_40 = arith.constant 3.200000e+01 : f32
    %68 = vector.broadcast %cst_40 : f32 to vector<8x1xf32>
    %69 = arith.divf %67, %68 : vector<8x1xf32>
    %70 = vector.broadcast %69 : vector<8x1xf32> to vector<8x32xf32>
    %71 = arith.subf %63, %70 : vector<8x32xf32>
    %72 = arith.mulf %71, %71 : vector<8x32xf32>
    %cst_41 = arith.constant dense<0.000000e+00> : vector<8xf32>
    %73 = vector.multi_reduction <add>, %72, %cst_41 [1] : vector<8x32xf32> to vector<8xf32>
    %74 = vector.shape_cast %73 : vector<8xf32> to vector<8x1xf32>
    %cst_42 = arith.constant 3.200000e+01 : f32
    %75 = vector.broadcast %cst_42 : f32 to vector<8x1xf32>
    %76 = arith.divf %74, %75 : vector<8x1xf32>
    %cst_43 = arith.constant 9.99999974E-6 : f32
    %77 = vector.broadcast %cst_43 : f32 to vector<8x1xf32>
    %78 = arith.addf %76, %77 : vector<8x1xf32>
    %79 = math.rsqrt %78 : vector<8x1xf32>
    %80 = vector.broadcast %79 : vector<8x1xf32> to vector<8x32xf32>
    %81 = arith.mulf %71, %80 : vector<8x32xf32>
    %82 = vector.broadcast %64 : vector<1x32xf32> to vector<8x32xf32>
    %83 = arith.mulf %81, %82 : vector<8x32xf32>
    %84 = vector.broadcast %65 : vector<1x32xf32> to vector<8x32xf32>
    %85 = arith.addf %83, %84 : vector<8x32xf32>
    %86 = arith.addf %85, %3 : vector<8x32xf32>
    %c0_44 = arith.constant 0 : index
    %c0_45 = arith.constant 0 : index
    %87 = vector.load %arg15[%c0_44, %c0_45] : memref<32x16xf32, #tpu.memory_space<vmem>>, vector<32x16xf32>
    %cst_46 = arith.constant dense<0.000000e+00> : vector<8x16xf32>
    %88 = tpu.matmul %86, %87, %cst_46 {dimension_numbers = #tpu.dot_dimension_numbers<[1], [0], [0], [1], [0, 0, 1, 1], [], []>} : vector<8x32xf32>, vector<32x16xf32>, vector<8x16xf32> -> vector<8x16xf32>
    %c0_47 = arith.constant 0 : index
    %c0_48 = arith.constant 0 : index
    %89 = vector.load %arg16[%c0_47, %c0_48] : memref<1x16xf32, #tpu.memory_space<vmem>>, vector<1x16xf32>
    %90 = vector.broadcast %89 : vector<1x16xf32> to vector<8x16xf32>
    %91 = arith.addf %88, %90 : vector<8x16xf32>
    %c0_49 = arith.constant 0 : index
    %c0_50 = arith.constant 0 : index
    %c0_51 = arith.constant 0 : index
    %92 = vector.load %arg3[%c0_49, %c0_50, %c0_51] : memref<1x16x16xf32, #tpu.memory_space<vmem>>, vector<1x16x16xf32>
    %93 = vector.shape_cast %92 : vector<1x16x16xf32> to vector<16x16xf32>
    %c0_52 = arith.constant 0 : index
    %c0_53 = arith.constant 0 : index
    %c0_54 = arith.constant 0 : index
    %94 = vector.load %arg4[%c0_52, %c0_53, %c0_54] : memref<1x16x16xf32, #tpu.memory_space<vmem>>, vector<1x16x16xf32>
    %95 = vector.shape_cast %94 : vector<1x16x16xf32> to vector<16x16xf32>
    %c0_55 = arith.constant 0 : index
    %c0_56 = arith.constant 0 : index
    %96 = vector.load %arg17[%c0_55, %c0_56] : memref<16x32xf32, #tpu.memory_space<vmem>>, vector<16x32xf32>
    %c0_57 = arith.constant 0 : index
    %c0_58 = arith.constant 0 : index
    %97 = vector.load %arg18[%c0_57, %c0_58] : memref<1x32xf32, #tpu.memory_space<vmem>>, vector<1x32xf32>
    %98 = vector.extract_strided_slice %91 {offsets = [0, 0], sizes = [8, 8], strides = [1, 1]} : vector<8x16xf32> to vector<8x8xf32>
    %99 = vector.extract_strided_slice %93 {offsets = [0, 0], sizes = [16, 8], strides = [1, 1]} : vector<16x16xf32> to vector<16x8xf32>
    %100 = vector.extract_strided_slice %95 {offsets = [0, 0], sizes = [16, 8], strides = [1, 1]} : vector<16x16xf32> to vector<16x8xf32>
    %cst_59 = arith.constant dense<0.000000e+00> : vector<8x16xf32>
    %101 = tpu.matmul %98, %99, %cst_59 {dimension_numbers = #tpu.dot_dimension_numbers<[1], [1], [0], [0], [0, 0, 1, 0], [], []>} : vector<8x8xf32>, vector<16x8xf32>, vector<8x16xf32> -> vector<8x16xf32>
    %cst_60 = arith.constant 0.353553385 : f32
    %102 = vector.broadcast %cst_60 : f32 to vector<8x16xf32>
    %103 = arith.mulf %101, %102 : vector<8x16xf32>
    %cst_61 = arith.constant dense<0xFF800000> : vector<8xf32>
    %104 = vector.multi_reduction <maximumf>, %103, %cst_61 [1] : vector<8x16xf32> to vector<8xf32>
    %105 = vector.shape_cast %104 : vector<8xf32> to vector<8x1xf32>
    %106 = vector.broadcast %105 : vector<8x1xf32> to vector<8x16xf32>
    %107 = arith.subf %103, %106 : vector<8x16xf32>
    %108 = math.exp %107 : vector<8x16xf32>
    %cst_62 = arith.constant dense<0.000000e+00> : vector<8xf32>
    %109 = vector.multi_reduction <add>, %108, %cst_62 [1] : vector<8x16xf32> to vector<8xf32>
    %110 = vector.shape_cast %109 : vector<8xf32> to vector<8x1xf32>
    %cst_63 = arith.constant dense<0.000000e+00> : vector<8x8xf32>
    %111 = tpu.matmul %108, %100, %cst_63 {dimension_numbers = #tpu.dot_dimension_numbers<[1], [0], [0], [1], [0, 0, 1, 1], [], []>} : vector<8x16xf32>, vector<16x8xf32>, vector<8x8xf32> -> vector<8x8xf32>
    %112 = tpu.reciprocal %110 : vector<8x1xf32> -> vector<8x1xf32>
    %113 = vector.broadcast %112 : vector<8x1xf32> to vector<8x8xf32>
    %114 = arith.mulf %111, %113 : vector<8x8xf32>
    %115 = vector.extract_strided_slice %96 {offsets = [0, 0], sizes = [8, 32], strides = [1, 1]} : vector<16x32xf32> to vector<8x32xf32>
    %cst_64 = arith.constant dense<0.000000e+00> : vector<8x32xf32>
    %116 = tpu.matmul %114, %115, %cst_64 {dimension_numbers = #tpu.dot_dimension_numbers<[1], [0], [0], [1], [0, 0, 1, 1], [], []>} : vector<8x8xf32>, vector<8x32xf32>, vector<8x32xf32> -> vector<8x32xf32>
    %117 = vector.extract_strided_slice %91 {offsets = [0, 8], sizes = [8, 8], strides = [1, 1]} : vector<8x16xf32> to vector<8x8xf32>
    %118 = vector.extract_strided_slice %93 {offsets = [0, 8], sizes = [16, 8], strides = [1, 1]} : vector<16x16xf32> to vector<16x8xf32>
    %119 = vector.extract_strided_slice %95 {offsets = [0, 8], sizes = [16, 8], strides = [1, 1]} : vector<16x16xf32> to vector<16x8xf32>
    %cst_65 = arith.constant dense<0.000000e+00> : vector<8x16xf32>
    %120 = tpu.matmul %117, %118, %cst_65 {dimension_numbers = #tpu.dot_dimension_numbers<[1], [1], [0], [0], [0, 0, 1, 0], [], []>} : vector<8x8xf32>, vector<16x8xf32>, vector<8x16xf32> -> vector<8x16xf32>
    %cst_66 = arith.constant 0.353553385 : f32
    %121 = vector.broadcast %cst_66 : f32 to vector<8x16xf32>
    %122 = arith.mulf %120, %121 : vector<8x16xf32>
    %cst_67 = arith.constant dense<0xFF800000> : vector<8xf32>
    %123 = vector.multi_reduction <maximumf>, %122, %cst_67 [1] : vector<8x16xf32> to vector<8xf32>
    %124 = vector.shape_cast %123 : vector<8xf32> to vector<8x1xf32>
    %125 = vector.broadcast %124 : vector<8x1xf32> to vector<8x16xf32>
    %126 = arith.subf %122, %125 : vector<8x16xf32>
    %127 = math.exp %126 : vector<8x16xf32>
    %cst_68 = arith.constant dense<0.000000e+00> : vector<8xf32>
    %128 = vector.multi_reduction <add>, %127, %cst_68 [1] : vector<8x16xf32> to vector<8xf32>
    %129 = vector.shape_cast %128 : vector<8xf32> to vector<8x1xf32>
    %cst_69 = arith.constant dense<0.000000e+00> : vector<8x8xf32>
    %130 = tpu.matmul %127, %119, %cst_69 {dimension_numbers = #tpu.dot_dimension_numbers<[1], [0], [0], [1], [0, 0, 1, 1], [], []>} : vector<8x16xf32>, vector<16x8xf32>, vector<8x8xf32> -> vector<8x8xf32>
    %131 = tpu.reciprocal %129 : vector<8x1xf32> -> vector<8x1xf32>
    %132 = vector.broadcast %131 : vector<8x1xf32> to vector<8x8xf32>
    %133 = arith.mulf %130, %132 : vector<8x8xf32>
    %134 = vector.extract_strided_slice %96 {offsets = [8, 0], sizes = [8, 32], strides = [1, 1]} : vector<16x32xf32> to vector<8x32xf32>
    %cst_70 = arith.constant dense<0.000000e+00> : vector<8x32xf32>
    %135 = tpu.matmul %133, %134, %cst_70 {dimension_numbers = #tpu.dot_dimension_numbers<[1], [0], [0], [1], [0, 0, 1, 1], [], []>} : vector<8x8xf32>, vector<8x32xf32>, vector<8x32xf32> -> vector<8x32xf32>
    %136 = arith.addf %116, %135 : vector<8x32xf32>
    %137 = vector.broadcast %97 : vector<1x32xf32> to vector<8x32xf32>
    %138 = arith.addf %136, %137 : vector<8x32xf32>
    %139 = arith.addf %85, %138 : vector<8x32xf32>
    %c0_71 = arith.constant 0 : index
    %c0_72 = arith.constant 0 : index
    %140 = vector.load %arg19[%c0_71, %c0_72] : memref<1x32xf32, #tpu.memory_space<vmem>>, vector<1x32xf32>
    %c0_73 = arith.constant 0 : index
    %c0_74 = arith.constant 0 : index
    %141 = vector.load %arg20[%c0_73, %c0_74] : memref<1x32xf32, #tpu.memory_space<vmem>>, vector<1x32xf32>
    %cst_75 = arith.constant dense<0.000000e+00> : vector<8xf32>
    %142 = vector.multi_reduction <add>, %139, %cst_75 [1] : vector<8x32xf32> to vector<8xf32>
    %143 = vector.shape_cast %142 : vector<8xf32> to vector<8x1xf32>
    %cst_76 = arith.constant 3.200000e+01 : f32
    %144 = vector.broadcast %cst_76 : f32 to vector<8x1xf32>
    %145 = arith.divf %143, %144 : vector<8x1xf32>
    %146 = vector.broadcast %145 : vector<8x1xf32> to vector<8x32xf32>
    %147 = arith.subf %139, %146 : vector<8x32xf32>
    %148 = arith.mulf %147, %147 : vector<8x32xf32>
    %cst_77 = arith.constant dense<0.000000e+00> : vector<8xf32>
    %149 = vector.multi_reduction <add>, %148, %cst_77 [1] : vector<8x32xf32> to vector<8xf32>
    %150 = vector.shape_cast %149 : vector<8xf32> to vector<8x1xf32>
    %cst_78 = arith.constant 3.200000e+01 : f32
    %151 = vector.broadcast %cst_78 : f32 to vector<8x1xf32>
    %152 = arith.divf %150, %151 : vector<8x1xf32>
    %cst_79 = arith.constant 9.99999974E-6 : f32
    %153 = vector.broadcast %cst_79 : f32 to vector<8x1xf32>
    %154 = arith.addf %152, %153 : vector<8x1xf32>
    %155 = math.rsqrt %154 : vector<8x1xf32>
    %156 = vector.broadcast %155 : vector<8x1xf32> to vector<8x32xf32>
    %157 = arith.mulf %147, %156 : vector<8x32xf32>
    %158 = vector.broadcast %140 : vector<1x32xf32> to vector<8x32xf32>
    %159 = arith.mulf %157, %158 : vector<8x32xf32>
    %160 = vector.broadcast %141 : vector<1x32xf32> to vector<8x32xf32>
    %161 = arith.addf %159, %160 : vector<8x32xf32>
    %c0_80 = arith.constant 0 : index
    %c0_81 = arith.constant 0 : index
    %162 = vector.load %arg21[%c0_80, %c0_81] : memref<32x64xf32, #tpu.memory_space<vmem>>, vector<32x64xf32>
    %cst_82 = arith.constant dense<0.000000e+00> : vector<8x64xf32>
    %163 = tpu.matmul %161, %162, %cst_82 {dimension_numbers = #tpu.dot_dimension_numbers<[1], [0], [0], [1], [0, 0, 1, 1], [], []>} : vector<8x32xf32>, vector<32x64xf32>, vector<8x64xf32> -> vector<8x64xf32>
    %c0_83 = arith.constant 0 : index
    %c0_84 = arith.constant 0 : index
    %164 = vector.load %arg22[%c0_83, %c0_84] : memref<1x64xf32, #tpu.memory_space<vmem>>, vector<1x64xf32>
    %165 = vector.broadcast %164 : vector<1x64xf32> to vector<8x64xf32>
    %166 = arith.addf %163, %165 : vector<8x64xf32>
    %cst_85 = arith.constant 0.000000e+00 : f32
    %167 = vector.broadcast %cst_85 : f32 to vector<8x64xf32>
    %168 = arith.maximumf %166, %167 : vector<8x64xf32>
    %c0_86 = arith.constant 0 : index
    %c0_87 = arith.constant 0 : index
    %169 = vector.load %arg23[%c0_86, %c0_87] : memref<64x32xf32, #tpu.memory_space<vmem>>, vector<64x32xf32>
    %cst_88 = arith.constant dense<0.000000e+00> : vector<8x32xf32>
    %170 = tpu.matmul %168, %169, %cst_88 {dimension_numbers = #tpu.dot_dimension_numbers<[1], [0], [0], [1], [0, 0, 1, 1], [], []>} : vector<8x64xf32>, vector<64x32xf32>, vector<8x32xf32> -> vector<8x32xf32>
    %c0_89 = arith.constant 0 : index
    %c0_90 = arith.constant 0 : index
    %171 = vector.load %arg24[%c0_89, %c0_90] : memref<1x32xf32, #tpu.memory_space<vmem>>, vector<1x32xf32>
    %172 = vector.broadcast %171 : vector<1x32xf32> to vector<8x32xf32>
    %173 = arith.addf %170, %172 : vector<8x32xf32>
    %174 = arith.addf %161, %173 : vector<8x32xf32>
    %c0_91 = arith.constant 0 : index
    %c0_92 = arith.constant 0 : index
    %175 = vector.load %arg25[%c0_91, %c0_92] : memref<1x32xf32, #tpu.memory_space<vmem>>, vector<1x32xf32>
    %c0_93 = arith.constant 0 : index
    %c0_94 = arith.constant 0 : index
    %176 = vector.load %arg26[%c0_93, %c0_94] : memref<1x32xf32, #tpu.memory_space<vmem>>, vector<1x32xf32>
    %cst_95 = arith.constant dense<0.000000e+00> : vector<8xf32>
    %177 = vector.multi_reduction <add>, %174, %cst_95 [1] : vector<8x32xf32> to vector<8xf32>
    %178 = vector.shape_cast %177 : vector<8xf32> to vector<8x1xf32>
    %cst_96 = arith.constant 3.200000e+01 : f32
    %179 = vector.broadcast %cst_96 : f32 to vector<8x1xf32>
    %180 = arith.divf %178, %179 : vector<8x1xf32>
    %181 = vector.broadcast %180 : vector<8x1xf32> to vector<8x32xf32>
    %182 = arith.subf %174, %181 : vector<8x32xf32>
    %183 = arith.mulf %182, %182 : vector<8x32xf32>
    %cst_97 = arith.constant dense<0.000000e+00> : vector<8xf32>
    %184 = vector.multi_reduction <add>, %183, %cst_97 [1] : vector<8x32xf32> to vector<8xf32>
    %185 = vector.shape_cast %184 : vector<8xf32> to vector<8x1xf32>
    %cst_98 = arith.constant 3.200000e+01 : f32
    %186 = vector.broadcast %cst_98 : f32 to vector<8x1xf32>
    %187 = arith.divf %185, %186 : vector<8x1xf32>
    %cst_99 = arith.constant 9.99999974E-6 : f32
    %188 = vector.broadcast %cst_99 : f32 to vector<8x1xf32>
    %189 = arith.addf %187, %188 : vector<8x1xf32>
    %190 = math.rsqrt %189 : vector<8x1xf32>
    %191 = vector.broadcast %190 : vector<8x1xf32> to vector<8x32xf32>
    %192 = arith.mulf %182, %191 : vector<8x32xf32>
    %193 = vector.broadcast %175 : vector<1x32xf32> to vector<8x32xf32>
    %194 = arith.mulf %192, %193 : vector<8x32xf32>
    %195 = vector.broadcast %176 : vector<1x32xf32> to vector<8x32xf32>
    %196 = arith.addf %194, %195 : vector<8x32xf32>
    %c0_100 = arith.constant 0 : index
    %c0_101 = arith.constant 0 : index
    %c0_102 = arith.constant 0 : index
    %197 = vector.load %arg31[%c0_100, %c0_101, %c0_102] : memref<1x8x32xf32, #tpu.memory_space<vmem>>, vector<1x8x32xf32>
    %198 = vector.shape_cast %197 : vector<1x8x32xf32> to vector<8x32xf32>
    %199 = vector.shape_cast %196 : vector<8x32xf32> to vector<1x8x32xf32>
    tpu.vector_store %arg31[%c0_100, %c0_101, %c0_102], %199 {strides = array<i32>} : memref<1x8x32xf32, #tpu.memory_space<vmem>>, vector<1x8x32xf32>,
    %200 = arith.addf %196, %3 : vector<8x32xf32>
    %c0_103 = arith.constant 0 : index
    %c0_104 = arith.constant 0 : index
    %201 = vector.load %arg27[%c0_103, %c0_104] : memref<32x16xf32, #tpu.memory_space<vmem>>, vector<32x16xf32>
    %cst_105 = arith.constant dense<0.000000e+00> : vector<8x16xf32>
    %202 = tpu.matmul %200, %201, %cst_105 {dimension_numbers = #tpu.dot_dimension_numbers<[1], [0], [0], [1], [0, 0, 1, 1], [], []>} : vector<8x32xf32>, vector<32x16xf32>, vector<8x16xf32> -> vector<8x16xf32>
    %c0_106 = arith.constant 0 : index
    %c0_107 = arith.constant 0 : index
    %203 = vector.load %arg28[%c0_106, %c0_107] : memref<1x16xf32, #tpu.memory_space<vmem>>, vector<1x16xf32>
    %204 = vector.broadcast %203 : vector<1x16xf32> to vector<8x16xf32>
    %205 = arith.addf %202, %204 : vector<8x16xf32>
    %c0_108 = arith.constant 0 : index
    %c0_109 = arith.constant 0 : index
    %206 = vector.load %arg29[%c0_108, %c0_109] : memref<32x16xf32, #tpu.memory_space<vmem>>, vector<32x16xf32>
    %cst_110 = arith.constant dense<0.000000e+00> : vector<8x16xf32>
    %207 = tpu.matmul %196, %206, %cst_110 {dimension_numbers = #tpu.dot_dimension_numbers<[1], [0], [0], [1], [0, 0, 1, 1], [], []>} : vector<8x32xf32>, vector<32x16xf32>, vector<8x16xf32> -> vector<8x16xf32>
    %c0_111 = arith.constant 0 : index
    %c0_112 = arith.constant 0 : index
    %208 = vector.load %arg30[%c0_111, %c0_112] : memref<1x16xf32, #tpu.memory_space<vmem>>, vector<1x16xf32>
    %209 = vector.broadcast %208 : vector<1x16xf32> to vector<8x16xf32>
    %210 = arith.addf %207, %209 : vector<8x16xf32>
    %c0_113 = arith.constant 0 : index
    %c0_114 = arith.constant 0 : index
    %c0_115 = arith.constant 0 : index
    %211 = vector.load %arg32[%c0_113, %c0_114, %c0_115] : memref<1x8x16xf32, #tpu.memory_space<vmem>>, vector<1x8x16xf32>
    %212 = vector.shape_cast %211 : vector<1x8x16xf32> to vector<8x16xf32>
    %213 = vector.shape_cast %205 : vector<8x16xf32> to vector<1x8x16xf32>
    tpu.vector_store %arg32[%c0_113, %c0_114, %c0_115], %213 {strides = array<i32>} : memref<1x8x16xf32, #tpu.memory_space<vmem>>, vector<1x8x16xf32>,
    %c0_116 = arith.constant 0 : index
    %c0_117 = arith.constant 0 : index
    %c0_118 = arith.constant 0 : index
    %214 = vector.load %arg33[%c0_116, %c0_117, %c0_118] : memref<1x8x16xf32, #tpu.memory_space<vmem>>, vector<1x8x16xf32>
    %215 = vector.shape_cast %214 : vector<1x8x16xf32> to vector<8x16xf32>
    %216 = vector.shape_cast %210 : vector<8x16xf32> to vector<1x8x16xf32>
    tpu.vector_store %arg33[%c0_116, %c0_117, %c0_118], %216 {strides = array<i32>} : memref<1x8x16xf32, #tpu.memory_space<vmem>>, vector<1x8x16xf32>,
    return
  }
  func.func @transform_0(%arg0: i32) -> (i32, i32, i32) {
    %c0_i32 = arith.constant 0 : i32
    %c0_i32_0 = arith.constant 0 : i32
    %c0_i32_1 = arith.constant 0 : i32
    return %arg0, %c0_i32, %c0_i32_0 : i32, i32, i32
  }
  func.func @transform_1(%arg0: i32) -> (i32, i32, i32) {
    %c0_i32 = arith.constant 0 : i32
    %c0_i32_0 = arith.constant 0 : i32
    %c0_i32_1 = arith.constant 0 : i32
    return %arg0, %c0_i32, %c0_i32_0 : i32, i32, i32
  }
  func.func @transform_2(%arg0: i32) -> (i32, i32, i32) {
    %c0_i32 = arith.constant 0 : i32
    %c0_i32_0 = arith.constant 0 : i32
    %c0_i32_1 = arith.constant 0 : i32
    return %arg0, %c0_i32, %c0_i32_0 : i32, i32, i32
  }
  func.func @transform_3(%arg0: i32) -> (i32, i32, i32) {
    %c0_i32 = arith.constant 0 : i32
    %c0_i32_0 = arith.constant 0 : i32
    %c0_i32_1 = arith.constant 0 : i32
    return %arg0, %c0_i32, %c0_i32_0 : i32, i32, i32
  }
  func.func @transform_4(%arg0: i32) -> (i32, i32) {
    %c0_i32 = arith.constant 0 : i32
    %c0_i32_0 = arith.constant 0 : i32
    %c0_i32_1 = arith.constant 0 : i32
    return %c0_i32, %c0_i32_0 : i32, i32
  }
  func.func @transform_5(%arg0: i32) -> (i32, i32) {
    %c0_i32 = arith.constant 0 : i32
    %c0_i32_0 = arith.constant 0 : i32
    %c0_i32_1 = arith.constant 0 : i32
    return %c0_i32, %c0_i32_0 : i32, i32
  }
  func.func @transform_6(%arg0: i32) -> (i32, i32) {
    %c0_i32 = arith.constant 0 : i32
    %c0_i32_0 = arith.constant 0 : i32
    %c0_i32_1 = arith.constant 0 : i32
    return %c0_i32, %c0_i32_0 : i32, i32
  }
  func.func @transform_7(%arg0: i32) -> (i32, i32) {
    %c0_i32 = arith.constant 0 : i32
    %c0_i32_0 = arith.constant 0 : i32
    %c0_i32_1 = arith.constant 0 : i32
    return %c0_i32, %c0_i32_0 : i32, i32
  }
  func.func @transform_8(%arg0: i32) -> (i32, i32) {
    %c0_i32 = arith.constant 0 : i32
    %c0_i32_0 = arith.constant 0 : i32
    %c0_i32_1 = arith.constant 0 : i32
    return %c0_i32, %c0_i32_0 : i32, i32
  }
  func.func @transform_9(%arg0: i32) -> (i32, i32) {
    %c0_i32 = arith.constant 0 : i32
    %c0_i32_0 = arith.constant 0 : i32
    %c0_i32_1 = arith.constant 0 : i32
    return %c0_i32, %c0_i32_0 : i32, i32
  }
  func.func @transform_10(%arg0: i32) -> (i32, i32) {
    %c0_i32 = arith.constant 0 : i32
    %c0_i32_0 = arith.constant 0 : i32
    %c0_i32_1 = arith.constant 0 : i32
    return %c0_i32, %c0_i32_0 : i32, i32
  }
  func.func @transform_11(%arg0: i32) -> (i32, i32) {
    %c0_i32 = arith.constant 0 : i32
    %c0_i32_0 = arith.constant 0 : i32
    %c0_i32_1 = arith.constant 0 : i32
    return %c0_i32, %c0_i32_0 : i32, i32
  }
  func.func @transform_12(%arg0: i32) -> (i32, i32) {
    %c0_i32 = arith.constant 0 : i32
    %c0_i32_0 = arith.constant 0 : i32
    %c0_i32_1 = arith.constant 0 : i32
    return %c0_i32, %c0_i32_0 : i32, i32
  }
  func.func @transform_13(%arg0: i32) -> (i32, i32) {
    %c0_i32 = arith.constant 0 : i32
    %c0_i32_0 = arith.constant 0 : i32
    %c0_i32_1 = arith.constant 0 : i32
    return %c0_i32, %c0_i32_0 : i32, i32
  }
  func.func @transform_14(%arg0: i32) -> (i32, i32) {
    %c0_i32 = arith.constant 0 : i32
    %c0_i32_0 = arith.constant 0 : i32
    %c0_i32_1 = arith.constant 0 : i32
    return %c0_i32, %c0_i32_0 : i32, i32
  }
  func.func @transform_15(%arg0: i32) -> (i32, i32) {
    %c0_i32 = arith.constant 0 : i32
    %c0_i32_0 = arith.constant 0 : i32
    %c0_i32_1 = arith.constant 0 : i32
    return %c0_i32, %c0_i32_0 : i32, i32
  }
  func.func @transform_16(%arg0: i32) -> (i32, i32) {
    %c0_i32 = arith.constant 0 : i32
    %c0_i32_0 = arith.constant 0 : i32
    %c0_i32_1 = arith.constant 0 : i32
    return %c0_i32, %c0_i32_0 : i32, i32
  }
  func.func @transform_17(%arg0: i32) -> (i32, i32) {
    %c0_i32 = arith.constant 0 : i32
    %c0_i32_0 = arith.constant 0 : i32
    %c0_i32_1 = arith.constant 0 : i32
    return %c0_i32, %c0_i32_0 : i32, i32
  }
  func.func @transform_18(%arg0: i32) -> (i32, i32) {
    %c0_i32 = arith.constant 0 : i32
    %c0_i32_0 = arith.constant 0 : i32
    %c0_i32_1 = arith.constant 0 : i32
    return %c0_i32, %c0_i32_0 : i32, i32
  }
  func.func @transform_19(%arg0: i32) -> (i32, i32) {
    %c0_i32 = arith.constant 0 : i32
    %c0_i32_0 = arith.constant 0 : i32
    %c0_i32_1 = arith.constant 0 : i32
    return %c0_i32, %c0_i32_0 : i32, i32
  }
  func.func @transform_20(%arg0: i32) -> (i32, i32) {
    %c0_i32 = arith.constant 0 : i32
    %c0_i32_0 = arith.constant 0 : i32
    %c0_i32_1 = arith.constant 0 : i32
    return %c0_i32, %c0_i32_0 : i32, i32
  }
  func.func @transform_21(%arg0: i32) -> (i32, i32) {
    %c0_i32 = arith.constant 0 : i32
    %c0_i32_0 = arith.constant 0 : i32
    %c0_i32_1 = arith.constant 0 : i32
    return %c0_i32, %c0_i32_0 : i32, i32
  }
  func.func @transform_22(%arg0: i32) -> (i32, i32) {
    %c0_i32 = arith.constant 0 : i32
    %c0_i32_0 = arith.constant 0 : i32
    %c0_i32_1 = arith.constant 0 : i32
    return %c0_i32, %c0_i32_0 : i32, i32
  }
  func.func @transform_23(%arg0: i32) -> (i32, i32) {
    %c0_i32 = arith.constant 0 : i32
    %c0_i32_0 = arith.constant 0 : i32
    %c0_i32_1 = arith.constant 0 : i32
    return %c0_i32, %c0_i32_0 : i32, i32
  }
  func.func @transform_24(%arg0: i32) -> (i32, i32) {
    %c0_i32 = arith.constant 0 : i32
    %c0_i32_0 = arith.constant 0 : i32
    %c0_i32_1 = arith.constant 0 : i32
    return %c0_i32, %c0_i32_0 : i32, i32
  }
  func.func @transform_25(%arg0: i32) -> (i32, i32) {
    %c0_i32 = arith.constant 0 : i32
    %c0_i32_0 = arith.constant 0 : i32
    %c0_i32_1 = arith.constant 0 : i32
    return %c0_i32, %c0_i32_0 : i32, i32
  }
  func.func @transform_26(%arg0: i32) -> (i32, i32) {
    %c0_i32 = arith.constant 0 : i32
    %c0_i32_0 = arith.constant 0 : i32
    %c0_i32_1 = arith.constant 0 : i32
    return %c0_i32, %c0_i32_0 : i32, i32
  }
  func.func @transform_27(%arg0: i32) -> (i32, i32) {
    %c0_i32 = arith.constant 0 : i32
    %c0_i32_0 = arith.constant 0 : i32
    %c0_i32_1 = arith.constant 0 : i32
    return %c0_i32, %c0_i32_0 : i32, i32
  }
  func.func @transform_28(%arg0: i32) -> (i32, i32) {
    %c0_i32 = arith.constant 0 : i32
    %c0_i32_0 = arith.constant 0 : i32
    %c0_i32_1 = arith.constant 0 : i32
    return %c0_i32, %c0_i32_0 : i32, i32
  }
  func.func @transform_29(%arg0: i32) -> (i32, i32) {
    %c0_i32 = arith.constant 0 : i32
    %c0_i32_0 = arith.constant 0 : i32
    %c0_i32_1 = arith.constant 0 : i32
    return %c0_i32, %c0_i32_0 : i32, i32
  }
  func.func @transform_30(%arg0: i32) -> (i32, i32, i32) {
    %c0_i32 = arith.constant 0 : i32
    %c0_i32_0 = arith.constant 0 : i32
    %c0_i32_1 = arith.constant 0 : i32
    return %arg0, %c0_i32, %c0_i32_0 : i32, i32, i32
  }
  func.func @transform_31(%arg0: i32) -> (i32, i32, i32) {
    %c0_i32 = arith.constant 0 : i32
    %c0_i32_0 = arith.constant 0 : i32
    %c0_i32_1 = arith.constant 0 : i32
    return %arg0, %c0_i32, %c0_i32_0 : i32, i32, i32
  }
  func.func @transform_32(%arg0: i32) -> (i32, i32, i32) {
    %c0_i32 = arith.constant 0 : i32
    %c0_i32_0 = arith.constant 0 : i32
    %c0_i32_1 = arith.constant 0 : i32
    return %arg0, %c0_i32, %c0_i32_0 : i32, i32, i32
  }
}

module attributes {stable_mosaic.version = 11 : i64} {
  func.func @_final_attn_kernel(%arg0: i32, %arg1: memref<1x8x32xf32, #tpu.memory_space<vmem>>, %arg2: memref<1x8x32xf32, #tpu.memory_space<vmem>>, %arg3: memref<1x16x16xf32, #tpu.memory_space<vmem>>, %arg4: memref<1x16x16xf32, #tpu.memory_space<vmem>>, %arg5: memref<32x16xf32, #tpu.memory_space<vmem>>, %arg6: memref<1x16xf32, #tpu.memory_space<vmem>>, %arg7: memref<16x32xf32, #tpu.memory_space<vmem>>, %arg8: memref<1x32xf32, #tpu.memory_space<vmem>>, %arg9: memref<1x32xf32, #tpu.memory_space<vmem>>, %arg10: memref<1x32xf32, #tpu.memory_space<vmem>>, %arg11: memref<1x8x32xf32, #tpu.memory_space<vmem>>) attributes {dimension_semantics = [#tpu.dimension_semantics<parallel>], iteration_bounds = array<i64: 2>, scalar_prefetch = 0 : i64, scratch_operands = 0 : i64, tpu.core_type = #tpu.core_type<tc>, window_params = [{transform_indices = @transform_0, window_bounds = array<i64: 1, 8, 32>}, {transform_indices = @transform_1, window_bounds = array<i64: 1, 8, 32>}, {transform_indices = @transform_2, window_bounds = array<i64: 1, 16, 16>}, {transform_indices = @transform_3, window_bounds = array<i64: 1, 16, 16>}, {pipeline_mode = #tpu.pipeline_mode<synchronous>, transform_indices = @transform_4, window_bounds = array<i64: 32, 16>}, {pipeline_mode = #tpu.pipeline_mode<synchronous>, transform_indices = @transform_5, window_bounds = array<i64: 1, 16>}, {pipeline_mode = #tpu.pipeline_mode<synchronous>, transform_indices = @transform_6, window_bounds = array<i64: 16, 32>}, {pipeline_mode = #tpu.pipeline_mode<synchronous>, transform_indices = @transform_7, window_bounds = array<i64: 1, 32>}, {pipeline_mode = #tpu.pipeline_mode<synchronous>, transform_indices = @transform_8, window_bounds = array<i64: 1, 32>}, {pipeline_mode = #tpu.pipeline_mode<synchronous>, transform_indices = @transform_9, window_bounds = array<i64: 1, 32>}, {transform_indices = @transform_10, window_bounds = array<i64: 1, 8, 32>}]} {
    %c0 = arith.constant 0 : index
    %c0_0 = arith.constant 0 : index
    %c0_1 = arith.constant 0 : index
    %0 = vector.load %arg1[%c0, %c0_0, %c0_1] : memref<1x8x32xf32, #tpu.memory_space<vmem>>, vector<1x8x32xf32>
    %1 = vector.shape_cast %0 : vector<1x8x32xf32> to vector<8x32xf32>
    %c0_2 = arith.constant 0 : index
    %c0_3 = arith.constant 0 : index
    %c0_4 = arith.constant 0 : index
    %2 = vector.load %arg2[%c0_2, %c0_3, %c0_4] : memref<1x8x32xf32, #tpu.memory_space<vmem>>, vector<1x8x32xf32>
    %3 = vector.shape_cast %2 : vector<1x8x32xf32> to vector<8x32xf32>
    %4 = arith.addf %1, %3 : vector<8x32xf32>
    %c0_5 = arith.constant 0 : index
    %c0_6 = arith.constant 0 : index
    %5 = vector.load %arg5[%c0_5, %c0_6] : memref<32x16xf32, #tpu.memory_space<vmem>>, vector<32x16xf32>
    %cst = arith.constant dense<0.000000e+00> : vector<8x16xf32>
    %6 = tpu.matmul %4, %5, %cst {dimension_numbers = #tpu.dot_dimension_numbers<[1], [0], [0], [1], [0, 0, 1, 1], [], []>} : vector<8x32xf32>, vector<32x16xf32>, vector<8x16xf32> -> vector<8x16xf32>
    %c0_7 = arith.constant 0 : index
    %c0_8 = arith.constant 0 : index
    %7 = vector.load %arg6[%c0_7, %c0_8] : memref<1x16xf32, #tpu.memory_space<vmem>>, vector<1x16xf32>
    %8 = vector.broadcast %7 : vector<1x16xf32> to vector<8x16xf32>
    %9 = arith.addf %6, %8 : vector<8x16xf32>
    %c0_9 = arith.constant 0 : index
    %c0_10 = arith.constant 0 : index
    %c0_11 = arith.constant 0 : index
    %10 = vector.load %arg3[%c0_9, %c0_10, %c0_11] : memref<1x16x16xf32, #tpu.memory_space<vmem>>, vector<1x16x16xf32>
    %11 = vector.shape_cast %10 : vector<1x16x16xf32> to vector<16x16xf32>
    %c0_12 = arith.constant 0 : index
    %c0_13 = arith.constant 0 : index
    %c0_14 = arith.constant 0 : index
    %12 = vector.load %arg4[%c0_12, %c0_13, %c0_14] : memref<1x16x16xf32, #tpu.memory_space<vmem>>, vector<1x16x16xf32>
    %13 = vector.shape_cast %12 : vector<1x16x16xf32> to vector<16x16xf32>
    %c0_15 = arith.constant 0 : index
    %c0_16 = arith.constant 0 : index
    %14 = vector.load %arg7[%c0_15, %c0_16] : memref<16x32xf32, #tpu.memory_space<vmem>>, vector<16x32xf32>
    %c0_17 = arith.constant 0 : index
    %c0_18 = arith.constant 0 : index
    %15 = vector.load %arg8[%c0_17, %c0_18] : memref<1x32xf32, #tpu.memory_space<vmem>>, vector<1x32xf32>
    %16 = vector.extract_strided_slice %9 {offsets = [0, 0], sizes = [8, 8], strides = [1, 1]} : vector<8x16xf32> to vector<8x8xf32>
    %17 = vector.extract_strided_slice %11 {offsets = [0, 0], sizes = [16, 8], strides = [1, 1]} : vector<16x16xf32> to vector<16x8xf32>
    %18 = vector.extract_strided_slice %13 {offsets = [0, 0], sizes = [16, 8], strides = [1, 1]} : vector<16x16xf32> to vector<16x8xf32>
    %cst_19 = arith.constant dense<0.000000e+00> : vector<8x16xf32>
    %19 = tpu.matmul %16, %17, %cst_19 {dimension_numbers = #tpu.dot_dimension_numbers<[1], [1], [0], [0], [0, 0, 1, 0], [], []>} : vector<8x8xf32>, vector<16x8xf32>, vector<8x16xf32> -> vector<8x16xf32>
    %cst_20 = arith.constant 0.353553385 : f32
    %20 = vector.broadcast %cst_20 : f32 to vector<8x16xf32>
    %21 = arith.mulf %19, %20 : vector<8x16xf32>
    %cst_21 = arith.constant dense<0xFF800000> : vector<8xf32>
    %22 = vector.multi_reduction <maximumf>, %21, %cst_21 [1] : vector<8x16xf32> to vector<8xf32>
    %23 = vector.shape_cast %22 : vector<8xf32> to vector<8x1xf32>
    %24 = vector.broadcast %23 : vector<8x1xf32> to vector<8x16xf32>
    %25 = arith.subf %21, %24 : vector<8x16xf32>
    %26 = math.exp %25 : vector<8x16xf32>
    %cst_22 = arith.constant dense<0.000000e+00> : vector<8xf32>
    %27 = vector.multi_reduction <add>, %26, %cst_22 [1] : vector<8x16xf32> to vector<8xf32>
    %28 = vector.shape_cast %27 : vector<8xf32> to vector<8x1xf32>
    %cst_23 = arith.constant dense<0.000000e+00> : vector<8x8xf32>
    %29 = tpu.matmul %26, %18, %cst_23 {dimension_numbers = #tpu.dot_dimension_numbers<[1], [0], [0], [1], [0, 0, 1, 1], [], []>} : vector<8x16xf32>, vector<16x8xf32>, vector<8x8xf32> -> vector<8x8xf32>
    %30 = tpu.reciprocal %28 : vector<8x1xf32> -> vector<8x1xf32>
    %31 = vector.broadcast %30 : vector<8x1xf32> to vector<8x8xf32>
    %32 = arith.mulf %29, %31 : vector<8x8xf32>
    %33 = vector.extract_strided_slice %14 {offsets = [0, 0], sizes = [8, 32], strides = [1, 1]} : vector<16x32xf32> to vector<8x32xf32>
    %cst_24 = arith.constant dense<0.000000e+00> : vector<8x32xf32>
    %34 = tpu.matmul %32, %33, %cst_24 {dimension_numbers = #tpu.dot_dimension_numbers<[1], [0], [0], [1], [0, 0, 1, 1], [], []>} : vector<8x8xf32>, vector<8x32xf32>, vector<8x32xf32> -> vector<8x32xf32>
    %35 = vector.extract_strided_slice %9 {offsets = [0, 8], sizes = [8, 8], strides = [1, 1]} : vector<8x16xf32> to vector<8x8xf32>
    %36 = vector.extract_strided_slice %11 {offsets = [0, 8], sizes = [16, 8], strides = [1, 1]} : vector<16x16xf32> to vector<16x8xf32>
    %37 = vector.extract_strided_slice %13 {offsets = [0, 8], sizes = [16, 8], strides = [1, 1]} : vector<16x16xf32> to vector<16x8xf32>
    %cst_25 = arith.constant dense<0.000000e+00> : vector<8x16xf32>
    %38 = tpu.matmul %35, %36, %cst_25 {dimension_numbers = #tpu.dot_dimension_numbers<[1], [1], [0], [0], [0, 0, 1, 0], [], []>} : vector<8x8xf32>, vector<16x8xf32>, vector<8x16xf32> -> vector<8x16xf32>
    %cst_26 = arith.constant 0.353553385 : f32
    %39 = vector.broadcast %cst_26 : f32 to vector<8x16xf32>
    %40 = arith.mulf %38, %39 : vector<8x16xf32>
    %cst_27 = arith.constant dense<0xFF800000> : vector<8xf32>
    %41 = vector.multi_reduction <maximumf>, %40, %cst_27 [1] : vector<8x16xf32> to vector<8xf32>
    %42 = vector.shape_cast %41 : vector<8xf32> to vector<8x1xf32>
    %43 = vector.broadcast %42 : vector<8x1xf32> to vector<8x16xf32>
    %44 = arith.subf %40, %43 : vector<8x16xf32>
    %45 = math.exp %44 : vector<8x16xf32>
    %cst_28 = arith.constant dense<0.000000e+00> : vector<8xf32>
    %46 = vector.multi_reduction <add>, %45, %cst_28 [1] : vector<8x16xf32> to vector<8xf32>
    %47 = vector.shape_cast %46 : vector<8xf32> to vector<8x1xf32>
    %cst_29 = arith.constant dense<0.000000e+00> : vector<8x8xf32>
    %48 = tpu.matmul %45, %37, %cst_29 {dimension_numbers = #tpu.dot_dimension_numbers<[1], [0], [0], [1], [0, 0, 1, 1], [], []>} : vector<8x16xf32>, vector<16x8xf32>, vector<8x8xf32> -> vector<8x8xf32>
    %49 = tpu.reciprocal %47 : vector<8x1xf32> -> vector<8x1xf32>
    %50 = vector.broadcast %49 : vector<8x1xf32> to vector<8x8xf32>
    %51 = arith.mulf %48, %50 : vector<8x8xf32>
    %52 = vector.extract_strided_slice %14 {offsets = [8, 0], sizes = [8, 32], strides = [1, 1]} : vector<16x32xf32> to vector<8x32xf32>
    %cst_30 = arith.constant dense<0.000000e+00> : vector<8x32xf32>
    %53 = tpu.matmul %51, %52, %cst_30 {dimension_numbers = #tpu.dot_dimension_numbers<[1], [0], [0], [1], [0, 0, 1, 1], [], []>} : vector<8x8xf32>, vector<8x32xf32>, vector<8x32xf32> -> vector<8x32xf32>
    %54 = arith.addf %34, %53 : vector<8x32xf32>
    %55 = vector.broadcast %15 : vector<1x32xf32> to vector<8x32xf32>
    %56 = arith.addf %54, %55 : vector<8x32xf32>
    %57 = arith.addf %1, %56 : vector<8x32xf32>
    %c0_31 = arith.constant 0 : index
    %c0_32 = arith.constant 0 : index
    %58 = vector.load %arg9[%c0_31, %c0_32] : memref<1x32xf32, #tpu.memory_space<vmem>>, vector<1x32xf32>
    %c0_33 = arith.constant 0 : index
    %c0_34 = arith.constant 0 : index
    %59 = vector.load %arg10[%c0_33, %c0_34] : memref<1x32xf32, #tpu.memory_space<vmem>>, vector<1x32xf32>
    %cst_35 = arith.constant dense<0.000000e+00> : vector<8xf32>
    %60 = vector.multi_reduction <add>, %57, %cst_35 [1] : vector<8x32xf32> to vector<8xf32>
    %61 = vector.shape_cast %60 : vector<8xf32> to vector<8x1xf32>
    %cst_36 = arith.constant 3.200000e+01 : f32
    %62 = vector.broadcast %cst_36 : f32 to vector<8x1xf32>
    %63 = arith.divf %61, %62 : vector<8x1xf32>
    %64 = vector.broadcast %63 : vector<8x1xf32> to vector<8x32xf32>
    %65 = arith.subf %57, %64 : vector<8x32xf32>
    %66 = arith.mulf %65, %65 : vector<8x32xf32>
    %cst_37 = arith.constant dense<0.000000e+00> : vector<8xf32>
    %67 = vector.multi_reduction <add>, %66, %cst_37 [1] : vector<8x32xf32> to vector<8xf32>
    %68 = vector.shape_cast %67 : vector<8xf32> to vector<8x1xf32>
    %cst_38 = arith.constant 3.200000e+01 : f32
    %69 = vector.broadcast %cst_38 : f32 to vector<8x1xf32>
    %70 = arith.divf %68, %69 : vector<8x1xf32>
    %cst_39 = arith.constant 9.99999974E-6 : f32
    %71 = vector.broadcast %cst_39 : f32 to vector<8x1xf32>
    %72 = arith.addf %70, %71 : vector<8x1xf32>
    %73 = math.rsqrt %72 : vector<8x1xf32>
    %74 = vector.broadcast %73 : vector<8x1xf32> to vector<8x32xf32>
    %75 = arith.mulf %65, %74 : vector<8x32xf32>
    %76 = vector.broadcast %58 : vector<1x32xf32> to vector<8x32xf32>
    %77 = arith.mulf %75, %76 : vector<8x32xf32>
    %78 = vector.broadcast %59 : vector<1x32xf32> to vector<8x32xf32>
    %79 = arith.addf %77, %78 : vector<8x32xf32>
    %c0_40 = arith.constant 0 : index
    %c0_41 = arith.constant 0 : index
    %c0_42 = arith.constant 0 : index
    %80 = vector.load %arg11[%c0_40, %c0_41, %c0_42] : memref<1x8x32xf32, #tpu.memory_space<vmem>>, vector<1x8x32xf32>
    %81 = vector.shape_cast %80 : vector<1x8x32xf32> to vector<8x32xf32>
    %82 = vector.shape_cast %79 : vector<8x32xf32> to vector<1x8x32xf32>
    tpu.vector_store %arg11[%c0_40, %c0_41, %c0_42], %82 {strides = array<i32>} : memref<1x8x32xf32, #tpu.memory_space<vmem>>, vector<1x8x32xf32>,
    return
  }
  func.func @transform_0(%arg0: i32) -> (i32, i32, i32) {
    %c0_i32 = arith.constant 0 : i32
    %c0_i32_0 = arith.constant 0 : i32
    %c0_i32_1 = arith.constant 0 : i32
    return %arg0, %c0_i32, %c0_i32_0 : i32, i32, i32
  }
  func.func @transform_1(%arg0: i32) -> (i32, i32, i32) {
    %c0_i32 = arith.constant 0 : i32
    %c0_i32_0 = arith.constant 0 : i32
    %c0_i32_1 = arith.constant 0 : i32
    return %arg0, %c0_i32, %c0_i32_0 : i32, i32, i32
  }
  func.func @transform_2(%arg0: i32) -> (i32, i32, i32) {
    %c0_i32 = arith.constant 0 : i32
    %c0_i32_0 = arith.constant 0 : i32
    %c0_i32_1 = arith.constant 0 : i32
    return %arg0, %c0_i32, %c0_i32_0 : i32, i32, i32
  }
  func.func @transform_3(%arg0: i32) -> (i32, i32, i32) {
    %c0_i32 = arith.constant 0 : i32
    %c0_i32_0 = arith.constant 0 : i32
    %c0_i32_1 = arith.constant 0 : i32
    return %arg0, %c0_i32, %c0_i32_0 : i32, i32, i32
  }
  func.func @transform_4(%arg0: i32) -> (i32, i32) {
    %c0_i32 = arith.constant 0 : i32
    %c0_i32_0 = arith.constant 0 : i32
    %c0_i32_1 = arith.constant 0 : i32
    return %c0_i32, %c0_i32_0 : i32, i32
  }
  func.func @transform_5(%arg0: i32) -> (i32, i32) {
    %c0_i32 = arith.constant 0 : i32
    %c0_i32_0 = arith.constant 0 : i32
    %c0_i32_1 = arith.constant 0 : i32
    return %c0_i32, %c0_i32_0 : i32, i32
  }
  func.func @transform_6(%arg0: i32) -> (i32, i32) {
    %c0_i32 = arith.constant 0 : i32
    %c0_i32_0 = arith.constant 0 : i32
    %c0_i32_1 = arith.constant 0 : i32
    return %c0_i32, %c0_i32_0 : i32, i32
  }
  func.func @transform_7(%arg0: i32) -> (i32, i32) {
    %c0_i32 = arith.constant 0 : i32
    %c0_i32_0 = arith.constant 0 : i32
    %c0_i32_1 = arith.constant 0 : i32
    return %c0_i32, %c0_i32_0 : i32, i32
  }
  func.func @transform_8(%arg0: i32) -> (i32, i32) {
    %c0_i32 = arith.constant 0 : i32
    %c0_i32_0 = arith.constant 0 : i32
    %c0_i32_1 = arith.constant 0 : i32
    return %c0_i32, %c0_i32_0 : i32, i32
  }
  func.func @transform_9(%arg0: i32) -> (i32, i32) {
    %c0_i32 = arith.constant 0 : i32
    %c0_i32_0 = arith.constant 0 : i32
    %c0_i32_1 = arith.constant 0 : i32
    return %c0_i32, %c0_i32_0 : i32, i32
  }
  func.func @transform_10(%arg0: i32) -> (i32, i32, i32) {
    %c0_i32 = arith.constant 0 : i32
    %c0_i32_0 = arith.constant 0 : i32
    %c0_i32_1 = arith.constant 0 : i32
    return %arg0, %c0_i32, %c0_i32_0 : i32, i32, i32
  }
}

module attributes {stable_mosaic.version = 11 : i64} {
  func.func @_kv_proj_kernel(%arg0: i32, %arg1: memref<32x32xf32, #tpu.memory_space<vmem>>, %arg2: memref<32x32xf32, #tpu.memory_space<vmem>>, %arg3: memref<32x16xf32, #tpu.memory_space<vmem>>, %arg4: memref<1x16xf32, #tpu.memory_space<vmem>>, %arg5: memref<32x16xf32, #tpu.memory_space<vmem>>, %arg6: memref<1x16xf32, #tpu.memory_space<vmem>>, %arg7: memref<32x16xf32, #tpu.memory_space<vmem>>, %arg8: memref<32x16xf32, #tpu.memory_space<vmem>>) attributes {dimension_semantics = [#tpu.dimension_semantics<parallel>], iteration_bounds = array<i64: 1>, scalar_prefetch = 0 : i64, scratch_operands = 0 : i64, tpu.core_type = #tpu.core_type<tc>, window_params = [{transform_indices = @transform_0, window_bounds = array<i64: 32, 32>}, {transform_indices = @transform_1, window_bounds = array<i64: 32, 32>}, {pipeline_mode = #tpu.pipeline_mode<synchronous>, transform_indices = @transform_2, window_bounds = array<i64: 32, 16>}, {pipeline_mode = #tpu.pipeline_mode<synchronous>, transform_indices = @transform_3, window_bounds = array<i64: 1, 16>}, {pipeline_mode = #tpu.pipeline_mode<synchronous>, transform_indices = @transform_4, window_bounds = array<i64: 32, 16>}, {pipeline_mode = #tpu.pipeline_mode<synchronous>, transform_indices = @transform_5, window_bounds = array<i64: 1, 16>}, {transform_indices = @transform_6, window_bounds = array<i64: 32, 16>}, {transform_indices = @transform_7, window_bounds = array<i64: 32, 16>}]} {
    %c0 = arith.constant 0 : index
    %c0_0 = arith.constant 0 : index
    %0 = vector.load %arg1[%c0, %c0_0] : memref<32x32xf32, #tpu.memory_space<vmem>>, vector<32x32xf32>
    %c0_1 = arith.constant 0 : index
    %c0_2 = arith.constant 0 : index
    %1 = vector.load %arg2[%c0_1, %c0_2] : memref<32x32xf32, #tpu.memory_space<vmem>>, vector<32x32xf32>
    %2 = arith.addf %0, %1 : vector<32x32xf32>
    %c0_3 = arith.constant 0 : index
    %c0_4 = arith.constant 0 : index
    %3 = vector.load %arg3[%c0_3, %c0_4] : memref<32x16xf32, #tpu.memory_space<vmem>>, vector<32x16xf32>
    %cst = arith.constant dense<0.000000e+00> : vector<32x16xf32>
    %4 = tpu.matmul %2, %3, %cst {dimension_numbers = #tpu.dot_dimension_numbers<[1], [0], [0], [1], [0, 0, 1, 1], [], []>} : vector<32x32xf32>, vector<32x16xf32>, vector<32x16xf32> -> vector<32x16xf32>
    %c0_5 = arith.constant 0 : index
    %c0_6 = arith.constant 0 : index
    %5 = vector.load %arg4[%c0_5, %c0_6] : memref<1x16xf32, #tpu.memory_space<vmem>>, vector<1x16xf32>
    %6 = vector.broadcast %5 : vector<1x16xf32> to vector<32x16xf32>
    %7 = arith.addf %4, %6 : vector<32x16xf32>
    %c0_7 = arith.constant 0 : index
    %c0_8 = arith.constant 0 : index
    %8 = vector.load %arg7[%c0_7, %c0_8] : memref<32x16xf32, #tpu.memory_space<vmem>>, vector<32x16xf32>
    tpu.vector_store %arg7[%c0_7, %c0_8], %7 {strides = array<i32>} : memref<32x16xf32, #tpu.memory_space<vmem>>, vector<32x16xf32>,
    %c0_9 = arith.constant 0 : index
    %c0_10 = arith.constant 0 : index
    %9 = vector.load %arg5[%c0_9, %c0_10] : memref<32x16xf32, #tpu.memory_space<vmem>>, vector<32x16xf32>
    %cst_11 = arith.constant dense<0.000000e+00> : vector<32x16xf32>
    %10 = tpu.matmul %0, %9, %cst_11 {dimension_numbers = #tpu.dot_dimension_numbers<[1], [0], [0], [1], [0, 0, 1, 1], [], []>} : vector<32x32xf32>, vector<32x16xf32>, vector<32x16xf32> -> vector<32x16xf32>
    %c0_12 = arith.constant 0 : index
    %c0_13 = arith.constant 0 : index
    %11 = vector.load %arg6[%c0_12, %c0_13] : memref<1x16xf32, #tpu.memory_space<vmem>>, vector<1x16xf32>
    %12 = vector.broadcast %11 : vector<1x16xf32> to vector<32x16xf32>
    %13 = arith.addf %10, %12 : vector<32x16xf32>
    %c0_14 = arith.constant 0 : index
    %c0_15 = arith.constant 0 : index
    %14 = vector.load %arg8[%c0_14, %c0_15] : memref<32x16xf32, #tpu.memory_space<vmem>>, vector<32x16xf32>
    tpu.vector_store %arg8[%c0_14, %c0_15], %13 {strides = array<i32>} : memref<32x16xf32, #tpu.memory_space<vmem>>, vector<32x16xf32>,
    return
  }
  func.func @transform_0(%arg0: i32) -> (i32, i32) {
    %c0_i32 = arith.constant 0 : i32
    %c0_i32_0 = arith.constant 0 : i32
    return %arg0, %c0_i32 : i32, i32
  }
  func.func @transform_1(%arg0: i32) -> (i32, i32) {
    %c0_i32 = arith.constant 0 : i32
    %c0_i32_0 = arith.constant 0 : i32
    return %arg0, %c0_i32 : i32, i32
  }
  func.func @transform_2(%arg0: i32) -> (i32, i32) {
    %c0_i32 = arith.constant 0 : i32
    %c0_i32_0 = arith.constant 0 : i32
    %c0_i32_1 = arith.constant 0 : i32
    return %c0_i32, %c0_i32_0 : i32, i32
  }
  func.func @transform_3(%arg0: i32) -> (i32, i32) {
    %c0_i32 = arith.constant 0 : i32
    %c0_i32_0 = arith.constant 0 : i32
    %c0_i32_1 = arith.constant 0 : i32
    return %c0_i32, %c0_i32_0 : i32, i32
  }
  func.func @transform_4(%arg0: i32) -> (i32, i32) {
    %c0_i32 = arith.constant 0 : i32
    %c0_i32_0 = arith.constant 0 : i32
    %c0_i32_1 = arith.constant 0 : i32
    return %c0_i32, %c0_i32_0 : i32, i32
  }
  func.func @transform_5(%arg0: i32) -> (i32, i32) {
    %c0_i32 = arith.constant 0 : i32
    %c0_i32_0 = arith.constant 0 : i32
    %c0_i32_1 = arith.constant 0 : i32
    return %c0_i32, %c0_i32_0 : i32, i32
  }
  func.func @transform_6(%arg0: i32) -> (i32, i32) {
    %c0_i32 = arith.constant 0 : i32
    %c0_i32_0 = arith.constant 0 : i32
    return %arg0, %c0_i32 : i32, i32
  }
  func.func @transform_7(%arg0: i32) -> (i32, i32) {
    %c0_i32 = arith.constant 0 : i32
    %c0_i32_0 = arith.constant 0 : i32
    return %arg0, %c0_i32 : i32, i32
  }
}

</mosaic_0001>

<llo_original>
// kernel: two_way_transformer.8
$region0: #{two_way_transformer.8}
  #allocation0 [shape = 'u32[]', space=smem, size = 0x4, offset = 0x4, fixed_abs, tag = 'smem constant byte address 0x4 - core index']
  #allocation1 [shape = 'u32[144,128]{1,0:T(1,128)}', space=vmem, size = 0x12000, scoped, tag = 'internal scratch']
  %s0 = inlined_call_operand.vmem [shape: f32[32,32], index: 0, kind: input, shape index: {}]
  %s1 = inlined_call_operand.vmem [shape: f32[32,32], index: 1, kind: input, shape index: {}]
  %s2 = inlined_call_operand.vmem [shape: f32[32,16], index: 2, kind: input, shape index: {}]
  %s3 = inlined_call_operand.vmem [shape: f32[1,16], index: 3, kind: input, shape index: {}]
  %s4 = inlined_call_operand.vmem [shape: f32[32,16], index: 4, kind: input, shape index: {}]
  %s5 = inlined_call_operand.vmem [shape: f32[1,16], index: 5, kind: input, shape index: {}]
  %s6 = inlined_call_operand.vmem [shape: f32[32,16], index: 6, kind: input, shape index: {}]
  %s7 = inlined_call_operand.vmem [shape: f32[1,16], index: 7, kind: input, shape index: {}]
  %s8 = inlined_call_operand.vmem [shape: f32[32,16], index: 8, kind: output, shape index: {0}]
  %s9 = inlined_call_operand.vmem [shape: f32[32,16], index: 9, kind: output, shape index: {1}]
  %s10 = inlined_call_operand.vmem [shape: f32[32,16], index: 10, kind: output, shape index: {2}]
  %11 = xla_tuple %s8, %s9, %s10
  %s12 = sld [smem:[#allocation0]]
  $region58: #{two_way_transformer.8} parent=0
    _
  %s14 = ssub.s32 1, %s12
  %s15 = scalar_select 0, %s14, %s12
  // Predicated region
  $region2: #{two_way_transformer.8} parent=0 // pred_check
    _
  $region3: #{two_way_transformer.8} parent=0 // pred_check_branch
    %17 = sbr.rel (0) target = $region5
  $region4: #{two_way_transformer.8} parent=0 // pred_region
    _
  $region5: #{two_way_transformer.8} parent=0 // pred_fallthru
    _
  // Predicated region
  $region6: #{two_way_transformer.8} parent=0 // pred_check
    _
  $region7: #{two_way_transformer.8} parent=0 // pred_check_branch
    %19 = sbr.rel (0) target = $region9
  $region8: #{two_way_transformer.8} parent=0 // pred_region
    _
  $region9: #{two_way_transformer.8} parent=0 // pred_fallthru
    _
  // Predicated region
  $region10: #{two_way_transformer.8} parent=0 // pred_check
    _
  $region11: #{two_way_transformer.8} parent=0 // pred_check_branch
    %21 = sbr.rel (0) target = $region13
  $region12: #{two_way_transformer.8} parent=0 // pred_region
    _
  $region13: #{two_way_transformer.8} parent=0 // pred_fallthru
    _
  // Predicated region
  $region14: #{two_way_transformer.8} parent=0 // pred_check
    _
  $region15: #{two_way_transformer.8} parent=0 // pred_check_branch
    %23 = sbr.rel (0) target = $region17
  $region16: #{two_way_transformer.8} parent=0 // pred_region
    _
  $region17: #{two_way_transformer.8} parent=0 // pred_fallthru
    _
  // Predicated region
  $region18: #{two_way_transformer.8} parent=0 // pred_check
    _
  $region19: #{two_way_transformer.8} parent=0 // pred_check_branch
    %25 = sbr.rel (0) target = $region21
  $region20: #{two_way_transformer.8} parent=0 // pred_region
    _
  $region21: #{two_way_transformer.8} parent=0 // pred_fallthru
    _
  // Predicated region
  $region22: #{two_way_transformer.8} parent=0 // pred_check
    _
  $region23: #{two_way_transformer.8} parent=0 // pred_check_branch
    %27 = sbr.rel (0) target = $region25
  $region24: #{two_way_transformer.8} parent=0 // pred_region
    _
  $region25: #{two_way_transformer.8} parent=0 // pred_fallthru
    _
  // Predicated region
  $region26: #{two_way_transformer.8} parent=0 // pred_check
    _
  $region27: #{two_way_transformer.8} parent=0 // pred_check_branch
    %29 = sbr.rel (0) target = $region29
  $region28: #{two_way_transformer.8} parent=0 // pred_region
    _
  $region29: #{two_way_transformer.8} parent=0 // pred_fallthru
    _
  // Predicated region
  $region30: #{two_way_transformer.8} parent=0 // pred_check
    _
  $region31: #{two_way_transformer.8} parent=0 // pred_check_branch
    %31 = sbr.rel (0) target = $region33
  $region32: #{two_way_transformer.8} parent=0 // pred_region
    _
  $region33: #{two_way_transformer.8} parent=0 // pred_fallthru
    _
  %v32 = vld [vmem:[%s0] sm:$0xff]
  %v33 = vld [vmem:[%s0 + $0x8] sm:$0xff]
  %v34 = vld [vmem:[%s0 + $0x10] sm:$0xff]
  %v35 = vld [vmem:[%s0 + $0x18] sm:$0xff]
  %v36 = vld [vmem:[%s1] sm:$0xff]
  %v37 = vld [vmem:[%s1 + $0x8] sm:$0xff]
  %v38 = vld [vmem:[%s1 + $0x10] sm:$0xff]
  %v39 = vld [vmem:[%s1 + $0x18] sm:$0xff]
  %v40 = vadd.f32 %v32, %v36
  %v41 = vadd.f32 %v33, %v37
  %v42 = vadd.f32 %v34, %v38
  %v43 = vadd.f32 %v35, %v39
  %v44 = vld [vmem:[%s2] sm:$0xff]
  %v45 = vld [vmem:[%s2 + $0x8] sm:$0xff]
  %v46 = vld [vmem:[%s2 + $0x10] sm:$0xff]
  %v47 = vld [vmem:[%s2 + $0x18] sm:$0xff]
  %v48 = vld [vmem:[%s3] sm:$0x1]
  %v50 = vlaneseq
  %v51 = vshrl.u32 %v50, 7
  %v52 = vsub.s32 0, %v51
  %v53 = vrot.slane %v48, %v52
  %vm55 = vcmask 261120
  %v57 = vsel %vm55, %v40, 0
  %v60 = vsel %vm55, %v41, 0
  %v63 = vsel %vm55, %v42, 0
  %v66 = vsel %vm55, %v43, 0
  %68 = vmatprep.subr.mxu0 0.0
  %69 = vmatpush1.msra.mxu0 %v44
  %70 = vmatprep.subr.mxu0 0.0
  %71 = vmatpush1.msra.mxu0 %v45
  %72 = vmatprep.subr.mxu0 0.0
  %73 = vmatpush1.msra.mxu0 %v46
  %74 = vmatprep.subr.mxu0 0.0
  %75 = vmatpush1.msra.mxu0 %v47
  %76 = vmatprep.subr.mxu0 0.0
  %77 = vmatpush1.msra.mxu0 0.0
  %78 = vmatprep.subr.mxu0 0.0
  %79 = vmatpush1.msra.mxu0 0.0
  %80 = vmatprep.subr.mxu0 0.0
  %81 = vmatpush1.msra.mxu0 0.0
  %82 = vmatprep.subr.mxu0 0.0
  %83 = vmatpush1.msra.mxu0 0.0
  %84 = vmatprep.subr.mxu0 0.0
  %85 = vmatpush1.msra.mxu0 0.0
  %86 = vmatprep.subr.mxu0 0.0
  %87 = vmatpush1.msra.mxu0 0.0
  %88 = vmatprep.subr.mxu0 0.0
  %89 = vmatpush1.msra.mxu0 0.0
  %90 = vmatprep.subr.mxu0 0.0
  %91 = vmatpush1.msra.mxu0 0.0
  %92 = vmatprep.subr.mxu0 0.0
  %93 = vmatpush1.msra.mxu0 0.0
  %94 = vmatprep.subr.mxu0 0.0
  %95 = vmatpush1.msra.mxu0 0.0
  %96 = vmatprep.subr.mxu0 0.0
  %97 = vmatpush1.msra.mxu0 0.0
  %98 = vmatprep.subr.mxu0 0.0
  %99 = vmatpush1.msra.mxu0 0.0
  %100 = vmatprep.subr.mxu0 0.0
  %101 = vmatpush1.msra.mxu0 0.0
  %102 = vmatprep.subr.mxu0 0.0
  %103 = vmatpush1.msra.mxu0 0.0
  %104 = vmatprep.subr.mxu0 0.0
  %105 = vmatpush1.msra.mxu0 0.0
  %106 = vmatprep.subr.mxu0 0.0
  %107 = vmatpush1.msra.mxu0 0.0
  %108 = vmatprep.subr.mxu0 0.0
  %109 = vmatpush1.msra.mxu0 0.0
  %110 = vmatprep.subr.mxu0 0.0
  %111 = vmatpush1.msra.mxu0 0.0
  %112 = vmatprep.subr.mxu0 0.0
  %113 = vmatpush1.msra.mxu0 0.0
  %114 = vmatprep.subr.mxu0 0.0
  %115 = vmatpush1.msra.mxu0 0.0
  %116 = vmatprep.subr.mxu0 0.0
  %117 = vmatpush1.msra.mxu0 0.0
  %118 = vmatprep.subr.mxu0 0.0
  %119 = vmatpush1.msra.mxu0 0.0
  %120 = vmatprep.subr.mxu0 0.0
  %121 = vmatpush1.msra.mxu0 0.0
  %122 = vmatprep.subr.mxu0 0.0
  %123 = vmatpush1.msra.mxu0 0.0
  %124 = vmatprep.subr.mxu0 0.0
  %125 = vmatpush1.msra.mxu0 0.0
  %126 = vmatprep.subr.mxu0 0.0
  %127 = vmatpush1.msra.mxu0 0.0
  %128 = vmatprep.subr.mxu0 0.0
  %129 = vmatpush1.msra.mxu0 0.0
  %130 = vmatprep.subr.mxu0 0.0
  %131 = vmatpush1.msra.mxu0 0.0
  %132 = vmatprep.mubr.f32.mxu0 0.0
  %133 = vmatmul.mubr.f32.gmra.mrb[0].mxu0 %v57
  %v134 = vpop.f32.mrb[0].mxu0
  %v135 = vadd.f32 %v53, %v134
  %v136 = vpop.f32.mrb[0].mxu0
  %137 = vmatprep.mubr.f32.mxu0 0.0
  %138 = vmatmul.mubr.f32.gmra.mrb[0].mxu0 %v60
  %v139 = vpop.f32.mrb[0].mxu0
  %v140 = vadd.f32 %v53, %v139
  %v141 = vpop.f32.mrb[0].mxu0
  %142 = vmatprep.mubr.f32.mxu0 0.0
  %143 = vmatmul.mubr.f32.gmra.mrb[0].mxu0 %v63
  %v144 = vpop.f32.mrb[0].mxu0
  %v145 = vadd.f32 %v53, %v144
  %v146 = vpop.f32.mrb[0].mxu0
  %147 = vmatprep.mubr.f32.mxu0 0.0
  %148 = vmatmul.mubr.f32.gmra.mrb[0].mxu0 %v66
  %v149 = vpop.f32.mrb[0].mxu0
  %v150 = vadd.f32 %v53, %v149
  %v151 = vpop.f32.mrb[0].mxu0
  %152 = vdwg.mxu0
  %vm153 = vcmask 130048
  %154 = vst.msk [vmem:[%s8] sm:$0xff] %vm153, %v135
  %155 = vst.msk [vmem:[%s8 + $0x8] sm:$0xff] %vm153, %v140
  %156 = vst.msk [vmem:[%s8 + $0x10] sm:$0xff] %vm153, %v145
  %157 = vst.msk [vmem:[%s8 + $0x18] sm:$0xff] %vm153, %v150
  %v158 = vld [vmem:[%s4] sm:$0xff]
  %v159 = vld [vmem:[%s4 + $0x8] sm:$0xff]
  %v160 = vld [vmem:[%s4 + $0x10] sm:$0xff]
  %v161 = vld [vmem:[%s4 + $0x18] sm:$0xff]
  %v162 = vld [vmem:[%s5] sm:$0x1]
  %v164 = vlaneseq
  %v165 = vshrl.u32 %v164, 7
  %v166 = vsub.s32 0, %v165
  %v167 = vrot.slane %v162, %v166
  %v170 = vsel %vm55, %v32, 0
  %v173 = vsel %vm55, %v33, 0
  %v176 = vsel %vm55, %v34, 0
  %v179 = vsel %vm55, %v35, 0
  %181 = vmatprep.subr.mxu0 0.0
  %182 = vmatpush1.msra.mxu0 %v158
  %183 = vmatprep.subr.mxu0 0.0
  %184 = vmatpush1.msra.mxu0 %v159
  %185 = vmatprep.subr.mxu0 0.0
  %186 = vmatpush1.msra.mxu0 %v160
  %187 = vmatprep.subr.mxu0 0.0
  %188 = vmatpush1.msra.mxu0 %v161
  %189 = vmatprep.subr.mxu0 0.0
  %190 = vmatpush1.msra.mxu0 0.0
  %191 = vmatprep.subr.mxu0 0.0
  %192 = vmatpush1.msra.mxu0 0.0
  %193 = vmatprep.subr.mxu0 0.0
  %194 = vmatpush1.msra.mxu0 0.0
  %195 = vmatprep.subr.mxu0 0.0
  %196 = vmatpush1.msra.mxu0 0.0
  %197 = vmatprep.subr.mxu0 0.0
  %198 = vmatpush1.msra.mxu0 0.0
  %199 = vmatprep.subr.mxu0 0.0
  %200 = vmatpush1.msra.mxu0 0.0
  %201 = vmatprep.subr.mxu0 0.0
  %202 = vmatpush1.msra.mxu0 0.0
  %203 = vmatprep.subr.mxu0 0.0
  %204 = vmatpush1.msra.mxu0 0.0
  %205 = vmatprep.subr.mxu0 0.0
  %206 = vmatpush1.msra.mxu0 0.0
  %207 = vmatprep.subr.mxu0 0.0
  %208 = vmatpush1.msra.mxu0 0.0
  %209 = vmatprep.subr.mxu0 0.0
  %210 = vmatpush1.msra.mxu0 0.0
  %211 = vmatprep.subr.mxu0 0.0
  %212 = vmatpush1.msra.mxu0 0.0
  %213 = vmatprep.subr.mxu0 0.0
  %214 = vmatpush1.msra.mxu0 0.0
  %215 = vmatprep.subr.mxu0 0.0
  %216 = vmatpush1.msra.mxu0 0.0
  %217 = vmatprep.subr.mxu0 0.0
  %218 = vmatpush1.msra.mxu0 0.0
  %219 = vmatprep.subr.mxu0 0.0
  %220 = vmatpush1.msra.mxu0 0.0
  %221 = vmatprep.subr.mxu0 0.0
  %222 = vmatpush1.msra.mxu0 0.0
  %223 = vmatprep.subr.mxu0 0.0
  %224 = vmatpush1.msra.mxu0 0.0
  %225 = vmatprep.subr.mxu0 0.0
  %226 = vmatpush1.msra.mxu0 0.0
  %227 = vmatprep.subr.mxu0 0.0
  %228 = vmatpush1.msra.mxu0 0.0
  %229 = vmatprep.subr.mxu0 0.0
  %230 = vmatpush1.msra.mxu0 0.0
  %231 = vmatprep.subr.mxu0 0.0
  %232 = vmatpush1.msra.mxu0 0.0
  %233 = vmatprep.subr.mxu0 0.0
  %234 = vmatpush1.msra.mxu0 0.0
  %235 = vmatprep.subr.mxu0 0.0
  %236 = vmatpush1.msra.mxu0 0.0
  %237 = vmatprep.subr.mxu0 0.0
  %238 = vmatpush1.msra.mxu0 0.0
  %239 = vmatprep.subr.mxu0 0.0
  %240 = vmatpush1.msra.mxu0 0.0
  %241 = vmatprep.subr.mxu0 0.0
  %242 = vmatpush1.msra.mxu0 0.0
  %243 = vmatprep.subr.mxu0 0.0
  %244 = vmatpush1.msra.mxu0 0.0
  %245 = vmatprep.mubr.f32.mxu0 0.0
  %246 = vmatmul.mubr.f32.gmra.mrb[0].mxu0 %v170
  %v247 = vpop.f32.mrb[0].mxu0
  %v248 = vadd.f32 %v167, %v247
  %v249 = vpop.f32.mrb[0].mxu0
  %250 = vmatprep.mubr.f32.mxu0 0.0
  %251 = vmatmul.mubr.f32.gmra.mrb[0].mxu0 %v173
  %v252 = vpop.f32.mrb[0].mxu0
  %v253 = vadd.f32 %v167, %v252
  %v254 = vpop.f32.mrb[0].mxu0
  %255 = vmatprep.mubr.f32.mxu0 0.0
  %256 = vmatmul.mubr.f32.gmra.mrb[0].mxu0 %v176
  %v257 = vpop.f32.mrb[0].mxu0
  %v258 = vadd.f32 %v167, %v257
  %v259 = vpop.f32.mrb[0].mxu0
  %260 = vmatprep.mubr.f32.mxu0 0.0
  %261 = vmatmul.mubr.f32.gmra.mrb[0].mxu0 %v179
  %v262 = vpop.f32.mrb[0].mxu0
  %v263 = vadd.f32 %v167, %v262
  %v264 = vpop.f32.mrb[0].mxu0
  %265 = vdwg.mxu0
  %266 = vst.msk [vmem:[%s9] sm:$0xff] %vm153, %v248
  %267 = vst.msk [vmem:[%s9 + $0x8] sm:$0xff] %vm153, %v253
  %268 = vst.msk [vmem:[%s9 + $0x10] sm:$0xff] %vm153, %v258
  %269 = vst.msk [vmem:[%s9 + $0x18] sm:$0xff] %vm153, %v263
  %v270 = vld [vmem:[%s6] sm:$0xff]
  %v271 = vld [vmem:[%s6 + $0x8] sm:$0xff]
  %v272 = vld [vmem:[%s6 + $0x10] sm:$0xff]
  %v273 = vld [vmem:[%s6 + $0x18] sm:$0xff]
  %v274 = vld [vmem:[%s7] sm:$0x1]
  %v276 = vlaneseq
  %v277 = vshrl.u32 %v276, 7
  %v278 = vsub.s32 0, %v277
  %v279 = vrot.slane %v274, %v278
  %281 = vmatprep.subr.mxu0 0.0
  %282 = vmatpush1.msra.mxu0 %v270
  %283 = vmatprep.subr.mxu0 0.0
  %284 = vmatpush1.msra.mxu0 %v271
  %285 = vmatprep.subr.mxu0 0.0
  %286 = vmatpush1.msra.mxu0 %v272
  %287 = vmatprep.subr.mxu0 0.0
  %288 = vmatpush1.msra.mxu0 %v273
  %289 = vmatprep.subr.mxu0 0.0
  %290 = vmatpush1.msra.mxu0 0.0
  %291 = vmatprep.subr.mxu0 0.0
  %292 = vmatpush1.msra.mxu0 0.0
  %293 = vmatprep.subr.mxu0 0.0
  %294 = vmatpush1.msra.mxu0 0.0
  %295 = vmatprep.subr.mxu0 0.0
  %296 = vmatpush1.msra.mxu0 0.0
  %297 = vmatprep.subr.mxu0 0.0
  %298 = vmatpush1.msra.mxu0 0.0
  %299 = vmatprep.subr.mxu0 0.0
  %300 = vmatpush1.msra.mxu0 0.0
  %301 = vmatprep.subr.mxu0 0.0
  %302 = vmatpush1.msra.mxu0 0.0
  %303 = vmatprep.subr.mxu0 0.0
  %304 = vmatpush1.msra.mxu0 0.0
  %305 = vmatprep.subr.mxu0 0.0
  %306 = vmatpush1.msra.mxu0 0.0
  %307 = vmatprep.subr.mxu0 0.0
  %308 = vmatpush1.msra.mxu0 0.0
  %309 = vmatprep.subr.mxu0 0.0
  %310 = vmatpush1.msra.mxu0 0.0
  %311 = vmatprep.subr.mxu0 0.0
  %312 = vmatpush1.msra.mxu0 0.0
  %313 = vmatprep.subr.mxu0 0.0
  %314 = vmatpush1.msra.mxu0 0.0
  %315 = vmatprep.subr.mxu0 0.0
  %316 = vmatpush1.msra.mxu0 0.0
  %317 = vmatprep.subr.mxu0 0.0
  %318 = vmatpush1.msra.mxu0 0.0
  %319 = vmatprep.subr.mxu0 0.0
  %320 = vmatpush1.msra.mxu0 0.0
  %321 = vmatprep.subr.mxu0 0.0
  %322 = vmatpush1.msra.mxu0 0.0
  %323 = vmatprep.subr.mxu0 0.0
  %324 = vmatpush1.msra.mxu0 0.0
  %325 = vmatprep.subr.mxu0 0.0
  %326 = vmatpush1.msra.mxu0 0.0
  %327 = vmatprep.subr.mxu0 0.0
  %328 = vmatpush1.msra.mxu0 0.0
  %329 = vmatprep.subr.mxu0 0.0
  %330 = vmatpush1.msra.mxu0 0.0
  %331 = vmatprep.subr.mxu0 0.0
  %332 = vmatpush1.msra.mxu0 0.0
  %333 = vmatprep.subr.mxu0 0.0
  %334 = vmatpush1.msra.mxu0 0.0
  %335 = vmatprep.subr.mxu0 0.0
  %336 = vmatpush1.msra.mxu0 0.0
  %337 = vmatprep.subr.mxu0 0.0
  %338 = vmatpush1.msra.mxu0 0.0
  %339 = vmatprep.subr.mxu0 0.0
  %340 = vmatpush1.msra.mxu0 0.0
  %341 = vmatprep.subr.mxu0 0.0
  %342 = vmatpush1.msra.mxu0 0.0
  %343 = vmatprep.subr.mxu0 0.0
  %344 = vmatpush1.msra.mxu0 0.0
  %345 = vmatprep.mubr.f32.mxu0 0.0
  %346 = vmatmul.mubr.f32.gmra.mrb[0].mxu0 %v57
  %v347 = vpop.f32.mrb[0].mxu0
  %v348 = vadd.f32 %v279, %v347
  %v349 = vpop.f32.mrb[0].mxu0
  %350 = vmatprep.mubr.f32.mxu0 0.0
  %351 = vmatmul.mubr.f32.gmra.mrb[0].mxu0 %v60
  %v352 = vpop.f32.mrb[0].mxu0
  %v353 = vadd.f32 %v279, %v352
  %v354 = vpop.f32.mrb[0].mxu0
  %355 = vmatprep.mubr.f32.mxu0 0.0
  %356 = vmatmul.mubr.f32.gmra.mrb[0].mxu0 %v63
  %v357 = vpop.f32.mrb[0].mxu0
  %v358 = vadd.f32 %v279, %v357
  %v359 = vpop.f32.mrb[0].mxu0
  %360 = vmatprep.mubr.f32.mxu0 0.0
  %361 = vmatmul.mubr.f32.gmra.mrb[0].mxu0 %v66
  %v362 = vpop.f32.mrb[0].mxu0
  %v363 = vadd.f32 %v279, %v362
  %v364 = vpop.f32.mrb[0].mxu0
  %365 = vdwg.mxu0
  %366 = vst.msk [vmem:[%s10] sm:$0xff] %vm153, %v348
  %367 = vst.msk [vmem:[%s10 + $0x8] sm:$0xff] %vm153, %v353
  %368 = vst.msk [vmem:[%s10 + $0x10] sm:$0xff] %vm153, %v358
  %369 = vst.msk [vmem:[%s10 + $0x18] sm:$0xff] %vm153, %v363
  // Predicated region
  $region34: #{two_way_transformer.8} parent=0 // pred_check
    _
  $region35: #{two_way_transformer.8} parent=0 // pred_check_branch
    %371 = sbr.rel (0) target = $region37
  $region36: #{two_way_transformer.8} parent=0 // pred_region
    _
  $region37: #{two_way_transformer.8} parent=0 // pred_fallthru
    _
  // Predicated region
  $region38: #{two_way_transformer.8} parent=0 // pred_check
    _
  $region39: #{two_way_transformer.8} parent=0 // pred_check_branch
    %373 = sbr.rel (0) target = $region41
  $region40: #{two_way_transformer.8} parent=0 // pred_region
    _
  $region41: #{two_way_transformer.8} parent=0 // pred_fallthru
    _
  // Predicated region
  $region42: #{two_way_transformer.8} parent=0 // pred_check
    _
  $region43: #{two_way_transformer.8} parent=0 // pred_check_branch
    %375 = sbr.rel (0) target = $region45
  $region44: #{two_way_transformer.8} parent=0 // pred_region
    _
  $region45: #{two_way_transformer.8} parent=0 // pred_fallthru
    _
  // Predicated region
  $region46: #{two_way_transformer.8} parent=0 // pred_check
    _
  $region47: #{two_way_transformer.8} parent=0 // pred_check_branch
    %377 = sbr.rel (0) target = $region49
  $region48: #{two_way_transformer.8} parent=0 // pred_region
    _
  $region49: #{two_way_transformer.8} parent=0 // pred_fallthru
    _
  // Predicated region
  $region50: #{two_way_transformer.8} parent=0 // pred_check
    _
  $region51: #{two_way_transformer.8} parent=0 // pred_check_branch
    %379 = sbr.rel (0) target = $region53
  $region52: #{two_way_transformer.8} parent=0 // pred_region
    _
  $region53: #{two_way_transformer.8} parent=0 // pred_fallthru
    _
  // Predicated region
  $region54: #{two_way_transformer.8} parent=0 // pred_check
    _
  $region55: #{two_way_transformer.8} parent=0 // pred_check_branch
    %381 = sbr.rel (0) target = $region57
  $region56: #{two_way_transformer.8} parent=0 // pred_region
    _
  $region57: #{two_way_transformer.8} parent=0 // pred_fallthru
    _

// kernel: two_way_transformer.10
$region0: #{two_way_transformer.10}
  #allocation0 [shape = 'u32[]', space=smem, size = 0x4, offset = 0x4, fixed_abs, tag = 'smem constant byte address 0x4 - core index']
  #allocation1 [shape = 'u32[144,128]{1,0:T(1,128)}', space=vmem, size = 0x12000, scoped, tag = 'internal scratch']
  %s0 = inlined_call_operand.vmem [shape: f32[2,16,16], index: 0, kind: input, shape index: {}]
  %s1 = inlined_call_operand.vmem [shape: f32[2,8,16], index: 1, kind: input, shape index: {}]
  %s2 = inlined_call_operand.vmem [shape: f32[2,8,16], index: 2, kind: input, shape index: {}]
  %s3 = inlined_call_operand.vmem [shape: f32[2,16,32], index: 3, kind: input, shape index: {}]
  %s4 = inlined_call_operand.vmem [shape: f32[16,32], index: 4, kind: input, shape index: {}]
  %s5 = inlined_call_operand.vmem [shape: f32[1,32], index: 5, kind: input, shape index: {}]
  %s6 = inlined_call_operand.vmem [shape: f32[1,32], index: 6, kind: input, shape index: {}]
  %s7 = inlined_call_operand.vmem [shape: f32[1,32], index: 7, kind: input, shape index: {}]
  %s8 = inlined_call_operand.vmem [shape: f32[2,16,32], index: 8, kind: output, shape index: {}]
  %s9 = sld [smem:[#allocation0]]
  $region65: #{two_way_transformer.10} parent=0
    _
  %s11 = ssub.s32 1, %s9
  %s12 = scalar_select 0, %s11, %s9
  loop: start=0, step=1, limit=4
  $region2: #{two_way_transformer.10} parent=0 // loop_pre_header
    _
  $region3: #{two_way_transformer.10} parent=0 // loop_header
    %s14 = sphi 0, %s18
    %p15 = scmp.ge.s32.totalorder %s14, 4
    %s21 = sphi 0, %s33
    %s22 = sphi 0, %s29
    %s23 = sphi 0, %s21
    %s24 = sphi 0, %s22
    %s25 = sphi 0, %s23
    %s26 = sphi 0, %s24
    %s38 = sphi 0, %s40
    %s41 = sphi 0, %s38
    %s42 = sphi 0, %s41
    %s58 = sphi 0, %s42
    %s64 = sphi 0, %s66
    %s67 = sphi 0, %s64
    %s68 = sphi 0, %s67
    %s84 = sphi 0, %s68
    %s90 = sphi 0, %s92
    %s93 = sphi 0, %s90
    %s94 = sphi 0, %s93
    %s110 = sphi 0, %s94
    %s118 = sphi 0, %s120
    %s121 = sphi 0, %s118
    %s122 = sphi 0, %s121
    %s138 = sphi 0, %s122
    %s142 = sphi 0, %s142
    %s144 = sphi 0, %s142
    %s145 = sphi 0, %s144
    %s159 = sphi 0, %s145
    %s163 = sphi 0, %s163
    %s165 = sphi 0, %s163
    %s166 = sphi 0, %s165
    %s180 = sphi 0, %s166
    %s184 = sphi 0, %s184
    %s186 = sphi 0, %s184
    %s187 = sphi 0, %s186
    %s201 = sphi 0, %s187
    %s205 = sphi 0, %s205
    %s207 = sphi 0, %s205
    %s208 = sphi 0, %s207
    %s222 = sphi 0, %s208
    %s230 = sphi 0, %s232
    %s233 = sphi 0, %s230
    %s234 = sphi 0, %s233
    %s250 = sphi 0, %s234
  $region4: #{two_way_transformer.10} parent=0 // loop_header_branch
    %17 = sbr.rel (%p15) target = $region8
  $region5: #{two_way_transformer.10} parent=0 // loop_body
    %s19 = ssub.s32 %s14, 1
    %s20 = ssub.s32 %s14, 2
    %s27 = sadd.s32 1, %s22
    %p28 = scmp.ge.s32.totalorder %s27, 1
    %s29 = scalar_select %p28, 0, %s27
    %s30 = sadd.s32 1, %s21
    %s31 = scalar_select %p28, %s30, %s21
    %p32 = scmp.ge.s32.totalorder %s31, 2
    %s33 = scalar_select %p32, 0, %s31
    %s34 = ssub.s32 %s21, %s33
    %s35 = ssub.s32 %s22, %s29
    %s36 = sor.u32 %s34, %s35
    %p37 = scmp.eq.s32.totalorder %s36, 0
    %s39 = sadd.s32 %s38, 1
    %s40 = scalar_select %p37, %s38, %s39
    %p43 = pneg %p37
    %p44 = scmp.eq.s32.totalorder %s14, 1
    %p45 = por %p43, %p44
    %p46 = scmp.ne.s32.totalorder %s38, %s41
    %p47 = scmp.eq.s32.totalorder %s14, 0
    %p48 = por %p46, %p47
    %p49 = scmp.ne.s32.totalorder %s38, %s41
    %p50 = scmp.eq.s32.totalorder %s19, 1
    %p51 = por %p49, %p50
    %p52 = scmp.ne.s32.totalorder %s41, %s42
    %p53 = scmp.eq.s32.totalorder %s19, 0
    %p54 = por %p52, %p53
    %p55 = scmp.ne.s32.totalorder %s41, %s42
    %p56 = scmp.eq.s32.totalorder %s20, 1
    %p57 = por %p55, %p56
    %p59 = scmp.ne.s32.totalorder %s42, %s58
    %p60 = scmp.eq.s32.totalorder %s20, 0
    %p61 = por %p59, %p60
    %s62 = ssub.s32 %s21, %s33
    %p63 = scmp.eq.s32.totalorder %s62, 0
    %s65 = sadd.s32 %s64, 1
    %s66 = scalar_select %p63, %s64, %s65
    %p69 = pneg %p63
    %p70 = scmp.eq.s32.totalorder %s14, 1
    %p71 = por %p69, %p70
    %p72 = scmp.ne.s32.totalorder %s64, %s67
    %p73 = scmp.eq.s32.totalorder %s14, 0
    %p74 = por %p72, %p73
    %p75 = scmp.ne.s32.totalorder %s64, %s67
    %p76 = scmp.eq.s32.totalorder %s19, 1
    %p77 = por %p75, %p76
    %p78 = scmp.ne.s32.totalorder %s67, %s68
    %p79 = scmp.eq.s32.totalorder %s19, 0
    %p80 = por %p78, %p79
    %p81 = scmp.ne.s32.totalorder %s67, %s68
    %p82 = scmp.eq.s32.totalorder %s20, 1
    %p83 = por %p81, %p82
    %p85 = scmp.ne.s32.totalorder %s68, %s84
    %p86 = scmp.eq.s32.totalorder %s20, 0
    %p87 = por %p85, %p86
    %s88 = ssub.s32 %s21, %s33
    %p89 = scmp.eq.s32.totalorder %s88, 0
    %s91 = sadd.s32 %s90, 1
    %s92 = scalar_select %p89, %s90, %s91
    %p95 = pneg %p89
    %p96 = scmp.eq.s32.totalorder %s14, 1
    %p97 = por %p95, %p96
    %p98 = scmp.ne.s32.totalorder %s90, %s93
    %p99 = scmp.eq.s32.totalorder %s14, 0
    %p100 = por %p98, %p99
    %p101 = scmp.ne.s32.totalorder %s90, %s93
    %p102 = scmp.eq.s32.totalorder %s19, 1
    %p103 = por %p101, %p102
    %p104 = scmp.ne.s32.totalorder %s93, %s94
    %p105 = scmp.eq.s32.totalorder %s19, 0
    %p106 = por %p104, %p105
    %p107 = scmp.ne.s32.totalorder %s93, %s94
    %p108 = scmp.eq.s32.totalorder %s20, 1
    %p109 = por %p107, %p108
    %p111 = scmp.ne.s32.totalorder %s94, %s110
    %p112 = scmp.eq.s32.totalorder %s20, 0
    %p113 = por %p111, %p112
    %s114 = ssub.s32 %s21, %s33
    %s115 = ssub.s32 %s22, %s29
    %s116 = sor.u32 %s114, %s115
    %p117 = scmp.eq.s32.totalorder %s116, 0
    %s119 = sadd.s32 %s118, 1
    %s120 = scalar_select %p117, %s118, %s119
    %p123 = pneg %p117
    %p124 = scmp.eq.s32.totalorder %s14, 1
    %p125 = por %p123, %p124
    %p126 = scmp.ne.s32.totalorder %s118, %s121
    %p127 = scmp.eq.s32.totalorder %s14, 0
    %p128 = por %p126, %p127
    %p129 = scmp.ne.s32.totalorder %s118, %s121
    %p130 = scmp.eq.s32.totalorder %s19, 1
    %p131 = por %p129, %p130
    %p132 = scmp.ne.s32.totalorder %s121, %s122
    %p133 = scmp.eq.s32.totalorder %s19, 0
    %p134 = por %p132, %p133
    %p135 = scmp.ne.s32.totalorder %s121, %s122
    %p136 = scmp.eq.s32.totalorder %s20, 1
    %p137 = por %p135, %p136
    %p139 = scmp.ne.s32.totalorder %s122, %s138
    %p140 = scmp.eq.s32.totalorder %s20, 0
    %p141 = por %p139, %p140
    %s143 = sadd.s32 %s142, 1
    %p146 = scmp.eq.s32.totalorder %s14, 1
    %p147 = scmp.ne.s32.totalorder %s142, %s144
    %p148 = scmp.eq.s32.totalorder %s14, 0
    %p149 = por %p147, %p148
    %p150 = scmp.ne.s32.totalorder %s142, %s144
    %p151 = scmp.eq.s32.totalorder %s19, 1
    %p152 = por %p150, %p151
    %p153 = scmp.ne.s32.totalorder %s144, %s145
    %p154 = scmp.eq.s32.totalorder %s19, 0
    %p155 = por %p153, %p154
    %p156 = scmp.ne.s32.totalorder %s144, %s145
    %p157 = scmp.eq.s32.totalorder %s20, 1
    %p158 = por %p156, %p157
    %p160 = scmp.ne.s32.totalorder %s145, %s159
    %p161 = scmp.eq.s32.totalorder %s20, 0
    %p162 = por %p160, %p161
    %s164 = sadd.s32 %s163, 1
    %p167 = scmp.eq.s32.totalorder %s14, 1
    %p168 = scmp.ne.s32.totalorder %s163, %s165
    %p169 = scmp.eq.s32.totalorder %s14, 0
    %p170 = por %p168, %p169
    %p171 = scmp.ne.s32.totalorder %s163, %s165
    %p172 = scmp.eq.s32.totalorder %s19, 1
    %p173 = por %p171, %p172
    %p174 = scmp.ne.s32.totalorder %s165, %s166
    %p175 = scmp.eq.s32.totalorder %s19, 0
    %p176 = por %p174, %p175
    %p177 = scmp.ne.s32.totalorder %s165, %s166
    %p178 = scmp.eq.s32.totalorder %s20, 1
    %p179 = por %p177, %p178
    %p181 = scmp.ne.s32.totalorder %s166, %s180
    %p182 = scmp.eq.s32.totalorder %s20, 0
    %p183 = por %p181, %p182
    %s185 = sadd.s32 %s184, 1
    %p188 = scmp.eq.s32.totalorder %s14, 1
    %p189 = scmp.ne.s32.totalorder %s184, %s186
    %p190 = scmp.eq.s32.totalorder %s14, 0
    %p191 = por %p189, %p190
    %p192 = scmp.ne.s32.totalorder %s184, %s186
    %p193 = scmp.eq.s32.totalorder %s19, 1
    %p194 = por %p192, %p193
    %p195 = scmp.ne.s32.totalorder %s186, %s187
    %p196 = scmp.eq.s32.totalorder %s19, 0
    %p197 = por %p195, %p196
    %p198 = scmp.ne.s32.totalorder %s186, %s187
    %p199 = scmp.eq.s32.totalorder %s20, 1
    %p200 = por %p198, %p199
    %p202 = scmp.ne.s32.totalorder %s187, %s201
    %p203 = scmp.eq.s32.totalorder %s20, 0
    %p204 = por %p202, %p203
    %s206 = sadd.s32 %s205, 1
    %p209 = scmp.eq.s32.totalorder %s14, 1
    %p210 = scmp.ne.s32.totalorder %s205, %s207
    %p211 = scmp.eq.s32.totalorder %s14, 0
    %p212 = por %p210, %p211
    %p213 = scmp.ne.s32.totalorder %s205, %s207
    %p214 = scmp.eq.s32.totalorder %s19, 1
    %p215 = por %p213, %p214
    %p216 = scmp.ne.s32.totalorder %s207, %s208
    %p217 = scmp.eq.s32.totalorder %s19, 0
    %p218 = por %p216, %p217
    %p219 = scmp.ne.s32.totalorder %s207, %s208
    %p220 = scmp.eq.s32.totalorder %s20, 1
    %p221 = por %p219, %p220
    %p223 = scmp.ne.s32.totalorder %s208, %s222
    %p224 = scmp.eq.s32.totalorder %s20, 0
    %p225 = por %p223, %p224
    %s226 = ssub.s32 %s21, %s33
    %s227 = ssub.s32 %s22, %s29
    %s228 = sor.u32 %s226, %s227
    %p229 = scmp.eq.s32.totalorder %s228, 0
    %s231 = sadd.s32 %s230, 1
    %s232 = scalar_select %p229, %s230, %s231
    %p235 = pneg %p229
    %p236 = scmp.eq.s32.totalorder %s14, 1
    %p237 = por %p235, %p236
    %p238 = scmp.ne.s32.totalorder %s230, %s233
    %p239 = scmp.eq.s32.totalorder %s14, 0
    %p240 = por %p238, %p239
    %p241 = scmp.ne.s32.totalorder %s230, %s233
    %p242 = scmp.eq.s32.totalorder %s19, 1
    %p243 = por %p241, %p242
    %p244 = scmp.ne.s32.totalorder %s233, %s234
    %p245 = scmp.eq.s32.totalorder %s19, 0
    %p246 = por %p244, %p245
    %p247 = scmp.ne.s32.totalorder %s233, %s234
    %p248 = scmp.eq.s32.totalorder %s20, 1
    %p249 = por %p247, %p248
    %p251 = scmp.ne.s32.totalorder %s234, %s250
    %p252 = scmp.eq.s32.totalorder %s20, 0
    %p253 = por %p251, %p252
    %p254 = scmp.le.s32.totalorder 1, %s14
    %p255 = scmp.lt.s32.totalorder %s14, 3
    %p256 = pnand %p254, %p255
    %p257 = pneg %p256
    // Predicated region
    $region9: #{two_way_transformer.10} parent=5 // pred_check
      _
    $region10: #{two_way_transformer.10} parent=5 // pred_check_branch
      %259 = sbr.rel (%p256) target = $region12
    $region11: #{two_way_transformer.10} parent=5 // pred_region
      %s260 = ssub.s32 %s14, 1
      // Predicated region
      $region13: #{two_way_transformer.10} parent=11 // pred_check
        %p261 = pneg %p155
      $region14: #{two_way_transformer.10} parent=11 // pred_check_branch
        %263 = sbr.rel (%p261) target = $region16
      $region15: #{two_way_transformer.10} parent=11 // pred_region
        _
      $region16: #{two_way_transformer.10} parent=11 // pred_fallthru
        _
      // Predicated region
      $region17: #{two_way_transformer.10} parent=11 // pred_check
        %p264 = pneg %p176
      $region18: #{two_way_transformer.10} parent=11 // pred_check_branch
        %266 = sbr.rel (%p264) target = $region20
      $region19: #{two_way_transformer.10} parent=11 // pred_region
        _
      $region20: #{two_way_transformer.10} parent=11 // pred_fallthru
        _
      // Predicated region
      $region21: #{two_way_transformer.10} parent=11 // pred_check
        %p267 = pneg %p197
      $region22: #{two_way_transformer.10} parent=11 // pred_check_branch
        %269 = sbr.rel (%p267) target = $region24
      $region23: #{two_way_transformer.10} parent=11 // pred_region
        _
      $region24: #{two_way_transformer.10} parent=11 // pred_fallthru
        _
      // Predicated region
      $region25: #{two_way_transformer.10} parent=11 // pred_check
        %p270 = pneg %p218
      $region26: #{two_way_transformer.10} parent=11 // pred_check_branch
        %272 = sbr.rel (%p270) target = $region28
      $region27: #{two_way_transformer.10} parent=11 // pred_region
        _
      $region28: #{two_way_transformer.10} parent=11 // pred_fallthru
        _
    $region12: #{two_way_transformer.10} parent=5 // pred_fallthru
      _
    %p273 = scmp.lt.s32.totalorder %s14, 2
    // Predicated region
    $region29: #{two_way_transformer.10} parent=5 // pred_check
      %p274 = pneg %p273
    $region30: #{two_way_transformer.10} parent=5 // pred_check_branch
      %276 = sbr.rel (%p274) target = $region32
    $region31: #{two_way_transformer.10} parent=5 // pred_region
      // Predicated region
      $region33: #{two_way_transformer.10} parent=31 // pred_check
        %p277 = pneg %p48
      $region34: #{two_way_transformer.10} parent=31 // pred_check_branch
        %279 = sbr.rel (%p277) target = $region36
      $region35: #{two_way_transformer.10} parent=31 // pred_region
        %s280 = smul.u32 2, %s22
        %p281 = scmp.lt.s32.totalorder %s21, 1
        %s282 = scalar_select %p281, %s21, 1
        %p283 = scmp.lt.s32.totalorder %s280, 1
        %s284 = scalar_select %p283, %s280, 1
        %s285 = smul.addr %s282, 2
        %s286 = sadd.s32 %s284, %s285
        %s287 = smul.addr %s286, 8
        %s288 = scalar_lea.vmem %s0, %s287
        %s289 = smul.u32 2, %s22
      $region36: #{two_way_transformer.10} parent=31 // pred_fallthru
        _
      // Predicated region
      $region37: #{two_way_transformer.10} parent=31 // pred_check
        %p290 = pneg %p74
      $region38: #{two_way_transformer.10} parent=31 // pred_check_branch
        %292 = sbr.rel (%p290) target = $region40
      $region39: #{two_way_transformer.10} parent=31 // pred_region
        %p293 = scmp.lt.s32.totalorder %s21, 1
        %s294 = scalar_select %p293, %s21, 1
        %s295 = smul.addr %s294, 8
        %s296 = scalar_lea.vmem %s1, %s295
      $region40: #{two_way_transformer.10} parent=31 // pred_fallthru
        _
      // Predicated region
      $region41: #{two_way_transformer.10} parent=31 // pred_check
        %p297 = pneg %p100
      $region42: #{two_way_transformer.10} parent=31 // pred_check_branch
        %299 = sbr.rel (%p297) target = $region44
      $region43: #{two_way_transformer.10} parent=31 // pred_region
        %p300 = scmp.lt.s32.totalorder %s21, 1
        %s301 = scalar_select %p300, %s21, 1
        %s302 = smul.addr %s301, 8
        %s303 = scalar_lea.vmem %s2, %s302
      $region44: #{two_way_transformer.10} parent=31 // pred_fallthru
        _
      // Predicated region
      $region45: #{two_way_transformer.10} parent=31 // pred_check
        %p304 = pneg %p128
      $region46: #{two_way_transformer.10} parent=31 // pred_check_branch
        %306 = sbr.rel (%p304) target = $region48
      $region47: #{two_way_transformer.10} parent=31 // pred_region
        %s307 = smul.u32 2, %s22
        %p308 = scmp.lt.s32.totalorder %s21, 1
        %s309 = scalar_select %p308, %s21, 1
        %p310 = scmp.lt.s32.totalorder %s307, 1
        %s311 = scalar_select %p310, %s307, 1
        %s312 = smul.addr %s309, 2
        %s313 = sadd.s32 %s311, %s312
        %s314 = smul.addr %s313, 8
        %s315 = scalar_lea.vmem %s3, %s314
        %s316 = smul.u32 2, %s22
      $region48: #{two_way_transformer.10} parent=31 // pred_fallthru
        _
    $region32: #{two_way_transformer.10} parent=5 // pred_fallthru
      _
    %p317 = scmp.le.s32.totalorder 1, %s14
    %p318 = scmp.lt.s32.totalorder %s14, 3
    %p319 = pnand %p317, %p318
    %p320 = pneg %p319
    // Predicated region
    $region49: #{two_way_transformer.10} parent=5 // pred_check
      _
    $region50: #{two_way_transformer.10} parent=5 // pred_check_branch
      %322 = sbr.rel (%p319) target = $region52
    $region51: #{two_way_transformer.10} parent=5 // pred_region
      %s323 = ssub.s32 %s14, 1
      %s324 = smul.u32 2, %s24
      %p325 = scmp.lt.s32.totalorder %s23, 1
      %s326 = scalar_select %p325, %s23, 1
      %p327 = scmp.lt.s32.totalorder %s324, 1
      %s328 = scalar_select %p327, %s324, 1
      %s329 = smul.addr %s326, 2
      %s330 = sadd.s32 %s328, %s329
      %s331 = smul.addr %s330, 8
      %s332 = scalar_lea.vmem %s0, %s331
      %p333 = pneg %p54
      %p334 = pneg %p51
      %p335 = scmp.lt.s32.totalorder %s23, 1
      %s336 = scalar_select %p335, %s23, 1
      %s337 = smul.addr %s336, 8
      %s338 = scalar_lea.vmem %s1, %s337
      %p339 = pneg %p80
      %p340 = pneg %p77
      %p341 = scmp.lt.s32.totalorder %s23, 1
      %s342 = scalar_select %p341, %s23, 1
      %s343 = smul.addr %s342, 8
      %s344 = scalar_lea.vmem %s2, %s343
      %p345 = pneg %p106
      %p346 = pneg %p103
      %s347 = smul.u32 2, %s24
      %p348 = scmp.lt.s32.totalorder %s23, 1
      %s349 = scalar_select %p348, %s23, 1
      %p350 = scmp.lt.s32.totalorder %s347, 1
      %s351 = scalar_select %p350, %s347, 1
      %s352 = smul.addr %s349, 2
      %s353 = sadd.s32 %s351, %s352
      %s354 = smul.addr %s353, 8
      %s355 = scalar_lea.vmem %s3, %s354
      %p356 = pneg %p134
      %p357 = pneg %p131
      %p358 = pneg %p155
      %p359 = pneg %p152
      %p360 = pneg %p176
      %p361 = pneg %p173
      %p362 = pneg %p197
      %p363 = pneg %p194
      %p364 = pneg %p218
      %p365 = pneg %p215
      %p366 = pneg %p246
      %p367 = pneg %p243
      %s368 = smul.u32 2, %s24
      %p369 = scmp.lt.s32.totalorder %s23, 1
      %s370 = scalar_select %p369, %s23, 1
      %p371 = scmp.lt.s32.totalorder %s368, 1
      %s372 = scalar_select %p371, %s368, 1
      %s373 = smul.addr %s370, 2
      %s374 = sadd.s32 %s372, %s373
      %s375 = smul.addr %s374, 8
      %s376 = scalar_lea.vmem %s8, %s375
      %s377 = smul.u32 2, %s24
      %p378 = scmp.lt.s32.totalorder %s23, 1
      %s379 = scalar_select %p378, %s23, 1
      %p380 = scmp.lt.s32.totalorder %s377, 1
      %s381 = scalar_select %p380, %s377, 1
      %s382 = smul.addr %s379, 2
      %s383 = sadd.s32 %s381, %s382
      %s384 = smul.addr %s383, 8
      %s385 = scalar_lea.vmem %s0, %s384
      %s386 = smul.u32 2, %s24
      %p387 = scmp.lt.s32.totalorder %s23, 1
      %s388 = scalar_select %p387, %s23, 1
      %s389 = smul.addr %s388, 8
      %s390 = scalar_lea.vmem %s1, %s389
      %p391 = scmp.lt.s32.totalorder %s23, 1
      %s392 = scalar_select %p391, %s23, 1
      %s393 = smul.addr %s392, 8
      %s394 = scalar_lea.vmem %s2, %s393
      %s395 = smul.u32 2, %s24
      %p396 = scmp.lt.s32.totalorder %s23, 1
      %s397 = scalar_select %p396, %s23, 1
      %p398 = scmp.lt.s32.totalorder %s395, 1
      %s399 = scalar_select %p398, %s395, 1
      %s400 = smul.addr %s397, 2
      %s401 = sadd.s32 %s399, %s400
      %s402 = smul.addr %s401, 8
      %s403 = scalar_lea.vmem %s3, %s402
      %s404 = smul.u32 2, %s24
      %s405 = smul.u32 2, %s24
      %p406 = scmp.lt.s32.totalorder %s23, 1
      %s407 = scalar_select %p406, %s23, 1
      %p408 = scmp.lt.s32.totalorder %s405, 1
      %s409 = scalar_select %p408, %s405, 1
      %s410 = smul.addr %s407, 2
      %s411 = sadd.s32 %s409, %s410
      %s412 = smul.addr %s411, 8
      %s413 = scalar_lea.vmem %s8, %s412
      %s414 = smul.u32 2, %s24
      %v415 = vld [vmem:[%s385] sm:$0xff]
      %v416 = vld [vmem:[%s385 + $0x8] sm:$0xff]
      %v417 = vld [vmem:[%s390] sm:$0xff]
      %v418 = vld [vmem:[%s394] sm:$0xff]
      %v419 = vld [vmem:[%s4] sm:$0xff]
      %v420 = vld [vmem:[%s4 + $0x8] sm:$0xff]
      %v421 = vld [vmem:[%s5] sm:$0x1]
      %vm422 = vcmask 64512
      %v424 = vsel %vm422, %v415, 0
      %v427 = vsel %vm422, %v416, 0
      %v430 = vsel %vm422, %v417, 0
      %432 = vmatprep.subr.mxu0 0.0
      %433 = vmatpush1.xpose.msra.mxu0 %v430
      %434 = vmatprep.subr.mxu0 0.0
      %435 = vmatpush1.xpose.msra.mxu0 0.0
      %436 = vmatprep.subr.mxu0 0.0
      %437 = vmatpush1.xpose.msra.mxu0 0.0
      %438 = vmatprep.subr.mxu0 0.0
      %439 = vmatpush1.xpose.msra.mxu0 0.0
      %440 = vmatprep.subr.mxu0 0.0
      %441 = vmatpush1.xpose.msra.mxu0 0.0
      %442 = vmatprep.subr.mxu0 0.0
      %443 = vmatpush1.xpose.msra.mxu0 0.0
      %444 = vmatprep.subr.mxu0 0.0
      %445 = vmatpush1.xpose.msra.mxu0 0.0
      %446 = vmatprep.subr.mxu0 0.0
      %447 = vmatpush1.xpose.msra.mxu0 0.0
      %448 = vmatprep.subr.mxu0 0.0
      %449 = vmatpush1.xpose.msra.mxu0 0.0
      %450 = vmatprep.subr.mxu0 0.0
      %451 = vmatpush1.xpose.msra.mxu0 0.0
      %452 = vmatprep.subr.mxu0 0.0
      %453 = vmatpush1.xpose.msra.mxu0 0.0
      %454 = vmatprep.subr.mxu0 0.0
      %455 = vmatpush1.xpose.msra.mxu0 0.0
      %456 = vmatprep.subr.mxu0 0.0
      %457 = vmatpush1.xpose.msra.mxu0 0.0
      %458 = vmatprep.subr.mxu0 0.0
      %459 = vmatpush1.xpose.msra.mxu0 0.0
      %460 = vmatprep.subr.mxu0 0.0
      %461 = vmatpush1.xpose.msra.mxu0 0.0
      %462 = vmatprep.subr.mxu0 0.0
      %463 = vmatpush1.xpose.msra.mxu0 0.0
      %464 = vmatprep.subr.mxu0 0.0
      %465 = vmatpush1.xpose.msra.mxu0 0.0
      %466 = vmatprep.subr.mxu0 0.0
      %467 = vmatpush1.xpose.msra.mxu0 0.0
      %468 = vmatprep.subr.mxu0 0.0
      %469 = vmatpush1.xpose.msra.mxu0 0.0
      %470 = vmatprep.subr.mxu0 0.0
      %471 = vmatpush1.xpose.msra.mxu0 0.0
      %472 = vmatprep.subr.mxu0 0.0
      %473 = vmatpush1.xpose.msra.mxu0 0.0
      %474 = vmatprep.subr.mxu0 0.0
      %475 = vmatpush1.xpose.msra.mxu0 0.0
      %476 = vmatprep.subr.mxu0 0.0
      %477 = vmatpush1.xpose.msra.mxu0 0.0
      %478 = vmatprep.subr.mxu0 0.0
      %479 = vmatpush1.xpose.msra.mxu0 0.0
      %480 = vmatprep.subr.mxu0 0.0
      %481 = vmatpush1.xpose.msra.mxu0 0.0
      %482 = vmatprep.subr.mxu0 0.0
      %483 = vmatpush1.xpose.msra.mxu0 0.0
      %484 = vmatprep.subr.mxu0 0.0
      %485 = vmatpush1.xpose.msra.mxu0 0.0
      %486 = vmatprep.subr.mxu0 0.0
      %487 = vmatpush1.xpose.msra.mxu0 0.0
      %488 = vmatprep.subr.mxu0 0.0
      %489 = vmatpush1.xpose.msra.mxu0 0.0
      %490 = vmatprep.subr.mxu0 0.0
      %491 = vmatpush1.xpose.msra.mxu0 0.0
      %492 = vmatprep.subr.mxu0 0.0
      %493 = vmatpush1.xpose.msra.mxu0 0.0
      %494 = vmatprep.subr.mxu0 0.0
      %495 = vmatpush1.xpose.msra.mxu0 0.0
      %496 = vmatprep.mubr.f32.mxu0 0.0
      %497 = vmatmul.mubr.f32.gmra.mrb[0].mxu0 %v424
      %v498 = vpop.f32.mrb[0].mxu0
      %v499 = vadd.f32 0.0, %v498
      %v500 = vpop.f32.mrb[0].mxu0
      %501 = vmatprep.mubr.f32.mxu0 0.0
      %502 = vmatmul.mubr.f32.gmra.mrb[0].mxu0 %v427
      %v503 = vpop.f32.mrb[0].mxu0
      %v504 = vadd.f32 0.0, %v503
      %v505 = vpop.f32.mrb[0].mxu0
      %506 = vdwg.mxu0
      %v507 = vmul.f32 %v499, 0.35355338
      %v508 = vmul.f32 %v504, 0.35355338
      %v509 = vsel %vm422, %v507, -inf
      %510 = vmax.xlane.f32.xlu0 %v509
      %v511 = vpop.xlane.xlu0 %510
      %v512 = vsel %vm422, %v508, -inf
      %513 = vmax.xlane.f32.xlu0 %v512
      %v514 = vpop.xlane.xlu0 %513
      %v515 = vsub.f32 %v507, %v511
      %v516 = vsub.f32 %v508, %v514
      %v517 = vmul.f32 %v515, 1.442695
      %v518 = vpow.pop %v517
      %v519 = vmul.f32 %v516, 1.442695
      %v520 = vpow.pop %v519
      %v521 = vsel %vm422, %v518, 0.0
      %522 = vadd.xlane.f32.xlu0 %v521
      %v523 = vpop.xlane.xlu0 %522
      %v524 = vsel %vm422, %v520, 0.0
      %525 = vadd.xlane.f32.xlu0 %v524
      %v526 = vpop.xlane.xlu0 %525
      %v528 = vsel %vm422, %v518, 0
      %v531 = vsel %vm422, %v520, 0
      %533 = vmatprep.subr.mxu0 0.0
      %534 = vmatpush1.msra.mxu0 %v418
      %535 = vmatprep.subr.mxu0 0.0
      %536 = vmatpush1.msra.mxu0 0.0
      %537 = vmatprep.subr.mxu0 0.0
      %538 = vmatpush1.msra.mxu0 0.0
      %539 = vmatprep.subr.mxu0 0.0
      %540 = vmatpush1.msra.mxu0 0.0
      %541 = vmatprep.subr.mxu0 0.0
      %542 = vmatpush1.msra.mxu0 0.0
      %543 = vmatprep.subr.mxu0 0.0
      %544 = vmatpush1.msra.mxu0 0.0
      %545 = vmatprep.subr.mxu0 0.0
      %546 = vmatpush1.msra.mxu0 0.0
      %547 = vmatprep.subr.mxu0 0.0
      %548 = vmatpush1.msra.mxu0 0.0
      %549 = vmatprep.subr.mxu0 0.0
      %550 = vmatpush1.msra.mxu0 0.0
      %551 = vmatprep.subr.mxu0 0.0
      %552 = vmatpush1.msra.mxu0 0.0
      %553 = vmatprep.subr.mxu0 0.0
      %554 = vmatpush1.msra.mxu0 0.0
      %555 = vmatprep.subr.mxu0 0.0
      %556 = vmatpush1.msra.mxu0 0.0
      %557 = vmatprep.subr.mxu0 0.0
      %558 = vmatpush1.msra.mxu0 0.0
      %559 = vmatprep.subr.mxu0 0.0
      %560 = vmatpush1.msra.mxu0 0.0
      %561 = vmatprep.subr.mxu0 0.0
      %562 = vmatpush1.msra.mxu0 0.0
      %563 = vmatprep.subr.mxu0 0.0
      %564 = vmatpush1.msra.mxu0 0.0
      %565 = vmatprep.subr.mxu0 0.0
      %566 = vmatpush1.msra.mxu0 0.0
      %567 = vmatprep.subr.mxu0 0.0
      %568 = vmatpush1.msra.mxu0 0.0
      %569 = vmatprep.subr.mxu0 0.0
      %570 = vmatpush1.msra.mxu0 0.0
      %571 = vmatprep.subr.mxu0 0.0
      %572 = vmatpush1.msra.mxu0 0.0
      %573 = vmatprep.subr.mxu0 0.0
      %574 = vmatpush1.msra.mxu0 0.0
      %575 = vmatprep.subr.mxu0 0.0
      %576 = vmatpush1.msra.mxu0 0.0
      %577 = vmatprep.subr.mxu0 0.0
      %578 = vmatpush1.msra.mxu0 0.0
      %579 = vmatprep.subr.mxu0 0.0
      %580 = vmatpush1.msra.mxu0 0.0
      %581 = vmatprep.subr.mxu0 0.0
      %582 = vmatpush1.msra.mxu0 0.0
      %583 = vmatprep.subr.mxu0 0.0
      %584 = vmatpush1.msra.mxu0 0.0
      %585 = vmatprep.subr.mxu0 0.0
      %586 = vmatpush1.msra.mxu0 0.0
      %587 = vmatprep.subr.mxu0 0.0
      %588 = vmatpush1.msra.mxu0 0.0
      %589 = vmatprep.subr.mxu0 0.0
      %590 = vmatpush1.msra.mxu0 0.0
      %591 = vmatprep.subr.mxu0 0.0
      %592 = vmatpush1.msra.mxu0 0.0
      %593 = vmatprep.subr.mxu0 0.0
      %594 = vmatpush1.msra.mxu0 0.0
      %595 = vmatprep.subr.mxu0 0.0
      %596 = vmatpush1.msra.mxu0 0.0
      %597 = vmatprep.mubr.f32.mxu0 0.0
      %598 = vmatmul.mubr.f32.gmra.mrb[0].mxu0 %v528
      %v599 = vpop.f32.mrb[0].mxu0
      %v600 = vadd.f32 0.0, %v599
      %v601 = vpop.f32.mrb[0].mxu0
      %602 = vmatprep.mubr.f32.mxu0 0.0
      %603 = vmatmul.mubr.f32.gmra.mrb[0].mxu0 %v531
      %v604 = vpop.f32.mrb[0].mxu0
      %v605 = vadd.f32 0.0, %v604
      %v606 = vpop.f32.mrb[0].mxu0
      %607 = vdwg.mxu0
      %v608 = vrcp.pop %v523
      %v609 = vrcp.pop %v526
      %v610 = vmul.f32 %v600, %v608
      %v611 = vmul.f32 %v605, %v609
      %612 = vrot.lane.b32.xlu0 %v415, 120
      %v613 = vpop.permute.xlu0 %612
      %614 = vrot.lane.b32.xlu0 %v416, 120
      %v615 = vpop.permute.xlu0 %614
      %616 = vrot.lane.b32.xlu0 %v417, 120
      %v617 = vpop.permute.xlu0 %616
      %v618 = vsel %vm422, %v613, 0
      %v620 = vsel %vm422, %v615, 0
      %v622 = vsel %vm422, %v617, 0
      %624 = vmatprep.subr.mxu0 0.0
      %625 = vmatpush1.xpose.msra.mxu0 %v622
      %626 = vmatprep.subr.mxu0 0.0
      %627 = vmatpush1.xpose.msra.mxu0 0.0
      %628 = vmatprep.subr.mxu0 0.0
      %629 = vmatpush1.xpose.msra.mxu0 0.0
      %630 = vmatprep.subr.mxu0 0.0
      %631 = vmatpush1.xpose.msra.mxu0 0.0
      %632 = vmatprep.subr.mxu0 0.0
      %633 = vmatpush1.xpose.msra.mxu0 0.0
      %634 = vmatprep.subr.mxu0 0.0
      %635 = vmatpush1.xpose.msra.mxu0 0.0
      %636 = vmatprep.subr.mxu0 0.0
      %637 = vmatpush1.xpose.msra.mxu0 0.0
      %638 = vmatprep.subr.mxu0 0.0
      %639 = vmatpush1.xpose.msra.mxu0 0.0
      %640 = vmatprep.subr.mxu0 0.0
      %641 = vmatpush1.xpose.msra.mxu0 0.0
      %642 = vmatprep.subr.mxu0 0.0
      %643 = vmatpush1.xpose.msra.mxu0 0.0
      %644 = vmatprep.subr.mxu0 0.0
      %645 = vmatpush1.xpose.msra.mxu0 0.0
      %646 = vmatprep.subr.mxu0 0.0
      %647 = vmatpush1.xpose.msra.mxu0 0.0
      %648 = vmatprep.subr.mxu0 0.0
      %649 = vmatpush1.xpose.msra.mxu0 0.0
      %650 = vmatprep.subr.mxu0 0.0
      %651 = vmatpush1.xpose.msra.mxu0 0.0
      %652 = vmatprep.subr.mxu0 0.0
      %653 = vmatpush1.xpose.msra.mxu0 0.0
      %654 = vmatprep.subr.mxu0 0.0
      %655 = vmatpush1.xpose.msra.mxu0 0.0
      %656 = vmatprep.subr.mxu0 0.0
      %657 = vmatpush1.xpose.msra.mxu0 0.0
      %658 = vmatprep.subr.mxu0 0.0
      %659 = vmatpush1.xpose.msra.mxu0 0.0
      %660 = vmatprep.subr.mxu0 0.0
      %661 = vmatpush1.xpose.msra.mxu0 0.0
      %662 = vmatprep.subr.mxu0 0.0
      %663 = vmatpush1.xpose.msra.mxu0 0.0
      %664 = vmatprep.subr.mxu0 0.0
      %665 = vmatpush1.xpose.msra.mxu0 0.0
      %666 = vmatprep.subr.mxu0 0.0
      %667 = vmatpush1.xpose.msra.mxu0 0.0
      %668 = vmatprep.subr.mxu0 0.0
      %669 = vmatpush1.xpose.msra.mxu0 0.0
      %670 = vmatprep.subr.mxu0 0.0
      %671 = vmatpush1.xpose.msra.mxu0 0.0
      %672 = vmatprep.subr.mxu0 0.0
      %673 = vmatpush1.xpose.msra.mxu0 0.0
      %674 = vmatprep.subr.mxu0 0.0
      %675 = vmatpush1.xpose.msra.mxu0 0.0
      %676 = vmatprep.subr.mxu0 0.0
      %677 = vmatpush1.xpose.msra.mxu0 0.0
      %678 = vmatprep.subr.mxu0 0.0
      %679 = vmatpush1.xpose.msra.mxu0 0.0
      %680 = vmatprep.subr.mxu0 0.0
      %681 = vmatpush1.xpose.msra.mxu0 0.0
      %682 = vmatprep.subr.mxu0 0.0
      %683 = vmatpush1.xpose.msra.mxu0 0.0
      %684 = vmatprep.subr.mxu0 0.0
      %685 = vmatpush1.xpose.msra.mxu0 0.0
      %686 = vmatprep.subr.mxu0 0.0
      %687 = vmatpush1.xpose.msra.mxu0 0.0
      %688 = vmatprep.mubr.f32.mxu0 0.0
      %689 = vmatmul.mubr.f32.gmra.mrb[0].mxu0 %v618
      %v690 = vpop.f32.mrb[0].mxu0
      %v691 = vadd.f32 0.0, %v690
      %v692 = vpop.f32.mrb[0].mxu0
      %693 = vmatprep.mubr.f32.mxu0 0.0
      %694 = vmatmul.mubr.f32.gmra.mrb[0].mxu0 %v620
      %v695 = vpop.f32.mrb[0].mxu0
      %v696 = vadd.f32 0.0, %v695
      %v697 = vpop.f32.mrb[0].mxu0
      %698 = vdwg.mxu0
      %v699 = vmul.f32 %v691, 0.35355338
      %v700 = vmul.f32 %v696, 0.35355338
      %v701 = vsel %vm422, %v699, -inf
      %702 = vmax.xlane.f32.xlu0 %v701
      %v703 = vpop.xlane.xlu0 %702
      %v704 = vsel %vm422, %v700, -inf
      %705 = vmax.xlane.f32.xlu0 %v704
      %v706 = vpop.xlane.xlu0 %705
      %v707 = vsub.f32 %v699, %v703
      %v708 = vsub.f32 %v700, %v706
      %v709 = vmul.f32 %v707, 1.442695
      %v710 = vpow.pop %v709
      %v711 = vmul.f32 %v708, 1.442695
      %v712 = vpow.pop %v711
      %v713 = vsel %vm422, %v710, 0.0
      %714 = vadd.xlane.f32.xlu0 %v713
      %v715 = vpop.xlane.xlu0 %714
      %v716 = vsel %vm422, %v712, 0.0
      %717 = vadd.xlane.f32.xlu0 %v716
      %v718 = vpop.xlane.xlu0 %717
      %720 = vrot.lane.b32.xlu0 %v418, 120
      %v721 = vpop.permute.xlu0 %720
      %v724 = vsel %vm422, %v710, 0
      %v727 = vsel %vm422, %v712, 0
      %729 = vmatprep.subr.mxu0 0.0
      %730 = vmatpush1.msra.mxu0 %v721
      %731 = vmatprep.subr.mxu0 0.0
      %732 = vmatpush1.msra.mxu0 0.0
      %733 = vmatprep.subr.mxu0 0.0
      %734 = vmatpush1.msra.mxu0 0.0
      %735 = vmatprep.subr.mxu0 0.0
      %736 = vmatpush1.msra.mxu0 0.0
      %737 = vmatprep.subr.mxu0 0.0
      %738 = vmatpush1.msra.mxu0 0.0
      %739 = vmatprep.subr.mxu0 0.0
      %740 = vmatpush1.msra.mxu0 0.0
      %741 = vmatprep.subr.mxu0 0.0
      %742 = vmatpush1.msra.mxu0 0.0
      %743 = vmatprep.subr.mxu0 0.0
      %744 = vmatpush1.msra.mxu0 0.0
      %745 = vmatprep.subr.mxu0 0.0
      %746 = vmatpush1.msra.mxu0 0.0
      %747 = vmatprep.subr.mxu0 0.0
      %748 = vmatpush1.msra.mxu0 0.0
      %749 = vmatprep.subr.mxu0 0.0
      %750 = vmatpush1.msra.mxu0 0.0
      %751 = vmatprep.subr.mxu0 0.0
      %752 = vmatpush1.msra.mxu0 0.0
      %753 = vmatprep.subr.mxu0 0.0
      %754 = vmatpush1.msra.mxu0 0.0
      %755 = vmatprep.subr.mxu0 0.0
      %756 = vmatpush1.msra.mxu0 0.0
      %757 = vmatprep.subr.mxu0 0.0
      %758 = vmatpush1.msra.mxu0 0.0
      %759 = vmatprep.subr.mxu0 0.0
      %760 = vmatpush1.msra.mxu0 0.0
      %761 = vmatprep.subr.mxu0 0.0
      %762 = vmatpush1.msra.mxu0 0.0
      %763 = vmatprep.subr.mxu0 0.0
      %764 = vmatpush1.msra.mxu0 0.0
      %765 = vmatprep.subr.mxu0 0.0
      %766 = vmatpush1.msra.mxu0 0.0
      %767 = vmatprep.subr.mxu0 0.0
      %768 = vmatpush1.msra.mxu0 0.0
      %769 = vmatprep.subr.mxu0 0.0
      %770 = vmatpush1.msra.mxu0 0.0
      %771 = vmatprep.subr.mxu0 0.0
      %772 = vmatpush1.msra.mxu0 0.0
      %773 = vmatprep.subr.mxu0 0.0
      %774 = vmatpush1.msra.mxu0 0.0
      %775 = vmatprep.subr.mxu0 0.0
      %776 = vmatpush1.msra.mxu0 0.0
      %777 = vmatprep.subr.mxu0 0.0
      %778 = vmatpush1.msra.mxu0 0.0
      %779 = vmatprep.subr.mxu0 0.0
      %780 = vmatpush1.msra.mxu0 0.0
      %781 = vmatprep.subr.mxu0 0.0
      %782 = vmatpush1.msra.mxu0 0.0
      %783 = vmatprep.subr.mxu0 0.0
      %784 = vmatpush1.msra.mxu0 0.0
      %785 = vmatprep.subr.mxu0 0.0
      %786 = vmatpush1.msra.mxu0 0.0
      %787 = vmatprep.subr.mxu0 0.0
      %788 = vmatpush1.msra.mxu0 0.0
      %789 = vmatprep.subr.mxu0 0.0
      %790 = vmatpush1.msra.mxu0 0.0
      %791 = vmatprep.subr.mxu0 0.0
      %792 = vmatpush1.msra.mxu0 0.0
      %793 = vmatprep.mubr.f32.mxu0 0.0
      %794 = vmatmul.mubr.f32.gmra.mrb[0].mxu0 %v724
      %v795 = vpop.f32.mrb[0].mxu0
      %v796 = vadd.f32 0.0, %v795
      %v797 = vpop.f32.mrb[0].mxu0
      %798 = vmatprep.mubr.f32.mxu0 0.0
      %799 = vmatmul.mubr.f32.gmra.mrb[0].mxu0 %v727
      %v800 = vpop.f32.mrb[0].mxu0
      %v801 = vadd.f32 0.0, %v800
      %v802 = vpop.f32.mrb[0].mxu0
      %803 = vdwg.mxu0
      %v804 = vrcp.pop %v715
      %v805 = vrcp.pop %v718
      %v806 = vmul.f32 %v796, %v804
      %v807 = vmul.f32 %v801, %v805
      %v809 = vsel %vm422, %v806, 0
      %v812 = vsel %vm422, %v807, 0
      %814 = vmatprep.subr.mxu0 0.0
      %815 = vmatpush1.msra.mxu0 %v420
      %816 = vmatprep.subr.mxu0 0.0
      %817 = vmatpush1.msra.mxu0 0.0
      %818 = vmatprep.subr.mxu0 0.0
      %819 = vmatpush1.msra.mxu0 0.0
      %820 = vmatprep.subr.mxu0 0.0
      %821 = vmatpush1.msra.mxu0 0.0
      %822 = vmatprep.subr.mxu0 0.0
      %823 = vmatpush1.msra.mxu0 0.0
      %824 = vmatprep.subr.mxu0 0.0
      %825 = vmatpush1.msra.mxu0 0.0
      %826 = vmatprep.subr.mxu0 0.0
      %827 = vmatpush1.msra.mxu0 0.0
      %828 = vmatprep.subr.mxu0 0.0
      %829 = vmatpush1.msra.mxu0 0.0
      %830 = vmatprep.subr.mxu0 0.0
      %831 = vmatpush1.msra.mxu0 0.0
      %832 = vmatprep.subr.mxu0 0.0
      %833 = vmatpush1.msra.mxu0 0.0
      %834 = vmatprep.subr.mxu0 0.0
      %835 = vmatpush1.msra.mxu0 0.0
      %836 = vmatprep.subr.mxu0 0.0
      %837 = vmatpush1.msra.mxu0 0.0
      %838 = vmatprep.subr.mxu0 0.0
      %839 = vmatpush1.msra.mxu0 0.0
      %840 = vmatprep.subr.mxu0 0.0
      %841 = vmatpush1.msra.mxu0 0.0
      %842 = vmatprep.subr.mxu0 0.0
      %843 = vmatpush1.msra.mxu0 0.0
      %844 = vmatprep.subr.mxu0 0.0
      %845 = vmatpush1.msra.mxu0 0.0
      %846 = vmatprep.subr.mxu0 0.0
      %847 = vmatpush1.msra.mxu0 0.0
      %848 = vmatprep.subr.mxu0 0.0
      %849 = vmatpush1.msra.mxu0 0.0
      %850 = vmatprep.subr.mxu0 0.0
      %851 = vmatpush1.msra.mxu0 0.0
      %852 = vmatprep.subr.mxu0 0.0
      %853 = vmatpush1.msra.mxu0 0.0
      %854 = vmatprep.subr.mxu0 0.0
      %855 = vmatpush1.msra.mxu0 0.0
      %856 = vmatprep.subr.mxu0 0.0
      %857 = vmatpush1.msra.mxu0 0.0
      %858 = vmatprep.subr.mxu0 0.0
      %859 = vmatpush1.msra.mxu0 0.0
      %860 = vmatprep.subr.mxu0 0.0
      %861 = vmatpush1.msra.mxu0 0.0
      %862 = vmatprep.subr.mxu0 0.0
      %863 = vmatpush1.msra.mxu0 0.0
      %864 = vmatprep.subr.mxu0 0.0
      %865 = vmatpush1.msra.mxu0 0.0
      %866 = vmatprep.subr.mxu0 0.0
      %867 = vmatpush1.msra.mxu0 0.0
      %868 = vmatprep.subr.mxu0 0.0
      %869 = vmatpush1.msra.mxu0 0.0
      %870 = vmatprep.subr.mxu0 0.0
      %871 = vmatpush1.msra.mxu0 0.0
      %872 = vmatprep.subr.mxu0 0.0
      %873 = vmatpush1.msra.mxu0 0.0
      %874 = vmatprep.subr.mxu0 0.0
      %875 = vmatpush1.msra.mxu0 0.0
      %876 = vmatprep.subr.mxu0 0.0
      %877 = vmatpush1.msra.mxu0 0.0
      %878 = vmatprep.mubr.f32.mxu0 0.0
      %879 = vmatmul.mubr.f32.gmra.mrb[0].mxu0 %v809
      %v880 = vpop.f32.mrb[0].mxu0
      %v881 = vadd.f32 0.0, %v880
      %v882 = vpop.f32.mrb[0].mxu0
      %883 = vmatprep.mubr.f32.mxu0 0.0
      %884 = vmatmul.mubr.f32.gmra.mrb[0].mxu0 %v812
      %v885 = vpop.f32.mrb[0].mxu0
      %v886 = vadd.f32 0.0, %v885
      %v887 = vpop.f32.mrb[0].mxu0
      %888 = vdwg.mxu0
      %v890 = vsel %vm422, %v610, 0
      %v893 = vsel %vm422, %v611, 0
      %895 = vmatprep.subr.mxu0 0.0
      %896 = vmatpush1.msra.mxu0 %v419
      %897 = vmatprep.subr.mxu0 0.0
      %898 = vmatpush1.msra.mxu0 0.0
      %899 = vmatprep.subr.mxu0 0.0
      %900 = vmatpush1.msra.mxu0 0.0
      %901 = vmatprep.subr.mxu0 0.0
      %902 = vmatpush1.msra.mxu0 0.0
      %903 = vmatprep.subr.mxu0 0.0
      %904 = vmatpush1.msra.mxu0 0.0
      %905 = vmatprep.subr.mxu0 0.0
      %906 = vmatpush1.msra.mxu0 0.0
      %907 = vmatprep.subr.mxu0 0.0
      %908 = vmatpush1.msra.mxu0 0.0
      %909 = vmatprep.subr.mxu0 0.0
      %910 = vmatpush1.msra.mxu0 0.0
      %911 = vmatprep.subr.mxu0 0.0
      %912 = vmatpush1.msra.mxu0 0.0
      %913 = vmatprep.subr.mxu0 0.0
      %914 = vmatpush1.msra.mxu0 0.0
      %915 = vmatprep.subr.mxu0 0.0
      %916 = vmatpush1.msra.mxu0 0.0
      %917 = vmatprep.subr.mxu0 0.0
      %918 = vmatpush1.msra.mxu0 0.0
      %919 = vmatprep.subr.mxu0 0.0
      %920 = vmatpush1.msra.mxu0 0.0
      %921 = vmatprep.subr.mxu0 0.0
      %922 = vmatpush1.msra.mxu0 0.0
      %923 = vmatprep.subr.mxu0 0.0
      %924 = vmatpush1.msra.mxu0 0.0
      %925 = vmatprep.subr.mxu0 0.0
      %926 = vmatpush1.msra.mxu0 0.0
      %927 = vmatprep.subr.mxu0 0.0
      %928 = vmatpush1.msra.mxu0 0.0
      %929 = vmatprep.subr.mxu0 0.0
      %930 = vmatpush1.msra.mxu0 0.0
      %931 = vmatprep.subr.mxu0 0.0
      %932 = vmatpush1.msra.mxu0 0.0
      %933 = vmatprep.subr.mxu0 0.0
      %934 = vmatpush1.msra.mxu0 0.0
      %935 = vmatprep.subr.mxu0 0.0
      %936 = vmatpush1.msra.mxu0 0.0
      %937 = vmatprep.subr.mxu0 0.0
      %938 = vmatpush1.msra.mxu0 0.0
      %939 = vmatprep.subr.mxu0 0.0
      %940 = vmatpush1.msra.mxu0 0.0
      %941 = vmatprep.subr.mxu0 0.0
      %942 = vmatpush1.msra.mxu0 0.0
      %943 = vmatprep.subr.mxu0 0.0
      %944 = vmatpush1.msra.mxu0 0.0
      %945 = vmatprep.subr.mxu0 0.0
      %946 = vmatpush1.msra.mxu0 0.0
      %947 = vmatprep.subr.mxu0 0.0
      %948 = vmatpush1.msra.mxu0 0.0
      %949 = vmatprep.subr.mxu0 0.0
      %950 = vmatpush1.msra.mxu0 0.0
      %951 = vmatprep.subr.mxu0 0.0
      %952 = vmatpush1.msra.mxu0 0.0
      %953 = vmatprep.subr.mxu0 0.0
      %954 = vmatpush1.msra.mxu0 0.0
      %955 = vmatprep.subr.mxu0 0.0
      %956 = vmatpush1.msra.mxu0 0.0
      %957 = vmatprep.subr.mxu0 0.0
      %958 = vmatpush1.msra.mxu0 0.0
      %959 = vmatprep.mubr.f32.mxu0 0.0
      %960 = vmatmul.mubr.f32.gmra.mrb[0].mxu0 %v890
      %v961 = vpop.f32.mrb[0].mxu0
      %v962 = vadd.f32 %v881, %v961
      %v963 = vpop.f32.mrb[0].mxu0
      %964 = vmatprep.mubr.f32.mxu0 0.0
      %965 = vmatmul.mubr.f32.gmra.mrb[0].mxu0 %v893
      %v966 = vpop.f32.mrb[0].mxu0
      %v967 = vadd.f32 %v886, %v966
      %v968 = vpop.f32.mrb[0].mxu0
      %969 = vdwg.mxu0
      %v971 = vlaneseq
      %v972 = vshrl.u32 %v971, 7
      %v973 = vsub.s32 0, %v972
      %v974 = vrot.slane %v421, %v973
      %v976 = vadd.f32 %v962, %v974
      %v977 = vadd.f32 %v967, %v974
      %v978 = vld [vmem:[%s403] sm:$0xff]
      %v979 = vld [vmem:[%s403 + $0x8] sm:$0xff]
      %v980 = vadd.f32 %v978, %v976
      %v981 = vadd.f32 %v979, %v977
      %v982 = vld [vmem:[%s6] sm:$0x1]
      %v983 = vld [vmem:[%s7] sm:$0x1]
      %vm984 = vcmask 261120
      %v985 = vsel %vm984, %v980, 0.0
      %986 = vadd.xlane.f32.xlu0 %v985
      %v987 = vpop.xlane.xlu0 %986
      %v988 = vsel %vm984, %v981, 0.0
      %989 = vadd.xlane.f32.xlu0 %v988
      %v990 = vpop.xlane.xlu0 %989
      %v991 = vrcp.pop 32.0
      %v992 = vmul.f32 %v987, %v991
      %v993 = vmul.f32 %v990, %v991
      %v994 = vsub.f32 %v980, %v992
      %v995 = vsub.f32 %v981, %v993
      %v996 = vmul.f32 %v994, %v994
      %v997 = vmul.f32 %v995, %v995
      %v998 = vsel %vm984, %v996, 0.0
      %999 = vadd.xlane.f32.xlu0 %v998
      %v1000 = vpop.xlane.xlu0 %999
      %v1001 = vsel %vm984, %v997, 0.0
      %1002 = vadd.xlane.f32.xlu0 %v1001
      %v1003 = vpop.xlane.xlu0 %1002
      %v1004 = vmul.f32 %v1000, %v991
      %v1005 = vmul.f32 %v1003, %v991
      %v1006 = vadd.f32 %v1004, 1e-05
      %v1007 = vadd.f32 %v1005, 1e-05
      %v1008 = vrsqrt.pop %v1006
      %v1009 = vrsqrt.pop %v1007
      %v1010 = vmul.f32 %v994, %v1008
      %v1011 = vmul.f32 %v995, %v1009
      %v1013 = vlaneseq
      %v1014 = vshrl.u32 %v1013, 7
      %v1015 = vsub.s32 0, %v1014
      %v1016 = vrot.slane %v982, %v1015
      %v1018 = vmul.f32 %v1010, %v1016
      %v1019 = vmul.f32 %v1011, %v1016
      %v1021 = vlaneseq
      %v1022 = vshrl.u32 %v1021, 7
      %v1023 = vsub.s32 0, %v1022
      %v1024 = vrot.slane %v983, %v1023
      %v1026 = vadd.f32 %v1018, %v1024
      %v1027 = vadd.f32 %v1019, %v1024
      %1028 = vst.msk [vmem:[%s413] sm:$0xff] %vm984, %v1026
      %1029 = vst.msk [vmem:[%s413 + $0x8] sm:$0xff] %vm984, %v1027
      %s1030 = smul.u32 2, %s24
      %p1031 = scmp.lt.s32.totalorder %s23, 1
      %s1032 = scalar_select %p1031, %s23, 1
      %p1033 = scmp.lt.s32.totalorder %s1030, 1
      %s1034 = scalar_select %p1033, %s1030, 1
      %s1035 = smul.addr %s1032, 2
      %s1036 = sadd.s32 %s1034, %s1035
      %s1037 = smul.addr %s1036, 8
      %s1038 = scalar_lea.vmem %s8, %s1037
      // Predicated region
      $region53: #{two_way_transformer.10} parent=51 // pred_check
        %p1039 = pneg %p243
      $region54: #{two_way_transformer.10} parent=51 // pred_check_branch
        %1041 = sbr.rel (%p1039) target = $region56
      $region55: #{two_way_transformer.10} parent=51 // pred_region
        %s1042 = smul.u32 2, %s24
      $region56: #{two_way_transformer.10} parent=51 // pred_fallthru
        _
    $region52: #{two_way_transformer.10} parent=5 // pred_fallthru
      _
    %p1043 = scmp.le.s32.totalorder 2, %s14
    // Predicated region
    $region57: #{two_way_transformer.10} parent=5 // pred_check
      %p1044 = pneg %p1043
    $region58: #{two_way_transformer.10} parent=5 // pred_check_branch
      %1046 = sbr.rel (%p1044) target = $region60
    $region59: #{two_way_transformer.10} parent=5 // pred_region
      %s1047 = ssub.s32 %s14, 2
      // Predicated region
      $region61: #{two_way_transformer.10} parent=59 // pred_check
        %p1048 = pneg %p249
      $region62: #{two_way_transformer.10} parent=59 // pred_check_branch
        %1050 = sbr.rel (%p1048) target = $region64
      $region63: #{two_way_transformer.10} parent=59 // pred_region
        %s1051 = smul.u32 2, %s26
        %p1052 = scmp.lt.s32.totalorder %s25, 1
        %s1053 = scalar_select %p1052, %s25, 1
        %p1054 = scmp.lt.s32.totalorder %s1051, 1
        %s1055 = scalar_select %p1054, %s1051, 1
        %s1056 = smul.addr %s1053, 2
        %s1057 = sadd.s32 %s1055, %s1056
        %s1058 = smul.addr %s1057, 8
        %s1059 = scalar_lea.vmem %s8, %s1058
      $region64: #{two_way_transformer.10} parent=59 // pred_fallthru
        _
    $region60: #{two_way_transformer.10} parent=5 // pred_fallthru
      _
  $region6: #{two_way_transformer.10} parent=0 // loop_footer
    %s18 = sadd.s32 1, %s14
  $region7: #{two_way_transformer.10} parent=0 // loop_footer_branch
    %13 = sbr.rel target = $region3
  $region8: #{two_way_transformer.10} parent=0 // loop_exit
    _

// kernel: two_way_transformer.9
$region0: #{two_way_transformer.9}
  #allocation0 [shape = 'u32[]', space=smem, size = 0x4, offset = 0x4, fixed_abs, tag = 'smem constant byte address 0x4 - core index']
  #allocation1 [shape = 'u32[144,128]{1,0:T(1,128)}', space=vmem, size = 0x12000, scoped, tag = 'internal scratch']
  %s0 = inlined_call_operand.smem [shape: u32[33], index: -1, kind: input, shape index: {}]
  %s1 = sld [smem:[%s0]]
  %s2 = scalar_lea.smem %s0, 1
  %s3 = sld [smem:[%s2]]
  %s4 = scalar_lea.smem %s0, 2
  %s5 = sld [smem:[%s4]]
  %s6 = scalar_lea.smem %s0, 3
  %s7 = sld [smem:[%s6]]
  %s8 = scalar_lea.smem %s0, 4
  %s9 = sld [smem:[%s8]]
  %s10 = scalar_lea.smem %s0, 5
  %s11 = sld [smem:[%s10]]
  %s12 = scalar_lea.smem %s0, 6
  %s13 = sld [smem:[%s12]]
  %s14 = scalar_lea.smem %s0, 7
  %s15 = sld [smem:[%s14]]
  %s16 = scalar_lea.smem %s0, 8
  %s17 = sld [smem:[%s16]]
  %s18 = scalar_lea.smem %s0, 9
  %s19 = sld [smem:[%s18]]
  %s20 = scalar_lea.smem %s0, 10
  %s21 = sld [smem:[%s20]]
  %s22 = scalar_lea.smem %s0, 11
  %s23 = sld [smem:[%s22]]
  %s24 = scalar_lea.smem %s0, 12
  %s25 = sld [smem:[%s24]]
  %s26 = scalar_lea.smem %s0, 13
  %s27 = sld [smem:[%s26]]
  %s28 = scalar_lea.smem %s0, 14
  %s29 = sld [smem:[%s28]]
  %s30 = scalar_lea.smem %s0, 15
  %s31 = sld [smem:[%s30]]
  %s32 = scalar_lea.smem %s0, 16
  %s33 = sld [smem:[%s32]]
  %s34 = scalar_lea.smem %s0, 17
  %s35 = sld [smem:[%s34]]
  %s36 = scalar_lea.smem %s0, 18
  %s37 = sld [smem:[%s36]]
  %s38 = scalar_lea.smem %s0, 19
  %s39 = sld [smem:[%s38]]
  %s40 = scalar_lea.smem %s0, 20
  %s41 = sld [smem:[%s40]]
  %s42 = scalar_lea.smem %s0, 21
  %s43 = sld [smem:[%s42]]
  %s44 = scalar_lea.smem %s0, 22
  %s45 = sld [smem:[%s44]]
  %s46 = scalar_lea.smem %s0, 23
  %s47 = sld [smem:[%s46]]
  %s48 = scalar_lea.smem %s0, 24
  %s49 = sld [smem:[%s48]]
  %s50 = scalar_lea.smem %s0, 25
  %s51 = sld [smem:[%s50]]
  %s52 = scalar_lea.smem %s0, 26
  %s53 = sld [smem:[%s52]]
  %s54 = scalar_lea.smem %s0, 27
  %s55 = sld [smem:[%s54]]
  %s56 = scalar_lea.smem %s0, 28
  %s57 = sld [smem:[%s56]]
  %s58 = scalar_lea.smem %s0, 29
  %s59 = sld [smem:[%s58]]
  %s60 = scalar_lea.smem %s0, 30
  %s61 = sld [smem:[%s60]]
  %s62 = scalar_lea.smem %s0, 31
  %s63 = sld [smem:[%s62]]
  %s64 = scalar_lea.smem %s0, 32
  %s65 = sld [smem:[%s64]]
  %66 = xla_tuple %s61, %s63, %s65
  %s67 = sld [smem:[#allocation0]]
  $region169: #{two_way_transformer.9} parent=0
    _
  %s69 = ssub.s32 1, %s67
  %s70 = scalar_select 0, %s69, %s67
  loop: start=0, step=1, limit=4
  $region2: #{two_way_transformer.9} parent=0 // loop_pre_header
    _
  $region3: #{two_way_transformer.9} parent=0 // loop_header
    %s72 = sphi 0, %s76
    %p73 = scmp.ge.s32.totalorder %s72, 4
    %s82 = sphi 0, %s84
    %s85 = sphi 0, %s82
    %s86 = sphi 0, %s85
    %s102 = sphi 0, %s86
    %s108 = sphi 0, %s110
    %s111 = sphi 0, %s108
    %s112 = sphi 0, %s111
    %s128 = sphi 0, %s112
    %s134 = sphi 0, %s136
    %s137 = sphi 0, %s134
    %s138 = sphi 0, %s137
    %s154 = sphi 0, %s138
    %s160 = sphi 0, %s162
    %s163 = sphi 0, %s160
    %s164 = sphi 0, %s163
    %s180 = sphi 0, %s164
    %s184 = sphi 0, %s184
    %s186 = sphi 0, %s184
    %s187 = sphi 0, %s186
    %s201 = sphi 0, %s187
    %s205 = sphi 0, %s205
    %s207 = sphi 0, %s205
    %s208 = sphi 0, %s207
    %s222 = sphi 0, %s208
    %s226 = sphi 0, %s226
    %s228 = sphi 0, %s226
    %s229 = sphi 0, %s228
    %s243 = sphi 0, %s229
    %s247 = sphi 0, %s247
    %s249 = sphi 0, %s247
    %s250 = sphi 0, %s249
    %s264 = sphi 0, %s250
    %s268 = sphi 0, %s268
    %s270 = sphi 0, %s268
    %s271 = sphi 0, %s270
    %s285 = sphi 0, %s271
    %s289 = sphi 0, %s289
    %s291 = sphi 0, %s289
    %s292 = sphi 0, %s291
    %s306 = sphi 0, %s292
    %s310 = sphi 0, %s310
    %s312 = sphi 0, %s310
    %s313 = sphi 0, %s312
    %s327 = sphi 0, %s313
    %s331 = sphi 0, %s331
    %s333 = sphi 0, %s331
    %s334 = sphi 0, %s333
    %s348 = sphi 0, %s334
    %s352 = sphi 0, %s352
    %s354 = sphi 0, %s352
    %s355 = sphi 0, %s354
    %s369 = sphi 0, %s355
    %s373 = sphi 0, %s373
    %s375 = sphi 0, %s373
    %s376 = sphi 0, %s375
    %s390 = sphi 0, %s376
    %s394 = sphi 0, %s394
    %s396 = sphi 0, %s394
    %s397 = sphi 0, %s396
    %s411 = sphi 0, %s397
    %s415 = sphi 0, %s415
    %s417 = sphi 0, %s415
    %s418 = sphi 0, %s417
    %s432 = sphi 0, %s418
    %s436 = sphi 0, %s436
    %s438 = sphi 0, %s436
    %s439 = sphi 0, %s438
    %s453 = sphi 0, %s439
    %s457 = sphi 0, %s457
    %s459 = sphi 0, %s457
    %s460 = sphi 0, %s459
    %s474 = sphi 0, %s460
    %s478 = sphi 0, %s478
    %s480 = sphi 0, %s478
    %s481 = sphi 0, %s480
    %s495 = sphi 0, %s481
    %s499 = sphi 0, %s499
    %s501 = sphi 0, %s499
    %s502 = sphi 0, %s501
    %s516 = sphi 0, %s502
    %s520 = sphi 0, %s520
    %s522 = sphi 0, %s520
    %s523 = sphi 0, %s522
    %s537 = sphi 0, %s523
    %s541 = sphi 0, %s541
    %s543 = sphi 0, %s541
    %s544 = sphi 0, %s543
    %s558 = sphi 0, %s544
    %s562 = sphi 0, %s562
    %s564 = sphi 0, %s562
    %s565 = sphi 0, %s564
    %s579 = sphi 0, %s565
    %s583 = sphi 0, %s583
    %s585 = sphi 0, %s583
    %s586 = sphi 0, %s585
    %s600 = sphi 0, %s586
    %s604 = sphi 0, %s604
    %s606 = sphi 0, %s604
    %s607 = sphi 0, %s606
    %s621 = sphi 0, %s607
    %s625 = sphi 0, %s625
    %s627 = sphi 0, %s625
    %s628 = sphi 0, %s627
    %s642 = sphi 0, %s628
    %s646 = sphi 0, %s646
    %s648 = sphi 0, %s646
    %s649 = sphi 0, %s648
    %s663 = sphi 0, %s649
    %s667 = sphi 0, %s667
    %s669 = sphi 0, %s667
    %s670 = sphi 0, %s669
    %s684 = sphi 0, %s670
    %s688 = sphi 0, %s688
    %s690 = sphi 0, %s688
    %s691 = sphi 0, %s690
    %s705 = sphi 0, %s691
    %s709 = sphi 0, %s709
    %s711 = sphi 0, %s709
    %s712 = sphi 0, %s711
    %s726 = sphi 0, %s712
    %s732 = sphi 0, %s734
    %s735 = sphi 0, %s732
    %s736 = sphi 0, %s735
    %s752 = sphi 0, %s736
    %s758 = sphi 0, %s760
    %s761 = sphi 0, %s758
    %s762 = sphi 0, %s761
    %s778 = sphi 0, %s762
    %s784 = sphi 0, %s786
    %s787 = sphi 0, %s784
    %s788 = sphi 0, %s787
    %s804 = sphi 0, %s788
  $region4: #{two_way_transformer.9} parent=0 // loop_header_branch
    %75 = sbr.rel (%p73) target = $region8
  $region5: #{two_way_transformer.9} parent=0 // loop_body
    %s77 = ssub.s32 %s72, 1
    %s78 = ssub.s32 %s72, 2
    %s79 = sadd.s32 %s72, 1
    %s80 = ssub.s32 %s72, %s79
    %p81 = scmp.eq.s32.totalorder %s80, 0
    %s83 = sadd.s32 %s82, 1
    %s84 = scalar_select %p81, %s82, %s83
    %p87 = pneg %p81
    %p88 = scmp.eq.s32.totalorder %s72, 1
    %p89 = por %p87, %p88
    %p90 = scmp.ne.s32.totalorder %s82, %s85
    %p91 = scmp.eq.s32.totalorder %s72, 0
    %p92 = por %p90, %p91
    %p93 = scmp.ne.s32.totalorder %s82, %s85
    %p94 = scmp.eq.s32.totalorder %s77, 1
    %p95 = por %p93, %p94
    %p96 = scmp.ne.s32.totalorder %s85, %s86
    %p97 = scmp.eq.s32.totalorder %s77, 0
    %p98 = por %p96, %p97
    %p99 = scmp.ne.s32.totalorder %s85, %s86
    %p100 = scmp.eq.s32.totalorder %s78, 1
    %p101 = por %p99, %p100
    %p103 = scmp.ne.s32.totalorder %s86, %s102
    %p104 = scmp.eq.s32.totalorder %s78, 0
    %p105 = por %p103, %p104
    %s106 = ssub.s32 %s72, %s79
    %p107 = scmp.eq.s32.totalorder %s106, 0
    %s109 = sadd.s32 %s108, 1
    %s110 = scalar_select %p107, %s108, %s109
    %p113 = pneg %p107
    %p114 = scmp.eq.s32.totalorder %s72, 1
    %p115 = por %p113, %p114
    %p116 = scmp.ne.s32.totalorder %s108, %s111
    %p117 = scmp.eq.s32.totalorder %s72, 0
    %p118 = por %p116, %p117
    %p119 = scmp.ne.s32.totalorder %s108, %s111
    %p120 = scmp.eq.s32.totalorder %s77, 1
    %p121 = por %p119, %p120
    %p122 = scmp.ne.s32.totalorder %s111, %s112
    %p123 = scmp.eq.s32.totalorder %s77, 0
    %p124 = por %p122, %p123
    %p125 = scmp.ne.s32.totalorder %s111, %s112
    %p126 = scmp.eq.s32.totalorder %s78, 1
    %p127 = por %p125, %p126
    %p129 = scmp.ne.s32.totalorder %s112, %s128
    %p130 = scmp.eq.s32.totalorder %s78, 0
    %p131 = por %p129, %p130
    %s132 = ssub.s32 %s72, %s79
    %p133 = scmp.eq.s32.totalorder %s132, 0
    %s135 = sadd.s32 %s134, 1
    %s136 = scalar_select %p133, %s134, %s135
    %p139 = pneg %p133
    %p140 = scmp.eq.s32.totalorder %s72, 1
    %p141 = por %p139, %p140
    %p142 = scmp.ne.s32.totalorder %s134, %s137
    %p143 = scmp.eq.s32.totalorder %s72, 0
    %p144 = por %p142, %p143
    %p145 = scmp.ne.s32.totalorder %s134, %s137
    %p146 = scmp.eq.s32.totalorder %s77, 1
    %p147 = por %p145, %p146
    %p148 = scmp.ne.s32.totalorder %s137, %s138
    %p149 = scmp.eq.s32.totalorder %s77, 0
    %p150 = por %p148, %p149
    %p151 = scmp.ne.s32.totalorder %s137, %s138
    %p152 = scmp.eq.s32.totalorder %s78, 1
    %p153 = por %p151, %p152
    %p155 = scmp.ne.s32.totalorder %s138, %s154
    %p156 = scmp.eq.s32.totalorder %s78, 0
    %p157 = por %p155, %p156
    %s158 = ssub.s32 %s72, %s79
    %p159 = scmp.eq.s32.totalorder %s158, 0
    %s161 = sadd.s32 %s160, 1
    %s162 = scalar_select %p159, %s160, %s161
    %p165 = pneg %p159
    %p166 = scmp.eq.s32.totalorder %s72, 1
    %p167 = por %p165, %p166
    %p168 = scmp.ne.s32.totalorder %s160, %s163
    %p169 = scmp.eq.s32.totalorder %s72, 0
    %p170 = por %p168, %p169
    %p171 = scmp.ne.s32.totalorder %s160, %s163
    %p172 = scmp.eq.s32.totalorder %s77, 1
    %p173 = por %p171, %p172
    %p174 = scmp.ne.s32.totalorder %s163, %s164
    %p175 = scmp.eq.s32.totalorder %s77, 0
    %p176 = por %p174, %p175
    %p177 = scmp.ne.s32.totalorder %s163, %s164
    %p178 = scmp.eq.s32.totalorder %s78, 1
    %p179 = por %p177, %p178
    %p181 = scmp.ne.s32.totalorder %s164, %s180
    %p182 = scmp.eq.s32.totalorder %s78, 0
    %p183 = por %p181, %p182
    %s185 = sadd.s32 %s184, 1
    %p188 = scmp.eq.s32.totalorder %s72, 1
    %p189 = scmp.ne.s32.totalorder %s184, %s186
    %p190 = scmp.eq.s32.totalorder %s72, 0
    %p191 = por %p189, %p190
    %p192 = scmp.ne.s32.totalorder %s184, %s186
    %p193 = scmp.eq.s32.totalorder %s77, 1
    %p194 = por %p192, %p193
    %p195 = scmp.ne.s32.totalorder %s186, %s187
    %p196 = scmp.eq.s32.totalorder %s77, 0
    %p197 = por %p195, %p196
    %p198 = scmp.ne.s32.totalorder %s186, %s187
    %p199 = scmp.eq.s32.totalorder %s78, 1
    %p200 = por %p198, %p199
    %p202 = scmp.ne.s32.totalorder %s187, %s201
    %p203 = scmp.eq.s32.totalorder %s78, 0
    %p204 = por %p202, %p203
    %s206 = sadd.s32 %s205, 1
    %p209 = scmp.eq.s32.totalorder %s72, 1
    %p210 = scmp.ne.s32.totalorder %s205, %s207
    %p211 = scmp.eq.s32.totalorder %s72, 0
    %p212 = por %p210, %p211
    %p213 = scmp.ne.s32.totalorder %s205, %s207
    %p214 = scmp.eq.s32.totalorder %s77, 1
    %p215 = por %p213, %p214
    %p216 = scmp.ne.s32.totalorder %s207, %s208
    %p217 = scmp.eq.s32.totalorder %s77, 0
    %p218 = por %p216, %p217
    %p219 = scmp.ne.s32.totalorder %s207, %s208
    %p220 = scmp.eq.s32.totalorder %s78, 1
    %p221 = por %p219, %p220
    %p223 = scmp.ne.s32.totalorder %s208, %s222
    %p224 = scmp.eq.s32.totalorder %s78, 0
    %p225 = por %p223, %p224
    %s227 = sadd.s32 %s226, 1
    %p230 = scmp.eq.s32.totalorder %s72, 1
    %p231 = scmp.ne.s32.totalorder %s226, %s228
    %p232 = scmp.eq.s32.totalorder %s72, 0
    %p233 = por %p231, %p232
    %p234 = scmp.ne.s32.totalorder %s226, %s228
    %p235 = scmp.eq.s32.totalorder %s77, 1
    %p236 = por %p234, %p235
    %p237 = scmp.ne.s32.totalorder %s228, %s229
    %p238 = scmp.eq.s32.totalorder %s77, 0
    %p239 = por %p237, %p238
    %p240 = scmp.ne.s32.totalorder %s228, %s229
    %p241 = scmp.eq.s32.totalorder %s78, 1
    %p242 = por %p240, %p241
    %p244 = scmp.ne.s32.totalorder %s229, %s243
    %p245 = scmp.eq.s32.totalorder %s78, 0
    %p246 = por %p244, %p245
    %s248 = sadd.s32 %s247, 1
    %p251 = scmp.eq.s32.totalorder %s72, 1
    %p252 = scmp.ne.s32.totalorder %s247, %s249
    %p253 = scmp.eq.s32.totalorder %s72, 0
    %p254 = por %p252, %p253
    %p255 = scmp.ne.s32.totalorder %s247, %s249
    %p256 = scmp.eq.s32.totalorder %s77, 1
    %p257 = por %p255, %p256
    %p258 = scmp.ne.s32.totalorder %s249, %s250
    %p259 = scmp.eq.s32.totalorder %s77, 0
    %p260 = por %p258, %p259
    %p261 = scmp.ne.s32.totalorder %s249, %s250
    %p262 = scmp.eq.s32.totalorder %s78, 1
    %p263 = por %p261, %p262
    %p265 = scmp.ne.s32.totalorder %s250, %s264
    %p266 = scmp.eq.s32.totalorder %s78, 0
    %p267 = por %p265, %p266
    %s269 = sadd.s32 %s268, 1
    %p272 = scmp.eq.s32.totalorder %s72, 1
    %p273 = scmp.ne.s32.totalorder %s268, %s270
    %p274 = scmp.eq.s32.totalorder %s72, 0
    %p275 = por %p273, %p274
    %p276 = scmp.ne.s32.totalorder %s268, %s270
    %p277 = scmp.eq.s32.totalorder %s77, 1
    %p278 = por %p276, %p277
    %p279 = scmp.ne.s32.totalorder %s270, %s271
    %p280 = scmp.eq.s32.totalorder %s77, 0
    %p281 = por %p279, %p280
    %p282 = scmp.ne.s32.totalorder %s270, %s271
    %p283 = scmp.eq.s32.totalorder %s78, 1
    %p284 = por %p282, %p283
    %p286 = scmp.ne.s32.totalorder %s271, %s285
    %p287 = scmp.eq.s32.totalorder %s78, 0
    %p288 = por %p286, %p287
    %s290 = sadd.s32 %s289, 1
    %p293 = scmp.eq.s32.totalorder %s72, 1
    %p294 = scmp.ne.s32.totalorder %s289, %s291
    %p295 = scmp.eq.s32.totalorder %s72, 0
    %p296 = por %p294, %p295
    %p297 = scmp.ne.s32.totalorder %s289, %s291
    %p298 = scmp.eq.s32.totalorder %s77, 1
    %p299 = por %p297, %p298
    %p300 = scmp.ne.s32.totalorder %s291, %s292
    %p301 = scmp.eq.s32.totalorder %s77, 0
    %p302 = por %p300, %p301
    %p303 = scmp.ne.s32.totalorder %s291, %s292
    %p304 = scmp.eq.s32.totalorder %s78, 1
    %p305 = por %p303, %p304
    %p307 = scmp.ne.s32.totalorder %s292, %s306
    %p308 = scmp.eq.s32.totalorder %s78, 0
    %p309 = por %p307, %p308
    %s311 = sadd.s32 %s310, 1
    %p314 = scmp.eq.s32.totalorder %s72, 1
    %p315 = scmp.ne.s32.totalorder %s310, %s312
    %p316 = scmp.eq.s32.totalorder %s72, 0
    %p317 = por %p315, %p316
    %p318 = scmp.ne.s32.totalorder %s310, %s312
    %p319 = scmp.eq.s32.totalorder %s77, 1
    %p320 = por %p318, %p319
    %p321 = scmp.ne.s32.totalorder %s312, %s313
    %p322 = scmp.eq.s32.totalorder %s77, 0
    %p323 = por %p321, %p322
    %p324 = scmp.ne.s32.totalorder %s312, %s313
    %p325 = scmp.eq.s32.totalorder %s78, 1
    %p326 = por %p324, %p325
    %p328 = scmp.ne.s32.totalorder %s313, %s327
    %p329 = scmp.eq.s32.totalorder %s78, 0
    %p330 = por %p328, %p329
    %s332 = sadd.s32 %s331, 1
    %p335 = scmp.eq.s32.totalorder %s72, 1
    %p336 = scmp.ne.s32.totalorder %s331, %s333
    %p337 = scmp.eq.s32.totalorder %s72, 0
    %p338 = por %p336, %p337
    %p339 = scmp.ne.s32.totalorder %s331, %s333
    %p340 = scmp.eq.s32.totalorder %s77, 1
    %p341 = por %p339, %p340
    %p342 = scmp.ne.s32.totalorder %s333, %s334
    %p343 = scmp.eq.s32.totalorder %s77, 0
    %p344 = por %p342, %p343
    %p345 = scmp.ne.s32.totalorder %s333, %s334
    %p346 = scmp.eq.s32.totalorder %s78, 1
    %p347 = por %p345, %p346
    %p349 = scmp.ne.s32.totalorder %s334, %s348
    %p350 = scmp.eq.s32.totalorder %s78, 0
    %p351 = por %p349, %p350
    %s353 = sadd.s32 %s352, 1
    %p356 = scmp.eq.s32.totalorder %s72, 1
    %p357 = scmp.ne.s32.totalorder %s352, %s354
    %p358 = scmp.eq.s32.totalorder %s72, 0
    %p359 = por %p357, %p358
    %p360 = scmp.ne.s32.totalorder %s352, %s354
    %p361 = scmp.eq.s32.totalorder %s77, 1
    %p362 = por %p360, %p361
    %p363 = scmp.ne.s32.totalorder %s354, %s355
    %p364 = scmp.eq.s32.totalorder %s77, 0
    %p365 = por %p363, %p364
    %p366 = scmp.ne.s32.totalorder %s354, %s355
    %p367 = scmp.eq.s32.totalorder %s78, 1
    %p368 = por %p366, %p367
    %p370 = scmp.ne.s32.totalorder %s355, %s369
    %p371 = scmp.eq.s32.totalorder %s78, 0
    %p372 = por %p370, %p371
    %s374 = sadd.s32 %s373, 1
    %p377 = scmp.eq.s32.totalorder %s72, 1
    %p378 = scmp.ne.s32.totalorder %s373, %s375
    %p379 = scmp.eq.s32.totalorder %s72, 0
    %p380 = por %p378, %p379
    %p381 = scmp.ne.s32.totalorder %s373, %s375
    %p382 = scmp.eq.s32.totalorder %s77, 1
    %p383 = por %p381, %p382
    %p384 = scmp.ne.s32.totalorder %s375, %s376
    %p385 = scmp.eq.s32.totalorder %s77, 0
    %p386 = por %p384, %p385
    %p387 = scmp.ne.s32.totalorder %s375, %s376
    %p388 = scmp.eq.s32.totalorder %s78, 1
    %p389 = por %p387, %p388
    %p391 = scmp.ne.s32.totalorder %s376, %s390
    %p392 = scmp.eq.s32.totalorder %s78, 0
    %p393 = por %p391, %p392
    %s395 = sadd.s32 %s394, 1
    %p398 = scmp.eq.s32.totalorder %s72, 1
    %p399 = scmp.ne.s32.totalorder %s394, %s396
    %p400 = scmp.eq.s32.totalorder %s72, 0
    %p401 = por %p399, %p400
    %p402 = scmp.ne.s32.totalorder %s394, %s396
    %p403 = scmp.eq.s32.totalorder %s77, 1
    %p404 = por %p402, %p403
    %p405 = scmp.ne.s32.totalorder %s396, %s397
    %p406 = scmp.eq.s32.totalorder %s77, 0
    %p407 = por %p405, %p406
    %p408 = scmp.ne.s32.totalorder %s396, %s397
    %p409 = scmp.eq.s32.totalorder %s78, 1
    %p410 = por %p408, %p409
    %p412 = scmp.ne.s32.totalorder %s397, %s411
    %p413 = scmp.eq.s32.totalorder %s78, 0
    %p414 = por %p412, %p413
    %s416 = sadd.s32 %s415, 1
    %p419 = scmp.eq.s32.totalorder %s72, 1
    %p420 = scmp.ne.s32.totalorder %s415, %s417
    %p421 = scmp.eq.s32.totalorder %s72, 0
    %p422 = por %p420, %p421
    %p423 = scmp.ne.s32.totalorder %s415, %s417
    %p424 = scmp.eq.s32.totalorder %s77, 1
    %p425 = por %p423, %p424
    %p426 = scmp.ne.s32.totalorder %s417, %s418
    %p427 = scmp.eq.s32.totalorder %s77, 0
    %p428 = por %p426, %p427
    %p429 = scmp.ne.s32.totalorder %s417, %s418
    %p430 = scmp.eq.s32.totalorder %s78, 1
    %p431 = por %p429, %p430
    %p433 = scmp.ne.s32.totalorder %s418, %s432
    %p434 = scmp.eq.s32.totalorder %s78, 0
    %p435 = por %p433, %p434
    %s437 = sadd.s32 %s436, 1
    %p440 = scmp.eq.s32.totalorder %s72, 1
    %p441 = scmp.ne.s32.totalorder %s436, %s438
    %p442 = scmp.eq.s32.totalorder %s72, 0
    %p443 = por %p441, %p442
    %p444 = scmp.ne.s32.totalorder %s436, %s438
    %p445 = scmp.eq.s32.totalorder %s77, 1
    %p446 = por %p444, %p445
    %p447 = scmp.ne.s32.totalorder %s438, %s439
    %p448 = scmp.eq.s32.totalorder %s77, 0
    %p449 = por %p447, %p448
    %p450 = scmp.ne.s32.totalorder %s438, %s439
    %p451 = scmp.eq.s32.totalorder %s78, 1
    %p452 = por %p450, %p451
    %p454 = scmp.ne.s32.totalorder %s439, %s453
    %p455 = scmp.eq.s32.totalorder %s78, 0
    %p456 = por %p454, %p455
    %s458 = sadd.s32 %s457, 1
    %p461 = scmp.eq.s32.totalorder %s72, 1
    %p462 = scmp.ne.s32.totalorder %s457, %s459
    %p463 = scmp.eq.s32.totalorder %s72, 0
    %p464 = por %p462, %p463
    %p465 = scmp.ne.s32.totalorder %s457, %s459
    %p466 = scmp.eq.s32.totalorder %s77, 1
    %p467 = por %p465, %p466
    %p468 = scmp.ne.s32.totalorder %s459, %s460
    %p469 = scmp.eq.s32.totalorder %s77, 0
    %p470 = por %p468, %p469
    %p471 = scmp.ne.s32.totalorder %s459, %s460
    %p472 = scmp.eq.s32.totalorder %s78, 1
    %p473 = por %p471, %p472
    %p475 = scmp.ne.s32.totalorder %s460, %s474
    %p476 = scmp.eq.s32.totalorder %s78, 0
    %p477 = por %p475, %p476
    %s479 = sadd.s32 %s478, 1
    %p482 = scmp.eq.s32.totalorder %s72, 1
    %p483 = scmp.ne.s32.totalorder %s478, %s480
    %p484 = scmp.eq.s32.totalorder %s72, 0
    %p485 = por %p483, %p484
    %p486 = scmp.ne.s32.totalorder %s478, %s480
    %p487 = scmp.eq.s32.totalorder %s77, 1
    %p488 = por %p486, %p487
    %p489 = scmp.ne.s32.totalorder %s480, %s481
    %p490 = scmp.eq.s32.totalorder %s77, 0
    %p491 = por %p489, %p490
    %p492 = scmp.ne.s32.totalorder %s480, %s481
    %p493 = scmp.eq.s32.totalorder %s78, 1
    %p494 = por %p492, %p493
    %p496 = scmp.ne.s32.totalorder %s481, %s495
    %p497 = scmp.eq.s32.totalorder %s78, 0
    %p498 = por %p496, %p497
    %s500 = sadd.s32 %s499, 1
    %p503 = scmp.eq.s32.totalorder %s72, 1
    %p504 = scmp.ne.s32.totalorder %s499, %s501
    %p505 = scmp.eq.s32.totalorder %s72, 0
    %p506 = por %p504, %p505
    %p507 = scmp.ne.s32.totalorder %s499, %s501
    %p508 = scmp.eq.s32.totalorder %s77, 1
    %p509 = por %p507, %p508
    %p510 = scmp.ne.s32.totalorder %s501, %s502
    %p511 = scmp.eq.s32.totalorder %s77, 0
    %p512 = por %p510, %p511
    %p513 = scmp.ne.s32.totalorder %s501, %s502
    %p514 = scmp.eq.s32.totalorder %s78, 1
    %p515 = por %p513, %p514
    %p517 = scmp.ne.s32.totalorder %s502, %s516
    %p518 = scmp.eq.s32.totalorder %s78, 0
    %p519 = por %p517, %p518
    %s521 = sadd.s32 %s520, 1
    %p524 = scmp.eq.s32.totalorder %s72, 1
    %p525 = scmp.ne.s32.totalorder %s520, %s522
    %p526 = scmp.eq.s32.totalorder %s72, 0
    %p527 = por %p525, %p526
    %p528 = scmp.ne.s32.totalorder %s520, %s522
    %p529 = scmp.eq.s32.totalorder %s77, 1
    %p530 = por %p528, %p529
    %p531 = scmp.ne.s32.totalorder %s522, %s523
    %p532 = scmp.eq.s32.totalorder %s77, 0
    %p533 = por %p531, %p532
    %p534 = scmp.ne.s32.totalorder %s522, %s523
    %p535 = scmp.eq.s32.totalorder %s78, 1
    %p536 = por %p534, %p535
    %p538 = scmp.ne.s32.totalorder %s523, %s537
    %p539 = scmp.eq.s32.totalorder %s78, 0
    %p540 = por %p538, %p539
    %s542 = sadd.s32 %s541, 1
    %p545 = scmp.eq.s32.totalorder %s72, 1
    %p546 = scmp.ne.s32.totalorder %s541, %s543
    %p547 = scmp.eq.s32.totalorder %s72, 0
    %p548 = por %p546, %p547
    %p549 = scmp.ne.s32.totalorder %s541, %s543
    %p550 = scmp.eq.s32.totalorder %s77, 1
    %p551 = por %p549, %p550
    %p552 = scmp.ne.s32.totalorder %s543, %s544
    %p553 = scmp.eq.s32.totalorder %s77, 0
    %p554 = por %p552, %p553
    %p555 = scmp.ne.s32.totalorder %s543, %s544
    %p556 = scmp.eq.s32.totalorder %s78, 1
    %p557 = por %p555, %p556
    %p559 = scmp.ne.s32.totalorder %s544, %s558
    %p560 = scmp.eq.s32.totalorder %s78, 0
    %p561 = por %p559, %p560
    %s563 = sadd.s32 %s562, 1
    %p566 = scmp.eq.s32.totalorder %s72, 1
    %p567 = scmp.ne.s32.totalorder %s562, %s564
    %p568 = scmp.eq.s32.totalorder %s72, 0
    %p569 = por %p567, %p568
    %p570 = scmp.ne.s32.totalorder %s562, %s564
    %p571 = scmp.eq.s32.totalorder %s77, 1
    %p572 = por %p570, %p571
    %p573 = scmp.ne.s32.totalorder %s564, %s565
    %p574 = scmp.eq.s32.totalorder %s77, 0
    %p575 = por %p573, %p574
    %p576 = scmp.ne.s32.totalorder %s564, %s565
    %p577 = scmp.eq.s32.totalorder %s78, 1
    %p578 = por %p576, %p577
    %p580 = scmp.ne.s32.totalorder %s565, %s579
    %p581 = scmp.eq.s32.totalorder %s78, 0
    %p582 = por %p580, %p581
    %s584 = sadd.s32 %s583, 1
    %p587 = scmp.eq.s32.totalorder %s72, 1
    %p588 = scmp.ne.s32.totalorder %s583, %s585
    %p589 = scmp.eq.s32.totalorder %s72, 0
    %p590 = por %p588, %p589
    %p591 = scmp.ne.s32.totalorder %s583, %s585
    %p592 = scmp.eq.s32.totalorder %s77, 1
    %p593 = por %p591, %p592
    %p594 = scmp.ne.s32.totalorder %s585, %s586
    %p595 = scmp.eq.s32.totalorder %s77, 0
    %p596 = por %p594, %p595
    %p597 = scmp.ne.s32.totalorder %s585, %s586
    %p598 = scmp.eq.s32.totalorder %s78, 1
    %p599 = por %p597, %p598
    %p601 = scmp.ne.s32.totalorder %s586, %s600
    %p602 = scmp.eq.s32.totalorder %s78, 0
    %p603 = por %p601, %p602
    %s605 = sadd.s32 %s604, 1
    %p608 = scmp.eq.s32.totalorder %s72, 1
    %p609 = scmp.ne.s32.totalorder %s604, %s606
    %p610 = scmp.eq.s32.totalorder %s72, 0
    %p611 = por %p609, %p610
    %p612 = scmp.ne.s32.totalorder %s604, %s606
    %p613 = scmp.eq.s32.totalorder %s77, 1
    %p614 = por %p612, %p613
    %p615 = scmp.ne.s32.totalorder %s606, %s607
    %p616 = scmp.eq.s32.totalorder %s77, 0
    %p617 = por %p615, %p616
    %p618 = scmp.ne.s32.totalorder %s606, %s607
    %p619 = scmp.eq.s32.totalorder %s78, 1
    %p620 = por %p618, %p619
    %p622 = scmp.ne.s32.totalorder %s607, %s621
    %p623 = scmp.eq.s32.totalorder %s78, 0
    %p624 = por %p622, %p623
    %s626 = sadd.s32 %s625, 1
    %p629 = scmp.eq.s32.totalorder %s72, 1
    %p630 = scmp.ne.s32.totalorder %s625, %s627
    %p631 = scmp.eq.s32.totalorder %s72, 0
    %p632 = por %p630, %p631
    %p633 = scmp.ne.s32.totalorder %s625, %s627
    %p634 = scmp.eq.s32.totalorder %s77, 1
    %p635 = por %p633, %p634
    %p636 = scmp.ne.s32.totalorder %s627, %s628
    %p637 = scmp.eq.s32.totalorder %s77, 0
    %p638 = por %p636, %p637
    %p639 = scmp.ne.s32.totalorder %s627, %s628
    %p640 = scmp.eq.s32.totalorder %s78, 1
    %p641 = por %p639, %p640
    %p643 = scmp.ne.s32.totalorder %s628, %s642
    %p644 = scmp.eq.s32.totalorder %s78, 0
    %p645 = por %p643, %p644
    %s647 = sadd.s32 %s646, 1
    %p650 = scmp.eq.s32.totalorder %s72, 1
    %p651 = scmp.ne.s32.totalorder %s646, %s648
    %p652 = scmp.eq.s32.totalorder %s72, 0
    %p653 = por %p651, %p652
    %p654 = scmp.ne.s32.totalorder %s646, %s648
    %p655 = scmp.eq.s32.totalorder %s77, 1
    %p656 = por %p654, %p655
    %p657 = scmp.ne.s32.totalorder %s648, %s649
    %p658 = scmp.eq.s32.totalorder %s77, 0
    %p659 = por %p657, %p658
    %p660 = scmp.ne.s32.totalorder %s648, %s649
    %p661 = scmp.eq.s32.totalorder %s78, 1
    %p662 = por %p660, %p661
    %p664 = scmp.ne.s32.totalorder %s649, %s663
    %p665 = scmp.eq.s32.totalorder %s78, 0
    %p666 = por %p664, %p665
    %s668 = sadd.s32 %s667, 1
    %p671 = scmp.eq.s32.totalorder %s72, 1
    %p672 = scmp.ne.s32.totalorder %s667, %s669
    %p673 = scmp.eq.s32.totalorder %s72, 0
    %p674 = por %p672, %p673
    %p675 = scmp.ne.s32.totalorder %s667, %s669
    %p676 = scmp.eq.s32.totalorder %s77, 1
    %p677 = por %p675, %p676
    %p678 = scmp.ne.s32.totalorder %s669, %s670
    %p679 = scmp.eq.s32.totalorder %s77, 0
    %p680 = por %p678, %p679
    %p681 = scmp.ne.s32.totalorder %s669, %s670
    %p682 = scmp.eq.s32.totalorder %s78, 1
    %p683 = por %p681, %p682
    %p685 = scmp.ne.s32.totalorder %s670, %s684
    %p686 = scmp.eq.s32.totalorder %s78, 0
    %p687 = por %p685, %p686
    %s689 = sadd.s32 %s688, 1
    %p692 = scmp.eq.s32.totalorder %s72, 1
    %p693 = scmp.ne.s32.totalorder %s688, %s690
    %p694 = scmp.eq.s32.totalorder %s72, 0
    %p695 = por %p693, %p694
    %p696 = scmp.ne.s32.totalorder %s688, %s690
    %p697 = scmp.eq.s32.totalorder %s77, 1
    %p698 = por %p696, %p697
    %p699 = scmp.ne.s32.totalorder %s690, %s691
    %p700 = scmp.eq.s32.totalorder %s77, 0
    %p701 = por %p699, %p700
    %p702 = scmp.ne.s32.totalorder %s690, %s691
    %p703 = scmp.eq.s32.totalorder %s78, 1
    %p704 = por %p702, %p703
    %p706 = scmp.ne.s32.totalorder %s691, %s705
    %p707 = scmp.eq.s32.totalorder %s78, 0
    %p708 = por %p706, %p707
    %s710 = sadd.s32 %s709, 1
    %p713 = scmp.eq.s32.totalorder %s72, 1
    %p714 = scmp.ne.s32.totalorder %s709, %s711
    %p715 = scmp.eq.s32.totalorder %s72, 0
    %p716 = por %p714, %p715
    %p717 = scmp.ne.s32.totalorder %s709, %s711
    %p718 = scmp.eq.s32.totalorder %s77, 1
    %p719 = por %p717, %p718
    %p720 = scmp.ne.s32.totalorder %s711, %s712
    %p721 = scmp.eq.s32.totalorder %s77, 0
    %p722 = por %p720, %p721
    %p723 = scmp.ne.s32.totalorder %s711, %s712
    %p724 = scmp.eq.s32.totalorder %s78, 1
    %p725 = por %p723, %p724
    %p727 = scmp.ne.s32.totalorder %s712, %s726
    %p728 = scmp.eq.s32.totalorder %s78, 0
    %p729 = por %p727, %p728
    %s730 = ssub.s32 %s72, %s79
    %p731 = scmp.eq.s32.totalorder %s730, 0
    %s733 = sadd.s32 %s732, 1
    %s734 = scalar_select %p731, %s732, %s733
    %p737 = pneg %p731
    %p738 = scmp.eq.s32.totalorder %s72, 1
    %p739 = por %p737, %p738
    %p740 = scmp.ne.s32.totalorder %s732, %s735
    %p741 = scmp.eq.s32.totalorder %s72, 0
    %p742 = por %p740, %p741
    %p743 = scmp.ne.s32.totalorder %s732, %s735
    %p744 = scmp.eq.s32.totalorder %s77, 1
    %p745 = por %p743, %p744
    %p746 = scmp.ne.s32.totalorder %s735, %s736
    %p747 = scmp.eq.s32.totalorder %s77, 0
    %p748 = por %p746, %p747
    %p749 = scmp.ne.s32.totalorder %s735, %s736
    %p750 = scmp.eq.s32.totalorder %s78, 1
    %p751 = por %p749, %p750
    %p753 = scmp.ne.s32.totalorder %s736, %s752
    %p754 = scmp.eq.s32.totalorder %s78, 0
    %p755 = por %p753, %p754
    %s756 = ssub.s32 %s72, %s79
    %p757 = scmp.eq.s32.totalorder %s756, 0
    %s759 = sadd.s32 %s758, 1
    %s760 = scalar_select %p757, %s758, %s759
    %p763 = pneg %p757
    %p764 = scmp.eq.s32.totalorder %s72, 1
    %p765 = por %p763, %p764
    %p766 = scmp.ne.s32.totalorder %s758, %s761
    %p767 = scmp.eq.s32.totalorder %s72, 0
    %p768 = por %p766, %p767
    %p769 = scmp.ne.s32.totalorder %s758, %s761
    %p770 = scmp.eq.s32.totalorder %s77, 1
    %p771 = por %p769, %p770
    %p772 = scmp.ne.s32.totalorder %s761, %s762
    %p773 = scmp.eq.s32.totalorder %s77, 0
    %p774 = por %p772, %p773
    %p775 = scmp.ne.s32.totalorder %s761, %s762
    %p776 = scmp.eq.s32.totalorder %s78, 1
    %p777 = por %p775, %p776
    %p779 = scmp.ne.s32.totalorder %s762, %s778
    %p780 = scmp.eq.s32.totalorder %s78, 0
    %p781 = por %p779, %p780
    %s782 = ssub.s32 %s72, %s79
    %p783 = scmp.eq.s32.totalorder %s782, 0
    %s785 = sadd.s32 %s784, 1
    %s786 = scalar_select %p783, %s784, %s785
    %p789 = pneg %p783
    %p790 = scmp.eq.s32.totalorder %s72, 1
    %p791 = por %p789, %p790
    %p792 = scmp.ne.s32.totalorder %s784, %s787
    %p793 = scmp.eq.s32.totalorder %s72, 0
    %p794 = por %p792, %p793
    %p795 = scmp.ne.s32.totalorder %s784, %s787
    %p796 = scmp.eq.s32.totalorder %s77, 1
    %p797 = por %p795, %p796
    %p798 = scmp.ne.s32.totalorder %s787, %s788
    %p799 = scmp.eq.s32.totalorder %s77, 0
    %p800 = por %p798, %p799
    %p801 = scmp.ne.s32.totalorder %s787, %s788
    %p802 = scmp.eq.s32.totalorder %s78, 1
    %p803 = por %p801, %p802
    %p805 = scmp.ne.s32.totalorder %s788, %s804
    %p806 = scmp.eq.s32.totalorder %s78, 0
    %p807 = por %p805, %p806
    %p808 = scmp.le.s32.totalorder 1, %s72
    %p809 = scmp.lt.s32.totalorder %s72, 3
    %p810 = pnand %p808, %p809
    %p811 = pneg %p810
    // Predicated region
    $region9: #{two_way_transformer.9} parent=5 // pred_check
      _
    $region10: #{two_way_transformer.9} parent=5 // pred_check_branch
      %813 = sbr.rel (%p810) target = $region12
    $region11: #{two_way_transformer.9} parent=5 // pred_region
      %s814 = ssub.s32 %s72, 1
      // Predicated region
      $region13: #{two_way_transformer.9} parent=11 // pred_check
        %p815 = pneg %p197
      $region14: #{two_way_transformer.9} parent=11 // pred_check_branch
        %817 = sbr.rel (%p815) target = $region16
      $region15: #{two_way_transformer.9} parent=11 // pred_region
        _
      $region16: #{two_way_transformer.9} parent=11 // pred_fallthru
        _
      // Predicated region
      $region17: #{two_way_transformer.9} parent=11 // pred_check
        %p818 = pneg %p218
      $region18: #{two_way_transformer.9} parent=11 // pred_check_branch
        %820 = sbr.rel (%p818) target = $region20
      $region19: #{two_way_transformer.9} parent=11 // pred_region
        _
      $region20: #{two_way_transformer.9} parent=11 // pred_fallthru
        _
      // Predicated region
      $region21: #{two_way_transformer.9} parent=11 // pred_check
        %p821 = pneg %p239
      $region22: #{two_way_transformer.9} parent=11 // pred_check_branch
        %823 = sbr.rel (%p821) target = $region24
      $region23: #{two_way_transformer.9} parent=11 // pred_region
        _
      $region24: #{two_way_transformer.9} parent=11 // pred_fallthru
        _
      // Predicated region
      $region25: #{two_way_transformer.9} parent=11 // pred_check
        %p824 = pneg %p260
      $region26: #{two_way_transformer.9} parent=11 // pred_check_branch
        %826 = sbr.rel (%p824) target = $region28
      $region27: #{two_way_transformer.9} parent=11 // pred_region
        _
      $region28: #{two_way_transformer.9} parent=11 // pred_fallthru
        _
      // Predicated region
      $region29: #{two_way_transformer.9} parent=11 // pred_check
        %p827 = pneg %p281
      $region30: #{two_way_transformer.9} parent=11 // pred_check_branch
        %829 = sbr.rel (%p827) target = $region32
      $region31: #{two_way_transformer.9} parent=11 // pred_region
        _
      $region32: #{two_way_transformer.9} parent=11 // pred_fallthru
        _
      // Predicated region
      $region33: #{two_way_transformer.9} parent=11 // pred_check
        %p830 = pneg %p302
      $region34: #{two_way_transformer.9} parent=11 // pred_check_branch
        %832 = sbr.rel (%p830) target = $region36
      $region35: #{two_way_transformer.9} parent=11 // pred_region
        _
      $region36: #{two_way_transformer.9} parent=11 // pred_fallthru
        _
      // Predicated region
      $region37: #{two_way_transformer.9} parent=11 // pred_check
        %p833 = pneg %p323
      $region38: #{two_way_transformer.9} parent=11 // pred_check_branch
        %835 = sbr.rel (%p833) target = $region40
      $region39: #{two_way_transformer.9} parent=11 // pred_region
        _
      $region40: #{two_way_transformer.9} parent=11 // pred_fallthru
        _
      // Predicated region
      $region41: #{two_way_transformer.9} parent=11 // pred_check
        %p836 = pneg %p344
      $region42: #{two_way_transformer.9} parent=11 // pred_check_branch
        %838 = sbr.rel (%p836) target = $region44
      $region43: #{two_way_transformer.9} parent=11 // pred_region
        _
      $region44: #{two_way_transformer.9} parent=11 // pred_fallthru
        _
      // Predicated region
      $region45: #{two_way_transformer.9} parent=11 // pred_check
        %p839 = pneg %p365
      $region46: #{two_way_transformer.9} parent=11 // pred_check_branch
        %841 = sbr.rel (%p839) target = $region48
      $region47: #{two_way_transformer.9} parent=11 // pred_region
        _
      $region48: #{two_way_transformer.9} parent=11 // pred_fallthru
        _
      // Predicated region
      $region49: #{two_way_transformer.9} parent=11 // pred_check
        %p842 = pneg %p386
      $region50: #{two_way_transformer.9} parent=11 // pred_check_branch
        %844 = sbr.rel (%p842) target = $region52
      $region51: #{two_way_transformer.9} parent=11 // pred_region
        _
      $region52: #{two_way_transformer.9} parent=11 // pred_fallthru
        _
      // Predicated region
      $region53: #{two_way_transformer.9} parent=11 // pred_check
        %p845 = pneg %p407
      $region54: #{two_way_transformer.9} parent=11 // pred_check_branch
        %847 = sbr.rel (%p845) target = $region56
      $region55: #{two_way_transformer.9} parent=11 // pred_region
        _
      $region56: #{two_way_transformer.9} parent=11 // pred_fallthru
        _
      // Predicated region
      $region57: #{two_way_transformer.9} parent=11 // pred_check
        %p848 = pneg %p428
      $region58: #{two_way_transformer.9} parent=11 // pred_check_branch
        %850 = sbr.rel (%p848) target = $region60
      $region59: #{two_way_transformer.9} parent=11 // pred_region
        _
      $region60: #{two_way_transformer.9} parent=11 // pred_fallthru
        _
      // Predicated region
      $region61: #{two_way_transformer.9} parent=11 // pred_check
        %p851 = pneg %p449
      $region62: #{two_way_transformer.9} parent=11 // pred_check_branch
        %853 = sbr.rel (%p851) target = $region64
      $region63: #{two_way_transformer.9} parent=11 // pred_region
        _
      $region64: #{two_way_transformer.9} parent=11 // pred_fallthru
        _
      // Predicated region
      $region65: #{two_way_transformer.9} parent=11 // pred_check
        %p854 = pneg %p470
      $region66: #{two_way_transformer.9} parent=11 // pred_check_branch
        %856 = sbr.rel (%p854) target = $region68
      $region67: #{two_way_transformer.9} parent=11 // pred_region
        _
      $region68: #{two_way_transformer.9} parent=11 // pred_fallthru
        _
      // Predicated region
      $region69: #{two_way_transformer.9} parent=11 // pred_check
        %p857 = pneg %p491
      $region70: #{two_way_transformer.9} parent=11 // pred_check_branch
        %859 = sbr.rel (%p857) target = $region72
      $region71: #{two_way_transformer.9} parent=11 // pred_region
        _
      $region72: #{two_way_transformer.9} parent=11 // pred_fallthru
        _
      // Predicated region
      $region73: #{two_way_transformer.9} parent=11 // pred_check
        %p860 = pneg %p512
      $region74: #{two_way_transformer.9} parent=11 // pred_check_branch
        %862 = sbr.rel (%p860) target = $region76
      $region75: #{two_way_transformer.9} parent=11 // pred_region
        _
      $region76: #{two_way_transformer.9} parent=11 // pred_fallthru
        _
      // Predicated region
      $region77: #{two_way_transformer.9} parent=11 // pred_check
        %p863 = pneg %p533
      $region78: #{two_way_transformer.9} parent=11 // pred_check_branch
        %865 = sbr.rel (%p863) target = $region80
      $region79: #{two_way_transformer.9} parent=11 // pred_region
        _
      $region80: #{two_way_transformer.9} parent=11 // pred_fallthru
        _
      // Predicated region
      $region81: #{two_way_transformer.9} parent=11 // pred_check
        %p866 = pneg %p554
      $region82: #{two_way_transformer.9} parent=11 // pred_check_branch
        %868 = sbr.rel (%p866) target = $region84
      $region83: #{two_way_transformer.9} parent=11 // pred_region
        _
      $region84: #{two_way_transformer.9} parent=11 // pred_fallthru
        _
      // Predicated region
      $region85: #{two_way_transformer.9} parent=11 // pred_check
        %p869 = pneg %p575
      $region86: #{two_way_transformer.9} parent=11 // pred_check_branch
        %871 = sbr.rel (%p869) target = $region88
      $region87: #{two_way_transformer.9} parent=11 // pred_region
        _
      $region88: #{two_way_transformer.9} parent=11 // pred_fallthru
        _
      // Predicated region
      $region89: #{two_way_transformer.9} parent=11 // pred_check
        %p872 = pneg %p596
      $region90: #{two_way_transformer.9} parent=11 // pred_check_branch
        %874 = sbr.rel (%p872) target = $region92
      $region91: #{two_way_transformer.9} parent=11 // pred_region
        _
      $region92: #{two_way_transformer.9} parent=11 // pred_fallthru
        _
      // Predicated region
      $region93: #{two_way_transformer.9} parent=11 // pred_check
        %p875 = pneg %p617
      $region94: #{two_way_transformer.9} parent=11 // pred_check_branch
        %877 = sbr.rel (%p875) target = $region96
      $region95: #{two_way_transformer.9} parent=11 // pred_region
        _
      $region96: #{two_way_transformer.9} parent=11 // pred_fallthru
        _
      // Predicated region
      $region97: #{two_way_transformer.9} parent=11 // pred_check
        %p878 = pneg %p638
      $region98: #{two_way_transformer.9} parent=11 // pred_check_branch
        %880 = sbr.rel (%p878) target = $region100
      $region99: #{two_way_transformer.9} parent=11 // pred_region
        _
      $region100: #{two_way_transformer.9} parent=11 // pred_fallthru
        _
      // Predicated region
      $region101: #{two_way_transformer.9} parent=11 // pred_check
        %p881 = pneg %p659
      $region102: #{two_way_transformer.9} parent=11 // pred_check_branch
        %883 = sbr.rel (%p881) target = $region104
      $region103: #{two_way_transformer.9} parent=11 // pred_region
        _
      $region104: #{two_way_transformer.9} parent=11 // pred_fallthru
        _
      // Predicated region
      $region105: #{two_way_transformer.9} parent=11 // pred_check
        %p884 = pneg %p680
      $region106: #{two_way_transformer.9} parent=11 // pred_check_branch
        %886 = sbr.rel (%p884) target = $region108
      $region107: #{two_way_transformer.9} parent=11 // pred_region
        _
      $region108: #{two_way_transformer.9} parent=11 // pred_fallthru
        _
      // Predicated region
      $region109: #{two_way_transformer.9} parent=11 // pred_check
        %p887 = pneg %p701
      $region110: #{two_way_transformer.9} parent=11 // pred_check_branch
        %889 = sbr.rel (%p887) target = $region112
      $region111: #{two_way_transformer.9} parent=11 // pred_region
        _
      $region112: #{two_way_transformer.9} parent=11 // pred_fallthru
        _
      // Predicated region
      $region113: #{two_way_transformer.9} parent=11 // pred_check
        %p890 = pneg %p722
      $region114: #{two_way_transformer.9} parent=11 // pred_check_branch
        %892 = sbr.rel (%p890) target = $region116
      $region115: #{two_way_transformer.9} parent=11 // pred_region
        _
      $region116: #{two_way_transformer.9} parent=11 // pred_fallthru
        _
    $region12: #{two_way_transformer.9} parent=5 // pred_fallthru
      _
    %p893 = scmp.lt.s32.totalorder %s72, 2
    // Predicated region
    $region117: #{two_way_transformer.9} parent=5 // pred_check
      %p894 = pneg %p893
    $region118: #{two_way_transformer.9} parent=5 // pred_check_branch
      %896 = sbr.rel (%p894) target = $region120
    $region119: #{two_way_transformer.9} parent=5 // pred_region
      // Predicated region
      $region121: #{two_way_transformer.9} parent=119 // pred_check
        %p897 = pneg %p92
      $region122: #{two_way_transformer.9} parent=119 // pred_check_branch
        %899 = sbr.rel (%p897) target = $region124
      $region123: #{two_way_transformer.9} parent=119 // pred_region
        %p900 = scmp.lt.s32.totalorder %s72, 1
        %s901 = scalar_select %p900, %s72, 1
        %s902 = smul.addr %s901, 8
        %s903 = scalar_lea.vmem %s1, %s902
      $region124: #{two_way_transformer.9} parent=119 // pred_fallthru
        _
      // Predicated region
      $region125: #{two_way_transformer.9} parent=119 // pred_check
        %p904 = pneg %p118
      $region126: #{two_way_transformer.9} parent=119 // pred_check_branch
        %906 = sbr.rel (%p904) target = $region128
      $region127: #{two_way_transformer.9} parent=119 // pred_region
        %p907 = scmp.lt.s32.totalorder %s72, 1
        %s908 = scalar_select %p907, %s72, 1
        %s909 = smul.addr %s908, 8
        %s910 = scalar_lea.vmem %s3, %s909
      $region128: #{two_way_transformer.9} parent=119 // pred_fallthru
        _
      // Predicated region
      $region129: #{two_way_transformer.9} parent=119 // pred_check
        %p911 = pneg %p144
      $region130: #{two_way_transformer.9} parent=119 // pred_check_branch
        %913 = sbr.rel (%p911) target = $region132
      $region131: #{two_way_transformer.9} parent=119 // pred_region
        %p914 = scmp.lt.s32.totalorder %s72, 1
        %s915 = scalar_select %p914, %s72, 1
        %s916 = smul.addr %s915, 2
        %s917 = smul.addr %s916, 8
        %s918 = scalar_lea.vmem %s5, %s917
      $region132: #{two_way_transformer.9} parent=119 // pred_fallthru
        _
      // Predicated region
      $region133: #{two_way_transformer.9} parent=119 // pred_check
        %p919 = pneg %p170
      $region134: #{two_way_transformer.9} parent=119 // pred_check_branch
        %921 = sbr.rel (%p919) target = $region136
      $region135: #{two_way_transformer.9} parent=119 // pred_region
        %p922 = scmp.lt.s32.totalorder %s72, 1
        %s923 = scalar_select %p922, %s72, 1
        %s924 = smul.addr %s923, 2
        %s925 = smul.addr %s924, 8
        %s926 = scalar_lea.vmem %s7, %s925
      $region136: #{two_way_transformer.9} parent=119 // pred_fallthru
        _
    $region120: #{two_way_transformer.9} parent=5 // pred_fallthru
      _
    %p927 = scmp.le.s32.totalorder 1, %s72
    %p928 = scmp.lt.s32.totalorder %s72, 3
    %p929 = pnand %p927, %p928
    %p930 = pneg %p929
    // Predicated region
    $region137: #{two_way_transformer.9} parent=5 // pred_check
      _
    $region138: #{two_way_transformer.9} parent=5 // pred_check_branch
      %932 = sbr.rel (%p929) target = $region140
    $region139: #{two_way_transformer.9} parent=5 // pred_region
      %s933 = ssub.s32 %s72, 1
      %p934 = scmp.lt.s32.totalorder %s77, 1
      %s935 = scalar_select %p934, %s77, 1
      %s936 = smul.addr %s935, 8
      %s937 = scalar_lea.vmem %s1, %s936
      %p938 = pneg %p98
      %p939 = pneg %p95
      %p940 = scmp.lt.s32.totalorder %s77, 1
      %s941 = scalar_select %p940, %s77, 1
      %s942 = smul.addr %s941, 8
      %s943 = scalar_lea.vmem %s3, %s942
      %p944 = pneg %p124
      %p945 = pneg %p121
      %p946 = scmp.lt.s32.totalorder %s77, 1
      %s947 = scalar_select %p946, %s77, 1
      %s948 = smul.addr %s947, 2
      %s949 = smul.addr %s948, 8
      %s950 = scalar_lea.vmem %s5, %s949
      %p951 = pneg %p150
      %p952 = pneg %p147
      %p953 = scmp.lt.s32.totalorder %s77, 1
      %s954 = scalar_select %p953, %s77, 1
      %s955 = smul.addr %s954, 2
      %s956 = smul.addr %s955, 8
      %s957 = scalar_lea.vmem %s7, %s956
      %p958 = pneg %p176
      %p959 = pneg %p173
      %p960 = pneg %p197
      %p961 = pneg %p194
      %p962 = pneg %p218
      %p963 = pneg %p215
      %p964 = pneg %p239
      %p965 = pneg %p236
      %p966 = pneg %p260
      %p967 = pneg %p257
      %p968 = pneg %p281
      %p969 = pneg %p278
      %p970 = pneg %p302
      %p971 = pneg %p299
      %p972 = pneg %p323
      %p973 = pneg %p320
      %p974 = pneg %p344
      %p975 = pneg %p341
      %p976 = pneg %p365
      %p977 = pneg %p362
      %p978 = pneg %p386
      %p979 = pneg %p383
      %p980 = pneg %p407
      %p981 = pneg %p404
      %p982 = pneg %p428
      %p983 = pneg %p425
      %p984 = pneg %p449
      %p985 = pneg %p446
      %p986 = pneg %p470
      %p987 = pneg %p467
      %p988 = pneg %p491
      %p989 = pneg %p488
      %p990 = pneg %p512
      %p991 = pneg %p509
      %p992 = pneg %p533
      %p993 = pneg %p530
      %p994 = pneg %p554
      %p995 = pneg %p551
      %p996 = pneg %p575
      %p997 = pneg %p572
      %p998 = pneg %p596
      %p999 = pneg %p593
      %p1000 = pneg %p617
      %p1001 = pneg %p614
      %p1002 = pneg %p638
      %p1003 = pneg %p635
      %p1004 = pneg %p659
      %p1005 = pneg %p656
      %p1006 = pneg %p680
      %p1007 = pneg %p677
      %p1008 = pneg %p701
      %p1009 = pneg %p698
      %p1010 = pneg %p722
      %p1011 = pneg %p719
      %p1012 = pneg %p748
      %p1013 = pneg %p745
      %p1014 = scmp.lt.s32.totalorder %s77, 1
      %s1015 = scalar_select %p1014, %s77, 1
      %s1016 = smul.addr %s1015, 8
      %s1017 = scalar_lea.vmem %s61, %s1016
      %p1018 = pneg %p774
      %p1019 = pneg %p771
      %p1020 = scmp.lt.s32.totalorder %s77, 1
      %s1021 = scalar_select %p1020, %s77, 1
      %s1022 = smul.addr %s1021, 8
      %s1023 = scalar_lea.vmem %s63, %s1022
      %p1024 = pneg %p800
      %p1025 = pneg %p797
      %p1026 = scmp.lt.s32.totalorder %s77, 1
      %s1027 = scalar_select %p1026, %s77, 1
      %s1028 = smul.addr %s1027, 8
      %s1029 = scalar_lea.vmem %s65, %s1028
      %p1030 = scmp.lt.s32.totalorder %s77, 1
      %s1031 = scalar_select %p1030, %s77, 1
      %s1032 = smul.addr %s1031, 8
      %s1033 = scalar_lea.vmem %s1, %s1032
      %p1034 = scmp.lt.s32.totalorder %s77, 1
      %s1035 = scalar_select %p1034, %s77, 1
      %s1036 = smul.addr %s1035, 8
      %s1037 = scalar_lea.vmem %s3, %s1036
      %p1038 = scmp.lt.s32.totalorder %s77, 1
      %s1039 = scalar_select %p1038, %s77, 1
      %s1040 = smul.addr %s1039, 2
      %s1041 = smul.addr %s1040, 8
      %s1042 = scalar_lea.vmem %s5, %s1041
      %p1043 = scmp.lt.s32.totalorder %s77, 1
      %s1044 = scalar_select %p1043, %s77, 1
      %s1045 = smul.addr %s1044, 2
      %s1046 = smul.addr %s1045, 8
      %s1047 = scalar_lea.vmem %s7, %s1046
      %p1048 = scmp.lt.s32.totalorder %s77, 1
      %s1049 = scalar_select %p1048, %s77, 1
      %s1050 = smul.addr %s1049, 8
      %s1051 = scalar_lea.vmem %s61, %s1050
      %p1052 = scmp.lt.s32.totalorder %s77, 1
      %s1053 = scalar_select %p1052, %s77, 1
      %s1054 = smul.addr %s1053, 8
      %s1055 = scalar_lea.vmem %s63, %s1054
      %p1056 = scmp.lt.s32.totalorder %s77, 1
      %s1057 = scalar_select %p1056, %s77, 1
      %s1058 = smul.addr %s1057, 8
      %s1059 = scalar_lea.vmem %s65, %s1058
      %v1060 = vld [vmem:[%s1033] sm:$0xff]
      %v1061 = vld [vmem:[%s1037] sm:$0xff]
      %v1062 = vld [vmem:[%s9] sm:$0xff]
      %v1063 = vld [vmem:[%s9 + $0x8] sm:$0xff]
      %v1064 = vld [vmem:[%s9 + $0x10] sm:$0xff]
      %v1065 = vld [vmem:[%s9 + $0x18] sm:$0xff]
      %v1066 = vld [vmem:[%s11] sm:$0x1]
      %v1068 = vlaneseq
      %v1069 = vshrl.u32 %v1068, 7
      %v1070 = vsub.s32 0, %v1069
      %v1071 = vrot.slane %v1066, %v1070
      %vm1073 = vcmask 261120
      %v1075 = vsel %vm1073, %v1060, 0
      %1077 = vmatprep.subr.mxu0 0.0
      %1078 = vmatpush1.msra.mxu0 %v1062
      %1079 = vmatprep.subr.mxu0 0.0
      %1080 = vmatpush1.msra.mxu0 %v1063
      %1081 = vmatprep.subr.mxu0 0.0
      %1082 = vmatpush1.msra.mxu0 %v1064
      %1083 = vmatprep.subr.mxu0 0.0
      %1084 = vmatpush1.msra.mxu0 %v1065
      %1085 = vmatprep.subr.mxu0 0.0
      %1086 = vmatpush1.msra.mxu0 0.0
      %1087 = vmatprep.subr.mxu0 0.0
      %1088 = vmatpush1.msra.mxu0 0.0
      %1089 = vmatprep.subr.mxu0 0.0
      %1090 = vmatpush1.msra.mxu0 0.0
      %1091 = vmatprep.subr.mxu0 0.0
      %1092 = vmatpush1.msra.mxu0 0.0
      %1093 = vmatprep.subr.mxu0 0.0
      %1094 = vmatpush1.msra.mxu0 0.0
      %1095 = vmatprep.subr.mxu0 0.0
      %1096 = vmatpush1.msra.mxu0 0.0
      %1097 = vmatprep.subr.mxu0 0.0
      %1098 = vmatpush1.msra.mxu0 0.0
      %1099 = vmatprep.subr.mxu0 0.0
      %1100 = vmatpush1.msra.mxu0 0.0
      %1101 = vmatprep.subr.mxu0 0.0
      %1102 = vmatpush1.msra.mxu0 0.0
      %1103 = vmatprep.subr.mxu0 0.0
      %1104 = vmatpush1.msra.mxu0 0.0
      %1105 = vmatprep.subr.mxu0 0.0
      %1106 = vmatpush1.msra.mxu0 0.0
      %1107 = vmatprep.subr.mxu0 0.0
      %1108 = vmatpush1.msra.mxu0 0.0
      %1109 = vmatprep.subr.mxu0 0.0
      %1110 = vmatpush1.msra.mxu0 0.0
      %1111 = vmatprep.subr.mxu0 0.0
      %1112 = vmatpush1.msra.mxu0 0.0
      %1113 = vmatprep.subr.mxu0 0.0
      %1114 = vmatpush1.msra.mxu0 0.0
      %1115 = vmatprep.subr.mxu0 0.0
      %1116 = vmatpush1.msra.mxu0 0.0
      %1117 = vmatprep.subr.mxu0 0.0
      %1118 = vmatpush1.msra.mxu0 0.0
      %1119 = vmatprep.subr.mxu0 0.0
      %1120 = vmatpush1.msra.mxu0 0.0
      %1121 = vmatprep.subr.mxu0 0.0
      %1122 = vmatpush1.msra.mxu0 0.0
      %1123 = vmatprep.subr.mxu0 0.0
      %1124 = vmatpush1.msra.mxu0 0.0
      %1125 = vmatprep.subr.mxu0 0.0
      %1126 = vmatpush1.msra.mxu0 0.0
      %1127 = vmatprep.subr.mxu0 0.0
      %1128 = vmatpush1.msra.mxu0 0.0
      %1129 = vmatprep.subr.mxu0 0.0
      %1130 = vmatpush1.msra.mxu0 0.0
      %1131 = vmatprep.subr.mxu0 0.0
      %1132 = vmatpush1.msra.mxu0 0.0
      %1133 = vmatprep.subr.mxu0 0.0
      %1134 = vmatpush1.msra.mxu0 0.0
      %1135 = vmatprep.subr.mxu0 0.0
      %1136 = vmatpush1.msra.mxu0 0.0
      %1137 = vmatprep.subr.mxu0 0.0
      %1138 = vmatpush1.msra.mxu0 0.0
      %1139 = vmatprep.subr.mxu0 0.0
      %1140 = vmatpush1.msra.mxu0 0.0
      %1141 = vmatprep.mubr.f32.mxu0 0.0
      %1142 = vmatmul.mubr.f32.gmra.mrb[0].mxu0 %v1075
      %v1143 = vpop.f32.mrb[0].mxu0
      %v1144 = vadd.f32 %v1071, %v1143
      %v1145 = vpop.f32.mrb[0].mxu0
      %1146 = vdwg.mxu0
      %v1147 = vld [vmem:[%s13] sm:$0xff]
      %v1148 = vld [vmem:[%s13 + $0x8] sm:$0xff]
      %v1149 = vld [vmem:[%s13 + $0x10] sm:$0xff]
      %v1150 = vld [vmem:[%s13 + $0x18] sm:$0xff]
      %v1151 = vld [vmem:[%s15] sm:$0x1]
      %v1153 = vlaneseq
      %v1154 = vshrl.u32 %v1153, 7
      %v1155 = vsub.s32 0, %v1154
      %v1156 = vrot.slane %v1151, %v1155
      %1158 = vmatprep.subr.mxu0 0.0
      %1159 = vmatpush1.msra.mxu0 %v1147
      %1160 = vmatprep.subr.mxu0 0.0
      %1161 = vmatpush1.msra.mxu0 %v1148
      %1162 = vmatprep.subr.mxu0 0.0
      %1163 = vmatpush1.msra.mxu0 %v1149
      %1164 = vmatprep.subr.mxu0 0.0
      %1165 = vmatpush1.msra.mxu0 %v1150
      %1166 = vmatprep.subr.mxu0 0.0
      %1167 = vmatpush1.msra.mxu0 0.0
      %1168 = vmatprep.subr.mxu0 0.0
      %1169 = vmatpush1.msra.mxu0 0.0
      %1170 = vmatprep.subr.mxu0 0.0
      %1171 = vmatpush1.msra.mxu0 0.0
      %1172 = vmatprep.subr.mxu0 0.0
      %1173 = vmatpush1.msra.mxu0 0.0
      %1174 = vmatprep.subr.mxu0 0.0
      %1175 = vmatpush1.msra.mxu0 0.0
      %1176 = vmatprep.subr.mxu0 0.0
      %1177 = vmatpush1.msra.mxu0 0.0
      %1178 = vmatprep.subr.mxu0 0.0
      %1179 = vmatpush1.msra.mxu0 0.0
      %1180 = vmatprep.subr.mxu0 0.0
      %1181 = vmatpush1.msra.mxu0 0.0
      %1182 = vmatprep.subr.mxu0 0.0
      %1183 = vmatpush1.msra.mxu0 0.0
      %1184 = vmatprep.subr.mxu0 0.0
      %1185 = vmatpush1.msra.mxu0 0.0
      %1186 = vmatprep.subr.mxu0 0.0
      %1187 = vmatpush1.msra.mxu0 0.0
      %1188 = vmatprep.subr.mxu0 0.0
      %1189 = vmatpush1.msra.mxu0 0.0
      %1190 = vmatprep.subr.mxu0 0.0
      %1191 = vmatpush1.msra.mxu0 0.0
      %1192 = vmatprep.subr.mxu0 0.0
      %1193 = vmatpush1.msra.mxu0 0.0
      %1194 = vmatprep.subr.mxu0 0.0
      %1195 = vmatpush1.msra.mxu0 0.0
      %1196 = vmatprep.subr.mxu0 0.0
      %1197 = vmatpush1.msra.mxu0 0.0
      %1198 = vmatprep.subr.mxu0 0.0
      %1199 = vmatpush1.msra.mxu0 0.0
      %1200 = vmatprep.subr.mxu0 0.0
      %1201 = vmatpush1.msra.mxu0 0.0
      %1202 = vmatprep.subr.mxu0 0.0
      %1203 = vmatpush1.msra.mxu0 0.0
      %1204 = vmatprep.subr.mxu0 0.0
      %1205 = vmatpush1.msra.mxu0 0.0
      %1206 = vmatprep.subr.mxu0 0.0
      %1207 = vmatpush1.msra.mxu0 0.0
      %1208 = vmatprep.subr.mxu0 0.0
      %1209 = vmatpush1.msra.mxu0 0.0
      %1210 = vmatprep.subr.mxu0 0.0
      %1211 = vmatpush1.msra.mxu0 0.0
      %1212 = vmatprep.subr.mxu0 0.0
      %1213 = vmatpush1.msra.mxu0 0.0
      %1214 = vmatprep.subr.mxu0 0.0
      %1215 = vmatpush1.msra.mxu0 0.0
      %1216 = vmatprep.subr.mxu0 0.0
      %1217 = vmatpush1.msra.mxu0 0.0
      %1218 = vmatprep.subr.mxu0 0.0
      %1219 = vmatpush1.msra.mxu0 0.0
      %1220 = vmatprep.subr.mxu0 0.0
      %1221 = vmatpush1.msra.mxu0 0.0
      %1222 = vmatprep.mubr.f32.mxu0 0.0
      %1223 = vmatmul.mubr.f32.gmra.mrb[0].mxu0 %v1075
      %v1224 = vpop.f32.mrb[0].mxu0
      %v1225 = vadd.f32 %v1156, %v1224
      %v1226 = vpop.f32.mrb[0].mxu0
      %1227 = vdwg.mxu0
      %v1228 = vld [vmem:[%s17] sm:$0xff]
      %v1229 = vld [vmem:[%s17 + $0x8] sm:$0xff]
      %v1230 = vld [vmem:[%s17 + $0x10] sm:$0xff]
      %v1231 = vld [vmem:[%s17 + $0x18] sm:$0xff]
      %v1232 = vld [vmem:[%s19] sm:$0x1]
      %v1234 = vlaneseq
      %v1235 = vshrl.u32 %v1234, 7
      %v1236 = vsub.s32 0, %v1235
      %v1237 = vrot.slane %v1232, %v1236
      %1239 = vmatprep.subr.mxu0 0.0
      %1240 = vmatpush1.msra.mxu0 %v1228
      %1241 = vmatprep.subr.mxu0 0.0
      %1242 = vmatpush1.msra.mxu0 %v1229
      %1243 = vmatprep.subr.mxu0 0.0
      %1244 = vmatpush1.msra.mxu0 %v1230
      %1245 = vmatprep.subr.mxu0 0.0
      %1246 = vmatpush1.msra.mxu0 %v1231
      %1247 = vmatprep.subr.mxu0 0.0
      %1248 = vmatpush1.msra.mxu0 0.0
      %1249 = vmatprep.subr.mxu0 0.0
      %1250 = vmatpush1.msra.mxu0 0.0
      %1251 = vmatprep.subr.mxu0 0.0
      %1252 = vmatpush1.msra.mxu0 0.0
      %1253 = vmatprep.subr.mxu0 0.0
      %1254 = vmatpush1.msra.mxu0 0.0
      %1255 = vmatprep.subr.mxu0 0.0
      %1256 = vmatpush1.msra.mxu0 0.0
      %1257 = vmatprep.subr.mxu0 0.0
      %1258 = vmatpush1.msra.mxu0 0.0
      %1259 = vmatprep.subr.mxu0 0.0
      %1260 = vmatpush1.msra.mxu0 0.0
      %1261 = vmatprep.subr.mxu0 0.0
      %1262 = vmatpush1.msra.mxu0 0.0
      %1263 = vmatprep.subr.mxu0 0.0
      %1264 = vmatpush1.msra.mxu0 0.0
      %1265 = vmatprep.subr.mxu0 0.0
      %1266 = vmatpush1.msra.mxu0 0.0
      %1267 = vmatprep.subr.mxu0 0.0
      %1268 = vmatpush1.msra.mxu0 0.0
      %1269 = vmatprep.subr.mxu0 0.0
      %1270 = vmatpush1.msra.mxu0 0.0
      %1271 = vmatprep.subr.mxu0 0.0
      %1272 = vmatpush1.msra.mxu0 0.0
      %1273 = vmatprep.subr.mxu0 0.0
      %1274 = vmatpush1.msra.mxu0 0.0
      %1275 = vmatprep.subr.mxu0 0.0
      %1276 = vmatpush1.msra.mxu0 0.0
      %1277 = vmatprep.subr.mxu0 0.0
      %1278 = vmatpush1.msra.mxu0 0.0
      %1279 = vmatprep.subr.mxu0 0.0
      %1280 = vmatpush1.msra.mxu0 0.0
      %1281 = vmatprep.subr.mxu0 0.0
      %1282 = vmatpush1.msra.mxu0 0.0
      %1283 = vmatprep.subr.mxu0 0.0
      %1284 = vmatpush1.msra.mxu0 0.0
      %1285 = vmatprep.subr.mxu0 0.0
      %1286 = vmatpush1.msra.mxu0 0.0
      %1287 = vmatprep.subr.mxu0 0.0
      %1288 = vmatpush1.msra.mxu0 0.0
      %1289 = vmatprep.subr.mxu0 0.0
      %1290 = vmatpush1.msra.mxu0 0.0
      %1291 = vmatprep.subr.mxu0 0.0
      %1292 = vmatpush1.msra.mxu0 0.0
      %1293 = vmatprep.subr.mxu0 0.0
      %1294 = vmatpush1.msra.mxu0 0.0
      %1295 = vmatprep.subr.mxu0 0.0
      %1296 = vmatpush1.msra.mxu0 0.0
      %1297 = vmatprep.subr.mxu0 0.0
      %1298 = vmatpush1.msra.mxu0 0.0
      %1299 = vmatprep.subr.mxu0 0.0
      %1300 = vmatpush1.msra.mxu0 0.0
      %1301 = vmatprep.subr.mxu0 0.0
      %1302 = vmatpush1.msra.mxu0 0.0
      %1303 = vmatprep.mubr.f32.mxu0 0.0
      %1304 = vmatmul.mubr.f32.gmra.mrb[0].mxu0 %v1075
      %v1305 = vpop.f32.mrb[0].mxu0
      %v1306 = vadd.f32 %v1237, %v1305
      %v1307 = vpop.f32.mrb[0].mxu0
      %1308 = vdwg.mxu0
      %v1309 = vld [vmem:[%s21] sm:$0xff]
      %v1310 = vld [vmem:[%s21 + $0x8] sm:$0xff]
      %v1311 = vld [vmem:[%s21 + $0x10] sm:$0xff]
      %v1312 = vld [vmem:[%s21 + $0x18] sm:$0xff]
      %v1313 = vld [vmem:[%s23] sm:$0x1]
      %vm1314 = vcmask 130048
      %v1316 = vsel %vm1314, %v1144, 0
      %v1319 = vsel %vm1314, %v1225, 0
      %1321 = vmatprep.subr.mxu0 0.0
      %1322 = vmatpush1.xpose.msra.mxu0 %v1319
      %1323 = vmatprep.subr.mxu0 0.0
      %1324 = vmatpush1.xpose.msra.mxu0 0.0
      %1325 = vmatprep.subr.mxu0 0.0
      %1326 = vmatpush1.xpose.msra.mxu0 0.0
      %1327 = vmatprep.subr.mxu0 0.0
      %1328 = vmatpush1.xpose.msra.mxu0 0.0
      %1329 = vmatprep.subr.mxu0 0.0
      %1330 = vmatpush1.xpose.msra.mxu0 0.0
      %1331 = vmatprep.subr.mxu0 0.0
      %1332 = vmatpush1.xpose.msra.mxu0 0.0
      %1333 = vmatprep.subr.mxu0 0.0
      %1334 = vmatpush1.xpose.msra.mxu0 0.0
      %1335 = vmatprep.subr.mxu0 0.0
      %1336 = vmatpush1.xpose.msra.mxu0 0.0
      %1337 = vmatprep.subr.mxu0 0.0
      %1338 = vmatpush1.xpose.msra.mxu0 0.0
      %1339 = vmatprep.subr.mxu0 0.0
      %1340 = vmatpush1.xpose.msra.mxu0 0.0
      %1341 = vmatprep.subr.mxu0 0.0
      %1342 = vmatpush1.xpose.msra.mxu0 0.0
      %1343 = vmatprep.subr.mxu0 0.0
      %1344 = vmatpush1.xpose.msra.mxu0 0.0
      %1345 = vmatprep.subr.mxu0 0.0
      %1346 = vmatpush1.xpose.msra.mxu0 0.0
      %1347 = vmatprep.subr.mxu0 0.0
      %1348 = vmatpush1.xpose.msra.mxu0 0.0
      %1349 = vmatprep.subr.mxu0 0.0
      %1350 = vmatpush1.xpose.msra.mxu0 0.0
      %1351 = vmatprep.subr.mxu0 0.0
      %1352 = vmatpush1.xpose.msra.mxu0 0.0
      %1353 = vmatprep.subr.mxu0 0.0
      %1354 = vmatpush1.xpose.msra.mxu0 0.0
      %1355 = vmatprep.subr.mxu0 0.0
      %1356 = vmatpush1.xpose.msra.mxu0 0.0
      %1357 = vmatprep.subr.mxu0 0.0
      %1358 = vmatpush1.xpose.msra.mxu0 0.0
      %1359 = vmatprep.subr.mxu0 0.0
      %1360 = vmatpush1.xpose.msra.mxu0 0.0
      %1361 = vmatprep.subr.mxu0 0.0
      %1362 = vmatpush1.xpose.msra.mxu0 0.0
      %1363 = vmatprep.subr.mxu0 0.0
      %1364 = vmatpush1.xpose.msra.mxu0 0.0
      %1365 = vmatprep.subr.mxu0 0.0
      %1366 = vmatpush1.xpose.msra.mxu0 0.0
      %1367 = vmatprep.subr.mxu0 0.0
      %1368 = vmatpush1.xpose.msra.mxu0 0.0
      %1369 = vmatprep.subr.mxu0 0.0
      %1370 = vmatpush1.xpose.msra.mxu0 0.0
      %1371 = vmatprep.subr.mxu0 0.0
      %1372 = vmatpush1.xpose.msra.mxu0 0.0
      %1373 = vmatprep.subr.mxu0 0.0
      %1374 = vmatpush1.xpose.msra.mxu0 0.0
      %1375 = vmatprep.subr.mxu0 0.0
      %1376 = vmatpush1.xpose.msra.mxu0 0.0
      %1377 = vmatprep.subr.mxu0 0.0
      %1378 = vmatpush1.xpose.msra.mxu0 0.0
      %1379 = vmatprep.subr.mxu0 0.0
      %1380 = vmatpush1.xpose.msra.mxu0 0.0
      %1381 = vmatprep.subr.mxu0 0.0
      %1382 = vmatpush1.xpose.msra.mxu0 0.0
      %1383 = vmatprep.subr.mxu0 0.0
      %1384 = vmatpush1.xpose.msra.mxu0 0.0
      %1385 = vmatprep.mubr.f32.mxu0 0.0
      %1386 = vmatmul.mubr.f32.gmra.mrb[0].mxu0 %v1316
      %v1387 = vpop.f32.mrb[0].mxu0
      %v1388 = vadd.f32 0.0, %v1387
      %v1389 = vpop.f32.mrb[0].mxu0
      %1390 = vdwg.mxu0
      %v1391 = vmul.f32 %v1388, 0.25
      %vm1392 = vcmask 64512
      %v1393 = vsel %vm1392, %v1391, -inf
      %1394 = vmax.xlane.f32.xlu0 %v1393
      %v1395 = vpop.xlane.xlu0 %1394
      %v1396 = vsub.f32 %v1391, %v1395
      %v1397 = vmul.f32 %v1396, 1.442695
      %v1398 = vpow.pop %v1397
      %v1399 = vsel %vm1392, %v1398, 0.0
      %1400 = vadd.xlane.f32.xlu0 %v1399
      %v1401 = vpop.xlane.xlu0 %1400
      %v1403 = vsel %vm1392, %v1398, 0
      %1405 = vmatprep.subr.mxu0 0.0
      %1406 = vmatpush1.msra.mxu0 %v1306
      %1407 = vmatprep.subr.mxu0 0.0
      %1408 = vmatpush1.msra.mxu0 0.0
      %1409 = vmatprep.subr.mxu0 0.0
      %1410 = vmatpush1.msra.mxu0 0.0
      %1411 = vmatprep.subr.mxu0 0.0
      %1412 = vmatpush1.msra.mxu0 0.0
      %1413 = vmatprep.subr.mxu0 0.0
      %1414 = vmatpush1.msra.mxu0 0.0
      %1415 = vmatprep.subr.mxu0 0.0
      %1416 = vmatpush1.msra.mxu0 0.0
      %1417 = vmatprep.subr.mxu0 0.0
      %1418 = vmatpush1.msra.mxu0 0.0
      %1419 = vmatprep.subr.mxu0 0.0
      %1420 = vmatpush1.msra.mxu0 0.0
      %1421 = vmatprep.subr.mxu0 0.0
      %1422 = vmatpush1.msra.mxu0 0.0
      %1423 = vmatprep.subr.mxu0 0.0
      %1424 = vmatpush1.msra.mxu0 0.0
      %1425 = vmatprep.subr.mxu0 0.0
      %1426 = vmatpush1.msra.mxu0 0.0
      %1427 = vmatprep.subr.mxu0 0.0
      %1428 = vmatpush1.msra.mxu0 0.0
      %1429 = vmatprep.subr.mxu0 0.0
      %1430 = vmatpush1.msra.mxu0 0.0
      %1431 = vmatprep.subr.mxu0 0.0
      %1432 = vmatpush1.msra.mxu0 0.0
      %1433 = vmatprep.subr.mxu0 0.0
      %1434 = vmatpush1.msra.mxu0 0.0
      %1435 = vmatprep.subr.mxu0 0.0
      %1436 = vmatpush1.msra.mxu0 0.0
      %1437 = vmatprep.subr.mxu0 0.0
      %1438 = vmatpush1.msra.mxu0 0.0
      %1439 = vmatprep.subr.mxu0 0.0
      %1440 = vmatpush1.msra.mxu0 0.0
      %1441 = vmatprep.subr.mxu0 0.0
      %1442 = vmatpush1.msra.mxu0 0.0
      %1443 = vmatprep.subr.mxu0 0.0
      %1444 = vmatpush1.msra.mxu0 0.0
      %1445 = vmatprep.subr.mxu0 0.0
      %1446 = vmatpush1.msra.mxu0 0.0
      %1447 = vmatprep.subr.mxu0 0.0
      %1448 = vmatpush1.msra.mxu0 0.0
      %1449 = vmatprep.subr.mxu0 0.0
      %1450 = vmatpush1.msra.mxu0 0.0
      %1451 = vmatprep.subr.mxu0 0.0
      %1452 = vmatpush1.msra.mxu0 0.0
      %1453 = vmatprep.subr.mxu0 0.0
      %1454 = vmatpush1.msra.mxu0 0.0
      %1455 = vmatprep.subr.mxu0 0.0
      %1456 = vmatpush1.msra.mxu0 0.0
      %1457 = vmatprep.subr.mxu0 0.0
      %1458 = vmatpush1.msra.mxu0 0.0
      %1459 = vmatprep.subr.mxu0 0.0
      %1460 = vmatpush1.msra.mxu0 0.0
      %1461 = vmatprep.subr.mxu0 0.0
      %1462 = vmatpush1.msra.mxu0 0.0
      %1463 = vmatprep.subr.mxu0 0.0
      %1464 = vmatpush1.msra.mxu0 0.0
      %1465 = vmatprep.subr.mxu0 0.0
      %1466 = vmatpush1.msra.mxu0 0.0
      %1467 = vmatprep.subr.mxu0 0.0
      %1468 = vmatpush1.msra.mxu0 0.0
      %1469 = vmatprep.mubr.f32.mxu0 0.0
      %1470 = vmatmul.mubr.f32.gmra.mrb[0].mxu0 %v1403
      %v1471 = vpop.f32.mrb[0].mxu0
      %v1472 = vadd.f32 0.0, %v1471
      %v1473 = vpop.f32.mrb[0].mxu0
      %1474 = vdwg.mxu0
      %v1475 = vrcp.pop %v1401
      %v1476 = vmul.f32 %v1472, %v1475
      %1477 = vrot.lane.b32.xlu0 %v1144, 112
      %v1478 = vpop.permute.xlu0 %1477
      %1479 = vrot.lane.b32.xlu0 %v1225, 112
      %v1480 = vpop.permute.xlu0 %1479
      %v1481 = vsel %vm1314, %v1478, 0
      %v1483 = vsel %vm1314, %v1480, 0
      %1485 = vmatprep.subr.mxu0 0.0
      %1486 = vmatpush1.xpose.msra.mxu0 %v1483
      %1487 = vmatprep.subr.mxu0 0.0
      %1488 = vmatpush1.xpose.msra.mxu0 0.0
      %1489 = vmatprep.subr.mxu0 0.0
      %1490 = vmatpush1.xpose.msra.mxu0 0.0
      %1491 = vmatprep.subr.mxu0 0.0
      %1492 = vmatpush1.xpose.msra.mxu0 0.0
      %1493 = vmatprep.subr.mxu0 0.0
      %1494 = vmatpush1.xpose.msra.mxu0 0.0
      %1495 = vmatprep.subr.mxu0 0.0
      %1496 = vmatpush1.xpose.msra.mxu0 0.0
      %1497 = vmatprep.subr.mxu0 0.0
      %1498 = vmatpush1.xpose.msra.mxu0 0.0
      %1499 = vmatprep.subr.mxu0 0.0
      %1500 = vmatpush1.xpose.msra.mxu0 0.0
      %1501 = vmatprep.subr.mxu0 0.0
      %1502 = vmatpush1.xpose.msra.mxu0 0.0
      %1503 = vmatprep.subr.mxu0 0.0
      %1504 = vmatpush1.xpose.msra.mxu0 0.0
      %1505 = vmatprep.subr.mxu0 0.0
      %1506 = vmatpush1.xpose.msra.mxu0 0.0
      %1507 = vmatprep.subr.mxu0 0.0
      %1508 = vmatpush1.xpose.msra.mxu0 0.0
      %1509 = vmatprep.subr.mxu0 0.0
      %1510 = vmatpush1.xpose.msra.mxu0 0.0
      %1511 = vmatprep.subr.mxu0 0.0
      %1512 = vmatpush1.xpose.msra.mxu0 0.0
      %1513 = vmatprep.subr.mxu0 0.0
      %1514 = vmatpush1.xpose.msra.mxu0 0.0
      %1515 = vmatprep.subr.mxu0 0.0
      %1516 = vmatpush1.xpose.msra.mxu0 0.0
      %1517 = vmatprep.subr.mxu0 0.0
      %1518 = vmatpush1.xpose.msra.mxu0 0.0
      %1519 = vmatprep.subr.mxu0 0.0
      %1520 = vmatpush1.xpose.msra.mxu0 0.0
      %1521 = vmatprep.subr.mxu0 0.0
      %1522 = vmatpush1.xpose.msra.mxu0 0.0
      %1523 = vmatprep.subr.mxu0 0.0
      %1524 = vmatpush1.xpose.msra.mxu0 0.0
      %1525 = vmatprep.subr.mxu0 0.0
      %1526 = vmatpush1.xpose.msra.mxu0 0.0
      %1527 = vmatprep.subr.mxu0 0.0
      %1528 = vmatpush1.xpose.msra.mxu0 0.0
      %1529 = vmatprep.subr.mxu0 0.0
      %1530 = vmatpush1.xpose.msra.mxu0 0.0
      %1531 = vmatprep.subr.mxu0 0.0
      %1532 = vmatpush1.xpose.msra.mxu0 0.0
      %1533 = vmatprep.subr.mxu0 0.0
      %1534 = vmatpush1.xpose.msra.mxu0 0.0
      %1535 = vmatprep.subr.mxu0 0.0
      %1536 = vmatpush1.xpose.msra.mxu0 0.0
      %1537 = vmatprep.subr.mxu0 0.0
      %1538 = vmatpush1.xpose.msra.mxu0 0.0
      %1539 = vmatprep.subr.mxu0 0.0
      %1540 = vmatpush1.xpose.msra.mxu0 0.0
      %1541 = vmatprep.subr.mxu0 0.0
      %1542 = vmatpush1.xpose.msra.mxu0 0.0
      %1543 = vmatprep.subr.mxu0 0.0
      %1544 = vmatpush1.xpose.msra.mxu0 0.0
      %1545 = vmatprep.subr.mxu0 0.0
      %1546 = vmatpush1.xpose.msra.mxu0 0.0
      %1547 = vmatprep.subr.mxu0 0.0
      %1548 = vmatpush1.xpose.msra.mxu0 0.0
      %1549 = vmatprep.mubr.f32.mxu0 0.0
      %1550 = vmatmul.mubr.f32.gmra.mrb[0].mxu0 %v1481
      %v1551 = vpop.f32.mrb[0].mxu0
      %v1552 = vadd.f32 0.0, %v1551
      %v1553 = vpop.f32.mrb[0].mxu0
      %1554 = vdwg.mxu0
      %v1555 = vmul.f32 %v1552, 0.25
      %v1556 = vsel %vm1392, %v1555, -inf
      %1557 = vmax.xlane.f32.xlu0 %v1556
      %v1558 = vpop.xlane.xlu0 %1557
      %v1559 = vsub.f32 %v1555, %v1558
      %v1560 = vmul.f32 %v1559, 1.442695
      %v1561 = vpow.pop %v1560
      %v1562 = vsel %vm1392, %v1561, 0.0
      %1563 = vadd.xlane.f32.xlu0 %v1562
      %v1564 = vpop.xlane.xlu0 %1563
      %1566 = vrot.lane.b32.xlu0 %v1306, 112
      %v1567 = vpop.permute.xlu0 %1566
      %v1570 = vsel %vm1392, %v1561, 0
      %1572 = vmatprep.subr.mxu0 0.0
      %1573 = vmatpush1.msra.mxu0 %v1567
      %1574 = vmatprep.subr.mxu0 0.0
      %1575 = vmatpush1.msra.mxu0 0.0
      %1576 = vmatprep.subr.mxu0 0.0
      %1577 = vmatpush1.msra.mxu0 0.0
      %1578 = vmatprep.subr.mxu0 0.0
      %1579 = vmatpush1.msra.mxu0 0.0
      %1580 = vmatprep.subr.mxu0 0.0
      %1581 = vmatpush1.msra.mxu0 0.0
      %1582 = vmatprep.subr.mxu0 0.0
      %1583 = vmatpush1.msra.mxu0 0.0
      %1584 = vmatprep.subr.mxu0 0.0
      %1585 = vmatpush1.msra.mxu0 0.0
      %1586 = vmatprep.subr.mxu0 0.0
      %1587 = vmatpush1.msra.mxu0 0.0
      %1588 = vmatprep.subr.mxu0 0.0
      %1589 = vmatpush1.msra.mxu0 0.0
      %1590 = vmatprep.subr.mxu0 0.0
      %1591 = vmatpush1.msra.mxu0 0.0
      %1592 = vmatprep.subr.mxu0 0.0
      %1593 = vmatpush1.msra.mxu0 0.0
      %1594 = vmatprep.subr.mxu0 0.0
      %1595 = vmatpush1.msra.mxu0 0.0
      %1596 = vmatprep.subr.mxu0 0.0
      %1597 = vmatpush1.msra.mxu0 0.0
      %1598 = vmatprep.subr.mxu0 0.0
      %1599 = vmatpush1.msra.mxu0 0.0
      %1600 = vmatprep.subr.mxu0 0.0
      %1601 = vmatpush1.msra.mxu0 0.0
      %1602 = vmatprep.subr.mxu0 0.0
      %1603 = vmatpush1.msra.mxu0 0.0
      %1604 = vmatprep.subr.mxu0 0.0
      %1605 = vmatpush1.msra.mxu0 0.0
      %1606 = vmatprep.subr.mxu0 0.0
      %1607 = vmatpush1.msra.mxu0 0.0
      %1608 = vmatprep.subr.mxu0 0.0
      %1609 = vmatpush1.msra.mxu0 0.0
      %1610 = vmatprep.subr.mxu0 0.0
      %1611 = vmatpush1.msra.mxu0 0.0
      %1612 = vmatprep.subr.mxu0 0.0
      %1613 = vmatpush1.msra.mxu0 0.0
      %1614 = vmatprep.subr.mxu0 0.0
      %1615 = vmatpush1.msra.mxu0 0.0
      %1616 = vmatprep.subr.mxu0 0.0
      %1617 = vmatpush1.msra.mxu0 0.0
      %1618 = vmatprep.subr.mxu0 0.0
      %1619 = vmatpush1.msra.mxu0 0.0
      %1620 = vmatprep.subr.mxu0 0.0
      %1621 = vmatpush1.msra.mxu0 0.0
      %1622 = vmatprep.subr.mxu0 0.0
      %1623 = vmatpush1.msra.mxu0 0.0
      %1624 = vmatprep.subr.mxu0 0.0
      %1625 = vmatpush1.msra.mxu0 0.0
      %1626 = vmatprep.subr.mxu0 0.0
      %1627 = vmatpush1.msra.mxu0 0.0
      %1628 = vmatprep.subr.mxu0 0.0
      %1629 = vmatpush1.msra.mxu0 0.0
      %1630 = vmatprep.subr.mxu0 0.0
      %1631 = vmatpush1.msra.mxu0 0.0
      %1632 = vmatprep.subr.mxu0 0.0
      %1633 = vmatpush1.msra.mxu0 0.0
      %1634 = vmatprep.subr.mxu0 0.0
      %1635 = vmatpush1.msra.mxu0 0.0
      %1636 = vmatprep.mubr.f32.mxu0 0.0
      %1637 = vmatmul.mubr.f32.gmra.mrb[0].mxu0 %v1570
      %v1638 = vpop.f32.mrb[0].mxu0
      %v1639 = vadd.f32 0.0, %v1638
      %v1640 = vpop.f32.mrb[0].mxu0
      %1641 = vdwg.mxu0
      %v1642 = vrcp.pop %v1564
      %v1643 = vmul.f32 %v1639, %v1642
      %v1645 = vsel %vm1314, %v1643, 0
      %1647 = vmatprep.subr.mxu0 0.0
      %1648 = vmatpush1.msra.mxu0 %v1311
      %1649 = vmatprep.subr.mxu0 0.0
      %1650 = vmatpush1.msra.mxu0 %v1312
      %1651 = vmatprep.subr.mxu0 0.0
      %1652 = vmatpush1.msra.mxu0 0.0
      %1653 = vmatprep.subr.mxu0 0.0
      %1654 = vmatpush1.msra.mxu0 0.0
      %1655 = vmatprep.subr.mxu0 0.0
      %1656 = vmatpush1.msra.mxu0 0.0
      %1657 = vmatprep.subr.mxu0 0.0
      %1658 = vmatpush1.msra.mxu0 0.0
      %1659 = vmatprep.subr.mxu0 0.0
      %1660 = vmatpush1.msra.mxu0 0.0
      %1661 = vmatprep.subr.mxu0 0.0
      %1662 = vmatpush1.msra.mxu0 0.0
      %1663 = vmatprep.subr.mxu0 0.0
      %1664 = vmatpush1.msra.mxu0 0.0
      %1665 = vmatprep.subr.mxu0 0.0
      %1666 = vmatpush1.msra.mxu0 0.0
      %1667 = vmatprep.subr.mxu0 0.0
      %1668 = vmatpush1.msra.mxu0 0.0
      %1669 = vmatprep.subr.mxu0 0.0
      %1670 = vmatpush1.msra.mxu0 0.0
      %1671 = vmatprep.subr.mxu0 0.0
      %1672 = vmatpush1.msra.mxu0 0.0
      %1673 = vmatprep.subr.mxu0 0.0
      %1674 = vmatpush1.msra.mxu0 0.0
      %1675 = vmatprep.subr.mxu0 0.0
      %1676 = vmatpush1.msra.mxu0 0.0
      %1677 = vmatprep.subr.mxu0 0.0
      %1678 = vmatpush1.msra.mxu0 0.0
      %1679 = vmatprep.subr.mxu0 0.0
      %1680 = vmatpush1.msra.mxu0 0.0
      %1681 = vmatprep.subr.mxu0 0.0
      %1682 = vmatpush1.msra.mxu0 0.0
      %1683 = vmatprep.subr.mxu0 0.0
      %1684 = vmatpush1.msra.mxu0 0.0
      %1685 = vmatprep.subr.mxu0 0.0
      %1686 = vmatpush1.msra.mxu0 0.0
      %1687 = vmatprep.subr.mxu0 0.0
      %1688 = vmatpush1.msra.mxu0 0.0
      %1689 = vmatprep.subr.mxu0 0.0
      %1690 = vmatpush1.msra.mxu0 0.0
      %1691 = vmatprep.subr.mxu0 0.0
      %1692 = vmatpush1.msra.mxu0 0.0
      %1693 = vmatprep.subr.mxu0 0.0
      %1694 = vmatpush1.msra.mxu0 0.0
      %1695 = vmatprep.subr.mxu0 0.0
      %1696 = vmatpush1.msra.mxu0 0.0
      %1697 = vmatprep.subr.mxu0 0.0
      %1698 = vmatpush1.msra.mxu0 0.0
      %1699 = vmatprep.subr.mxu0 0.0
      %1700 = vmatpush1.msra.mxu0 0.0
      %1701 = vmatprep.subr.mxu0 0.0
      %1702 = vmatpush1.msra.mxu0 0.0
      %1703 = vmatprep.subr.mxu0 0.0
      %1704 = vmatpush1.msra.mxu0 0.0
      %1705 = vmatprep.subr.mxu0 0.0
      %1706 = vmatpush1.msra.mxu0 0.0
      %1707 = vmatprep.subr.mxu0 0.0
      %1708 = vmatpush1.msra.mxu0 0.0
      %1709 = vmatprep.subr.mxu0 0.0
      %1710 = vmatpush1.msra.mxu0 0.0
      %1711 = vmatprep.mubr.f32.mxu0 0.0
      %1712 = vmatmul.mubr.f32.gmra.mrb[0].mxu0 %v1645
      %v1713 = vpop.f32.mrb[0].mxu0
      %v1714 = vadd.f32 0.0, %v1713
      %v1715 = vpop.f32.mrb[0].mxu0
      %1716 = vdwg.mxu0
      %v1718 = vsel %vm1314, %v1476, 0
      %1720 = vmatprep.subr.mxu0 0.0
      %1721 = vmatpush1.msra.mxu0 %v1309
      %1722 = vmatprep.subr.mxu0 0.0
      %1723 = vmatpush1.msra.mxu0 %v1310
      %1724 = vmatprep.subr.mxu0 0.0
      %1725 = vmatpush1.msra.mxu0 0.0
      %1726 = vmatprep.subr.mxu0 0.0
      %1727 = vmatpush1.msra.mxu0 0.0
      %1728 = vmatprep.subr.mxu0 0.0
      %1729 = vmatpush1.msra.mxu0 0.0
      %1730 = vmatprep.subr.mxu0 0.0
      %1731 = vmatpush1.msra.mxu0 0.0
      %1732 = vmatprep.subr.mxu0 0.0
      %1733 = vmatpush1.msra.mxu0 0.0
      %1734 = vmatprep.subr.mxu0 0.0
      %1735 = vmatpush1.msra.mxu0 0.0
      %1736 = vmatprep.subr.mxu0 0.0
      %1737 = vmatpush1.msra.mxu0 0.0
      %1738 = vmatprep.subr.mxu0 0.0
      %1739 = vmatpush1.msra.mxu0 0.0
      %1740 = vmatprep.subr.mxu0 0.0
      %1741 = vmatpush1.msra.mxu0 0.0
      %1742 = vmatprep.subr.mxu0 0.0
      %1743 = vmatpush1.msra.mxu0 0.0
      %1744 = vmatprep.subr.mxu0 0.0
      %1745 = vmatpush1.msra.mxu0 0.0
      %1746 = vmatprep.subr.mxu0 0.0
      %1747 = vmatpush1.msra.mxu0 0.0
      %1748 = vmatprep.subr.mxu0 0.0
      %1749 = vmatpush1.msra.mxu0 0.0
      %1750 = vmatprep.subr.mxu0 0.0
      %1751 = vmatpush1.msra.mxu0 0.0
      %1752 = vmatprep.subr.mxu0 0.0
      %1753 = vmatpush1.msra.mxu0 0.0
      %1754 = vmatprep.subr.mxu0 0.0
      %1755 = vmatpush1.msra.mxu0 0.0
      %1756 = vmatprep.subr.mxu0 0.0
      %1757 = vmatpush1.msra.mxu0 0.0
      %1758 = vmatprep.subr.mxu0 0.0
      %1759 = vmatpush1.msra.mxu0 0.0
      %1760 = vmatprep.subr.mxu0 0.0
      %1761 = vmatpush1.msra.mxu0 0.0
      %1762 = vmatprep.subr.mxu0 0.0
      %1763 = vmatpush1.msra.mxu0 0.0
      %1764 = vmatprep.subr.mxu0 0.0
      %1765 = vmatpush1.msra.mxu0 0.0
      %1766 = vmatprep.subr.mxu0 0.0
      %1767 = vmatpush1.msra.mxu0 0.0
      %1768 = vmatprep.subr.mxu0 0.0
      %1769 = vmatpush1.msra.mxu0 0.0
      %1770 = vmatprep.subr.mxu0 0.0
      %1771 = vmatpush1.msra.mxu0 0.0
      %1772 = vmatprep.subr.mxu0 0.0
      %1773 = vmatpush1.msra.mxu0 0.0
      %1774 = vmatprep.subr.mxu0 0.0
      %1775 = vmatpush1.msra.mxu0 0.0
      %1776 = vmatprep.subr.mxu0 0.0
      %1777 = vmatpush1.msra.mxu0 0.0
      %1778 = vmatprep.subr.mxu0 0.0
      %1779 = vmatpush1.msra.mxu0 0.0
      %1780 = vmatprep.subr.mxu0 0.0
      %1781 = vmatpush1.msra.mxu0 0.0
      %1782 = vmatprep.subr.mxu0 0.0
      %1783 = vmatpush1.msra.mxu0 0.0
      %1784 = vmatprep.mubr.f32.mxu0 0.0
      %1785 = vmatmul.mubr.f32.gmra.mrb[0].mxu0 %v1718
      %v1786 = vpop.f32.mrb[0].mxu0
      %v1787 = vadd.f32 %v1714, %v1786
      %v1788 = vpop.f32.mrb[0].mxu0
      %1789 = vdwg.mxu0
      %v1791 = vlaneseq
      %v1792 = vshrl.u32 %v1791, 7
      %v1793 = vsub.s32 0, %v1792
      %v1794 = vrot.slane %v1313, %v1793
      %v1796 = vadd.f32 %v1787, %v1794
      %v1797 = vld [vmem:[%s25] sm:$0x1]
      %v1798 = vld [vmem:[%s27] sm:$0x1]
      %v1799 = vsel %vm1073, %v1796, 0.0
      %1800 = vadd.xlane.f32.xlu0 %v1799
      %v1801 = vpop.xlane.xlu0 %1800
      %v1802 = vrcp.pop 32.0
      %v1803 = vmul.f32 %v1801, %v1802
      %v1804 = vsub.f32 %v1796, %v1803
      %v1805 = vmul.f32 %v1804, %v1804
      %v1806 = vsel %vm1073, %v1805, 0.0
      %1807 = vadd.xlane.f32.xlu0 %v1806
      %v1808 = vpop.xlane.xlu0 %1807
      %v1809 = vmul.f32 %v1808, %v1802
      %v1810 = vadd.f32 %v1809, 1e-05
      %v1811 = vrsqrt.pop %v1810
      %v1812 = vmul.f32 %v1804, %v1811
      %v1814 = vlaneseq
      %v1815 = vshrl.u32 %v1814, 7
      %v1816 = vsub.s32 0, %v1815
      %v1817 = vrot.slane %v1797, %v1816
      %v1819 = vmul.f32 %v1812, %v1817
      %v1821 = vlaneseq
      %v1822 = vshrl.u32 %v1821, 7
      %v1823 = vsub.s32 0, %v1822
      %v1824 = vrot.slane %v1798, %v1823
      %v1826 = vadd.f32 %v1819, %v1824
      %v1827 = vadd.f32 %v1826, %v1061
      %v1828 = vld [vmem:[%s29] sm:$0xff]
      %v1829 = vld [vmem:[%s29 + $0x8] sm:$0xff]
      %v1830 = vld [vmem:[%s29 + $0x10] sm:$0xff]
      %v1831 = vld [vmem:[%s29 + $0x18] sm:$0xff]
      %v1832 = vld [vmem:[%s31] sm:$0x1]
      %v1834 = vlaneseq
      %v1835 = vshrl.u32 %v1834, 7
      %v1836 = vsub.s32 0, %v1835
      %v1837 = vrot.slane %v1832, %v1836
      %v1840 = vsel %vm1073, %v1827, 0
      %1842 = vmatprep.subr.mxu0 0.0
      %1843 = vmatpush1.msra.mxu0 %v1828
      %1844 = vmatprep.subr.mxu0 0.0
      %1845 = vmatpush1.msra.mxu0 %v1829
      %1846 = vmatprep.subr.mxu0 0.0
      %1847 = vmatpush1.msra.mxu0 %v1830
      %1848 = vmatprep.subr.mxu0 0.0
      %1849 = vmatpush1.msra.mxu0 %v1831
      %1850 = vmatprep.subr.mxu0 0.0
      %1851 = vmatpush1.msra.mxu0 0.0
      %1852 = vmatprep.subr.mxu0 0.0
      %1853 = vmatpush1.msra.mxu0 0.0
      %1854 = vmatprep.subr.mxu0 0.0
      %1855 = vmatpush1.msra.mxu0 0.0
      %1856 = vmatprep.subr.mxu0 0.0
      %1857 = vmatpush1.msra.mxu0 0.0
      %1858 = vmatprep.subr.mxu0 0.0
      %1859 = vmatpush1.msra.mxu0 0.0
      %1860 = vmatprep.subr.mxu0 0.0
      %1861 = vmatpush1.msra.mxu0 0.0
      %1862 = vmatprep.subr.mxu0 0.0
      %1863 = vmatpush1.msra.mxu0 0.0
      %1864 = vmatprep.subr.mxu0 0.0
      %1865 = vmatpush1.msra.mxu0 0.0
      %1866 = vmatprep.subr.mxu0 0.0
      %1867 = vmatpush1.msra.mxu0 0.0
      %1868 = vmatprep.subr.mxu0 0.0
      %1869 = vmatpush1.msra.mxu0 0.0
      %1870 = vmatprep.subr.mxu0 0.0
      %1871 = vmatpush1.msra.mxu0 0.0
      %1872 = vmatprep.subr.mxu0 0.0
      %1873 = vmatpush1.msra.mxu0 0.0
      %1874 = vmatprep.subr.mxu0 0.0
      %1875 = vmatpush1.msra.mxu0 0.0
      %1876 = vmatprep.subr.mxu0 0.0
      %1877 = vmatpush1.msra.mxu0 0.0
      %1878 = vmatprep.subr.mxu0 0.0
      %1879 = vmatpush1.msra.mxu0 0.0
      %1880 = vmatprep.subr.mxu0 0.0
      %1881 = vmatpush1.msra.mxu0 0.0
      %1882 = vmatprep.subr.mxu0 0.0
      %1883 = vmatpush1.msra.mxu0 0.0
      %1884 = vmatprep.subr.mxu0 0.0
      %1885 = vmatpush1.msra.mxu0 0.0
      %1886 = vmatprep.subr.mxu0 0.0
      %1887 = vmatpush1.msra.mxu0 0.0
      %1888 = vmatprep.subr.mxu0 0.0
      %1889 = vmatpush1.msra.mxu0 0.0
      %1890 = vmatprep.subr.mxu0 0.0
      %1891 = vmatpush1.msra.mxu0 0.0
      %1892 = vmatprep.subr.mxu0 0.0
      %1893 = vmatpush1.msra.mxu0 0.0
      %1894 = vmatprep.subr.mxu0 0.0
      %1895 = vmatpush1.msra.mxu0 0.0
      %1896 = vmatprep.subr.mxu0 0.0
      %1897 = vmatpush1.msra.mxu0 0.0
      %1898 = vmatprep.subr.mxu0 0.0
      %1899 = vmatpush1.msra.mxu0 0.0
      %1900 = vmatprep.subr.mxu0 0.0
      %1901 = vmatpush1.msra.mxu0 0.0
      %1902 = vmatprep.subr.mxu0 0.0
      %1903 = vmatpush1.msra.mxu0 0.0
      %1904 = vmatprep.subr.mxu0 0.0
      %1905 = vmatpush1.msra.mxu0 0.0
      %1906 = vmatprep.mubr.f32.mxu0 0.0
      %1907 = vmatmul.mubr.f32.gmra.mrb[0].mxu0 %v1840
      %v1908 = vpop.f32.mrb[0].mxu0
      %v1909 = vadd.f32 %v1837, %v1908
      %v1910 = vpop.f32.mrb[0].mxu0
      %1911 = vdwg.mxu0
      %v1912 = vld [vmem:[%s1042] sm:$0xff]
      %v1913 = vld [vmem:[%s1042 + $0x8] sm:$0xff]
      %v1914 = vld [vmem:[%s1047] sm:$0xff]
      %v1915 = vld [vmem:[%s1047 + $0x8] sm:$0xff]
      %v1916 = vld [vmem:[%s33] sm:$0xff]
      %v1917 = vld [vmem:[%s33 + $0x8] sm:$0xff]
      %v1918 = vld [vmem:[%s35] sm:$0x1]
      %v1920 = vsel %vm1392, %v1909, 0
      %v1923 = vsel %vm1392, %v1912, 0
      %v1926 = vsel %vm1392, %v1913, 0
      %1928 = vmatprep.subr.mxu0 0.0
      %1929 = vmatpush1.xpose.msra.mxu0 %v1923
      %1930 = vmatprep.subr.mxu0 0.0
      %1931 = vmatpush1.xpose.msra.mxu0 %v1926
      %1932 = vmatprep.subr.mxu0 0.0
      %1933 = vmatpush1.xpose.msra.mxu0 0.0
      %1934 = vmatprep.subr.mxu0 0.0
      %1935 = vmatpush1.xpose.msra.mxu0 0.0
      %1936 = vmatprep.subr.mxu0 0.0
      %1937 = vmatpush1.xpose.msra.mxu0 0.0
      %1938 = vmatprep.subr.mxu0 0.0
      %1939 = vmatpush1.xpose.msra.mxu0 0.0
      %1940 = vmatprep.subr.mxu0 0.0
      %1941 = vmatpush1.xpose.msra.mxu0 0.0
      %1942 = vmatprep.subr.mxu0 0.0
      %1943 = vmatpush1.xpose.msra.mxu0 0.0
      %1944 = vmatprep.subr.mxu0 0.0
      %1945 = vmatpush1.xpose.msra.mxu0 0.0
      %1946 = vmatprep.subr.mxu0 0.0
      %1947 = vmatpush1.xpose.msra.mxu0 0.0
      %1948 = vmatprep.subr.mxu0 0.0
      %1949 = vmatpush1.xpose.msra.mxu0 0.0
      %1950 = vmatprep.subr.mxu0 0.0
      %1951 = vmatpush1.xpose.msra.mxu0 0.0
      %1952 = vmatprep.subr.mxu0 0.0
      %1953 = vmatpush1.xpose.msra.mxu0 0.0
      %1954 = vmatprep.subr.mxu0 0.0
      %1955 = vmatpush1.xpose.msra.mxu0 0.0
      %1956 = vmatprep.subr.mxu0 0.0
      %1957 = vmatpush1.xpose.msra.mxu0 0.0
      %1958 = vmatprep.subr.mxu0 0.0
      %1959 = vmatpush1.xpose.msra.mxu0 0.0
      %1960 = vmatprep.subr.mxu0 0.0
      %1961 = vmatpush1.xpose.msra.mxu0 0.0
      %1962 = vmatprep.subr.mxu0 0.0
      %1963 = vmatpush1.xpose.msra.mxu0 0.0
      %1964 = vmatprep.subr.mxu0 0.0
      %1965 = vmatpush1.xpose.msra.mxu0 0.0
      %1966 = vmatprep.subr.mxu0 0.0
      %1967 = vmatpush1.xpose.msra.mxu0 0.0
      %1968 = vmatprep.subr.mxu0 0.0
      %1969 = vmatpush1.xpose.msra.mxu0 0.0
      %1970 = vmatprep.subr.mxu0 0.0
      %1971 = vmatpush1.xpose.msra.mxu0 0.0
      %1972 = vmatprep.subr.mxu0 0.0
      %1973 = vmatpush1.xpose.msra.mxu0 0.0
      %1974 = vmatprep.subr.mxu0 0.0
      %1975 = vmatpush1.xpose.msra.mxu0 0.0
      %1976 = vmatprep.subr.mxu0 0.0
      %1977 = vmatpush1.xpose.msra.mxu0 0.0
      %1978 = vmatprep.subr.mxu0 0.0
      %1979 = vmatpush1.xpose.msra.mxu0 0.0
      %1980 = vmatprep.subr.mxu0 0.0
      %1981 = vmatpush1.xpose.msra.mxu0 0.0
      %1982 = vmatprep.subr.mxu0 0.0
      %1983 = vmatpush1.xpose.msra.mxu0 0.0
      %1984 = vmatprep.subr.mxu0 0.0
      %1985 = vmatpush1.xpose.msra.mxu0 0.0
      %1986 = vmatprep.subr.mxu0 0.0
      %1987 = vmatpush1.xpose.msra.mxu0 0.0
      %1988 = vmatprep.subr.mxu0 0.0
      %1989 = vmatpush1.xpose.msra.mxu0 0.0
      %1990 = vmatprep.subr.mxu0 0.0
      %1991 = vmatpush1.xpose.msra.mxu0 0.0
      %1992 = vmatprep.mubr.f32.mxu0 0.0
      %1993 = vmatmul.mubr.f32.gmra.mrb[0].mxu0 %v1920
      %v1994 = vpop.f32.mrb[0].mxu0
      %v1995 = vadd.f32 0.0, %v1994
      %v1996 = vpop.f32.mrb[0].mxu0
      %1997 = vdwg.mxu0
      %v1998 = vmul.f32 %v1995, 0.35355338
      %v1999 = vsel %vm1314, %v1998, -inf
      %2000 = vmax.xlane.f32.xlu0 %v1999
      %v2001 = vpop.xlane.xlu0 %2000
      %v2002 = vsub.f32 %v1998, %v2001
      %v2003 = vmul.f32 %v2002, 1.442695
      %v2004 = vpow.pop %v2003
      %v2005 = vsel %vm1314, %v2004, 0.0
      %2006 = vadd.xlane.f32.xlu0 %v2005
      %v2007 = vpop.xlane.xlu0 %2006
      %v2009 = vsel %vm1314, %v2004, 0
      %2011 = vmatprep.subr.mxu0 0.0
      %2012 = vmatpush1.msra.mxu0 %v1914
      %2013 = vmatprep.subr.mxu0 0.0
      %2014 = vmatpush1.msra.mxu0 %v1915
      %2015 = vmatprep.subr.mxu0 0.0
      %2016 = vmatpush1.msra.mxu0 0.0
      %2017 = vmatprep.subr.mxu0 0.0
      %2018 = vmatpush1.msra.mxu0 0.0
      %2019 = vmatprep.subr.mxu0 0.0
      %2020 = vmatpush1.msra.mxu0 0.0
      %2021 = vmatprep.subr.mxu0 0.0
      %2022 = vmatpush1.msra.mxu0 0.0
      %2023 = vmatprep.subr.mxu0 0.0
      %2024 = vmatpush1.msra.mxu0 0.0
      %2025 = vmatprep.subr.mxu0 0.0
      %2026 = vmatpush1.msra.mxu0 0.0
      %2027 = vmatprep.subr.mxu0 0.0
      %2028 = vmatpush1.msra.mxu0 0.0
      %2029 = vmatprep.subr.mxu0 0.0
      %2030 = vmatpush1.msra.mxu0 0.0
      %2031 = vmatprep.subr.mxu0 0.0
      %2032 = vmatpush1.msra.mxu0 0.0
      %2033 = vmatprep.subr.mxu0 0.0
      %2034 = vmatpush1.msra.mxu0 0.0
      %2035 = vmatprep.subr.mxu0 0.0
      %2036 = vmatpush1.msra.mxu0 0.0
      %2037 = vmatprep.subr.mxu0 0.0
      %2038 = vmatpush1.msra.mxu0 0.0
      %2039 = vmatprep.subr.mxu0 0.0
      %2040 = vmatpush1.msra.mxu0 0.0
      %2041 = vmatprep.subr.mxu0 0.0
      %2042 = vmatpush1.msra.mxu0 0.0
      %2043 = vmatprep.subr.mxu0 0.0
      %2044 = vmatpush1.msra.mxu0 0.0
      %2045 = vmatprep.subr.mxu0 0.0
      %2046 = vmatpush1.msra.mxu0 0.0
      %2047 = vmatprep.subr.mxu0 0.0
      %2048 = vmatpush1.msra.mxu0 0.0
      %2049 = vmatprep.subr.mxu0 0.0
      %2050 = vmatpush1.msra.mxu0 0.0
      %2051 = vmatprep.subr.mxu0 0.0
      %2052 = vmatpush1.msra.mxu0 0.0
      %2053 = vmatprep.subr.mxu0 0.0
      %2054 = vmatpush1.msra.mxu0 0.0
      %2055 = vmatprep.subr.mxu0 0.0
      %2056 = vmatpush1.msra.mxu0 0.0
      %2057 = vmatprep.subr.mxu0 0.0
      %2058 = vmatpush1.msra.mxu0 0.0
      %2059 = vmatprep.subr.mxu0 0.0
      %2060 = vmatpush1.msra.mxu0 0.0
      %2061 = vmatprep.subr.mxu0 0.0
      %2062 = vmatpush1.msra.mxu0 0.0
      %2063 = vmatprep.subr.mxu0 0.0
      %2064 = vmatpush1.msra.mxu0 0.0
      %2065 = vmatprep.subr.mxu0 0.0
      %2066 = vmatpush1.msra.mxu0 0.0
      %2067 = vmatprep.subr.mxu0 0.0
      %2068 = vmatpush1.msra.mxu0 0.0
      %2069 = vmatprep.subr.mxu0 0.0
      %2070 = vmatpush1.msra.mxu0 0.0
      %2071 = vmatprep.subr.mxu0 0.0
      %2072 = vmatpush1.msra.mxu0 0.0
      %2073 = vmatprep.subr.mxu0 0.0
      %2074 = vmatpush1.msra.mxu0 0.0
      %2075 = vmatprep.mubr.f32.mxu0 0.0
      %2076 = vmatmul.mubr.f32.gmra.mrb[0].mxu0 %v2009
      %v2077 = vpop.f32.mrb[0].mxu0
      %v2078 = vadd.f32 0.0, %v2077
      %v2079 = vpop.f32.mrb[0].mxu0
      %2080 = vdwg.mxu0
      %v2081 = vrcp.pop %v2007
      %v2082 = vmul.f32 %v2078, %v2081
      %2083 = vrot.lane.b32.xlu0 %v1909, 120
      %v2084 = vpop.permute.xlu0 %2083
      %2085 = vrot.lane.b32.xlu0 %v1912, 120
      %v2086 = vpop.permute.xlu0 %2085
      %2087 = vrot.lane.b32.xlu0 %v1913, 120
      %v2088 = vpop.permute.xlu0 %2087
      %v2089 = vsel %vm1392, %v2084, 0
      %v2091 = vsel %vm1392, %v2086, 0
      %v2093 = vsel %vm1392, %v2088, 0
      %2095 = vmatprep.subr.mxu0 0.0
      %2096 = vmatpush1.xpose.msra.mxu0 %v2091
      %2097 = vmatprep.subr.mxu0 0.0
      %2098 = vmatpush1.xpose.msra.mxu0 %v2093
      %2099 = vmatprep.subr.mxu0 0.0
      %2100 = vmatpush1.xpose.msra.mxu0 0.0
      %2101 = vmatprep.subr.mxu0 0.0
      %2102 = vmatpush1.xpose.msra.mxu0 0.0
      %2103 = vmatprep.subr.mxu0 0.0
      %2104 = vmatpush1.xpose.msra.mxu0 0.0
      %2105 = vmatprep.subr.mxu0 0.0
      %2106 = vmatpush1.xpose.msra.mxu0 0.0
      %2107 = vmatprep.subr.mxu0 0.0
      %2108 = vmatpush1.xpose.msra.mxu0 0.0
      %2109 = vmatprep.subr.mxu0 0.0
      %2110 = vmatpush1.xpose.msra.mxu0 0.0
      %2111 = vmatprep.subr.mxu0 0.0
      %2112 = vmatpush1.xpose.msra.mxu0 0.0
      %2113 = vmatprep.subr.mxu0 0.0
      %2114 = vmatpush1.xpose.msra.mxu0 0.0
      %2115 = vmatprep.subr.mxu0 0.0
      %2116 = vmatpush1.xpose.msra.mxu0 0.0
      %2117 = vmatprep.subr.mxu0 0.0
      %2118 = vmatpush1.xpose.msra.mxu0 0.0
      %2119 = vmatprep.subr.mxu0 0.0
      %2120 = vmatpush1.xpose.msra.mxu0 0.0
      %2121 = vmatprep.subr.mxu0 0.0
      %2122 = vmatpush1.xpose.msra.mxu0 0.0
      %2123 = vmatprep.subr.mxu0 0.0
      %2124 = vmatpush1.xpose.msra.mxu0 0.0
      %2125 = vmatprep.subr.mxu0 0.0
      %2126 = vmatpush1.xpose.msra.mxu0 0.0
      %2127 = vmatprep.subr.mxu0 0.0
      %2128 = vmatpush1.xpose.msra.mxu0 0.0
      %2129 = vmatprep.subr.mxu0 0.0
      %2130 = vmatpush1.xpose.msra.mxu0 0.0
      %2131 = vmatprep.subr.mxu0 0.0
      %2132 = vmatpush1.xpose.msra.mxu0 0.0
      %2133 = vmatprep.subr.mxu0 0.0
      %2134 = vmatpush1.xpose.msra.mxu0 0.0
      %2135 = vmatprep.subr.mxu0 0.0
      %2136 = vmatpush1.xpose.msra.mxu0 0.0
      %2137 = vmatprep.subr.mxu0 0.0
      %2138 = vmatpush1.xpose.msra.mxu0 0.0
      %2139 = vmatprep.subr.mxu0 0.0
      %2140 = vmatpush1.xpose.msra.mxu0 0.0
      %2141 = vmatprep.subr.mxu0 0.0
      %2142 = vmatpush1.xpose.msra.mxu0 0.0
      %2143 = vmatprep.subr.mxu0 0.0
      %2144 = vmatpush1.xpose.msra.mxu0 0.0
      %2145 = vmatprep.subr.mxu0 0.0
      %2146 = vmatpush1.xpose.msra.mxu0 0.0
      %2147 = vmatprep.subr.mxu0 0.0
      %2148 = vmatpush1.xpose.msra.mxu0 0.0
      %2149 = vmatprep.subr.mxu0 0.0
      %2150 = vmatpush1.xpose.msra.mxu0 0.0
      %2151 = vmatprep.subr.mxu0 0.0
      %2152 = vmatpush1.xpose.msra.mxu0 0.0
      %2153 = vmatprep.subr.mxu0 0.0
      %2154 = vmatpush1.xpose.msra.mxu0 0.0
      %2155 = vmatprep.subr.mxu0 0.0
      %2156 = vmatpush1.xpose.msra.mxu0 0.0
      %2157 = vmatprep.subr.mxu0 0.0
      %2158 = vmatpush1.xpose.msra.mxu0 0.0
      %2159 = vmatprep.mubr.f32.mxu0 0.0
      %2160 = vmatmul.mubr.f32.gmra.mrb[0].mxu0 %v2089
      %v2161 = vpop.f32.mrb[0].mxu0
      %v2162 = vadd.f32 0.0, %v2161
      %v2163 = vpop.f32.mrb[0].mxu0
      %2164 = vdwg.mxu0
      %v2165 = vmul.f32 %v2162, 0.35355338
      %v2166 = vsel %vm1314, %v2165, -inf
      %2167 = vmax.xlane.f32.xlu0 %v2166
      %v2168 = vpop.xlane.xlu0 %2167
      %v2169 = vsub.f32 %v2165, %v2168
      %v2170 = vmul.f32 %v2169, 1.442695
      %v2171 = vpow.pop %v2170
      %v2172 = vsel %vm1314, %v2171, 0.0
      %2173 = vadd.xlane.f32.xlu0 %v2172
      %v2174 = vpop.xlane.xlu0 %2173
      %2177 = vrot.lane.b32.xlu0 %v1914, 120
      %v2178 = vpop.permute.xlu0 %2177
      %2179 = vrot.lane.b32.xlu0 %v1915, 120
      %v2180 = vpop.permute.xlu0 %2179
      %v2184 = vsel %vm1314, %v2171, 0
      %2186 = vmatprep.subr.mxu0 0.0
      %2187 = vmatpush1.msra.mxu0 %v2178
      %2188 = vmatprep.subr.mxu0 0.0
      %2189 = vmatpush1.msra.mxu0 %v2180
      %2190 = vmatprep.subr.mxu0 0.0
      %2191 = vmatpush1.msra.mxu0 0.0
      %2192 = vmatprep.subr.mxu0 0.0
      %2193 = vmatpush1.msra.mxu0 0.0
      %2194 = vmatprep.subr.mxu0 0.0
      %2195 = vmatpush1.msra.mxu0 0.0
      %2196 = vmatprep.subr.mxu0 0.0
      %2197 = vmatpush1.msra.mxu0 0.0
      %2198 = vmatprep.subr.mxu0 0.0
      %2199 = vmatpush1.msra.mxu0 0.0
      %2200 = vmatprep.subr.mxu0 0.0
      %2201 = vmatpush1.msra.mxu0 0.0
      %2202 = vmatprep.subr.mxu0 0.0
      %2203 = vmatpush1.msra.mxu0 0.0
      %2204 = vmatprep.subr.mxu0 0.0
      %2205 = vmatpush1.msra.mxu0 0.0
      %2206 = vmatprep.subr.mxu0 0.0
      %2207 = vmatpush1.msra.mxu0 0.0
      %2208 = vmatprep.subr.mxu0 0.0
      %2209 = vmatpush1.msra.mxu0 0.0
      %2210 = vmatprep.subr.mxu0 0.0
      %2211 = vmatpush1.msra.mxu0 0.0
      %2212 = vmatprep.subr.mxu0 0.0
      %2213 = vmatpush1.msra.mxu0 0.0
      %2214 = vmatprep.subr.mxu0 0.0
      %2215 = vmatpush1.msra.mxu0 0.0
      %2216 = vmatprep.subr.mxu0 0.0
      %2217 = vmatpush1.msra.mxu0 0.0
      %2218 = vmatprep.subr.mxu0 0.0
      %2219 = vmatpush1.msra.mxu0 0.0
      %2220 = vmatprep.subr.mxu0 0.0
      %2221 = vmatpush1.msra.mxu0 0.0
      %2222 = vmatprep.subr.mxu0 0.0
      %2223 = vmatpush1.msra.mxu0 0.0
      %2224 = vmatprep.subr.mxu0 0.0
      %2225 = vmatpush1.msra.mxu0 0.0
      %2226 = vmatprep.subr.mxu0 0.0
      %2227 = vmatpush1.msra.mxu0 0.0
      %2228 = vmatprep.subr.mxu0 0.0
      %2229 = vmatpush1.msra.mxu0 0.0
      %2230 = vmatprep.subr.mxu0 0.0
      %2231 = vmatpush1.msra.mxu0 0.0
      %2232 = vmatprep.subr.mxu0 0.0
      %2233 = vmatpush1.msra.mxu0 0.0
      %2234 = vmatprep.subr.mxu0 0.0
      %2235 = vmatpush1.msra.mxu0 0.0
      %2236 = vmatprep.subr.mxu0 0.0
      %2237 = vmatpush1.msra.mxu0 0.0
      %2238 = vmatprep.subr.mxu0 0.0
      %2239 = vmatpush1.msra.mxu0 0.0
      %2240 = vmatprep.subr.mxu0 0.0
      %2241 = vmatpush1.msra.mxu0 0.0
      %2242 = vmatprep.subr.mxu0 0.0
      %2243 = vmatpush1.msra.mxu0 0.0
      %2244 = vmatprep.subr.mxu0 0.0
      %2245 = vmatpush1.msra.mxu0 0.0
      %2246 = vmatprep.subr.mxu0 0.0
      %2247 = vmatpush1.msra.mxu0 0.0
      %2248 = vmatprep.subr.mxu0 0.0
      %2249 = vmatpush1.msra.mxu0 0.0
      %2250 = vmatprep.mubr.f32.mxu0 0.0
      %2251 = vmatmul.mubr.f32.gmra.mrb[0].mxu0 %v2184
      %v2252 = vpop.f32.mrb[0].mxu0
      %v2253 = vadd.f32 0.0, %v2252
      %v2254 = vpop.f32.mrb[0].mxu0
      %2255 = vdwg.mxu0
      %v2256 = vrcp.pop %v2174
      %v2257 = vmul.f32 %v2253, %v2256
      %v2259 = vsel %vm1392, %v2257, 0
      %2261 = vmatprep.subr.mxu0 0.0
      %2262 = vmatpush1.msra.mxu0 %v1917
      %2263 = vmatprep.subr.mxu0 0.0
      %2264 = vmatpush1.msra.mxu0 0.0
      %2265 = vmatprep.subr.mxu0 0.0
      %2266 = vmatpush1.msra.mxu0 0.0
      %2267 = vmatprep.subr.mxu0 0.0
      %2268 = vmatpush1.msra.mxu0 0.0
      %2269 = vmatprep.subr.mxu0 0.0
      %2270 = vmatpush1.msra.mxu0 0.0
      %2271 = vmatprep.subr.mxu0 0.0
      %2272 = vmatpush1.msra.mxu0 0.0
      %2273 = vmatprep.subr.mxu0 0.0
      %2274 = vmatpush1.msra.mxu0 0.0
      %2275 = vmatprep.subr.mxu0 0.0
      %2276 = vmatpush1.msra.mxu0 0.0
      %2277 = vmatprep.subr.mxu0 0.0
      %2278 = vmatpush1.msra.mxu0 0.0
      %2279 = vmatprep.subr.mxu0 0.0
      %2280 = vmatpush1.msra.mxu0 0.0
      %2281 = vmatprep.subr.mxu0 0.0
      %2282 = vmatpush1.msra.mxu0 0.0
      %2283 = vmatprep.subr.mxu0 0.0
      %2284 = vmatpush1.msra.mxu0 0.0
      %2285 = vmatprep.subr.mxu0 0.0
      %2286 = vmatpush1.msra.mxu0 0.0
      %2287 = vmatprep.subr.mxu0 0.0
      %2288 = vmatpush1.msra.mxu0 0.0
      %2289 = vmatprep.subr.mxu0 0.0
      %2290 = vmatpush1.msra.mxu0 0.0
      %2291 = vmatprep.subr.mxu0 0.0
      %2292 = vmatpush1.msra.mxu0 0.0
      %2293 = vmatprep.subr.mxu0 0.0
      %2294 = vmatpush1.msra.mxu0 0.0
      %2295 = vmatprep.subr.mxu0 0.0
      %2296 = vmatpush1.msra.mxu0 0.0
      %2297 = vmatprep.subr.mxu0 0.0
      %2298 = vmatpush1.msra.mxu0 0.0
      %2299 = vmatprep.subr.mxu0 0.0
      %2300 = vmatpush1.msra.mxu0 0.0
      %2301 = vmatprep.subr.mxu0 0.0
      %2302 = vmatpush1.msra.mxu0 0.0
      %2303 = vmatprep.subr.mxu0 0.0
      %2304 = vmatpush1.msra.mxu0 0.0
      %2305 = vmatprep.subr.mxu0 0.0
      %2306 = vmatpush1.msra.mxu0 0.0
      %2307 = vmatprep.subr.mxu0 0.0
      %2308 = vmatpush1.msra.mxu0 0.0
      %2309 = vmatprep.subr.mxu0 0.0
      %2310 = vmatpush1.msra.mxu0 0.0
      %2311 = vmatprep.subr.mxu0 0.0
      %2312 = vmatpush1.msra.mxu0 0.0
      %2313 = vmatprep.subr.mxu0 0.0
      %2314 = vmatpush1.msra.mxu0 0.0
      %2315 = vmatprep.subr.mxu0 0.0
      %2316 = vmatpush1.msra.mxu0 0.0
      %2317 = vmatprep.subr.mxu0 0.0
      %2318 = vmatpush1.msra.mxu0 0.0
      %2319 = vmatprep.subr.mxu0 0.0
      %2320 = vmatpush1.msra.mxu0 0.0
      %2321 = vmatprep.subr.mxu0 0.0
      %2322 = vmatpush1.msra.mxu0 0.0
      %2323 = vmatprep.subr.mxu0 0.0
      %2324 = vmatpush1.msra.mxu0 0.0
      %2325 = vmatprep.mubr.f32.mxu0 0.0
      %2326 = vmatmul.mubr.f32.gmra.mrb[0].mxu0 %v2259
      %v2327 = vpop.f32.mrb[0].mxu0
      %v2328 = vadd.f32 0.0, %v2327
      %v2329 = vpop.f32.mrb[0].mxu0
      %2330 = vdwg.mxu0
      %v2332 = vsel %vm1392, %v2082, 0
      %2334 = vmatprep.subr.mxu0 0.0
      %2335 = vmatpush1.msra.mxu0 %v1916
      %2336 = vmatprep.subr.mxu0 0.0
      %2337 = vmatpush1.msra.mxu0 0.0
      %2338 = vmatprep.subr.mxu0 0.0
      %2339 = vmatpush1.msra.mxu0 0.0
      %2340 = vmatprep.subr.mxu0 0.0
      %2341 = vmatpush1.msra.mxu0 0.0
      %2342 = vmatprep.subr.mxu0 0.0
      %2343 = vmatpush1.msra.mxu0 0.0
      %2344 = vmatprep.subr.mxu0 0.0
      %2345 = vmatpush1.msra.mxu0 0.0
      %2346 = vmatprep.subr.mxu0 0.0
      %2347 = vmatpush1.msra.mxu0 0.0
      %2348 = vmatprep.subr.mxu0 0.0
      %2349 = vmatpush1.msra.mxu0 0.0
      %2350 = vmatprep.subr.mxu0 0.0
      %2351 = vmatpush1.msra.mxu0 0.0
      %2352 = vmatprep.subr.mxu0 0.0
      %2353 = vmatpush1.msra.mxu0 0.0
      %2354 = vmatprep.subr.mxu0 0.0
      %2355 = vmatpush1.msra.mxu0 0.0
      %2356 = vmatprep.subr.mxu0 0.0
      %2357 = vmatpush1.msra.mxu0 0.0
      %2358 = vmatprep.subr.mxu0 0.0
      %2359 = vmatpush1.msra.mxu0 0.0
      %2360 = vmatprep.subr.mxu0 0.0
      %2361 = vmatpush1.msra.mxu0 0.0
      %2362 = vmatprep.subr.mxu0 0.0
      %2363 = vmatpush1.msra.mxu0 0.0
      %2364 = vmatprep.subr.mxu0 0.0
      %2365 = vmatpush1.msra.mxu0 0.0
      %2366 = vmatprep.subr.mxu0 0.0
      %2367 = vmatpush1.msra.mxu0 0.0
      %2368 = vmatprep.subr.mxu0 0.0
      %2369 = vmatpush1.msra.mxu0 0.0
      %2370 = vmatprep.subr.mxu0 0.0
      %2371 = vmatpush1.msra.mxu0 0.0
      %2372 = vmatprep.subr.mxu0 0.0
      %2373 = vmatpush1.msra.mxu0 0.0
      %2374 = vmatprep.subr.mxu0 0.0
      %2375 = vmatpush1.msra.mxu0 0.0
      %2376 = vmatprep.subr.mxu0 0.0
      %2377 = vmatpush1.msra.mxu0 0.0
      %2378 = vmatprep.subr.mxu0 0.0
      %2379 = vmatpush1.msra.mxu0 0.0
      %2380 = vmatprep.subr.mxu0 0.0
      %2381 = vmatpush1.msra.mxu0 0.0
      %2382 = vmatprep.subr.mxu0 0.0
      %2383 = vmatpush1.msra.mxu0 0.0
      %2384 = vmatprep.subr.mxu0 0.0
      %2385 = vmatpush1.msra.mxu0 0.0
      %2386 = vmatprep.subr.mxu0 0.0
      %2387 = vmatpush1.msra.mxu0 0.0
      %2388 = vmatprep.subr.mxu0 0.0
      %2389 = vmatpush1.msra.mxu0 0.0
      %2390 = vmatprep.subr.mxu0 0.0
      %2391 = vmatpush1.msra.mxu0 0.0
      %2392 = vmatprep.subr.mxu0 0.0
      %2393 = vmatpush1.msra.mxu0 0.0
      %2394 = vmatprep.subr.mxu0 0.0
      %2395 = vmatpush1.msra.mxu0 0.0
      %2396 = vmatprep.subr.mxu0 0.0
      %2397 = vmatpush1.msra.mxu0 0.0
      %2398 = vmatprep.mubr.f32.mxu0 0.0
      %2399 = vmatmul.mubr.f32.gmra.mrb[0].mxu0 %v2332
      %v2400 = vpop.f32.mrb[0].mxu0
      %v2401 = vadd.f32 %v2328, %v2400
      %v2402 = vpop.f32.mrb[0].mxu0
      %2403 = vdwg.mxu0
      %v2405 = vlaneseq
      %v2406 = vshrl.u32 %v2405, 7
      %v2407 = vsub.s32 0, %v2406
      %v2408 = vrot.slane %v1918, %v2407
      %v2410 = vadd.f32 %v2401, %v2408
      %v2411 = vadd.f32 %v1826, %v2410
      %v2412 = vld [vmem:[%s37] sm:$0x1]
      %v2413 = vld [vmem:[%s39] sm:$0x1]
      %v2414 = vsel %vm1073, %v2411, 0.0
      %2415 = vadd.xlane.f32.xlu0 %v2414
      %v2416 = vpop.xlane.xlu0 %2415
      %v2417 = vmul.f32 %v2416, %v1802
      %v2418 = vsub.f32 %v2411, %v2417
      %v2419 = vmul.f32 %v2418, %v2418
      %v2420 = vsel %vm1073, %v2419, 0.0
      %2421 = vadd.xlane.f32.xlu0 %v2420
      %v2422 = vpop.xlane.xlu0 %2421
      %v2423 = vmul.f32 %v2422, %v1802
      %v2424 = vadd.f32 %v2423, 1e-05
      %v2425 = vrsqrt.pop %v2424
      %v2426 = vmul.f32 %v2418, %v2425
      %v2428 = vlaneseq
      %v2429 = vshrl.u32 %v2428, 7
      %v2430 = vsub.s32 0, %v2429
      %v2431 = vrot.slane %v2412, %v2430
      %v2433 = vmul.f32 %v2426, %v2431
      %v2435 = vlaneseq
      %v2436 = vshrl.u32 %v2435, 7
      %v2437 = vsub.s32 0, %v2436
      %v2438 = vrot.slane %v2413, %v2437
      %v2440 = vadd.f32 %v2433, %v2438
      %v2441 = vld [vmem:[%s41] sm:$0xff]
      %v2442 = vld [vmem:[%s41 + $0x8] sm:$0xff]
      %v2443 = vld [vmem:[%s41 + $0x10] sm:$0xff]
      %v2444 = vld [vmem:[%s41 + $0x18] sm:$0xff]
      %v2445 = vld [vmem:[%s43] sm:$0x1]
      %v2447 = vlaneseq
      %v2448 = vshrl.u32 %v2447, 7
      %v2449 = vsub.s32 0, %v2448
      %v2450 = vrot.slane %v2445, %v2449
      %v2453 = vsel %vm1073, %v2440, 0
      %2455 = vmatprep.subr.mxu0 0.0
      %2456 = vmatpush1.msra.mxu0 %v2441
      %2457 = vmatprep.subr.mxu0 0.0
      %2458 = vmatpush1.msra.mxu0 %v2442
      %2459 = vmatprep.subr.mxu0 0.0
      %2460 = vmatpush1.msra.mxu0 %v2443
      %2461 = vmatprep.subr.mxu0 0.0
      %2462 = vmatpush1.msra.mxu0 %v2444
      %2463 = vmatprep.subr.mxu0 0.0
      %2464 = vmatpush1.msra.mxu0 0.0
      %2465 = vmatprep.subr.mxu0 0.0
      %2466 = vmatpush1.msra.mxu0 0.0
      %2467 = vmatprep.subr.mxu0 0.0
      %2468 = vmatpush1.msra.mxu0 0.0
      %2469 = vmatprep.subr.mxu0 0.0
      %2470 = vmatpush1.msra.mxu0 0.0
      %2471 = vmatprep.subr.mxu0 0.0
      %2472 = vmatpush1.msra.mxu0 0.0
      %2473 = vmatprep.subr.mxu0 0.0
      %2474 = vmatpush1.msra.mxu0 0.0
      %2475 = vmatprep.subr.mxu0 0.0
      %2476 = vmatpush1.msra.mxu0 0.0
      %2477 = vmatprep.subr.mxu0 0.0
      %2478 = vmatpush1.msra.mxu0 0.0
      %2479 = vmatprep.subr.mxu0 0.0
      %2480 = vmatpush1.msra.mxu0 0.0
      %2481 = vmatprep.subr.mxu0 0.0
      %2482 = vmatpush1.msra.mxu0 0.0
      %2483 = vmatprep.subr.mxu0 0.0
      %2484 = vmatpush1.msra.mxu0 0.0
      %2485 = vmatprep.subr.mxu0 0.0
      %2486 = vmatpush1.msra.mxu0 0.0
      %2487 = vmatprep.subr.mxu0 0.0
      %2488 = vmatpush1.msra.mxu0 0.0
      %2489 = vmatprep.subr.mxu0 0.0
      %2490 = vmatpush1.msra.mxu0 0.0
      %2491 = vmatprep.subr.mxu0 0.0
      %2492 = vmatpush1.msra.mxu0 0.0
      %2493 = vmatprep.subr.mxu0 0.0
      %2494 = vmatpush1.msra.mxu0 0.0
      %2495 = vmatprep.subr.mxu0 0.0
      %2496 = vmatpush1.msra.mxu0 0.0
      %2497 = vmatprep.subr.mxu0 0.0
      %2498 = vmatpush1.msra.mxu0 0.0
      %2499 = vmatprep.subr.mxu0 0.0
      %2500 = vmatpush1.msra.mxu0 0.0
      %2501 = vmatprep.subr.mxu0 0.0
      %2502 = vmatpush1.msra.mxu0 0.0
      %2503 = vmatprep.subr.mxu0 0.0
      %2504 = vmatpush1.msra.mxu0 0.0
      %2505 = vmatprep.subr.mxu0 0.0
      %2506 = vmatpush1.msra.mxu0 0.0
      %2507 = vmatprep.subr.mxu0 0.0
      %2508 = vmatpush1.msra.mxu0 0.0
      %2509 = vmatprep.subr.mxu0 0.0
      %2510 = vmatpush1.msra.mxu0 0.0
      %2511 = vmatprep.subr.mxu0 0.0
      %2512 = vmatpush1.msra.mxu0 0.0
      %2513 = vmatprep.subr.mxu0 0.0
      %2514 = vmatpush1.msra.mxu0 0.0
      %2515 = vmatprep.subr.mxu0 0.0
      %2516 = vmatpush1.msra.mxu0 0.0
      %2517 = vmatprep.subr.mxu0 0.0
      %2518 = vmatpush1.msra.mxu0 0.0
      %2519 = vmatprep.mubr.f32.mxu0 0.0
      %2520 = vmatmul.mubr.f32.gmra.mrb[0].mxu0 %v2453
      %v2521 = vpop.f32.mrb[0].mxu0
      %v2522 = vadd.f32 %v2450, %v2521
      %v2523 = vpop.f32.mrb[0].mxu0
      %2524 = vdwg.mxu0
      %v2525 = vmax.f32 %v2522, 0.0
      %v2526 = vld [vmem:[%s45] sm:$0xff]
      %v2527 = vld [vmem:[%s45 + $0x8] sm:$0xff]
      %v2528 = vld [vmem:[%s45 + $0x10] sm:$0xff]
      %v2529 = vld [vmem:[%s45 + $0x18] sm:$0xff]
      %v2530 = vld [vmem:[%s45 + $0x20] sm:$0xff]
      %v2531 = vld [vmem:[%s45 + $0x28] sm:$0xff]
      %v2532 = vld [vmem:[%s45 + $0x30] sm:$0xff]
      %v2533 = vld [vmem:[%s45 + $0x38] sm:$0xff]
      %v2534 = vld [vmem:[%s47] sm:$0x1]
      %v2536 = vlaneseq
      %v2537 = vshrl.u32 %v2536, 7
      %v2538 = vsub.s32 0, %v2537
      %v2539 = vrot.slane %v2534, %v2538
      %vm2541 = vcmask 523264
      %v2543 = vsel %vm2541, %v2525, 0
      %2545 = vmatprep.subr.mxu0 0.0
      %2546 = vmatpush1.msra.mxu0 %v2526
      %2547 = vmatprep.subr.mxu0 0.0
      %2548 = vmatpush1.msra.mxu0 %v2527
      %2549 = vmatprep.subr.mxu0 0.0
      %2550 = vmatpush1.msra.mxu0 %v2528
      %2551 = vmatprep.subr.mxu0 0.0
      %2552 = vmatpush1.msra.mxu0 %v2529
      %2553 = vmatprep.subr.mxu0 0.0
      %2554 = vmatpush1.msra.mxu0 %v2530
      %2555 = vmatprep.subr.mxu0 0.0
      %2556 = vmatpush1.msra.mxu0 %v2531
      %2557 = vmatprep.subr.mxu0 0.0
      %2558 = vmatpush1.msra.mxu0 %v2532
      %2559 = vmatprep.subr.mxu0 0.0
      %2560 = vmatpush1.msra.mxu0 %v2533
      %2561 = vmatprep.subr.mxu0 0.0
      %2562 = vmatpush1.msra.mxu0 0.0
      %2563 = vmatprep.subr.mxu0 0.0
      %2564 = vmatpush1.msra.mxu0 0.0
      %2565 = vmatprep.subr.mxu0 0.0
      %2566 = vmatpush1.msra.mxu0 0.0
      %2567 = vmatprep.subr.mxu0 0.0
      %2568 = vmatpush1.msra.mxu0 0.0
      %2569 = vmatprep.subr.mxu0 0.0
      %2570 = vmatpush1.msra.mxu0 0.0
      %2571 = vmatprep.subr.mxu0 0.0
      %2572 = vmatpush1.msra.mxu0 0.0
      %2573 = vmatprep.subr.mxu0 0.0
      %2574 = vmatpush1.msra.mxu0 0.0
      %2575 = vmatprep.subr.mxu0 0.0
      %2576 = vmatpush1.msra.mxu0 0.0
      %2577 = vmatprep.subr.mxu0 0.0
      %2578 = vmatpush1.msra.mxu0 0.0
      %2579 = vmatprep.subr.mxu0 0.0
      %2580 = vmatpush1.msra.mxu0 0.0
      %2581 = vmatprep.subr.mxu0 0.0
      %2582 = vmatpush1.msra.mxu0 0.0
      %2583 = vmatprep.subr.mxu0 0.0
      %2584 = vmatpush1.msra.mxu0 0.0
      %2585 = vmatprep.subr.mxu0 0.0
      %2586 = vmatpush1.msra.mxu0 0.0
      %2587 = vmatprep.subr.mxu0 0.0
      %2588 = vmatpush1.msra.mxu0 0.0
      %2589 = vmatprep.subr.mxu0 0.0
      %2590 = vmatpush1.msra.mxu0 0.0
      %2591 = vmatprep.subr.mxu0 0.0
      %2592 = vmatpush1.msra.mxu0 0.0
      %2593 = vmatprep.subr.mxu0 0.0
      %2594 = vmatpush1.msra.mxu0 0.0
      %2595 = vmatprep.subr.mxu0 0.0
      %2596 = vmatpush1.msra.mxu0 0.0
      %2597 = vmatprep.subr.mxu0 0.0
      %2598 = vmatpush1.msra.mxu0 0.0
      %2599 = vmatprep.subr.mxu0 0.0
      %2600 = vmatpush1.msra.mxu0 0.0
      %2601 = vmatprep.subr.mxu0 0.0
      %2602 = vmatpush1.msra.mxu0 0.0
      %2603 = vmatprep.subr.mxu0 0.0
      %2604 = vmatpush1.msra.mxu0 0.0
      %2605 = vmatprep.subr.mxu0 0.0
      %2606 = vmatpush1.msra.mxu0 0.0
      %2607 = vmatprep.subr.mxu0 0.0
      %2608 = vmatpush1.msra.mxu0 0.0
      %2609 = vmatprep.mubr.f32.mxu0 0.0
      %2610 = vmatmul.mubr.f32.gmra.mrb[0].mxu0 %v2543
      %v2611 = vpop.f32.mrb[0].mxu0
      %v2612 = vadd.f32 %v2539, %v2611
      %v2613 = vpop.f32.mrb[0].mxu0
      %2614 = vdwg.mxu0
      %v2615 = vadd.f32 %v2440, %v2612
      %v2616 = vld [vmem:[%s49] sm:$0x1]
      %v2617 = vld [vmem:[%s51] sm:$0x1]
      %v2618 = vsel %vm1073, %v2615, 0.0
      %2619 = vadd.xlane.f32.xlu0 %v2618
      %v2620 = vpop.xlane.xlu0 %2619
      %v2621 = vmul.f32 %v2620, %v1802
      %v2622 = vsub.f32 %v2615, %v2621
      %v2623 = vmul.f32 %v2622, %v2622
      %v2624 = vsel %vm1073, %v2623, 0.0
      %2625 = vadd.xlane.f32.xlu0 %v2624
      %v2626 = vpop.xlane.xlu0 %2625
      %v2627 = vmul.f32 %v2626, %v1802
      %v2628 = vadd.f32 %v2627, 1e-05
      %v2629 = vrsqrt.pop %v2628
      %v2630 = vmul.f32 %v2622, %v2629
      %v2632 = vlaneseq
      %v2633 = vshrl.u32 %v2632, 7
      %v2634 = vsub.s32 0, %v2633
      %v2635 = vrot.slane %v2616, %v2634
      %v2637 = vmul.f32 %v2630, %v2635
      %v2639 = vlaneseq
      %v2640 = vshrl.u32 %v2639, 7
      %v2641 = vsub.s32 0, %v2640
      %v2642 = vrot.slane %v2617, %v2641
      %v2644 = vadd.f32 %v2637, %v2642
      %2645 = vst.msk [vmem:[%s1051] sm:$0xff] %vm1073, %v2644
      %v2646 = vadd.f32 %v2644, %v1061
      %v2647 = vld [vmem:[%s53] sm:$0xff]
      %v2648 = vld [vmem:[%s53 + $0x8] sm:$0xff]
      %v2649 = vld [vmem:[%s53 + $0x10] sm:$0xff]
      %v2650 = vld [vmem:[%s53 + $0x18] sm:$0xff]
      %v2651 = vld [vmem:[%s55] sm:$0x1]
      %v2653 = vlaneseq
      %v2654 = vshrl.u32 %v2653, 7
      %v2655 = vsub.s32 0, %v2654
      %v2656 = vrot.slane %v2651, %v2655
      %v2659 = vsel %vm1073, %v2646, 0
      %2661 = vmatprep.subr.mxu0 0.0
      %2662 = vmatpush1.msra.mxu0 %v2647
      %2663 = vmatprep.subr.mxu0 0.0
      %2664 = vmatpush1.msra.mxu0 %v2648
      %2665 = vmatprep.subr.mxu0 0.0
      %2666 = vmatpush1.msra.mxu0 %v2649
      %2667 = vmatprep.subr.mxu0 0.0
      %2668 = vmatpush1.msra.mxu0 %v2650
      %2669 = vmatprep.subr.mxu0 0.0
      %2670 = vmatpush1.msra.mxu0 0.0
      %2671 = vmatprep.subr.mxu0 0.0
      %2672 = vmatpush1.msra.mxu0 0.0
      %2673 = vmatprep.subr.mxu0 0.0
      %2674 = vmatpush1.msra.mxu0 0.0
      %2675 = vmatprep.subr.mxu0 0.0
      %2676 = vmatpush1.msra.mxu0 0.0
      %2677 = vmatprep.subr.mxu0 0.0
      %2678 = vmatpush1.msra.mxu0 0.0
      %2679 = vmatprep.subr.mxu0 0.0
      %2680 = vmatpush1.msra.mxu0 0.0
      %2681 = vmatprep.subr.mxu0 0.0
      %2682 = vmatpush1.msra.mxu0 0.0
      %2683 = vmatprep.subr.mxu0 0.0
      %2684 = vmatpush1.msra.mxu0 0.0
      %2685 = vmatprep.subr.mxu0 0.0
      %2686 = vmatpush1.msra.mxu0 0.0
      %2687 = vmatprep.subr.mxu0 0.0
      %2688 = vmatpush1.msra.mxu0 0.0
      %2689 = vmatprep.subr.mxu0 0.0
      %2690 = vmatpush1.msra.mxu0 0.0
      %2691 = vmatprep.subr.mxu0 0.0
      %2692 = vmatpush1.msra.mxu0 0.0
      %2693 = vmatprep.subr.mxu0 0.0
      %2694 = vmatpush1.msra.mxu0 0.0
      %2695 = vmatprep.subr.mxu0 0.0
      %2696 = vmatpush1.msra.mxu0 0.0
      %2697 = vmatprep.subr.mxu0 0.0
      %2698 = vmatpush1.msra.mxu0 0.0
      %2699 = vmatprep.subr.mxu0 0.0
      %2700 = vmatpush1.msra.mxu0 0.0
      %2701 = vmatprep.subr.mxu0 0.0
      %2702 = vmatpush1.msra.mxu0 0.0
      %2703 = vmatprep.subr.mxu0 0.0
      %2704 = vmatpush1.msra.mxu0 0.0
      %2705 = vmatprep.subr.mxu0 0.0
      %2706 = vmatpush1.msra.mxu0 0.0
      %2707 = vmatprep.subr.mxu0 0.0
      %2708 = vmatpush1.msra.mxu0 0.0
      %2709 = vmatprep.subr.mxu0 0.0
      %2710 = vmatpush1.msra.mxu0 0.0
      %2711 = vmatprep.subr.mxu0 0.0
      %2712 = vmatpush1.msra.mxu0 0.0
      %2713 = vmatprep.subr.mxu0 0.0
      %2714 = vmatpush1.msra.mxu0 0.0
      %2715 = vmatprep.subr.mxu0 0.0
      %2716 = vmatpush1.msra.mxu0 0.0
      %2717 = vmatprep.subr.mxu0 0.0
      %2718 = vmatpush1.msra.mxu0 0.0
      %2719 = vmatprep.subr.mxu0 0.0
      %2720 = vmatpush1.msra.mxu0 0.0
      %2721 = vmatprep.subr.mxu0 0.0
      %2722 = vmatpush1.msra.mxu0 0.0
      %2723 = vmatprep.subr.mxu0 0.0
      %2724 = vmatpush1.msra.mxu0 0.0
      %2725 = vmatprep.mubr.f32.mxu0 0.0
      %2726 = vmatmul.mubr.f32.gmra.mrb[0].mxu0 %v2659
      %v2727 = vpop.f32.mrb[0].mxu0
      %v2728 = vadd.f32 %v2656, %v2727
      %v2729 = vpop.f32.mrb[0].mxu0
      %2730 = vdwg.mxu0
      %v2731 = vld [vmem:[%s57] sm:$0xff]
      %v2732 = vld [vmem:[%s57 + $0x8] sm:$0xff]
      %v2733 = vld [vmem:[%s57 + $0x10] sm:$0xff]
      %v2734 = vld [vmem:[%s57 + $0x18] sm:$0xff]
      %v2735 = vld [vmem:[%s59] sm:$0x1]
      %v2737 = vlaneseq
      %v2738 = vshrl.u32 %v2737, 7
      %v2739 = vsub.s32 0, %v2738
      %v2740 = vrot.slane %v2735, %v2739
      %v2743 = vsel %vm1073, %v2644, 0
      %2745 = vmatprep.subr.mxu0 0.0
      %2746 = vmatpush1.msra.mxu0 %v2731
      %2747 = vmatprep.subr.mxu0 0.0
      %2748 = vmatpush1.msra.mxu0 %v2732
      %2749 = vmatprep.subr.mxu0 0.0
      %2750 = vmatpush1.msra.mxu0 %v2733
      %2751 = vmatprep.subr.mxu0 0.0
      %2752 = vmatpush1.msra.mxu0 %v2734
      %2753 = vmatprep.subr.mxu0 0.0
      %2754 = vmatpush1.msra.mxu0 0.0
      %2755 = vmatprep.subr.mxu0 0.0
      %2756 = vmatpush1.msra.mxu0 0.0
      %2757 = vmatprep.subr.mxu0 0.0
      %2758 = vmatpush1.msra.mxu0 0.0
      %2759 = vmatprep.subr.mxu0 0.0
      %2760 = vmatpush1.msra.mxu0 0.0
      %2761 = vmatprep.subr.mxu0 0.0
      %2762 = vmatpush1.msra.mxu0 0.0
      %2763 = vmatprep.subr.mxu0 0.0
      %2764 = vmatpush1.msra.mxu0 0.0
      %2765 = vmatprep.subr.mxu0 0.0
      %2766 = vmatpush1.msra.mxu0 0.0
      %2767 = vmatprep.subr.mxu0 0.0
      %2768 = vmatpush1.msra.mxu0 0.0
      %2769 = vmatprep.subr.mxu0 0.0
      %2770 = vmatpush1.msra.mxu0 0.0
      %2771 = vmatprep.subr.mxu0 0.0
      %2772 = vmatpush1.msra.mxu0 0.0
      %2773 = vmatprep.subr.mxu0 0.0
      %2774 = vmatpush1.msra.mxu0 0.0
      %2775 = vmatprep.subr.mxu0 0.0
      %2776 = vmatpush1.msra.mxu0 0.0
      %2777 = vmatprep.subr.mxu0 0.0
      %2778 = vmatpush1.msra.mxu0 0.0
      %2779 = vmatprep.subr.mxu0 0.0
      %2780 = vmatpush1.msra.mxu0 0.0
      %2781 = vmatprep.subr.mxu0 0.0
      %2782 = vmatpush1.msra.mxu0 0.0
      %2783 = vmatprep.subr.mxu0 0.0
      %2784 = vmatpush1.msra.mxu0 0.0
      %2785 = vmatprep.subr.mxu0 0.0
      %2786 = vmatpush1.msra.mxu0 0.0
      %2787 = vmatprep.subr.mxu0 0.0
      %2788 = vmatpush1.msra.mxu0 0.0
      %2789 = vmatprep.subr.mxu0 0.0
      %2790 = vmatpush1.msra.mxu0 0.0
      %2791 = vmatprep.subr.mxu0 0.0
      %2792 = vmatpush1.msra.mxu0 0.0
      %2793 = vmatprep.subr.mxu0 0.0
      %2794 = vmatpush1.msra.mxu0 0.0
      %2795 = vmatprep.subr.mxu0 0.0
      %2796 = vmatpush1.msra.mxu0 0.0
      %2797 = vmatprep.subr.mxu0 0.0
      %2798 = vmatpush1.msra.mxu0 0.0
      %2799 = vmatprep.subr.mxu0 0.0
      %2800 = vmatpush1.msra.mxu0 0.0
      %2801 = vmatprep.subr.mxu0 0.0
      %2802 = vmatpush1.msra.mxu0 0.0
      %2803 = vmatprep.subr.mxu0 0.0
      %2804 = vmatpush1.msra.mxu0 0.0
      %2805 = vmatprep.subr.mxu0 0.0
      %2806 = vmatpush1.msra.mxu0 0.0
      %2807 = vmatprep.subr.mxu0 0.0
      %2808 = vmatpush1.msra.mxu0 0.0
      %2809 = vmatprep.mubr.f32.mxu0 0.0
      %2810 = vmatmul.mubr.f32.gmra.mrb[0].mxu0 %v2743
      %v2811 = vpop.f32.mrb[0].mxu0
      %v2812 = vadd.f32 %v2740, %v2811
      %v2813 = vpop.f32.mrb[0].mxu0
      %2814 = vdwg.mxu0
      %2815 = vst.msk [vmem:[%s1055] sm:$0xff] %vm1314, %v2728
      %2816 = vst.msk [vmem:[%s1059] sm:$0xff] %vm1314, %v2812
      %p2817 = scmp.lt.s32.totalorder %s77, 1
      %s2818 = scalar_select %p2817, %s77, 1
      %s2819 = smul.addr %s2818, 8
      %s2820 = scalar_lea.vmem %s61, %s2819
      %p2821 = scmp.lt.s32.totalorder %s77, 1
      %s2822 = scalar_select %p2821, %s77, 1
      %s2823 = smul.addr %s2822, 8
      %s2824 = scalar_lea.vmem %s63, %s2823
      %p2825 = scmp.lt.s32.totalorder %s77, 1
      %s2826 = scalar_select %p2825, %s77, 1
      %s2827 = smul.addr %s2826, 8
      %s2828 = scalar_lea.vmem %s65, %s2827
      // Predicated region
      $region141: #{two_way_transformer.9} parent=139 // pred_check
        %p2829 = pneg %p745
      $region142: #{two_way_transformer.9} parent=139 // pred_check_branch
        %2831 = sbr.rel (%p2829) target = $region144
      $region143: #{two_way_transformer.9} parent=139 // pred_region
        _
      $region144: #{two_way_transformer.9} parent=139 // pred_fallthru
        _
      // Predicated region
      $region145: #{two_way_transformer.9} parent=139 // pred_check
        %p2832 = pneg %p771
      $region146: #{two_way_transformer.9} parent=139 // pred_check_branch
        %2834 = sbr.rel (%p2832) target = $region148
      $region147: #{two_way_transformer.9} parent=139 // pred_region
        _
      $region148: #{two_way_transformer.9} parent=139 // pred_fallthru
        _
      // Predicated region
      $region149: #{two_way_transformer.9} parent=139 // pred_check
        %p2835 = pneg %p797
      $region150: #{two_way_transformer.9} parent=139 // pred_check_branch
        %2837 = sbr.rel (%p2835) target = $region152
      $region151: #{two_way_transformer.9} parent=139 // pred_region
        _
      $region152: #{two_way_transformer.9} parent=139 // pred_fallthru
        _
    $region140: #{two_way_transformer.9} parent=5 // pred_fallthru
      _
    %p2838 = scmp.le.s32.totalorder 2, %s72
    // Predicated region
    $region153: #{two_way_transformer.9} parent=5 // pred_check
      %p2839 = pneg %p2838
    $region154: #{two_way_transformer.9} parent=5 // pred_check_branch
      %2841 = sbr.rel (%p2839) target = $region156
    $region155: #{two_way_transformer.9} parent=5 // pred_region
      %s2842 = ssub.s32 %s72, 2
      // Predicated region
      $region157: #{two_way_transformer.9} parent=155 // pred_check
        %p2843 = pneg %p751
      $region158: #{two_way_transformer.9} parent=155 // pred_check_branch
        %2845 = sbr.rel (%p2843) target = $region160
      $region159: #{two_way_transformer.9} parent=155 // pred_region
        %p2846 = scmp.lt.s32.totalorder %s78, 1
        %s2847 = scalar_select %p2846, %s78, 1
        %s2848 = smul.addr %s2847, 8
        %s2849 = scalar_lea.vmem %s61, %s2848
      $region160: #{two_way_transformer.9} parent=155 // pred_fallthru
        _
      // Predicated region
      $region161: #{two_way_transformer.9} parent=155 // pred_check
        %p2850 = pneg %p777
      $region162: #{two_way_transformer.9} parent=155 // pred_check_branch
        %2852 = sbr.rel (%p2850) target = $region164
      $region163: #{two_way_transformer.9} parent=155 // pred_region
        %p2853 = scmp.lt.s32.totalorder %s78, 1
        %s2854 = scalar_select %p2853, %s78, 1
        %s2855 = smul.addr %s2854, 8
        %s2856 = scalar_lea.vmem %s63, %s2855
      $region164: #{two_way_transformer.9} parent=155 // pred_fallthru
        _
      // Predicated region
      $region165: #{two_way_transformer.9} parent=155 // pred_check
        %p2857 = pneg %p803
      $region166: #{two_way_transformer.9} parent=155 // pred_check_branch
        %2859 = sbr.rel (%p2857) target = $region168
      $region167: #{two_way_transformer.9} parent=155 // pred_region
        %p2860 = scmp.lt.s32.totalorder %s78, 1
        %s2861 = scalar_select %p2860, %s78, 1
        %s2862 = smul.addr %s2861, 8
        %s2863 = scalar_lea.vmem %s65, %s2862
      $region168: #{two_way_transformer.9} parent=155 // pred_fallthru
        _
    $region156: #{two_way_transformer.9} parent=5 // pred_fallthru
      _
  $region6: #{two_way_transformer.9} parent=0 // loop_footer
    %s76 = sadd.s32 1, %s72
  $region7: #{two_way_transformer.9} parent=0 // loop_footer_branch
    %71 = sbr.rel target = $region3
  $region8: #{two_way_transformer.9} parent=0 // loop_exit
    _

// kernel: two_way_transformer.12
$region0: #{two_way_transformer.12}
  #allocation0 [shape = 'u32[]', space=smem, size = 0x4, offset = 0x4, fixed_abs, tag = 'smem constant byte address 0x4 - core index']
  #allocation1 [shape = 'u32[144,128]{1,0:T(1,128)}', space=vmem, size = 0x12000, scoped, tag = 'internal scratch']
  %s0 = inlined_call_operand.smem [shape: u32[33], index: -1, kind: input, shape index: {}]
  %s1 = sld [smem:[%s0]]
  %s2 = scalar_lea.smem %s0, 1
  %s3 = sld [smem:[%s2]]
  %s4 = scalar_lea.smem %s0, 2
  %s5 = sld [smem:[%s4]]
  %s6 = scalar_lea.smem %s0, 3
  %s7 = sld [smem:[%s6]]
  %s8 = scalar_lea.smem %s0, 4
  %s9 = sld [smem:[%s8]]
  %s10 = scalar_lea.smem %s0, 5
  %s11 = sld [smem:[%s10]]
  %s12 = scalar_lea.smem %s0, 6
  %s13 = sld [smem:[%s12]]
  %s14 = scalar_lea.smem %s0, 7
  %s15 = sld [smem:[%s14]]
  %s16 = scalar_lea.smem %s0, 8
  %s17 = sld [smem:[%s16]]
  %s18 = scalar_lea.smem %s0, 9
  %s19 = sld [smem:[%s18]]
  %s20 = scalar_lea.smem %s0, 10
  %s21 = sld [smem:[%s20]]
  %s22 = scalar_lea.smem %s0, 11
  %s23 = sld [smem:[%s22]]
  %s24 = scalar_lea.smem %s0, 12
  %s25 = sld [smem:[%s24]]
  %s26 = scalar_lea.smem %s0, 13
  %s27 = sld [smem:[%s26]]
  %s28 = scalar_lea.smem %s0, 14
  %s29 = sld [smem:[%s28]]
  %s30 = scalar_lea.smem %s0, 15
  %s31 = sld [smem:[%s30]]
  %s32 = scalar_lea.smem %s0, 16
  %s33 = sld [smem:[%s32]]
  %s34 = scalar_lea.smem %s0, 17
  %s35 = sld [smem:[%s34]]
  %s36 = scalar_lea.smem %s0, 18
  %s37 = sld [smem:[%s36]]
  %s38 = scalar_lea.smem %s0, 19
  %s39 = sld [smem:[%s38]]
  %s40 = scalar_lea.smem %s0, 20
  %s41 = sld [smem:[%s40]]
  %s42 = scalar_lea.smem %s0, 21
  %s43 = sld [smem:[%s42]]
  %s44 = scalar_lea.smem %s0, 22
  %s45 = sld [smem:[%s44]]
  %s46 = scalar_lea.smem %s0, 23
  %s47 = sld [smem:[%s46]]
  %s48 = scalar_lea.smem %s0, 24
  %s49 = sld [smem:[%s48]]
  %s50 = scalar_lea.smem %s0, 25
  %s51 = sld [smem:[%s50]]
  %s52 = scalar_lea.smem %s0, 26
  %s53 = sld [smem:[%s52]]
  %s54 = scalar_lea.smem %s0, 27
  %s55 = sld [smem:[%s54]]
  %s56 = scalar_lea.smem %s0, 28
  %s57 = sld [smem:[%s56]]
  %s58 = scalar_lea.smem %s0, 29
  %s59 = sld [smem:[%s58]]
  %s60 = scalar_lea.smem %s0, 30
  %s61 = sld [smem:[%s60]]
  %s62 = scalar_lea.smem %s0, 31
  %s63 = sld [smem:[%s62]]
  %s64 = scalar_lea.smem %s0, 32
  %s65 = sld [smem:[%s64]]
  %66 = xla_tuple %s61, %s63, %s65
  %s67 = sld [smem:[#allocation0]]
  $region169: #{two_way_transformer.12} parent=0
    _
  %s69 = ssub.s32 1, %s67
  %s70 = scalar_select 0, %s69, %s67
  loop: start=0, step=1, limit=4
  $region2: #{two_way_transformer.12} parent=0 // loop_pre_header
    _
  $region3: #{two_way_transformer.12} parent=0 // loop_header
    %s72 = sphi 0, %s76
    %p73 = scmp.ge.s32.totalorder %s72, 4
    %s82 = sphi 0, %s84
    %s85 = sphi 0, %s82
    %s86 = sphi 0, %s85
    %s102 = sphi 0, %s86
    %s108 = sphi 0, %s110
    %s111 = sphi 0, %s108
    %s112 = sphi 0, %s111
    %s128 = sphi 0, %s112
    %s134 = sphi 0, %s136
    %s137 = sphi 0, %s134
    %s138 = sphi 0, %s137
    %s154 = sphi 0, %s138
    %s160 = sphi 0, %s162
    %s163 = sphi 0, %s160
    %s164 = sphi 0, %s163
    %s180 = sphi 0, %s164
    %s184 = sphi 0, %s184
    %s186 = sphi 0, %s184
    %s187 = sphi 0, %s186
    %s201 = sphi 0, %s187
    %s205 = sphi 0, %s205
    %s207 = sphi 0, %s205
    %s208 = sphi 0, %s207
    %s222 = sphi 0, %s208
    %s226 = sphi 0, %s226
    %s228 = sphi 0, %s226
    %s229 = sphi 0, %s228
    %s243 = sphi 0, %s229
    %s247 = sphi 0, %s247
    %s249 = sphi 0, %s247
    %s250 = sphi 0, %s249
    %s264 = sphi 0, %s250
    %s268 = sphi 0, %s268
    %s270 = sphi 0, %s268
    %s271 = sphi 0, %s270
    %s285 = sphi 0, %s271
    %s289 = sphi 0, %s289
    %s291 = sphi 0, %s289
    %s292 = sphi 0, %s291
    %s306 = sphi 0, %s292
    %s310 = sphi 0, %s310
    %s312 = sphi 0, %s310
    %s313 = sphi 0, %s312
    %s327 = sphi 0, %s313
    %s331 = sphi 0, %s331
    %s333 = sphi 0, %s331
    %s334 = sphi 0, %s333
    %s348 = sphi 0, %s334
    %s352 = sphi 0, %s352
    %s354 = sphi 0, %s352
    %s355 = sphi 0, %s354
    %s369 = sphi 0, %s355
    %s373 = sphi 0, %s373
    %s375 = sphi 0, %s373
    %s376 = sphi 0, %s375
    %s390 = sphi 0, %s376
    %s394 = sphi 0, %s394
    %s396 = sphi 0, %s394
    %s397 = sphi 0, %s396
    %s411 = sphi 0, %s397
    %s415 = sphi 0, %s415
    %s417 = sphi 0, %s415
    %s418 = sphi 0, %s417
    %s432 = sphi 0, %s418
    %s436 = sphi 0, %s436
    %s438 = sphi 0, %s436
    %s439 = sphi 0, %s438
    %s453 = sphi 0, %s439
    %s457 = sphi 0, %s457
    %s459 = sphi 0, %s457
    %s460 = sphi 0, %s459
    %s474 = sphi 0, %s460
    %s478 = sphi 0, %s478
    %s480 = sphi 0, %s478
    %s481 = sphi 0, %s480
    %s495 = sphi 0, %s481
    %s499 = sphi 0, %s499
    %s501 = sphi 0, %s499
    %s502 = sphi 0, %s501
    %s516 = sphi 0, %s502
    %s520 = sphi 0, %s520
    %s522 = sphi 0, %s520
    %s523 = sphi 0, %s522
    %s537 = sphi 0, %s523
    %s541 = sphi 0, %s541
    %s543 = sphi 0, %s541
    %s544 = sphi 0, %s543
    %s558 = sphi 0, %s544
    %s562 = sphi 0, %s562
    %s564 = sphi 0, %s562
    %s565 = sphi 0, %s564
    %s579 = sphi 0, %s565
    %s583 = sphi 0, %s583
    %s585 = sphi 0, %s583
    %s586 = sphi 0, %s585
    %s600 = sphi 0, %s586
    %s604 = sphi 0, %s604
    %s606 = sphi 0, %s604
    %s607 = sphi 0, %s606
    %s621 = sphi 0, %s607
    %s625 = sphi 0, %s625
    %s627 = sphi 0, %s625
    %s628 = sphi 0, %s627
    %s642 = sphi 0, %s628
    %s646 = sphi 0, %s646
    %s648 = sphi 0, %s646
    %s649 = sphi 0, %s648
    %s663 = sphi 0, %s649
    %s667 = sphi 0, %s667
    %s669 = sphi 0, %s667
    %s670 = sphi 0, %s669
    %s684 = sphi 0, %s670
    %s688 = sphi 0, %s688
    %s690 = sphi 0, %s688
    %s691 = sphi 0, %s690
    %s705 = sphi 0, %s691
    %s709 = sphi 0, %s709
    %s711 = sphi 0, %s709
    %s712 = sphi 0, %s711
    %s726 = sphi 0, %s712
    %s732 = sphi 0, %s734
    %s735 = sphi 0, %s732
    %s736 = sphi 0, %s735
    %s752 = sphi 0, %s736
    %s758 = sphi 0, %s760
    %s761 = sphi 0, %s758
    %s762 = sphi 0, %s761
    %s778 = sphi 0, %s762
    %s784 = sphi 0, %s786
    %s787 = sphi 0, %s784
    %s788 = sphi 0, %s787
    %s804 = sphi 0, %s788
  $region4: #{two_way_transformer.12} parent=0 // loop_header_branch
    %75 = sbr.rel (%p73) target = $region8
  $region5: #{two_way_transformer.12} parent=0 // loop_body
    %s77 = ssub.s32 %s72, 1
    %s78 = ssub.s32 %s72, 2
    %s79 = sadd.s32 %s72, 1
    %s80 = ssub.s32 %s72, %s79
    %p81 = scmp.eq.s32.totalorder %s80, 0
    %s83 = sadd.s32 %s82, 1
    %s84 = scalar_select %p81, %s82, %s83
    %p87 = pneg %p81
    %p88 = scmp.eq.s32.totalorder %s72, 1
    %p89 = por %p87, %p88
    %p90 = scmp.ne.s32.totalorder %s82, %s85
    %p91 = scmp.eq.s32.totalorder %s72, 0
    %p92 = por %p90, %p91
    %p93 = scmp.ne.s32.totalorder %s82, %s85
    %p94 = scmp.eq.s32.totalorder %s77, 1
    %p95 = por %p93, %p94
    %p96 = scmp.ne.s32.totalorder %s85, %s86
    %p97 = scmp.eq.s32.totalorder %s77, 0
    %p98 = por %p96, %p97
    %p99 = scmp.ne.s32.totalorder %s85, %s86
    %p100 = scmp.eq.s32.totalorder %s78, 1
    %p101 = por %p99, %p100
    %p103 = scmp.ne.s32.totalorder %s86, %s102
    %p104 = scmp.eq.s32.totalorder %s78, 0
    %p105 = por %p103, %p104
    %s106 = ssub.s32 %s72, %s79
    %p107 = scmp.eq.s32.totalorder %s106, 0
    %s109 = sadd.s32 %s108, 1
    %s110 = scalar_select %p107, %s108, %s109
    %p113 = pneg %p107
    %p114 = scmp.eq.s32.totalorder %s72, 1
    %p115 = por %p113, %p114
    %p116 = scmp.ne.s32.totalorder %s108, %s111
    %p117 = scmp.eq.s32.totalorder %s72, 0
    %p118 = por %p116, %p117
    %p119 = scmp.ne.s32.totalorder %s108, %s111
    %p120 = scmp.eq.s32.totalorder %s77, 1
    %p121 = por %p119, %p120
    %p122 = scmp.ne.s32.totalorder %s111, %s112
    %p123 = scmp.eq.s32.totalorder %s77, 0
    %p124 = por %p122, %p123
    %p125 = scmp.ne.s32.totalorder %s111, %s112
    %p126 = scmp.eq.s32.totalorder %s78, 1
    %p127 = por %p125, %p126
    %p129 = scmp.ne.s32.totalorder %s112, %s128
    %p130 = scmp.eq.s32.totalorder %s78, 0
    %p131 = por %p129, %p130
    %s132 = ssub.s32 %s72, %s79
    %p133 = scmp.eq.s32.totalorder %s132, 0
    %s135 = sadd.s32 %s134, 1
    %s136 = scalar_select %p133, %s134, %s135
    %p139 = pneg %p133
    %p140 = scmp.eq.s32.totalorder %s72, 1
    %p141 = por %p139, %p140
    %p142 = scmp.ne.s32.totalorder %s134, %s137
    %p143 = scmp.eq.s32.totalorder %s72, 0
    %p144 = por %p142, %p143
    %p145 = scmp.ne.s32.totalorder %s134, %s137
    %p146 = scmp.eq.s32.totalorder %s77, 1
    %p147 = por %p145, %p146
    %p148 = scmp.ne.s32.totalorder %s137, %s138
    %p149 = scmp.eq.s32.totalorder %s77, 0
    %p150 = por %p148, %p149
    %p151 = scmp.ne.s32.totalorder %s137, %s138
    %p152 = scmp.eq.s32.totalorder %s78, 1
    %p153 = por %p151, %p152
    %p155 = scmp.ne.s32.totalorder %s138, %s154
    %p156 = scmp.eq.s32.totalorder %s78, 0
    %p157 = por %p155, %p156
    %s158 = ssub.s32 %s72, %s79
    %p159 = scmp.eq.s32.totalorder %s158, 0
    %s161 = sadd.s32 %s160, 1
    %s162 = scalar_select %p159, %s160, %s161
    %p165 = pneg %p159
    %p166 = scmp.eq.s32.totalorder %s72, 1
    %p167 = por %p165, %p166
    %p168 = scmp.ne.s32.totalorder %s160, %s163
    %p169 = scmp.eq.s32.totalorder %s72, 0
    %p170 = por %p168, %p169
    %p171 = scmp.ne.s32.totalorder %s160, %s163
    %p172 = scmp.eq.s32.totalorder %s77, 1
    %p173 = por %p171, %p172
    %p174 = scmp.ne.s32.totalorder %s163, %s164
    %p175 = scmp.eq.s32.totalorder %s77, 0
    %p176 = por %p174, %p175
    %p177 = scmp.ne.s32.totalorder %s163, %s164
    %p178 = scmp.eq.s32.totalorder %s78, 1
    %p179 = por %p177, %p178
    %p181 = scmp.ne.s32.totalorder %s164, %s180
    %p182 = scmp.eq.s32.totalorder %s78, 0
    %p183 = por %p181, %p182
    %s185 = sadd.s32 %s184, 1
    %p188 = scmp.eq.s32.totalorder %s72, 1
    %p189 = scmp.ne.s32.totalorder %s184, %s186
    %p190 = scmp.eq.s32.totalorder %s72, 0
    %p191 = por %p189, %p190
    %p192 = scmp.ne.s32.totalorder %s184, %s186
    %p193 = scmp.eq.s32.totalorder %s77, 1
    %p194 = por %p192, %p193
    %p195 = scmp.ne.s32.totalorder %s186, %s187
    %p196 = scmp.eq.s32.totalorder %s77, 0
    %p197 = por %p195, %p196
    %p198 = scmp.ne.s32.totalorder %s186, %s187
    %p199 = scmp.eq.s32.totalorder %s78, 1
    %p200 = por %p198, %p199
    %p202 = scmp.ne.s32.totalorder %s187, %s201
    %p203 = scmp.eq.s32.totalorder %s78, 0
    %p204 = por %p202, %p203
    %s206 = sadd.s32 %s205, 1
    %p209 = scmp.eq.s32.totalorder %s72, 1
    %p210 = scmp.ne.s32.totalorder %s205, %s207
    %p211 = scmp.eq.s32.totalorder %s72, 0
    %p212 = por %p210, %p211
    %p213 = scmp.ne.s32.totalorder %s205, %s207
    %p214 = scmp.eq.s32.totalorder %s77, 1
    %p215 = por %p213, %p214
    %p216 = scmp.ne.s32.totalorder %s207, %s208
    %p217 = scmp.eq.s32.totalorder %s77, 0
    %p218 = por %p216, %p217
    %p219 = scmp.ne.s32.totalorder %s207, %s208
    %p220 = scmp.eq.s32.totalorder %s78, 1
    %p221 = por %p219, %p220
    %p223 = scmp.ne.s32.totalorder %s208, %s222
    %p224 = scmp.eq.s32.totalorder %s78, 0
    %p225 = por %p223, %p224
    %s227 = sadd.s32 %s226, 1
    %p230 = scmp.eq.s32.totalorder %s72, 1
    %p231 = scmp.ne.s32.totalorder %s226, %s228
    %p232 = scmp.eq.s32.totalorder %s72, 0
    %p233 = por %p231, %p232
    %p234 = scmp.ne.s32.totalorder %s226, %s228
    %p235 = scmp.eq.s32.totalorder %s77, 1
    %p236 = por %p234, %p235
    %p237 = scmp.ne.s32.totalorder %s228, %s229
    %p238 = scmp.eq.s32.totalorder %s77, 0
    %p239 = por %p237, %p238
    %p240 = scmp.ne.s32.totalorder %s228, %s229
    %p241 = scmp.eq.s32.totalorder %s78, 1
    %p242 = por %p240, %p241
    %p244 = scmp.ne.s32.totalorder %s229, %s243
    %p245 = scmp.eq.s32.totalorder %s78, 0
    %p246 = por %p244, %p245
    %s248 = sadd.s32 %s247, 1
    %p251 = scmp.eq.s32.totalorder %s72, 1
    %p252 = scmp.ne.s32.totalorder %s247, %s249
    %p253 = scmp.eq.s32.totalorder %s72, 0
    %p254 = por %p252, %p253
    %p255 = scmp.ne.s32.totalorder %s247, %s249
    %p256 = scmp.eq.s32.totalorder %s77, 1
    %p257 = por %p255, %p256
    %p258 = scmp.ne.s32.totalorder %s249, %s250
    %p259 = scmp.eq.s32.totalorder %s77, 0
    %p260 = por %p258, %p259
    %p261 = scmp.ne.s32.totalorder %s249, %s250
    %p262 = scmp.eq.s32.totalorder %s78, 1
    %p263 = por %p261, %p262
    %p265 = scmp.ne.s32.totalorder %s250, %s264
    %p266 = scmp.eq.s32.totalorder %s78, 0
    %p267 = por %p265, %p266
    %s269 = sadd.s32 %s268, 1
    %p272 = scmp.eq.s32.totalorder %s72, 1
    %p273 = scmp.ne.s32.totalorder %s268, %s270
    %p274 = scmp.eq.s32.totalorder %s72, 0
    %p275 = por %p273, %p274
    %p276 = scmp.ne.s32.totalorder %s268, %s270
    %p277 = scmp.eq.s32.totalorder %s77, 1
    %p278 = por %p276, %p277
    %p279 = scmp.ne.s32.totalorder %s270, %s271
    %p280 = scmp.eq.s32.totalorder %s77, 0
    %p281 = por %p279, %p280
    %p282 = scmp.ne.s32.totalorder %s270, %s271
    %p283 = scmp.eq.s32.totalorder %s78, 1
    %p284 = por %p282, %p283
    %p286 = scmp.ne.s32.totalorder %s271, %s285
    %p287 = scmp.eq.s32.totalorder %s78, 0
    %p288 = por %p286, %p287
    %s290 = sadd.s32 %s289, 1
    %p293 = scmp.eq.s32.totalorder %s72, 1
    %p294 = scmp.ne.s32.totalorder %s289, %s291
    %p295 = scmp.eq.s32.totalorder %s72, 0
    %p296 = por %p294, %p295
    %p297 = scmp.ne.s32.totalorder %s289, %s291
    %p298 = scmp.eq.s32.totalorder %s77, 1
    %p299 = por %p297, %p298
    %p300 = scmp.ne.s32.totalorder %s291, %s292
    %p301 = scmp.eq.s32.totalorder %s77, 0
    %p302 = por %p300, %p301
    %p303 = scmp.ne.s32.totalorder %s291, %s292
    %p304 = scmp.eq.s32.totalorder %s78, 1
    %p305 = por %p303, %p304
    %p307 = scmp.ne.s32.totalorder %s292, %s306
    %p308 = scmp.eq.s32.totalorder %s78, 0
    %p309 = por %p307, %p308
    %s311 = sadd.s32 %s310, 1
    %p314 = scmp.eq.s32.totalorder %s72, 1
    %p315 = scmp.ne.s32.totalorder %s310, %s312
    %p316 = scmp.eq.s32.totalorder %s72, 0
    %p317 = por %p315, %p316
    %p318 = scmp.ne.s32.totalorder %s310, %s312
    %p319 = scmp.eq.s32.totalorder %s77, 1
    %p320 = por %p318, %p319
    %p321 = scmp.ne.s32.totalorder %s312, %s313
    %p322 = scmp.eq.s32.totalorder %s77, 0
    %p323 = por %p321, %p322
    %p324 = scmp.ne.s32.totalorder %s312, %s313
    %p325 = scmp.eq.s32.totalorder %s78, 1
    %p326 = por %p324, %p325
    %p328 = scmp.ne.s32.totalorder %s313, %s327
    %p329 = scmp.eq.s32.totalorder %s78, 0
    %p330 = por %p328, %p329
    %s332 = sadd.s32 %s331, 1
    %p335 = scmp.eq.s32.totalorder %s72, 1
    %p336 = scmp.ne.s32.totalorder %s331, %s333
    %p337 = scmp.eq.s32.totalorder %s72, 0
    %p338 = por %p336, %p337
    %p339 = scmp.ne.s32.totalorder %s331, %s333
    %p340 = scmp.eq.s32.totalorder %s77, 1
    %p341 = por %p339, %p340
    %p342 = scmp.ne.s32.totalorder %s333, %s334
    %p343 = scmp.eq.s32.totalorder %s77, 0
    %p344 = por %p342, %p343
    %p345 = scmp.ne.s32.totalorder %s333, %s334
    %p346 = scmp.eq.s32.totalorder %s78, 1
    %p347 = por %p345, %p346
    %p349 = scmp.ne.s32.totalorder %s334, %s348
    %p350 = scmp.eq.s32.totalorder %s78, 0
    %p351 = por %p349, %p350
    %s353 = sadd.s32 %s352, 1
    %p356 = scmp.eq.s32.totalorder %s72, 1
    %p357 = scmp.ne.s32.totalorder %s352, %s354
    %p358 = scmp.eq.s32.totalorder %s72, 0
    %p359 = por %p357, %p358
    %p360 = scmp.ne.s32.totalorder %s352, %s354
    %p361 = scmp.eq.s32.totalorder %s77, 1
    %p362 = por %p360, %p361
    %p363 = scmp.ne.s32.totalorder %s354, %s355
    %p364 = scmp.eq.s32.totalorder %s77, 0
    %p365 = por %p363, %p364
    %p366 = scmp.ne.s32.totalorder %s354, %s355
    %p367 = scmp.eq.s32.totalorder %s78, 1
    %p368 = por %p366, %p367
    %p370 = scmp.ne.s32.totalorder %s355, %s369
    %p371 = scmp.eq.s32.totalorder %s78, 0
    %p372 = por %p370, %p371
    %s374 = sadd.s32 %s373, 1
    %p377 = scmp.eq.s32.totalorder %s72, 1
    %p378 = scmp.ne.s32.totalorder %s373, %s375
    %p379 = scmp.eq.s32.totalorder %s72, 0
    %p380 = por %p378, %p379
    %p381 = scmp.ne.s32.totalorder %s373, %s375
    %p382 = scmp.eq.s32.totalorder %s77, 1
    %p383 = por %p381, %p382
    %p384 = scmp.ne.s32.totalorder %s375, %s376
    %p385 = scmp.eq.s32.totalorder %s77, 0
    %p386 = por %p384, %p385
    %p387 = scmp.ne.s32.totalorder %s375, %s376
    %p388 = scmp.eq.s32.totalorder %s78, 1
    %p389 = por %p387, %p388
    %p391 = scmp.ne.s32.totalorder %s376, %s390
    %p392 = scmp.eq.s32.totalorder %s78, 0
    %p393 = por %p391, %p392
    %s395 = sadd.s32 %s394, 1
    %p398 = scmp.eq.s32.totalorder %s72, 1
    %p399 = scmp.ne.s32.totalorder %s394, %s396
    %p400 = scmp.eq.s32.totalorder %s72, 0
    %p401 = por %p399, %p400
    %p402 = scmp.ne.s32.totalorder %s394, %s396
    %p403 = scmp.eq.s32.totalorder %s77, 1
    %p404 = por %p402, %p403
    %p405 = scmp.ne.s32.totalorder %s396, %s397
    %p406 = scmp.eq.s32.totalorder %s77, 0
    %p407 = por %p405, %p406
    %p408 = scmp.ne.s32.totalorder %s396, %s397
    %p409 = scmp.eq.s32.totalorder %s78, 1
    %p410 = por %p408, %p409
    %p412 = scmp.ne.s32.totalorder %s397, %s411
    %p413 = scmp.eq.s32.totalorder %s78, 0
    %p414 = por %p412, %p413
    %s416 = sadd.s32 %s415, 1
    %p419 = scmp.eq.s32.totalorder %s72, 1
    %p420 = scmp.ne.s32.totalorder %s415, %s417
    %p421 = scmp.eq.s32.totalorder %s72, 0
    %p422 = por %p420, %p421
    %p423 = scmp.ne.s32.totalorder %s415, %s417
    %p424 = scmp.eq.s32.totalorder %s77, 1
    %p425 = por %p423, %p424
    %p426 = scmp.ne.s32.totalorder %s417, %s418
    %p427 = scmp.eq.s32.totalorder %s77, 0
    %p428 = por %p426, %p427
    %p429 = scmp.ne.s32.totalorder %s417, %s418
    %p430 = scmp.eq.s32.totalorder %s78, 1
    %p431 = por %p429, %p430
    %p433 = scmp.ne.s32.totalorder %s418, %s432
    %p434 = scmp.eq.s32.totalorder %s78, 0
    %p435 = por %p433, %p434
    %s437 = sadd.s32 %s436, 1
    %p440 = scmp.eq.s32.totalorder %s72, 1
    %p441 = scmp.ne.s32.totalorder %s436, %s438
    %p442 = scmp.eq.s32.totalorder %s72, 0
    %p443 = por %p441, %p442
    %p444 = scmp.ne.s32.totalorder %s436, %s438
    %p445 = scmp.eq.s32.totalorder %s77, 1
    %p446 = por %p444, %p445
    %p447 = scmp.ne.s32.totalorder %s438, %s439
    %p448 = scmp.eq.s32.totalorder %s77, 0
    %p449 = por %p447, %p448
    %p450 = scmp.ne.s32.totalorder %s438, %s439
    %p451 = scmp.eq.s32.totalorder %s78, 1
    %p452 = por %p450, %p451
    %p454 = scmp.ne.s32.totalorder %s439, %s453
    %p455 = scmp.eq.s32.totalorder %s78, 0
    %p456 = por %p454, %p455
    %s458 = sadd.s32 %s457, 1
    %p461 = scmp.eq.s32.totalorder %s72, 1
    %p462 = scmp.ne.s32.totalorder %s457, %s459
    %p463 = scmp.eq.s32.totalorder %s72, 0
    %p464 = por %p462, %p463
    %p465 = scmp.ne.s32.totalorder %s457, %s459
    %p466 = scmp.eq.s32.totalorder %s77, 1
    %p467 = por %p465, %p466
    %p468 = scmp.ne.s32.totalorder %s459, %s460
    %p469 = scmp.eq.s32.totalorder %s77, 0
    %p470 = por %p468, %p469
    %p471 = scmp.ne.s32.totalorder %s459, %s460
    %p472 = scmp.eq.s32.totalorder %s78, 1
    %p473 = por %p471, %p472
    %p475 = scmp.ne.s32.totalorder %s460, %s474
    %p476 = scmp.eq.s32.totalorder %s78, 0
    %p477 = por %p475, %p476
    %s479 = sadd.s32 %s478, 1
    %p482 = scmp.eq.s32.totalorder %s72, 1
    %p483 = scmp.ne.s32.totalorder %s478, %s480
    %p484 = scmp.eq.s32.totalorder %s72, 0
    %p485 = por %p483, %p484
    %p486 = scmp.ne.s32.totalorder %s478, %s480
    %p487 = scmp.eq.s32.totalorder %s77, 1
    %p488 = por %p486, %p487
    %p489 = scmp.ne.s32.totalorder %s480, %s481
    %p490 = scmp.eq.s32.totalorder %s77, 0
    %p491 = por %p489, %p490
    %p492 = scmp.ne.s32.totalorder %s480, %s481
    %p493 = scmp.eq.s32.totalorder %s78, 1
    %p494 = por %p492, %p493
    %p496 = scmp.ne.s32.totalorder %s481, %s495
    %p497 = scmp.eq.s32.totalorder %s78, 0
    %p498 = por %p496, %p497
    %s500 = sadd.s32 %s499, 1
    %p503 = scmp.eq.s32.totalorder %s72, 1
    %p504 = scmp.ne.s32.totalorder %s499, %s501
    %p505 = scmp.eq.s32.totalorder %s72, 0
    %p506 = por %p504, %p505
    %p507 = scmp.ne.s32.totalorder %s499, %s501
    %p508 = scmp.eq.s32.totalorder %s77, 1
    %p509 = por %p507, %p508
    %p510 = scmp.ne.s32.totalorder %s501, %s502
    %p511 = scmp.eq.s32.totalorder %s77, 0
    %p512 = por %p510, %p511
    %p513 = scmp.ne.s32.totalorder %s501, %s502
    %p514 = scmp.eq.s32.totalorder %s78, 1
    %p515 = por %p513, %p514
    %p517 = scmp.ne.s32.totalorder %s502, %s516
    %p518 = scmp.eq.s32.totalorder %s78, 0
    %p519 = por %p517, %p518
    %s521 = sadd.s32 %s520, 1
    %p524 = scmp.eq.s32.totalorder %s72, 1
    %p525 = scmp.ne.s32.totalorder %s520, %s522
    %p526 = scmp.eq.s32.totalorder %s72, 0
    %p527 = por %p525, %p526
    %p528 = scmp.ne.s32.totalorder %s520, %s522
    %p529 = scmp.eq.s32.totalorder %s77, 1
    %p530 = por %p528, %p529
    %p531 = scmp.ne.s32.totalorder %s522, %s523
    %p532 = scmp.eq.s32.totalorder %s77, 0
    %p533 = por %p531, %p532
    %p534 = scmp.ne.s32.totalorder %s522, %s523
    %p535 = scmp.eq.s32.totalorder %s78, 1
    %p536 = por %p534, %p535
    %p538 = scmp.ne.s32.totalorder %s523, %s537
    %p539 = scmp.eq.s32.totalorder %s78, 0
    %p540 = por %p538, %p539
    %s542 = sadd.s32 %s541, 1
    %p545 = scmp.eq.s32.totalorder %s72, 1
    %p546 = scmp.ne.s32.totalorder %s541, %s543
    %p547 = scmp.eq.s32.totalorder %s72, 0
    %p548 = por %p546, %p547
    %p549 = scmp.ne.s32.totalorder %s541, %s543
    %p550 = scmp.eq.s32.totalorder %s77, 1
    %p551 = por %p549, %p550
    %p552 = scmp.ne.s32.totalorder %s543, %s544
    %p553 = scmp.eq.s32.totalorder %s77, 0
    %p554 = por %p552, %p553
    %p555 = scmp.ne.s32.totalorder %s543, %s544
    %p556 = scmp.eq.s32.totalorder %s78, 1
    %p557 = por %p555, %p556
    %p559 = scmp.ne.s32.totalorder %s544, %s558
    %p560 = scmp.eq.s32.totalorder %s78, 0
    %p561 = por %p559, %p560
    %s563 = sadd.s32 %s562, 1
    %p566 = scmp.eq.s32.totalorder %s72, 1
    %p567 = scmp.ne.s32.totalorder %s562, %s564
    %p568 = scmp.eq.s32.totalorder %s72, 0
    %p569 = por %p567, %p568
    %p570 = scmp.ne.s32.totalorder %s562, %s564
    %p571 = scmp.eq.s32.totalorder %s77, 1
    %p572 = por %p570, %p571
    %p573 = scmp.ne.s32.totalorder %s564, %s565
    %p574 = scmp.eq.s32.totalorder %s77, 0
    %p575 = por %p573, %p574
    %p576 = scmp.ne.s32.totalorder %s564, %s565
    %p577 = scmp.eq.s32.totalorder %s78, 1
    %p578 = por %p576, %p577
    %p580 = scmp.ne.s32.totalorder %s565, %s579
    %p581 = scmp.eq.s32.totalorder %s78, 0
    %p582 = por %p580, %p581
    %s584 = sadd.s32 %s583, 1
    %p587 = scmp.eq.s32.totalorder %s72, 1
    %p588 = scmp.ne.s32.totalorder %s583, %s585
    %p589 = scmp.eq.s32.totalorder %s72, 0
    %p590 = por %p588, %p589
    %p591 = scmp.ne.s32.totalorder %s583, %s585
    %p592 = scmp.eq.s32.totalorder %s77, 1
    %p593 = por %p591, %p592
    %p594 = scmp.ne.s32.totalorder %s585, %s586
    %p595 = scmp.eq.s32.totalorder %s77, 0
    %p596 = por %p594, %p595
    %p597 = scmp.ne.s32.totalorder %s585, %s586
    %p598 = scmp.eq.s32.totalorder %s78, 1
    %p599 = por %p597, %p598
    %p601 = scmp.ne.s32.totalorder %s586, %s600
    %p602 = scmp.eq.s32.totalorder %s78, 0
    %p603 = por %p601, %p602
    %s605 = sadd.s32 %s604, 1
    %p608 = scmp.eq.s32.totalorder %s72, 1
    %p609 = scmp.ne.s32.totalorder %s604, %s606
    %p610 = scmp.eq.s32.totalorder %s72, 0
    %p611 = por %p609, %p610
    %p612 = scmp.ne.s32.totalorder %s604, %s606
    %p613 = scmp.eq.s32.totalorder %s77, 1
    %p614 = por %p612, %p613
    %p615 = scmp.ne.s32.totalorder %s606, %s607
    %p616 = scmp.eq.s32.totalorder %s77, 0
    %p617 = por %p615, %p616
    %p618 = scmp.ne.s32.totalorder %s606, %s607
    %p619 = scmp.eq.s32.totalorder %s78, 1
    %p620 = por %p618, %p619
    %p622 = scmp.ne.s32.totalorder %s607, %s621
    %p623 = scmp.eq.s32.totalorder %s78, 0
    %p624 = por %p622, %p623
    %s626 = sadd.s32 %s625, 1
    %p629 = scmp.eq.s32.totalorder %s72, 1
    %p630 = scmp.ne.s32.totalorder %s625, %s627
    %p631 = scmp.eq.s32.totalorder %s72, 0
    %p632 = por %p630, %p631
    %p633 = scmp.ne.s32.totalorder %s625, %s627
    %p634 = scmp.eq.s32.totalorder %s77, 1
    %p635 = por %p633, %p634
    %p636 = scmp.ne.s32.totalorder %s627, %s628
    %p637 = scmp.eq.s32.totalorder %s77, 0
    %p638 = por %p636, %p637
    %p639 = scmp.ne.s32.totalorder %s627, %s628
    %p640 = scmp.eq.s32.totalorder %s78, 1
    %p641 = por %p639, %p640
    %p643 = scmp.ne.s32.totalorder %s628, %s642
    %p644 = scmp.eq.s32.totalorder %s78, 0
    %p645 = por %p643, %p644
    %s647 = sadd.s32 %s646, 1
    %p650 = scmp.eq.s32.totalorder %s72, 1
    %p651 = scmp.ne.s32.totalorder %s646, %s648
    %p652 = scmp.eq.s32.totalorder %s72, 0
    %p653 = por %p651, %p652
    %p654 = scmp.ne.s32.totalorder %s646, %s648
    %p655 = scmp.eq.s32.totalorder %s77, 1
    %p656 = por %p654, %p655
    %p657 = scmp.ne.s32.totalorder %s648, %s649
    %p658 = scmp.eq.s32.totalorder %s77, 0
    %p659 = por %p657, %p658
    %p660 = scmp.ne.s32.totalorder %s648, %s649
    %p661 = scmp.eq.s32.totalorder %s78, 1
    %p662 = por %p660, %p661
    %p664 = scmp.ne.s32.totalorder %s649, %s663
    %p665 = scmp.eq.s32.totalorder %s78, 0
    %p666 = por %p664, %p665
    %s668 = sadd.s32 %s667, 1
    %p671 = scmp.eq.s32.totalorder %s72, 1
    %p672 = scmp.ne.s32.totalorder %s667, %s669
    %p673 = scmp.eq.s32.totalorder %s72, 0
    %p674 = por %p672, %p673
    %p675 = scmp.ne.s32.totalorder %s667, %s669
    %p676 = scmp.eq.s32.totalorder %s77, 1
    %p677 = por %p675, %p676
    %p678 = scmp.ne.s32.totalorder %s669, %s670
    %p679 = scmp.eq.s32.totalorder %s77, 0
    %p680 = por %p678, %p679
    %p681 = scmp.ne.s32.totalorder %s669, %s670
    %p682 = scmp.eq.s32.totalorder %s78, 1
    %p683 = por %p681, %p682
    %p685 = scmp.ne.s32.totalorder %s670, %s684
    %p686 = scmp.eq.s32.totalorder %s78, 0
    %p687 = por %p685, %p686
    %s689 = sadd.s32 %s688, 1
    %p692 = scmp.eq.s32.totalorder %s72, 1
    %p693 = scmp.ne.s32.totalorder %s688, %s690
    %p694 = scmp.eq.s32.totalorder %s72, 0
    %p695 = por %p693, %p694
    %p696 = scmp.ne.s32.totalorder %s688, %s690
    %p697 = scmp.eq.s32.totalorder %s77, 1
    %p698 = por %p696, %p697
    %p699 = scmp.ne.s32.totalorder %s690, %s691
    %p700 = scmp.eq.s32.totalorder %s77, 0
    %p701 = por %p699, %p700
    %p702 = scmp.ne.s32.totalorder %s690, %s691
    %p703 = scmp.eq.s32.totalorder %s78, 1
    %p704 = por %p702, %p703
    %p706 = scmp.ne.s32.totalorder %s691, %s705
    %p707 = scmp.eq.s32.totalorder %s78, 0
    %p708 = por %p706, %p707
    %s710 = sadd.s32 %s709, 1
    %p713 = scmp.eq.s32.totalorder %s72, 1
    %p714 = scmp.ne.s32.totalorder %s709, %s711
    %p715 = scmp.eq.s32.totalorder %s72, 0
    %p716 = por %p714, %p715
    %p717 = scmp.ne.s32.totalorder %s709, %s711
    %p718 = scmp.eq.s32.totalorder %s77, 1
    %p719 = por %p717, %p718
    %p720 = scmp.ne.s32.totalorder %s711, %s712
    %p721 = scmp.eq.s32.totalorder %s77, 0
    %p722 = por %p720, %p721
    %p723 = scmp.ne.s32.totalorder %s711, %s712
    %p724 = scmp.eq.s32.totalorder %s78, 1
    %p725 = por %p723, %p724
    %p727 = scmp.ne.s32.totalorder %s712, %s726
    %p728 = scmp.eq.s32.totalorder %s78, 0
    %p729 = por %p727, %p728
    %s730 = ssub.s32 %s72, %s79
    %p731 = scmp.eq.s32.totalorder %s730, 0
    %s733 = sadd.s32 %s732, 1
    %s734 = scalar_select %p731, %s732, %s733
    %p737 = pneg %p731
    %p738 = scmp.eq.s32.totalorder %s72, 1
    %p739 = por %p737, %p738
    %p740 = scmp.ne.s32.totalorder %s732, %s735
    %p741 = scmp.eq.s32.totalorder %s72, 0
    %p742 = por %p740, %p741
    %p743 = scmp.ne.s32.totalorder %s732, %s735
    %p744 = scmp.eq.s32.totalorder %s77, 1
    %p745 = por %p743, %p744
    %p746 = scmp.ne.s32.totalorder %s735, %s736
    %p747 = scmp.eq.s32.totalorder %s77, 0
    %p748 = por %p746, %p747
    %p749 = scmp.ne.s32.totalorder %s735, %s736
    %p750 = scmp.eq.s32.totalorder %s78, 1
    %p751 = por %p749, %p750
    %p753 = scmp.ne.s32.totalorder %s736, %s752
    %p754 = scmp.eq.s32.totalorder %s78, 0
    %p755 = por %p753, %p754
    %s756 = ssub.s32 %s72, %s79
    %p757 = scmp.eq.s32.totalorder %s756, 0
    %s759 = sadd.s32 %s758, 1
    %s760 = scalar_select %p757, %s758, %s759
    %p763 = pneg %p757
    %p764 = scmp.eq.s32.totalorder %s72, 1
    %p765 = por %p763, %p764
    %p766 = scmp.ne.s32.totalorder %s758, %s761
    %p767 = scmp.eq.s32.totalorder %s72, 0
    %p768 = por %p766, %p767
    %p769 = scmp.ne.s32.totalorder %s758, %s761
    %p770 = scmp.eq.s32.totalorder %s77, 1
    %p771 = por %p769, %p770
    %p772 = scmp.ne.s32.totalorder %s761, %s762
    %p773 = scmp.eq.s32.totalorder %s77, 0
    %p774 = por %p772, %p773
    %p775 = scmp.ne.s32.totalorder %s761, %s762
    %p776 = scmp.eq.s32.totalorder %s78, 1
    %p777 = por %p775, %p776
    %p779 = scmp.ne.s32.totalorder %s762, %s778
    %p780 = scmp.eq.s32.totalorder %s78, 0
    %p781 = por %p779, %p780
    %s782 = ssub.s32 %s72, %s79
    %p783 = scmp.eq.s32.totalorder %s782, 0
    %s785 = sadd.s32 %s784, 1
    %s786 = scalar_select %p783, %s784, %s785
    %p789 = pneg %p783
    %p790 = scmp.eq.s32.totalorder %s72, 1
    %p791 = por %p789, %p790
    %p792 = scmp.ne.s32.totalorder %s784, %s787
    %p793 = scmp.eq.s32.totalorder %s72, 0
    %p794 = por %p792, %p793
    %p795 = scmp.ne.s32.totalorder %s784, %s787
    %p796 = scmp.eq.s32.totalorder %s77, 1
    %p797 = por %p795, %p796
    %p798 = scmp.ne.s32.totalorder %s787, %s788
    %p799 = scmp.eq.s32.totalorder %s77, 0
    %p800 = por %p798, %p799
    %p801 = scmp.ne.s32.totalorder %s787, %s788
    %p802 = scmp.eq.s32.totalorder %s78, 1
    %p803 = por %p801, %p802
    %p805 = scmp.ne.s32.totalorder %s788, %s804
    %p806 = scmp.eq.s32.totalorder %s78, 0
    %p807 = por %p805, %p806
    %p808 = scmp.le.s32.totalorder 1, %s72
    %p809 = scmp.lt.s32.totalorder %s72, 3
    %p810 = pnand %p808, %p809
    %p811 = pneg %p810
    // Predicated region
    $region9: #{two_way_transformer.12} parent=5 // pred_check
      _
    $region10: #{two_way_transformer.12} parent=5 // pred_check_branch
      %813 = sbr.rel (%p810) target = $region12
    $region11: #{two_way_transformer.12} parent=5 // pred_region
      %s814 = ssub.s32 %s72, 1
      // Predicated region
      $region13: #{two_way_transformer.12} parent=11 // pred_check
        %p815 = pneg %p197
      $region14: #{two_way_transformer.12} parent=11 // pred_check_branch
        %817 = sbr.rel (%p815) target = $region16
      $region15: #{two_way_transformer.12} parent=11 // pred_region
        _
      $region16: #{two_way_transformer.12} parent=11 // pred_fallthru
        _
      // Predicated region
      $region17: #{two_way_transformer.12} parent=11 // pred_check
        %p818 = pneg %p218
      $region18: #{two_way_transformer.12} parent=11 // pred_check_branch
        %820 = sbr.rel (%p818) target = $region20
      $region19: #{two_way_transformer.12} parent=11 // pred_region
        _
      $region20: #{two_way_transformer.12} parent=11 // pred_fallthru
        _
      // Predicated region
      $region21: #{two_way_transformer.12} parent=11 // pred_check
        %p821 = pneg %p239
      $region22: #{two_way_transformer.12} parent=11 // pred_check_branch
        %823 = sbr.rel (%p821) target = $region24
      $region23: #{two_way_transformer.12} parent=11 // pred_region
        _
      $region24: #{two_way_transformer.12} parent=11 // pred_fallthru
        _
      // Predicated region
      $region25: #{two_way_transformer.12} parent=11 // pred_check
        %p824 = pneg %p260
      $region26: #{two_way_transformer.12} parent=11 // pred_check_branch
        %826 = sbr.rel (%p824) target = $region28
      $region27: #{two_way_transformer.12} parent=11 // pred_region
        _
      $region28: #{two_way_transformer.12} parent=11 // pred_fallthru
        _
      // Predicated region
      $region29: #{two_way_transformer.12} parent=11 // pred_check
        %p827 = pneg %p281
      $region30: #{two_way_transformer.12} parent=11 // pred_check_branch
        %829 = sbr.rel (%p827) target = $region32
      $region31: #{two_way_transformer.12} parent=11 // pred_region
        _
      $region32: #{two_way_transformer.12} parent=11 // pred_fallthru
        _
      // Predicated region
      $region33: #{two_way_transformer.12} parent=11 // pred_check
        %p830 = pneg %p302
      $region34: #{two_way_transformer.12} parent=11 // pred_check_branch
        %832 = sbr.rel (%p830) target = $region36
      $region35: #{two_way_transformer.12} parent=11 // pred_region
        _
      $region36: #{two_way_transformer.12} parent=11 // pred_fallthru
        _
      // Predicated region
      $region37: #{two_way_transformer.12} parent=11 // pred_check
        %p833 = pneg %p323
      $region38: #{two_way_transformer.12} parent=11 // pred_check_branch
        %835 = sbr.rel (%p833) target = $region40
      $region39: #{two_way_transformer.12} parent=11 // pred_region
        _
      $region40: #{two_way_transformer.12} parent=11 // pred_fallthru
        _
      // Predicated region
      $region41: #{two_way_transformer.12} parent=11 // pred_check
        %p836 = pneg %p344
      $region42: #{two_way_transformer.12} parent=11 // pred_check_branch
        %838 = sbr.rel (%p836) target = $region44
      $region43: #{two_way_transformer.12} parent=11 // pred_region
        _
      $region44: #{two_way_transformer.12} parent=11 // pred_fallthru
        _
      // Predicated region
      $region45: #{two_way_transformer.12} parent=11 // pred_check
        %p839 = pneg %p365
      $region46: #{two_way_transformer.12} parent=11 // pred_check_branch
        %841 = sbr.rel (%p839) target = $region48
      $region47: #{two_way_transformer.12} parent=11 // pred_region
        _
      $region48: #{two_way_transformer.12} parent=11 // pred_fallthru
        _
      // Predicated region
      $region49: #{two_way_transformer.12} parent=11 // pred_check
        %p842 = pneg %p386
      $region50: #{two_way_transformer.12} parent=11 // pred_check_branch
        %844 = sbr.rel (%p842) target = $region52
      $region51: #{two_way_transformer.12} parent=11 // pred_region
        _
      $region52: #{two_way_transformer.12} parent=11 // pred_fallthru
        _
      // Predicated region
      $region53: #{two_way_transformer.12} parent=11 // pred_check
        %p845 = pneg %p407
      $region54: #{two_way_transformer.12} parent=11 // pred_check_branch
        %847 = sbr.rel (%p845) target = $region56
      $region55: #{two_way_transformer.12} parent=11 // pred_region
        _
      $region56: #{two_way_transformer.12} parent=11 // pred_fallthru
        _
      // Predicated region
      $region57: #{two_way_transformer.12} parent=11 // pred_check
        %p848 = pneg %p428
      $region58: #{two_way_transformer.12} parent=11 // pred_check_branch
        %850 = sbr.rel (%p848) target = $region60
      $region59: #{two_way_transformer.12} parent=11 // pred_region
        _
      $region60: #{two_way_transformer.12} parent=11 // pred_fallthru
        _
      // Predicated region
      $region61: #{two_way_transformer.12} parent=11 // pred_check
        %p851 = pneg %p449
      $region62: #{two_way_transformer.12} parent=11 // pred_check_branch
        %853 = sbr.rel (%p851) target = $region64
      $region63: #{two_way_transformer.12} parent=11 // pred_region
        _
      $region64: #{two_way_transformer.12} parent=11 // pred_fallthru
        _
      // Predicated region
      $region65: #{two_way_transformer.12} parent=11 // pred_check
        %p854 = pneg %p470
      $region66: #{two_way_transformer.12} parent=11 // pred_check_branch
        %856 = sbr.rel (%p854) target = $region68
      $region67: #{two_way_transformer.12} parent=11 // pred_region
        _
      $region68: #{two_way_transformer.12} parent=11 // pred_fallthru
        _
      // Predicated region
      $region69: #{two_way_transformer.12} parent=11 // pred_check
        %p857 = pneg %p491
      $region70: #{two_way_transformer.12} parent=11 // pred_check_branch
        %859 = sbr.rel (%p857) target = $region72
      $region71: #{two_way_transformer.12} parent=11 // pred_region
        _
      $region72: #{two_way_transformer.12} parent=11 // pred_fallthru
        _
      // Predicated region
      $region73: #{two_way_transformer.12} parent=11 // pred_check
        %p860 = pneg %p512
      $region74: #{two_way_transformer.12} parent=11 // pred_check_branch
        %862 = sbr.rel (%p860) target = $region76
      $region75: #{two_way_transformer.12} parent=11 // pred_region
        _
      $region76: #{two_way_transformer.12} parent=11 // pred_fallthru
        _
      // Predicated region
      $region77: #{two_way_transformer.12} parent=11 // pred_check
        %p863 = pneg %p533
      $region78: #{two_way_transformer.12} parent=11 // pred_check_branch
        %865 = sbr.rel (%p863) target = $region80
      $region79: #{two_way_transformer.12} parent=11 // pred_region
        _
      $region80: #{two_way_transformer.12} parent=11 // pred_fallthru
        _
      // Predicated region
      $region81: #{two_way_transformer.12} parent=11 // pred_check
        %p866 = pneg %p554
      $region82: #{two_way_transformer.12} parent=11 // pred_check_branch
        %868 = sbr.rel (%p866) target = $region84
      $region83: #{two_way_transformer.12} parent=11 // pred_region
        _
      $region84: #{two_way_transformer.12} parent=11 // pred_fallthru
        _
      // Predicated region
      $region85: #{two_way_transformer.12} parent=11 // pred_check
        %p869 = pneg %p575
      $region86: #{two_way_transformer.12} parent=11 // pred_check_branch
        %871 = sbr.rel (%p869) target = $region88
      $region87: #{two_way_transformer.12} parent=11 // pred_region
        _
      $region88: #{two_way_transformer.12} parent=11 // pred_fallthru
        _
      // Predicated region
      $region89: #{two_way_transformer.12} parent=11 // pred_check
        %p872 = pneg %p596
      $region90: #{two_way_transformer.12} parent=11 // pred_check_branch
        %874 = sbr.rel (%p872) target = $region92
      $region91: #{two_way_transformer.12} parent=11 // pred_region
        _
      $region92: #{two_way_transformer.12} parent=11 // pred_fallthru
        _
      // Predicated region
      $region93: #{two_way_transformer.12} parent=11 // pred_check
        %p875 = pneg %p617
      $region94: #{two_way_transformer.12} parent=11 // pred_check_branch
        %877 = sbr.rel (%p875) target = $region96
      $region95: #{two_way_transformer.12} parent=11 // pred_region
        _
      $region96: #{two_way_transformer.12} parent=11 // pred_fallthru
        _
      // Predicated region
      $region97: #{two_way_transformer.12} parent=11 // pred_check
        %p878 = pneg %p638
      $region98: #{two_way_transformer.12} parent=11 // pred_check_branch
        %880 = sbr.rel (%p878) target = $region100
      $region99: #{two_way_transformer.12} parent=11 // pred_region
        _
      $region100: #{two_way_transformer.12} parent=11 // pred_fallthru
        _
      // Predicated region
      $region101: #{two_way_transformer.12} parent=11 // pred_check
        %p881 = pneg %p659
      $region102: #{two_way_transformer.12} parent=11 // pred_check_branch
        %883 = sbr.rel (%p881) target = $region104
      $region103: #{two_way_transformer.12} parent=11 // pred_region
        _
      $region104: #{two_way_transformer.12} parent=11 // pred_fallthru
        _
      // Predicated region
      $region105: #{two_way_transformer.12} parent=11 // pred_check
        %p884 = pneg %p680
      $region106: #{two_way_transformer.12} parent=11 // pred_check_branch
        %886 = sbr.rel (%p884) target = $region108
      $region107: #{two_way_transformer.12} parent=11 // pred_region
        _
      $region108: #{two_way_transformer.12} parent=11 // pred_fallthru
        _
      // Predicated region
      $region109: #{two_way_transformer.12} parent=11 // pred_check
        %p887 = pneg %p701
      $region110: #{two_way_transformer.12} parent=11 // pred_check_branch
        %889 = sbr.rel (%p887) target = $region112
      $region111: #{two_way_transformer.12} parent=11 // pred_region
        _
      $region112: #{two_way_transformer.12} parent=11 // pred_fallthru
        _
      // Predicated region
      $region113: #{two_way_transformer.12} parent=11 // pred_check
        %p890 = pneg %p722
      $region114: #{two_way_transformer.12} parent=11 // pred_check_branch
        %892 = sbr.rel (%p890) target = $region116
      $region115: #{two_way_transformer.12} parent=11 // pred_region
        _
      $region116: #{two_way_transformer.12} parent=11 // pred_fallthru
        _
    $region12: #{two_way_transformer.12} parent=5 // pred_fallthru
      _
    %p893 = scmp.lt.s32.totalorder %s72, 2
    // Predicated region
    $region117: #{two_way_transformer.12} parent=5 // pred_check
      %p894 = pneg %p893
    $region118: #{two_way_transformer.12} parent=5 // pred_check_branch
      %896 = sbr.rel (%p894) target = $region120
    $region119: #{two_way_transformer.12} parent=5 // pred_region
      // Predicated region
      $region121: #{two_way_transformer.12} parent=119 // pred_check
        %p897 = pneg %p92
      $region122: #{two_way_transformer.12} parent=119 // pred_check_branch
        %899 = sbr.rel (%p897) target = $region124
      $region123: #{two_way_transformer.12} parent=119 // pred_region
        %p900 = scmp.lt.s32.totalorder %s72, 1
        %s901 = scalar_select %p900, %s72, 1
        %s902 = smul.addr %s901, 8
        %s903 = scalar_lea.vmem %s1, %s902
      $region124: #{two_way_transformer.12} parent=119 // pred_fallthru
        _
      // Predicated region
      $region125: #{two_way_transformer.12} parent=119 // pred_check
        %p904 = pneg %p118
      $region126: #{two_way_transformer.12} parent=119 // pred_check_branch
        %906 = sbr.rel (%p904) target = $region128
      $region127: #{two_way_transformer.12} parent=119 // pred_region
        %p907 = scmp.lt.s32.totalorder %s72, 1
        %s908 = scalar_select %p907, %s72, 1
        %s909 = smul.addr %s908, 8
        %s910 = scalar_lea.vmem %s3, %s909
      $region128: #{two_way_transformer.12} parent=119 // pred_fallthru
        _
      // Predicated region
      $region129: #{two_way_transformer.12} parent=119 // pred_check
        %p911 = pneg %p144
      $region130: #{two_way_transformer.12} parent=119 // pred_check_branch
        %913 = sbr.rel (%p911) target = $region132
      $region131: #{two_way_transformer.12} parent=119 // pred_region
        %p914 = scmp.lt.s32.totalorder %s72, 1
        %s915 = scalar_select %p914, %s72, 1
        %s916 = smul.addr %s915, 2
        %s917 = smul.addr %s916, 8
        %s918 = scalar_lea.vmem %s5, %s917
      $region132: #{two_way_transformer.12} parent=119 // pred_fallthru
        _
      // Predicated region
      $region133: #{two_way_transformer.12} parent=119 // pred_check
        %p919 = pneg %p170
      $region134: #{two_way_transformer.12} parent=119 // pred_check_branch
        %921 = sbr.rel (%p919) target = $region136
      $region135: #{two_way_transformer.12} parent=119 // pred_region
        %p922 = scmp.lt.s32.totalorder %s72, 1
        %s923 = scalar_select %p922, %s72, 1
        %s924 = smul.addr %s923, 2
        %s925 = smul.addr %s924, 8
        %s926 = scalar_lea.vmem %s7, %s925
      $region136: #{two_way_transformer.12} parent=119 // pred_fallthru
        _
    $region120: #{two_way_transformer.12} parent=5 // pred_fallthru
      _
    %p927 = scmp.le.s32.totalorder 1, %s72
    %p928 = scmp.lt.s32.totalorder %s72, 3
    %p929 = pnand %p927, %p928
    %p930 = pneg %p929
    // Predicated region
    $region137: #{two_way_transformer.12} parent=5 // pred_check
      _
    $region138: #{two_way_transformer.12} parent=5 // pred_check_branch
      %932 = sbr.rel (%p929) target = $region140
    $region139: #{two_way_transformer.12} parent=5 // pred_region
      %s933 = ssub.s32 %s72, 1
      %p934 = scmp.lt.s32.totalorder %s77, 1
      %s935 = scalar_select %p934, %s77, 1
      %s936 = smul.addr %s935, 8
      %s937 = scalar_lea.vmem %s1, %s936
      %p938 = pneg %p98
      %p939 = pneg %p95
      %p940 = scmp.lt.s32.totalorder %s77, 1
      %s941 = scalar_select %p940, %s77, 1
      %s942 = smul.addr %s941, 8
      %s943 = scalar_lea.vmem %s3, %s942
      %p944 = pneg %p124
      %p945 = pneg %p121
      %p946 = scmp.lt.s32.totalorder %s77, 1
      %s947 = scalar_select %p946, %s77, 1
      %s948 = smul.addr %s947, 2
      %s949 = smul.addr %s948, 8
      %s950 = scalar_lea.vmem %s5, %s949
      %p951 = pneg %p150
      %p952 = pneg %p147
      %p953 = scmp.lt.s32.totalorder %s77, 1
      %s954 = scalar_select %p953, %s77, 1
      %s955 = smul.addr %s954, 2
      %s956 = smul.addr %s955, 8
      %s957 = scalar_lea.vmem %s7, %s956
      %p958 = pneg %p176
      %p959 = pneg %p173
      %p960 = pneg %p197
      %p961 = pneg %p194
      %p962 = pneg %p218
      %p963 = pneg %p215
      %p964 = pneg %p239
      %p965 = pneg %p236
      %p966 = pneg %p260
      %p967 = pneg %p257
      %p968 = pneg %p281
      %p969 = pneg %p278
      %p970 = pneg %p302
      %p971 = pneg %p299
      %p972 = pneg %p323
      %p973 = pneg %p320
      %p974 = pneg %p344
      %p975 = pneg %p341
      %p976 = pneg %p365
      %p977 = pneg %p362
      %p978 = pneg %p386
      %p979 = pneg %p383
      %p980 = pneg %p407
      %p981 = pneg %p404
      %p982 = pneg %p428
      %p983 = pneg %p425
      %p984 = pneg %p449
      %p985 = pneg %p446
      %p986 = pneg %p470
      %p987 = pneg %p467
      %p988 = pneg %p491
      %p989 = pneg %p488
      %p990 = pneg %p512
      %p991 = pneg %p509
      %p992 = pneg %p533
      %p993 = pneg %p530
      %p994 = pneg %p554
      %p995 = pneg %p551
      %p996 = pneg %p575
      %p997 = pneg %p572
      %p998 = pneg %p596
      %p999 = pneg %p593
      %p1000 = pneg %p617
      %p1001 = pneg %p614
      %p1002 = pneg %p638
      %p1003 = pneg %p635
      %p1004 = pneg %p659
      %p1005 = pneg %p656
      %p1006 = pneg %p680
      %p1007 = pneg %p677
      %p1008 = pneg %p701
      %p1009 = pneg %p698
      %p1010 = pneg %p722
      %p1011 = pneg %p719
      %p1012 = pneg %p748
      %p1013 = pneg %p745
      %p1014 = scmp.lt.s32.totalorder %s77, 1
      %s1015 = scalar_select %p1014, %s77, 1
      %s1016 = smul.addr %s1015, 8
      %s1017 = scalar_lea.vmem %s61, %s1016
      %p1018 = pneg %p774
      %p1019 = pneg %p771
      %p1020 = scmp.lt.s32.totalorder %s77, 1
      %s1021 = scalar_select %p1020, %s77, 1
      %s1022 = smul.addr %s1021, 8
      %s1023 = scalar_lea.vmem %s63, %s1022
      %p1024 = pneg %p800
      %p1025 = pneg %p797
      %p1026 = scmp.lt.s32.totalorder %s77, 1
      %s1027 = scalar_select %p1026, %s77, 1
      %s1028 = smul.addr %s1027, 8
      %s1029 = scalar_lea.vmem %s65, %s1028
      %p1030 = scmp.lt.s32.totalorder %s77, 1
      %s1031 = scalar_select %p1030, %s77, 1
      %s1032 = smul.addr %s1031, 8
      %s1033 = scalar_lea.vmem %s1, %s1032
      %p1034 = scmp.lt.s32.totalorder %s77, 1
      %s1035 = scalar_select %p1034, %s77, 1
      %s1036 = smul.addr %s1035, 8
      %s1037 = scalar_lea.vmem %s3, %s1036
      %p1038 = scmp.lt.s32.totalorder %s77, 1
      %s1039 = scalar_select %p1038, %s77, 1
      %s1040 = smul.addr %s1039, 2
      %s1041 = smul.addr %s1040, 8
      %s1042 = scalar_lea.vmem %s5, %s1041
      %p1043 = scmp.lt.s32.totalorder %s77, 1
      %s1044 = scalar_select %p1043, %s77, 1
      %s1045 = smul.addr %s1044, 2
      %s1046 = smul.addr %s1045, 8
      %s1047 = scalar_lea.vmem %s7, %s1046
      %p1048 = scmp.lt.s32.totalorder %s77, 1
      %s1049 = scalar_select %p1048, %s77, 1
      %s1050 = smul.addr %s1049, 8
      %s1051 = scalar_lea.vmem %s61, %s1050
      %p1052 = scmp.lt.s32.totalorder %s77, 1
      %s1053 = scalar_select %p1052, %s77, 1
      %s1054 = smul.addr %s1053, 8
      %s1055 = scalar_lea.vmem %s63, %s1054
      %p1056 = scmp.lt.s32.totalorder %s77, 1
      %s1057 = scalar_select %p1056, %s77, 1
      %s1058 = smul.addr %s1057, 8
      %s1059 = scalar_lea.vmem %s65, %s1058
      %v1060 = vld [vmem:[%s1033] sm:$0xff]
      %v1061 = vld [vmem:[%s1037] sm:$0xff]
      %v1062 = vadd.f32 %v1060, %v1061
      %v1063 = vld [vmem:[%s9] sm:$0xff]
      %v1064 = vld [vmem:[%s9 + $0x8] sm:$0xff]
      %v1065 = vld [vmem:[%s9 + $0x10] sm:$0xff]
      %v1066 = vld [vmem:[%s9 + $0x18] sm:$0xff]
      %v1067 = vld [vmem:[%s11] sm:$0x1]
      %v1069 = vlaneseq
      %v1070 = vshrl.u32 %v1069, 7
      %v1071 = vsub.s32 0, %v1070
      %v1072 = vrot.slane %v1067, %v1071
      %vm1074 = vcmask 261120
      %v1076 = vsel %vm1074, %v1062, 0
      %1078 = vmatprep.subr.mxu0 0.0
      %1079 = vmatpush1.msra.mxu0 %v1063
      %1080 = vmatprep.subr.mxu0 0.0
      %1081 = vmatpush1.msra.mxu0 %v1064
      %1082 = vmatprep.subr.mxu0 0.0
      %1083 = vmatpush1.msra.mxu0 %v1065
      %1084 = vmatprep.subr.mxu0 0.0
      %1085 = vmatpush1.msra.mxu0 %v1066
      %1086 = vmatprep.subr.mxu0 0.0
      %1087 = vmatpush1.msra.mxu0 0.0
      %1088 = vmatprep.subr.mxu0 0.0
      %1089 = vmatpush1.msra.mxu0 0.0
      %1090 = vmatprep.subr.mxu0 0.0
      %1091 = vmatpush1.msra.mxu0 0.0
      %1092 = vmatprep.subr.mxu0 0.0
      %1093 = vmatpush1.msra.mxu0 0.0
      %1094 = vmatprep.subr.mxu0 0.0
      %1095 = vmatpush1.msra.mxu0 0.0
      %1096 = vmatprep.subr.mxu0 0.0
      %1097 = vmatpush1.msra.mxu0 0.0
      %1098 = vmatprep.subr.mxu0 0.0
      %1099 = vmatpush1.msra.mxu0 0.0
      %1100 = vmatprep.subr.mxu0 0.0
      %1101 = vmatpush1.msra.mxu0 0.0
      %1102 = vmatprep.subr.mxu0 0.0
      %1103 = vmatpush1.msra.mxu0 0.0
      %1104 = vmatprep.subr.mxu0 0.0
      %1105 = vmatpush1.msra.mxu0 0.0
      %1106 = vmatprep.subr.mxu0 0.0
      %1107 = vmatpush1.msra.mxu0 0.0
      %1108 = vmatprep.subr.mxu0 0.0
      %1109 = vmatpush1.msra.mxu0 0.0
      %1110 = vmatprep.subr.mxu0 0.0
      %1111 = vmatpush1.msra.mxu0 0.0
      %1112 = vmatprep.subr.mxu0 0.0
      %1113 = vmatpush1.msra.mxu0 0.0
      %1114 = vmatprep.subr.mxu0 0.0
      %1115 = vmatpush1.msra.mxu0 0.0
      %1116 = vmatprep.subr.mxu0 0.0
      %1117 = vmatpush1.msra.mxu0 0.0
      %1118 = vmatprep.subr.mxu0 0.0
      %1119 = vmatpush1.msra.mxu0 0.0
      %1120 = vmatprep.subr.mxu0 0.0
      %1121 = vmatpush1.msra.mxu0 0.0
      %1122 = vmatprep.subr.mxu0 0.0
      %1123 = vmatpush1.msra.mxu0 0.0
      %1124 = vmatprep.subr.mxu0 0.0
      %1125 = vmatpush1.msra.mxu0 0.0
      %1126 = vmatprep.subr.mxu0 0.0
      %1127 = vmatpush1.msra.mxu0 0.0
      %1128 = vmatprep.subr.mxu0 0.0
      %1129 = vmatpush1.msra.mxu0 0.0
      %1130 = vmatprep.subr.mxu0 0.0
      %1131 = vmatpush1.msra.mxu0 0.0
      %1132 = vmatprep.subr.mxu0 0.0
      %1133 = vmatpush1.msra.mxu0 0.0
      %1134 = vmatprep.subr.mxu0 0.0
      %1135 = vmatpush1.msra.mxu0 0.0
      %1136 = vmatprep.subr.mxu0 0.0
      %1137 = vmatpush1.msra.mxu0 0.0
      %1138 = vmatprep.subr.mxu0 0.0
      %1139 = vmatpush1.msra.mxu0 0.0
      %1140 = vmatprep.subr.mxu0 0.0
      %1141 = vmatpush1.msra.mxu0 0.0
      %1142 = vmatprep.mubr.f32.mxu0 0.0
      %1143 = vmatmul.mubr.f32.gmra.mrb[0].mxu0 %v1076
      %v1144 = vpop.f32.mrb[0].mxu0
      %v1145 = vadd.f32 %v1072, %v1144
      %v1146 = vpop.f32.mrb[0].mxu0
      %1147 = vdwg.mxu0
      %v1148 = vld [vmem:[%s13] sm:$0xff]
      %v1149 = vld [vmem:[%s13 + $0x8] sm:$0xff]
      %v1150 = vld [vmem:[%s13 + $0x10] sm:$0xff]
      %v1151 = vld [vmem:[%s13 + $0x18] sm:$0xff]
      %v1152 = vld [vmem:[%s15] sm:$0x1]
      %v1154 = vlaneseq
      %v1155 = vshrl.u32 %v1154, 7
      %v1156 = vsub.s32 0, %v1155
      %v1157 = vrot.slane %v1152, %v1156
      %1159 = vmatprep.subr.mxu0 0.0
      %1160 = vmatpush1.msra.mxu0 %v1148
      %1161 = vmatprep.subr.mxu0 0.0
      %1162 = vmatpush1.msra.mxu0 %v1149
      %1163 = vmatprep.subr.mxu0 0.0
      %1164 = vmatpush1.msra.mxu0 %v1150
      %1165 = vmatprep.subr.mxu0 0.0
      %1166 = vmatpush1.msra.mxu0 %v1151
      %1167 = vmatprep.subr.mxu0 0.0
      %1168 = vmatpush1.msra.mxu0 0.0
      %1169 = vmatprep.subr.mxu0 0.0
      %1170 = vmatpush1.msra.mxu0 0.0
      %1171 = vmatprep.subr.mxu0 0.0
      %1172 = vmatpush1.msra.mxu0 0.0
      %1173 = vmatprep.subr.mxu0 0.0
      %1174 = vmatpush1.msra.mxu0 0.0
      %1175 = vmatprep.subr.mxu0 0.0
      %1176 = vmatpush1.msra.mxu0 0.0
      %1177 = vmatprep.subr.mxu0 0.0
      %1178 = vmatpush1.msra.mxu0 0.0
      %1179 = vmatprep.subr.mxu0 0.0
      %1180 = vmatpush1.msra.mxu0 0.0
      %1181 = vmatprep.subr.mxu0 0.0
      %1182 = vmatpush1.msra.mxu0 0.0
      %1183 = vmatprep.subr.mxu0 0.0
      %1184 = vmatpush1.msra.mxu0 0.0
      %1185 = vmatprep.subr.mxu0 0.0
      %1186 = vmatpush1.msra.mxu0 0.0
      %1187 = vmatprep.subr.mxu0 0.0
      %1188 = vmatpush1.msra.mxu0 0.0
      %1189 = vmatprep.subr.mxu0 0.0
      %1190 = vmatpush1.msra.mxu0 0.0
      %1191 = vmatprep.subr.mxu0 0.0
      %1192 = vmatpush1.msra.mxu0 0.0
      %1193 = vmatprep.subr.mxu0 0.0
      %1194 = vmatpush1.msra.mxu0 0.0
      %1195 = vmatprep.subr.mxu0 0.0
      %1196 = vmatpush1.msra.mxu0 0.0
      %1197 = vmatprep.subr.mxu0 0.0
      %1198 = vmatpush1.msra.mxu0 0.0
      %1199 = vmatprep.subr.mxu0 0.0
      %1200 = vmatpush1.msra.mxu0 0.0
      %1201 = vmatprep.subr.mxu0 0.0
      %1202 = vmatpush1.msra.mxu0 0.0
      %1203 = vmatprep.subr.mxu0 0.0
      %1204 = vmatpush1.msra.mxu0 0.0
      %1205 = vmatprep.subr.mxu0 0.0
      %1206 = vmatpush1.msra.mxu0 0.0
      %1207 = vmatprep.subr.mxu0 0.0
      %1208 = vmatpush1.msra.mxu0 0.0
      %1209 = vmatprep.subr.mxu0 0.0
      %1210 = vmatpush1.msra.mxu0 0.0
      %1211 = vmatprep.subr.mxu0 0.0
      %1212 = vmatpush1.msra.mxu0 0.0
      %1213 = vmatprep.subr.mxu0 0.0
      %1214 = vmatpush1.msra.mxu0 0.0
      %1215 = vmatprep.subr.mxu0 0.0
      %1216 = vmatpush1.msra.mxu0 0.0
      %1217 = vmatprep.subr.mxu0 0.0
      %1218 = vmatpush1.msra.mxu0 0.0
      %1219 = vmatprep.subr.mxu0 0.0
      %1220 = vmatpush1.msra.mxu0 0.0
      %1221 = vmatprep.subr.mxu0 0.0
      %1222 = vmatpush1.msra.mxu0 0.0
      %1223 = vmatprep.mubr.f32.mxu0 0.0
      %1224 = vmatmul.mubr.f32.gmra.mrb[0].mxu0 %v1076
      %v1225 = vpop.f32.mrb[0].mxu0
      %v1226 = vadd.f32 %v1157, %v1225
      %v1227 = vpop.f32.mrb[0].mxu0
      %1228 = vdwg.mxu0
      %v1229 = vld [vmem:[%s17] sm:$0xff]
      %v1230 = vld [vmem:[%s17 + $0x8] sm:$0xff]
      %v1231 = vld [vmem:[%s17 + $0x10] sm:$0xff]
      %v1232 = vld [vmem:[%s17 + $0x18] sm:$0xff]
      %v1233 = vld [vmem:[%s19] sm:$0x1]
      %v1235 = vlaneseq
      %v1236 = vshrl.u32 %v1235, 7
      %v1237 = vsub.s32 0, %v1236
      %v1238 = vrot.slane %v1233, %v1237
      %v1241 = vsel %vm1074, %v1060, 0
      %1243 = vmatprep.subr.mxu0 0.0
      %1244 = vmatpush1.msra.mxu0 %v1229
      %1245 = vmatprep.subr.mxu0 0.0
      %1246 = vmatpush1.msra.mxu0 %v1230
      %1247 = vmatprep.subr.mxu0 0.0
      %1248 = vmatpush1.msra.mxu0 %v1231
      %1249 = vmatprep.subr.mxu0 0.0
      %1250 = vmatpush1.msra.mxu0 %v1232
      %1251 = vmatprep.subr.mxu0 0.0
      %1252 = vmatpush1.msra.mxu0 0.0
      %1253 = vmatprep.subr.mxu0 0.0
      %1254 = vmatpush1.msra.mxu0 0.0
      %1255 = vmatprep.subr.mxu0 0.0
      %1256 = vmatpush1.msra.mxu0 0.0
      %1257 = vmatprep.subr.mxu0 0.0
      %1258 = vmatpush1.msra.mxu0 0.0
      %1259 = vmatprep.subr.mxu0 0.0
      %1260 = vmatpush1.msra.mxu0 0.0
      %1261 = vmatprep.subr.mxu0 0.0
      %1262 = vmatpush1.msra.mxu0 0.0
      %1263 = vmatprep.subr.mxu0 0.0
      %1264 = vmatpush1.msra.mxu0 0.0
      %1265 = vmatprep.subr.mxu0 0.0
      %1266 = vmatpush1.msra.mxu0 0.0
      %1267 = vmatprep.subr.mxu0 0.0
      %1268 = vmatpush1.msra.mxu0 0.0
      %1269 = vmatprep.subr.mxu0 0.0
      %1270 = vmatpush1.msra.mxu0 0.0
      %1271 = vmatprep.subr.mxu0 0.0
      %1272 = vmatpush1.msra.mxu0 0.0
      %1273 = vmatprep.subr.mxu0 0.0
      %1274 = vmatpush1.msra.mxu0 0.0
      %1275 = vmatprep.subr.mxu0 0.0
      %1276 = vmatpush1.msra.mxu0 0.0
      %1277 = vmatprep.subr.mxu0 0.0
      %1278 = vmatpush1.msra.mxu0 0.0
      %1279 = vmatprep.subr.mxu0 0.0
      %1280 = vmatpush1.msra.mxu0 0.0
      %1281 = vmatprep.subr.mxu0 0.0
      %1282 = vmatpush1.msra.mxu0 0.0
      %1283 = vmatprep.subr.mxu0 0.0
      %1284 = vmatpush1.msra.mxu0 0.0
      %1285 = vmatprep.subr.mxu0 0.0
      %1286 = vmatpush1.msra.mxu0 0.0
      %1287 = vmatprep.subr.mxu0 0.0
      %1288 = vmatpush1.msra.mxu0 0.0
      %1289 = vmatprep.subr.mxu0 0.0
      %1290 = vmatpush1.msra.mxu0 0.0
      %1291 = vmatprep.subr.mxu0 0.0
      %1292 = vmatpush1.msra.mxu0 0.0
      %1293 = vmatprep.subr.mxu0 0.0
      %1294 = vmatpush1.msra.mxu0 0.0
      %1295 = vmatprep.subr.mxu0 0.0
      %1296 = vmatpush1.msra.mxu0 0.0
      %1297 = vmatprep.subr.mxu0 0.0
      %1298 = vmatpush1.msra.mxu0 0.0
      %1299 = vmatprep.subr.mxu0 0.0
      %1300 = vmatpush1.msra.mxu0 0.0
      %1301 = vmatprep.subr.mxu0 0.0
      %1302 = vmatpush1.msra.mxu0 0.0
      %1303 = vmatprep.subr.mxu0 0.0
      %1304 = vmatpush1.msra.mxu0 0.0
      %1305 = vmatprep.subr.mxu0 0.0
      %1306 = vmatpush1.msra.mxu0 0.0
      %1307 = vmatprep.mubr.f32.mxu0 0.0
      %1308 = vmatmul.mubr.f32.gmra.mrb[0].mxu0 %v1241
      %v1309 = vpop.f32.mrb[0].mxu0
      %v1310 = vadd.f32 %v1238, %v1309
      %v1311 = vpop.f32.mrb[0].mxu0
      %1312 = vdwg.mxu0
      %v1313 = vld [vmem:[%s21] sm:$0xff]
      %v1314 = vld [vmem:[%s21 + $0x8] sm:$0xff]
      %v1315 = vld [vmem:[%s21 + $0x10] sm:$0xff]
      %v1316 = vld [vmem:[%s21 + $0x18] sm:$0xff]
      %v1317 = vld [vmem:[%s23] sm:$0x1]
      %vm1318 = vcmask 130048
      %v1320 = vsel %vm1318, %v1145, 0
      %v1323 = vsel %vm1318, %v1226, 0
      %1325 = vmatprep.subr.mxu0 0.0
      %1326 = vmatpush1.xpose.msra.mxu0 %v1323
      %1327 = vmatprep.subr.mxu0 0.0
      %1328 = vmatpush1.xpose.msra.mxu0 0.0
      %1329 = vmatprep.subr.mxu0 0.0
      %1330 = vmatpush1.xpose.msra.mxu0 0.0
      %1331 = vmatprep.subr.mxu0 0.0
      %1332 = vmatpush1.xpose.msra.mxu0 0.0
      %1333 = vmatprep.subr.mxu0 0.0
      %1334 = vmatpush1.xpose.msra.mxu0 0.0
      %1335 = vmatprep.subr.mxu0 0.0
      %1336 = vmatpush1.xpose.msra.mxu0 0.0
      %1337 = vmatprep.subr.mxu0 0.0
      %1338 = vmatpush1.xpose.msra.mxu0 0.0
      %1339 = vmatprep.subr.mxu0 0.0
      %1340 = vmatpush1.xpose.msra.mxu0 0.0
      %1341 = vmatprep.subr.mxu0 0.0
      %1342 = vmatpush1.xpose.msra.mxu0 0.0
      %1343 = vmatprep.subr.mxu0 0.0
      %1344 = vmatpush1.xpose.msra.mxu0 0.0
      %1345 = vmatprep.subr.mxu0 0.0
      %1346 = vmatpush1.xpose.msra.mxu0 0.0
      %1347 = vmatprep.subr.mxu0 0.0
      %1348 = vmatpush1.xpose.msra.mxu0 0.0
      %1349 = vmatprep.subr.mxu0 0.0
      %1350 = vmatpush1.xpose.msra.mxu0 0.0
      %1351 = vmatprep.subr.mxu0 0.0
      %1352 = vmatpush1.xpose.msra.mxu0 0.0
      %1353 = vmatprep.subr.mxu0 0.0
      %1354 = vmatpush1.xpose.msra.mxu0 0.0
      %1355 = vmatprep.subr.mxu0 0.0
      %1356 = vmatpush1.xpose.msra.mxu0 0.0
      %1357 = vmatprep.subr.mxu0 0.0
      %1358 = vmatpush1.xpose.msra.mxu0 0.0
      %1359 = vmatprep.subr.mxu0 0.0
      %1360 = vmatpush1.xpose.msra.mxu0 0.0
      %1361 = vmatprep.subr.mxu0 0.0
      %1362 = vmatpush1.xpose.msra.mxu0 0.0
      %1363 = vmatprep.subr.mxu0 0.0
      %1364 = vmatpush1.xpose.msra.mxu0 0.0
      %1365 = vmatprep.subr.mxu0 0.0
      %1366 = vmatpush1.xpose.msra.mxu0 0.0
      %1367 = vmatprep.subr.mxu0 0.0
      %1368 = vmatpush1.xpose.msra.mxu0 0.0
      %1369 = vmatprep.subr.mxu0 0.0
      %1370 = vmatpush1.xpose.msra.mxu0 0.0
      %1371 = vmatprep.subr.mxu0 0.0
      %1372 = vmatpush1.xpose.msra.mxu0 0.0
      %1373 = vmatprep.subr.mxu0 0.0
      %1374 = vmatpush1.xpose.msra.mxu0 0.0
      %1375 = vmatprep.subr.mxu0 0.0
      %1376 = vmatpush1.xpose.msra.mxu0 0.0
      %1377 = vmatprep.subr.mxu0 0.0
      %1378 = vmatpush1.xpose.msra.mxu0 0.0
      %1379 = vmatprep.subr.mxu0 0.0
      %1380 = vmatpush1.xpose.msra.mxu0 0.0
      %1381 = vmatprep.subr.mxu0 0.0
      %1382 = vmatpush1.xpose.msra.mxu0 0.0
      %1383 = vmatprep.subr.mxu0 0.0
      %1384 = vmatpush1.xpose.msra.mxu0 0.0
      %1385 = vmatprep.subr.mxu0 0.0
      %1386 = vmatpush1.xpose.msra.mxu0 0.0
      %1387 = vmatprep.subr.mxu0 0.0
      %1388 = vmatpush1.xpose.msra.mxu0 0.0
      %1389 = vmatprep.mubr.f32.mxu0 0.0
      %1390 = vmatmul.mubr.f32.gmra.mrb[0].mxu0 %v1320
      %v1391 = vpop.f32.mrb[0].mxu0
      %v1392 = vadd.f32 0.0, %v1391
      %v1393 = vpop.f32.mrb[0].mxu0
      %1394 = vdwg.mxu0
      %v1395 = vmul.f32 %v1392, 0.25
      %vm1396 = vcmask 64512
      %v1397 = vsel %vm1396, %v1395, -inf
      %1398 = vmax.xlane.f32.xlu0 %v1397
      %v1399 = vpop.xlane.xlu0 %1398
      %v1400 = vsub.f32 %v1395, %v1399
      %v1401 = vmul.f32 %v1400, 1.442695
      %v1402 = vpow.pop %v1401
      %v1403 = vsel %vm1396, %v1402, 0.0
      %1404 = vadd.xlane.f32.xlu0 %v1403
      %v1405 = vpop.xlane.xlu0 %1404
      %v1407 = vsel %vm1396, %v1402, 0
      %1409 = vmatprep.subr.mxu0 0.0
      %1410 = vmatpush1.msra.mxu0 %v1310
      %1411 = vmatprep.subr.mxu0 0.0
      %1412 = vmatpush1.msra.mxu0 0.0
      %1413 = vmatprep.subr.mxu0 0.0
      %1414 = vmatpush1.msra.mxu0 0.0
      %1415 = vmatprep.subr.mxu0 0.0
      %1416 = vmatpush1.msra.mxu0 0.0
      %1417 = vmatprep.subr.mxu0 0.0
      %1418 = vmatpush1.msra.mxu0 0.0
      %1419 = vmatprep.subr.mxu0 0.0
      %1420 = vmatpush1.msra.mxu0 0.0
      %1421 = vmatprep.subr.mxu0 0.0
      %1422 = vmatpush1.msra.mxu0 0.0
      %1423 = vmatprep.subr.mxu0 0.0
      %1424 = vmatpush1.msra.mxu0 0.0
      %1425 = vmatprep.subr.mxu0 0.0
      %1426 = vmatpush1.msra.mxu0 0.0
      %1427 = vmatprep.subr.mxu0 0.0
      %1428 = vmatpush1.msra.mxu0 0.0
      %1429 = vmatprep.subr.mxu0 0.0
      %1430 = vmatpush1.msra.mxu0 0.0
      %1431 = vmatprep.subr.mxu0 0.0
      %1432 = vmatpush1.msra.mxu0 0.0
      %1433 = vmatprep.subr.mxu0 0.0
      %1434 = vmatpush1.msra.mxu0 0.0
      %1435 = vmatprep.subr.mxu0 0.0
      %1436 = vmatpush1.msra.mxu0 0.0
      %1437 = vmatprep.subr.mxu0 0.0
      %1438 = vmatpush1.msra.mxu0 0.0
      %1439 = vmatprep.subr.mxu0 0.0
      %1440 = vmatpush1.msra.mxu0 0.0
      %1441 = vmatprep.subr.mxu0 0.0
      %1442 = vmatpush1.msra.mxu0 0.0
      %1443 = vmatprep.subr.mxu0 0.0
      %1444 = vmatpush1.msra.mxu0 0.0
      %1445 = vmatprep.subr.mxu0 0.0
      %1446 = vmatpush1.msra.mxu0 0.0
      %1447 = vmatprep.subr.mxu0 0.0
      %1448 = vmatpush1.msra.mxu0 0.0
      %1449 = vmatprep.subr.mxu0 0.0
      %1450 = vmatpush1.msra.mxu0 0.0
      %1451 = vmatprep.subr.mxu0 0.0
      %1452 = vmatpush1.msra.mxu0 0.0
      %1453 = vmatprep.subr.mxu0 0.0
      %1454 = vmatpush1.msra.mxu0 0.0
      %1455 = vmatprep.subr.mxu0 0.0
      %1456 = vmatpush1.msra.mxu0 0.0
      %1457 = vmatprep.subr.mxu0 0.0
      %1458 = vmatpush1.msra.mxu0 0.0
      %1459 = vmatprep.subr.mxu0 0.0
      %1460 = vmatpush1.msra.mxu0 0.0
      %1461 = vmatprep.subr.mxu0 0.0
      %1462 = vmatpush1.msra.mxu0 0.0
      %1463 = vmatprep.subr.mxu0 0.0
      %1464 = vmatpush1.msra.mxu0 0.0
      %1465 = vmatprep.subr.mxu0 0.0
      %1466 = vmatpush1.msra.mxu0 0.0
      %1467 = vmatprep.subr.mxu0 0.0
      %1468 = vmatpush1.msra.mxu0 0.0
      %1469 = vmatprep.subr.mxu0 0.0
      %1470 = vmatpush1.msra.mxu0 0.0
      %1471 = vmatprep.subr.mxu0 0.0
      %1472 = vmatpush1.msra.mxu0 0.0
      %1473 = vmatprep.mubr.f32.mxu0 0.0
      %1474 = vmatmul.mubr.f32.gmra.mrb[0].mxu0 %v1407
      %v1475 = vpop.f32.mrb[0].mxu0
      %v1476 = vadd.f32 0.0, %v1475
      %v1477 = vpop.f32.mrb[0].mxu0
      %1478 = vdwg.mxu0
      %v1479 = vrcp.pop %v1405
      %v1480 = vmul.f32 %v1476, %v1479
      %1481 = vrot.lane.b32.xlu0 %v1145, 112
      %v1482 = vpop.permute.xlu0 %1481
      %1483 = vrot.lane.b32.xlu0 %v1226, 112
      %v1484 = vpop.permute.xlu0 %1483
      %v1485 = vsel %vm1318, %v1482, 0
      %v1487 = vsel %vm1318, %v1484, 0
      %1489 = vmatprep.subr.mxu0 0.0
      %1490 = vmatpush1.xpose.msra.mxu0 %v1487
      %1491 = vmatprep.subr.mxu0 0.0
      %1492 = vmatpush1.xpose.msra.mxu0 0.0
      %1493 = vmatprep.subr.mxu0 0.0
      %1494 = vmatpush1.xpose.msra.mxu0 0.0
      %1495 = vmatprep.subr.mxu0 0.0
      %1496 = vmatpush1.xpose.msra.mxu0 0.0
      %1497 = vmatprep.subr.mxu0 0.0
      %1498 = vmatpush1.xpose.msra.mxu0 0.0
      %1499 = vmatprep.subr.mxu0 0.0
      %1500 = vmatpush1.xpose.msra.mxu0 0.0
      %1501 = vmatprep.subr.mxu0 0.0
      %1502 = vmatpush1.xpose.msra.mxu0 0.0
      %1503 = vmatprep.subr.mxu0 0.0
      %1504 = vmatpush1.xpose.msra.mxu0 0.0
      %1505 = vmatprep.subr.mxu0 0.0
      %1506 = vmatpush1.xpose.msra.mxu0 0.0
      %1507 = vmatprep.subr.mxu0 0.0
      %1508 = vmatpush1.xpose.msra.mxu0 0.0
      %1509 = vmatprep.subr.mxu0 0.0
      %1510 = vmatpush1.xpose.msra.mxu0 0.0
      %1511 = vmatprep.subr.mxu0 0.0
      %1512 = vmatpush1.xpose.msra.mxu0 0.0
      %1513 = vmatprep.subr.mxu0 0.0
      %1514 = vmatpush1.xpose.msra.mxu0 0.0
      %1515 = vmatprep.subr.mxu0 0.0
      %1516 = vmatpush1.xpose.msra.mxu0 0.0
      %1517 = vmatprep.subr.mxu0 0.0
      %1518 = vmatpush1.xpose.msra.mxu0 0.0
      %1519 = vmatprep.subr.mxu0 0.0
      %1520 = vmatpush1.xpose.msra.mxu0 0.0
      %1521 = vmatprep.subr.mxu0 0.0
      %1522 = vmatpush1.xpose.msra.mxu0 0.0
      %1523 = vmatprep.subr.mxu0 0.0
      %1524 = vmatpush1.xpose.msra.mxu0 0.0
      %1525 = vmatprep.subr.mxu0 0.0
      %1526 = vmatpush1.xpose.msra.mxu0 0.0
      %1527 = vmatprep.subr.mxu0 0.0
      %1528 = vmatpush1.xpose.msra.mxu0 0.0
      %1529 = vmatprep.subr.mxu0 0.0
      %1530 = vmatpush1.xpose.msra.mxu0 0.0
      %1531 = vmatprep.subr.mxu0 0.0
      %1532 = vmatpush1.xpose.msra.mxu0 0.0
      %1533 = vmatprep.subr.mxu0 0.0
      %1534 = vmatpush1.xpose.msra.mxu0 0.0
      %1535 = vmatprep.subr.mxu0 0.0
      %1536 = vmatpush1.xpose.msra.mxu0 0.0
      %1537 = vmatprep.subr.mxu0 0.0
      %1538 = vmatpush1.xpose.msra.mxu0 0.0
      %1539 = vmatprep.subr.mxu0 0.0
      %1540 = vmatpush1.xpose.msra.mxu0 0.0
      %1541 = vmatprep.subr.mxu0 0.0
      %1542 = vmatpush1.xpose.msra.mxu0 0.0
      %1543 = vmatprep.subr.mxu0 0.0
      %1544 = vmatpush1.xpose.msra.mxu0 0.0
      %1545 = vmatprep.subr.mxu0 0.0
      %1546 = vmatpush1.xpose.msra.mxu0 0.0
      %1547 = vmatprep.subr.mxu0 0.0
      %1548 = vmatpush1.xpose.msra.mxu0 0.0
      %1549 = vmatprep.subr.mxu0 0.0
      %1550 = vmatpush1.xpose.msra.mxu0 0.0
      %1551 = vmatprep.subr.mxu0 0.0
      %1552 = vmatpush1.xpose.msra.mxu0 0.0
      %1553 = vmatprep.mubr.f32.mxu0 0.0
      %1554 = vmatmul.mubr.f32.gmra.mrb[0].mxu0 %v1485
      %v1555 = vpop.f32.mrb[0].mxu0
      %v1556 = vadd.f32 0.0, %v1555
      %v1557 = vpop.f32.mrb[0].mxu0
      %1558 = vdwg.mxu0
      %v1559 = vmul.f32 %v1556, 0.25
      %v1560 = vsel %vm1396, %v1559, -inf
      %1561 = vmax.xlane.f32.xlu0 %v1560
      %v1562 = vpop.xlane.xlu0 %1561
      %v1563 = vsub.f32 %v1559, %v1562
      %v1564 = vmul.f32 %v1563, 1.442695
      %v1565 = vpow.pop %v1564
      %v1566 = vsel %vm1396, %v1565, 0.0
      %1567 = vadd.xlane.f32.xlu0 %v1566
      %v1568 = vpop.xlane.xlu0 %1567
      %1570 = vrot.lane.b32.xlu0 %v1310, 112
      %v1571 = vpop.permute.xlu0 %1570
      %v1574 = vsel %vm1396, %v1565, 0
      %1576 = vmatprep.subr.mxu0 0.0
      %1577 = vmatpush1.msra.mxu0 %v1571
      %1578 = vmatprep.subr.mxu0 0.0
      %1579 = vmatpush1.msra.mxu0 0.0
      %1580 = vmatprep.subr.mxu0 0.0
      %1581 = vmatpush1.msra.mxu0 0.0
      %1582 = vmatprep.subr.mxu0 0.0
      %1583 = vmatpush1.msra.mxu0 0.0
      %1584 = vmatprep.subr.mxu0 0.0
      %1585 = vmatpush1.msra.mxu0 0.0
      %1586 = vmatprep.subr.mxu0 0.0
      %1587 = vmatpush1.msra.mxu0 0.0
      %1588 = vmatprep.subr.mxu0 0.0
      %1589 = vmatpush1.msra.mxu0 0.0
      %1590 = vmatprep.subr.mxu0 0.0
      %1591 = vmatpush1.msra.mxu0 0.0
      %1592 = vmatprep.subr.mxu0 0.0
      %1593 = vmatpush1.msra.mxu0 0.0
      %1594 = vmatprep.subr.mxu0 0.0
      %1595 = vmatpush1.msra.mxu0 0.0
      %1596 = vmatprep.subr.mxu0 0.0
      %1597 = vmatpush1.msra.mxu0 0.0
      %1598 = vmatprep.subr.mxu0 0.0
      %1599 = vmatpush1.msra.mxu0 0.0
      %1600 = vmatprep.subr.mxu0 0.0
      %1601 = vmatpush1.msra.mxu0 0.0
      %1602 = vmatprep.subr.mxu0 0.0
      %1603 = vmatpush1.msra.mxu0 0.0
      %1604 = vmatprep.subr.mxu0 0.0
      %1605 = vmatpush1.msra.mxu0 0.0
      %1606 = vmatprep.subr.mxu0 0.0
      %1607 = vmatpush1.msra.mxu0 0.0
      %1608 = vmatprep.subr.mxu0 0.0
      %1609 = vmatpush1.msra.mxu0 0.0
      %1610 = vmatprep.subr.mxu0 0.0
      %1611 = vmatpush1.msra.mxu0 0.0
      %1612 = vmatprep.subr.mxu0 0.0
      %1613 = vmatpush1.msra.mxu0 0.0
      %1614 = vmatprep.subr.mxu0 0.0
      %1615 = vmatpush1.msra.mxu0 0.0
      %1616 = vmatprep.subr.mxu0 0.0
      %1617 = vmatpush1.msra.mxu0 0.0
      %1618 = vmatprep.subr.mxu0 0.0
      %1619 = vmatpush1.msra.mxu0 0.0
      %1620 = vmatprep.subr.mxu0 0.0
      %1621 = vmatpush1.msra.mxu0 0.0
      %1622 = vmatprep.subr.mxu0 0.0
      %1623 = vmatpush1.msra.mxu0 0.0
      %1624 = vmatprep.subr.mxu0 0.0
      %1625 = vmatpush1.msra.mxu0 0.0
      %1626 = vmatprep.subr.mxu0 0.0
      %1627 = vmatpush1.msra.mxu0 0.0
      %1628 = vmatprep.subr.mxu0 0.0
      %1629 = vmatpush1.msra.mxu0 0.0
      %1630 = vmatprep.subr.mxu0 0.0
      %1631 = vmatpush1.msra.mxu0 0.0
      %1632 = vmatprep.subr.mxu0 0.0
      %1633 = vmatpush1.msra.mxu0 0.0
      %1634 = vmatprep.subr.mxu0 0.0
      %1635 = vmatpush1.msra.mxu0 0.0
      %1636 = vmatprep.subr.mxu0 0.0
      %1637 = vmatpush1.msra.mxu0 0.0
      %1638 = vmatprep.subr.mxu0 0.0
      %1639 = vmatpush1.msra.mxu0 0.0
      %1640 = vmatprep.mubr.f32.mxu0 0.0
      %1641 = vmatmul.mubr.f32.gmra.mrb[0].mxu0 %v1574
      %v1642 = vpop.f32.mrb[0].mxu0
      %v1643 = vadd.f32 0.0, %v1642
      %v1644 = vpop.f32.mrb[0].mxu0
      %1645 = vdwg.mxu0
      %v1646 = vrcp.pop %v1568
      %v1647 = vmul.f32 %v1643, %v1646
      %v1649 = vsel %vm1318, %v1647, 0
      %1651 = vmatprep.subr.mxu0 0.0
      %1652 = vmatpush1.msra.mxu0 %v1315
      %1653 = vmatprep.subr.mxu0 0.0
      %1654 = vmatpush1.msra.mxu0 %v1316
      %1655 = vmatprep.subr.mxu0 0.0
      %1656 = vmatpush1.msra.mxu0 0.0
      %1657 = vmatprep.subr.mxu0 0.0
      %1658 = vmatpush1.msra.mxu0 0.0
      %1659 = vmatprep.subr.mxu0 0.0
      %1660 = vmatpush1.msra.mxu0 0.0
      %1661 = vmatprep.subr.mxu0 0.0
      %1662 = vmatpush1.msra.mxu0 0.0
      %1663 = vmatprep.subr.mxu0 0.0
      %1664 = vmatpush1.msra.mxu0 0.0
      %1665 = vmatprep.subr.mxu0 0.0
      %1666 = vmatpush1.msra.mxu0 0.0
      %1667 = vmatprep.subr.mxu0 0.0
      %1668 = vmatpush1.msra.mxu0 0.0
      %1669 = vmatprep.subr.mxu0 0.0
      %1670 = vmatpush1.msra.mxu0 0.0
      %1671 = vmatprep.subr.mxu0 0.0
      %1672 = vmatpush1.msra.mxu0 0.0
      %1673 = vmatprep.subr.mxu0 0.0
      %1674 = vmatpush1.msra.mxu0 0.0
      %1675 = vmatprep.subr.mxu0 0.0
      %1676 = vmatpush1.msra.mxu0 0.0
      %1677 = vmatprep.subr.mxu0 0.0
      %1678 = vmatpush1.msra.mxu0 0.0
      %1679 = vmatprep.subr.mxu0 0.0
      %1680 = vmatpush1.msra.mxu0 0.0
      %1681 = vmatprep.subr.mxu0 0.0
      %1682 = vmatpush1.msra.mxu0 0.0
      %1683 = vmatprep.subr.mxu0 0.0
      %1684 = vmatpush1.msra.mxu0 0.0
      %1685 = vmatprep.subr.mxu0 0.0
      %1686 = vmatpush1.msra.mxu0 0.0
      %1687 = vmatprep.subr.mxu0 0.0
      %1688 = vmatpush1.msra.mxu0 0.0
      %1689 = vmatprep.subr.mxu0 0.0
      %1690 = vmatpush1.msra.mxu0 0.0
      %1691 = vmatprep.subr.mxu0 0.0
      %1692 = vmatpush1.msra.mxu0 0.0
      %1693 = vmatprep.subr.mxu0 0.0
      %1694 = vmatpush1.msra.mxu0 0.0
      %1695 = vmatprep.subr.mxu0 0.0
      %1696 = vmatpush1.msra.mxu0 0.0
      %1697 = vmatprep.subr.mxu0 0.0
      %1698 = vmatpush1.msra.mxu0 0.0
      %1699 = vmatprep.subr.mxu0 0.0
      %1700 = vmatpush1.msra.mxu0 0.0
      %1701 = vmatprep.subr.mxu0 0.0
      %1702 = vmatpush1.msra.mxu0 0.0
      %1703 = vmatprep.subr.mxu0 0.0
      %1704 = vmatpush1.msra.mxu0 0.0
      %1705 = vmatprep.subr.mxu0 0.0
      %1706 = vmatpush1.msra.mxu0 0.0
      %1707 = vmatprep.subr.mxu0 0.0
      %1708 = vmatpush1.msra.mxu0 0.0
      %1709 = vmatprep.subr.mxu0 0.0
      %1710 = vmatpush1.msra.mxu0 0.0
      %1711 = vmatprep.subr.mxu0 0.0
      %1712 = vmatpush1.msra.mxu0 0.0
      %1713 = vmatprep.subr.mxu0 0.0
      %1714 = vmatpush1.msra.mxu0 0.0
      %1715 = vmatprep.mubr.f32.mxu0 0.0
      %1716 = vmatmul.mubr.f32.gmra.mrb[0].mxu0 %v1649
      %v1717 = vpop.f32.mrb[0].mxu0
      %v1718 = vadd.f32 0.0, %v1717
      %v1719 = vpop.f32.mrb[0].mxu0
      %1720 = vdwg.mxu0
      %v1722 = vsel %vm1318, %v1480, 0
      %1724 = vmatprep.subr.mxu0 0.0
      %1725 = vmatpush1.msra.mxu0 %v1313
      %1726 = vmatprep.subr.mxu0 0.0
      %1727 = vmatpush1.msra.mxu0 %v1314
      %1728 = vmatprep.subr.mxu0 0.0
      %1729 = vmatpush1.msra.mxu0 0.0
      %1730 = vmatprep.subr.mxu0 0.0
      %1731 = vmatpush1.msra.mxu0 0.0
      %1732 = vmatprep.subr.mxu0 0.0
      %1733 = vmatpush1.msra.mxu0 0.0
      %1734 = vmatprep.subr.mxu0 0.0
      %1735 = vmatpush1.msra.mxu0 0.0
      %1736 = vmatprep.subr.mxu0 0.0
      %1737 = vmatpush1.msra.mxu0 0.0
      %1738 = vmatprep.subr.mxu0 0.0
      %1739 = vmatpush1.msra.mxu0 0.0
      %1740 = vmatprep.subr.mxu0 0.0
      %1741 = vmatpush1.msra.mxu0 0.0
      %1742 = vmatprep.subr.mxu0 0.0
      %1743 = vmatpush1.msra.mxu0 0.0
      %1744 = vmatprep.subr.mxu0 0.0
      %1745 = vmatpush1.msra.mxu0 0.0
      %1746 = vmatprep.subr.mxu0 0.0
      %1747 = vmatpush1.msra.mxu0 0.0
      %1748 = vmatprep.subr.mxu0 0.0
      %1749 = vmatpush1.msra.mxu0 0.0
      %1750 = vmatprep.subr.mxu0 0.0
      %1751 = vmatpush1.msra.mxu0 0.0
      %1752 = vmatprep.subr.mxu0 0.0
      %1753 = vmatpush1.msra.mxu0 0.0
      %1754 = vmatprep.subr.mxu0 0.0
      %1755 = vmatpush1.msra.mxu0 0.0
      %1756 = vmatprep.subr.mxu0 0.0
      %1757 = vmatpush1.msra.mxu0 0.0
      %1758 = vmatprep.subr.mxu0 0.0
      %1759 = vmatpush1.msra.mxu0 0.0
      %1760 = vmatprep.subr.mxu0 0.0
      %1761 = vmatpush1.msra.mxu0 0.0
      %1762 = vmatprep.subr.mxu0 0.0
      %1763 = vmatpush1.msra.mxu0 0.0
      %1764 = vmatprep.subr.mxu0 0.0
      %1765 = vmatpush1.msra.mxu0 0.0
      %1766 = vmatprep.subr.mxu0 0.0
      %1767 = vmatpush1.msra.mxu0 0.0
      %1768 = vmatprep.subr.mxu0 0.0
      %1769 = vmatpush1.msra.mxu0 0.0
      %1770 = vmatprep.subr.mxu0 0.0
      %1771 = vmatpush1.msra.mxu0 0.0
      %1772 = vmatprep.subr.mxu0 0.0
      %1773 = vmatpush1.msra.mxu0 0.0
      %1774 = vmatprep.subr.mxu0 0.0
      %1775 = vmatpush1.msra.mxu0 0.0
      %1776 = vmatprep.subr.mxu0 0.0
      %1777 = vmatpush1.msra.mxu0 0.0
      %1778 = vmatprep.subr.mxu0 0.0
      %1779 = vmatpush1.msra.mxu0 0.0
      %1780 = vmatprep.subr.mxu0 0.0
      %1781 = vmatpush1.msra.mxu0 0.0
      %1782 = vmatprep.subr.mxu0 0.0
      %1783 = vmatpush1.msra.mxu0 0.0
      %1784 = vmatprep.subr.mxu0 0.0
      %1785 = vmatpush1.msra.mxu0 0.0
      %1786 = vmatprep.subr.mxu0 0.0
      %1787 = vmatpush1.msra.mxu0 0.0
      %1788 = vmatprep.mubr.f32.mxu0 0.0
      %1789 = vmatmul.mubr.f32.gmra.mrb[0].mxu0 %v1722
      %v1790 = vpop.f32.mrb[0].mxu0
      %v1791 = vadd.f32 %v1718, %v1790
      %v1792 = vpop.f32.mrb[0].mxu0
      %1793 = vdwg.mxu0
      %v1795 = vlaneseq
      %v1796 = vshrl.u32 %v1795, 7
      %v1797 = vsub.s32 0, %v1796
      %v1798 = vrot.slane %v1317, %v1797
      %v1800 = vadd.f32 %v1791, %v1798
      %v1801 = vadd.f32 %v1060, %v1800
      %v1802 = vld [vmem:[%s25] sm:$0x1]
      %v1803 = vld [vmem:[%s27] sm:$0x1]
      %v1804 = vsel %vm1074, %v1801, 0.0
      %1805 = vadd.xlane.f32.xlu0 %v1804
      %v1806 = vpop.xlane.xlu0 %1805
      %v1807 = vrcp.pop 32.0
      %v1808 = vmul.f32 %v1806, %v1807
      %v1809 = vsub.f32 %v1801, %v1808
      %v1810 = vmul.f32 %v1809, %v1809
      %v1811 = vsel %vm1074, %v1810, 0.0
      %1812 = vadd.xlane.f32.xlu0 %v1811
      %v1813 = vpop.xlane.xlu0 %1812
      %v1814 = vmul.f32 %v1813, %v1807
      %v1815 = vadd.f32 %v1814, 1e-05
      %v1816 = vrsqrt.pop %v1815
      %v1817 = vmul.f32 %v1809, %v1816
      %v1819 = vlaneseq
      %v1820 = vshrl.u32 %v1819, 7
      %v1821 = vsub.s32 0, %v1820
      %v1822 = vrot.slane %v1802, %v1821
      %v1824 = vmul.f32 %v1817, %v1822
      %v1826 = vlaneseq
      %v1827 = vshrl.u32 %v1826, 7
      %v1828 = vsub.s32 0, %v1827
      %v1829 = vrot.slane %v1803, %v1828
      %v1831 = vadd.f32 %v1824, %v1829
      %v1832 = vadd.f32 %v1831, %v1061
      %v1833 = vld [vmem:[%s29] sm:$0xff]
      %v1834 = vld [vmem:[%s29 + $0x8] sm:$0xff]
      %v1835 = vld [vmem:[%s29 + $0x10] sm:$0xff]
      %v1836 = vld [vmem:[%s29 + $0x18] sm:$0xff]
      %v1837 = vld [vmem:[%s31] sm:$0x1]
      %v1839 = vlaneseq
      %v1840 = vshrl.u32 %v1839, 7
      %v1841 = vsub.s32 0, %v1840
      %v1842 = vrot.slane %v1837, %v1841
      %v1845 = vsel %vm1074, %v1832, 0
      %1847 = vmatprep.subr.mxu0 0.0
      %1848 = vmatpush1.msra.mxu0 %v1833
      %1849 = vmatprep.subr.mxu0 0.0
      %1850 = vmatpush1.msra.mxu0 %v1834
      %1851 = vmatprep.subr.mxu0 0.0
      %1852 = vmatpush1.msra.mxu0 %v1835
      %1853 = vmatprep.subr.mxu0 0.0
      %1854 = vmatpush1.msra.mxu0 %v1836
      %1855 = vmatprep.subr.mxu0 0.0
      %1856 = vmatpush1.msra.mxu0 0.0
      %1857 = vmatprep.subr.mxu0 0.0
      %1858 = vmatpush1.msra.mxu0 0.0
      %1859 = vmatprep.subr.mxu0 0.0
      %1860 = vmatpush1.msra.mxu0 0.0
      %1861 = vmatprep.subr.mxu0 0.0
      %1862 = vmatpush1.msra.mxu0 0.0
      %1863 = vmatprep.subr.mxu0 0.0
      %1864 = vmatpush1.msra.mxu0 0.0
      %1865 = vmatprep.subr.mxu0 0.0
      %1866 = vmatpush1.msra.mxu0 0.0
      %1867 = vmatprep.subr.mxu0 0.0
      %1868 = vmatpush1.msra.mxu0 0.0
      %1869 = vmatprep.subr.mxu0 0.0
      %1870 = vmatpush1.msra.mxu0 0.0
      %1871 = vmatprep.subr.mxu0 0.0
      %1872 = vmatpush1.msra.mxu0 0.0
      %1873 = vmatprep.subr.mxu0 0.0
      %1874 = vmatpush1.msra.mxu0 0.0
      %1875 = vmatprep.subr.mxu0 0.0
      %1876 = vmatpush1.msra.mxu0 0.0
      %1877 = vmatprep.subr.mxu0 0.0
      %1878 = vmatpush1.msra.mxu0 0.0
      %1879 = vmatprep.subr.mxu0 0.0
      %1880 = vmatpush1.msra.mxu0 0.0
      %1881 = vmatprep.subr.mxu0 0.0
      %1882 = vmatpush1.msra.mxu0 0.0
      %1883 = vmatprep.subr.mxu0 0.0
      %1884 = vmatpush1.msra.mxu0 0.0
      %1885 = vmatprep.subr.mxu0 0.0
      %1886 = vmatpush1.msra.mxu0 0.0
      %1887 = vmatprep.subr.mxu0 0.0
      %1888 = vmatpush1.msra.mxu0 0.0
      %1889 = vmatprep.subr.mxu0 0.0
      %1890 = vmatpush1.msra.mxu0 0.0
      %1891 = vmatprep.subr.mxu0 0.0
      %1892 = vmatpush1.msra.mxu0 0.0
      %1893 = vmatprep.subr.mxu0 0.0
      %1894 = vmatpush1.msra.mxu0 0.0
      %1895 = vmatprep.subr.mxu0 0.0
      %1896 = vmatpush1.msra.mxu0 0.0
      %1897 = vmatprep.subr.mxu0 0.0
      %1898 = vmatpush1.msra.mxu0 0.0
      %1899 = vmatprep.subr.mxu0 0.0
      %1900 = vmatpush1.msra.mxu0 0.0
      %1901 = vmatprep.subr.mxu0 0.0
      %1902 = vmatpush1.msra.mxu0 0.0
      %1903 = vmatprep.subr.mxu0 0.0
      %1904 = vmatpush1.msra.mxu0 0.0
      %1905 = vmatprep.subr.mxu0 0.0
      %1906 = vmatpush1.msra.mxu0 0.0
      %1907 = vmatprep.subr.mxu0 0.0
      %1908 = vmatpush1.msra.mxu0 0.0
      %1909 = vmatprep.subr.mxu0 0.0
      %1910 = vmatpush1.msra.mxu0 0.0
      %1911 = vmatprep.mubr.f32.mxu0 0.0
      %1912 = vmatmul.mubr.f32.gmra.mrb[0].mxu0 %v1845
      %v1913 = vpop.f32.mrb[0].mxu0
      %v1914 = vadd.f32 %v1842, %v1913
      %v1915 = vpop.f32.mrb[0].mxu0
      %1916 = vdwg.mxu0
      %v1917 = vld [vmem:[%s1042] sm:$0xff]
      %v1918 = vld [vmem:[%s1042 + $0x8] sm:$0xff]
      %v1919 = vld [vmem:[%s1047] sm:$0xff]
      %v1920 = vld [vmem:[%s1047 + $0x8] sm:$0xff]
      %v1921 = vld [vmem:[%s33] sm:$0xff]
      %v1922 = vld [vmem:[%s33 + $0x8] sm:$0xff]
      %v1923 = vld [vmem:[%s35] sm:$0x1]
      %v1925 = vsel %vm1396, %v1914, 0
      %v1928 = vsel %vm1396, %v1917, 0
      %v1931 = vsel %vm1396, %v1918, 0
      %1933 = vmatprep.subr.mxu0 0.0
      %1934 = vmatpush1.xpose.msra.mxu0 %v1928
      %1935 = vmatprep.subr.mxu0 0.0
      %1936 = vmatpush1.xpose.msra.mxu0 %v1931
      %1937 = vmatprep.subr.mxu0 0.0
      %1938 = vmatpush1.xpose.msra.mxu0 0.0
      %1939 = vmatprep.subr.mxu0 0.0
      %1940 = vmatpush1.xpose.msra.mxu0 0.0
      %1941 = vmatprep.subr.mxu0 0.0
      %1942 = vmatpush1.xpose.msra.mxu0 0.0
      %1943 = vmatprep.subr.mxu0 0.0
      %1944 = vmatpush1.xpose.msra.mxu0 0.0
      %1945 = vmatprep.subr.mxu0 0.0
      %1946 = vmatpush1.xpose.msra.mxu0 0.0
      %1947 = vmatprep.subr.mxu0 0.0
      %1948 = vmatpush1.xpose.msra.mxu0 0.0
      %1949 = vmatprep.subr.mxu0 0.0
      %1950 = vmatpush1.xpose.msra.mxu0 0.0
      %1951 = vmatprep.subr.mxu0 0.0
      %1952 = vmatpush1.xpose.msra.mxu0 0.0
      %1953 = vmatprep.subr.mxu0 0.0
      %1954 = vmatpush1.xpose.msra.mxu0 0.0
      %1955 = vmatprep.subr.mxu0 0.0
      %1956 = vmatpush1.xpose.msra.mxu0 0.0
      %1957 = vmatprep.subr.mxu0 0.0
      %1958 = vmatpush1.xpose.msra.mxu0 0.0
      %1959 = vmatprep.subr.mxu0 0.0
      %1960 = vmatpush1.xpose.msra.mxu0 0.0
      %1961 = vmatprep.subr.mxu0 0.0
      %1962 = vmatpush1.xpose.msra.mxu0 0.0
      %1963 = vmatprep.subr.mxu0 0.0
      %1964 = vmatpush1.xpose.msra.mxu0 0.0
      %1965 = vmatprep.subr.mxu0 0.0
      %1966 = vmatpush1.xpose.msra.mxu0 0.0
      %1967 = vmatprep.subr.mxu0 0.0
      %1968 = vmatpush1.xpose.msra.mxu0 0.0
      %1969 = vmatprep.subr.mxu0 0.0
      %1970 = vmatpush1.xpose.msra.mxu0 0.0
      %1971 = vmatprep.subr.mxu0 0.0
      %1972 = vmatpush1.xpose.msra.mxu0 0.0
      %1973 = vmatprep.subr.mxu0 0.0
      %1974 = vmatpush1.xpose.msra.mxu0 0.0
      %1975 = vmatprep.subr.mxu0 0.0
      %1976 = vmatpush1.xpose.msra.mxu0 0.0
      %1977 = vmatprep.subr.mxu0 0.0
      %1978 = vmatpush1.xpose.msra.mxu0 0.0
      %1979 = vmatprep.subr.mxu0 0.0
      %1980 = vmatpush1.xpose.msra.mxu0 0.0
      %1981 = vmatprep.subr.mxu0 0.0
      %1982 = vmatpush1.xpose.msra.mxu0 0.0
      %1983 = vmatprep.subr.mxu0 0.0
      %1984 = vmatpush1.xpose.msra.mxu0 0.0
      %1985 = vmatprep.subr.mxu0 0.0
      %1986 = vmatpush1.xpose.msra.mxu0 0.0
      %1987 = vmatprep.subr.mxu0 0.0
      %1988 = vmatpush1.xpose.msra.mxu0 0.0
      %1989 = vmatprep.subr.mxu0 0.0
      %1990 = vmatpush1.xpose.msra.mxu0 0.0
      %1991 = vmatprep.subr.mxu0 0.0
      %1992 = vmatpush1.xpose.msra.mxu0 0.0
      %1993 = vmatprep.subr.mxu0 0.0
      %1994 = vmatpush1.xpose.msra.mxu0 0.0
      %1995 = vmatprep.subr.mxu0 0.0
      %1996 = vmatpush1.xpose.msra.mxu0 0.0
      %1997 = vmatprep.mubr.f32.mxu0 0.0
      %1998 = vmatmul.mubr.f32.gmra.mrb[0].mxu0 %v1925
      %v1999 = vpop.f32.mrb[0].mxu0
      %v2000 = vadd.f32 0.0, %v1999
      %v2001 = vpop.f32.mrb[0].mxu0
      %2002 = vdwg.mxu0
      %v2003 = vmul.f32 %v2000, 0.35355338
      %v2004 = vsel %vm1318, %v2003, -inf
      %2005 = vmax.xlane.f32.xlu0 %v2004
      %v2006 = vpop.xlane.xlu0 %2005
      %v2007 = vsub.f32 %v2003, %v2006
      %v2008 = vmul.f32 %v2007, 1.442695
      %v2009 = vpow.pop %v2008
      %v2010 = vsel %vm1318, %v2009, 0.0
      %2011 = vadd.xlane.f32.xlu0 %v2010
      %v2012 = vpop.xlane.xlu0 %2011
      %v2014 = vsel %vm1318, %v2009, 0
      %2016 = vmatprep.subr.mxu0 0.0
      %2017 = vmatpush1.msra.mxu0 %v1919
      %2018 = vmatprep.subr.mxu0 0.0
      %2019 = vmatpush1.msra.mxu0 %v1920
      %2020 = vmatprep.subr.mxu0 0.0
      %2021 = vmatpush1.msra.mxu0 0.0
      %2022 = vmatprep.subr.mxu0 0.0
      %2023 = vmatpush1.msra.mxu0 0.0
      %2024 = vmatprep.subr.mxu0 0.0
      %2025 = vmatpush1.msra.mxu0 0.0
      %2026 = vmatprep.subr.mxu0 0.0
      %2027 = vmatpush1.msra.mxu0 0.0
      %2028 = vmatprep.subr.mxu0 0.0
      %2029 = vmatpush1.msra.mxu0 0.0
      %2030 = vmatprep.subr.mxu0 0.0
      %2031 = vmatpush1.msra.mxu0 0.0
      %2032 = vmatprep.subr.mxu0 0.0
      %2033 = vmatpush1.msra.mxu0 0.0
      %2034 = vmatprep.subr.mxu0 0.0
      %2035 = vmatpush1.msra.mxu0 0.0
      %2036 = vmatprep.subr.mxu0 0.0
      %2037 = vmatpush1.msra.mxu0 0.0
      %2038 = vmatprep.subr.mxu0 0.0
      %2039 = vmatpush1.msra.mxu0 0.0
      %2040 = vmatprep.subr.mxu0 0.0
      %2041 = vmatpush1.msra.mxu0 0.0
      %2042 = vmatprep.subr.mxu0 0.0
      %2043 = vmatpush1.msra.mxu0 0.0
      %2044 = vmatprep.subr.mxu0 0.0
      %2045 = vmatpush1.msra.mxu0 0.0
      %2046 = vmatprep.subr.mxu0 0.0
      %2047 = vmatpush1.msra.mxu0 0.0
      %2048 = vmatprep.subr.mxu0 0.0
      %2049 = vmatpush1.msra.mxu0 0.0
      %2050 = vmatprep.subr.mxu0 0.0
      %2051 = vmatpush1.msra.mxu0 0.0
      %2052 = vmatprep.subr.mxu0 0.0
      %2053 = vmatpush1.msra.mxu0 0.0
      %2054 = vmatprep.subr.mxu0 0.0
      %2055 = vmatpush1.msra.mxu0 0.0
      %2056 = vmatprep.subr.mxu0 0.0
      %2057 = vmatpush1.msra.mxu0 0.0
      %2058 = vmatprep.subr.mxu0 0.0
      %2059 = vmatpush1.msra.mxu0 0.0
      %2060 = vmatprep.subr.mxu0 0.0
      %2061 = vmatpush1.msra.mxu0 0.0
      %2062 = vmatprep.subr.mxu0 0.0
      %2063 = vmatpush1.msra.mxu0 0.0
      %2064 = vmatprep.subr.mxu0 0.0
      %2065 = vmatpush1.msra.mxu0 0.0
      %2066 = vmatprep.subr.mxu0 0.0
      %2067 = vmatpush1.msra.mxu0 0.0
      %2068 = vmatprep.subr.mxu0 0.0
      %2069 = vmatpush1.msra.mxu0 0.0
      %2070 = vmatprep.subr.mxu0 0.0
      %2071 = vmatpush1.msra.mxu0 0.0
      %2072 = vmatprep.subr.mxu0 0.0
      %2073 = vmatpush1.msra.mxu0 0.0
      %2074 = vmatprep.subr.mxu0 0.0
      %2075 = vmatpush1.msra.mxu0 0.0
      %2076 = vmatprep.subr.mxu0 0.0
      %2077 = vmatpush1.msra.mxu0 0.0
      %2078 = vmatprep.subr.mxu0 0.0
      %2079 = vmatpush1.msra.mxu0 0.0
      %2080 = vmatprep.mubr.f32.mxu0 0.0
      %2081 = vmatmul.mubr.f32.gmra.mrb[0].mxu0 %v2014
      %v2082 = vpop.f32.mrb[0].mxu0
      %v2083 = vadd.f32 0.0, %v2082
      %v2084 = vpop.f32.mrb[0].mxu0
      %2085 = vdwg.mxu0
      %v2086 = vrcp.pop %v2012
      %v2087 = vmul.f32 %v2083, %v2086
      %2088 = vrot.lane.b32.xlu0 %v1914, 120
      %v2089 = vpop.permute.xlu0 %2088
      %2090 = vrot.lane.b32.xlu0 %v1917, 120
      %v2091 = vpop.permute.xlu0 %2090
      %2092 = vrot.lane.b32.xlu0 %v1918, 120
      %v2093 = vpop.permute.xlu0 %2092
      %v2094 = vsel %vm1396, %v2089, 0
      %v2096 = vsel %vm1396, %v2091, 0
      %v2098 = vsel %vm1396, %v2093, 0
      %2100 = vmatprep.subr.mxu0 0.0
      %2101 = vmatpush1.xpose.msra.mxu0 %v2096
      %2102 = vmatprep.subr.mxu0 0.0
      %2103 = vmatpush1.xpose.msra.mxu0 %v2098
      %2104 = vmatprep.subr.mxu0 0.0
      %2105 = vmatpush1.xpose.msra.mxu0 0.0
      %2106 = vmatprep.subr.mxu0 0.0
      %2107 = vmatpush1.xpose.msra.mxu0 0.0
      %2108 = vmatprep.subr.mxu0 0.0
      %2109 = vmatpush1.xpose.msra.mxu0 0.0
      %2110 = vmatprep.subr.mxu0 0.0
      %2111 = vmatpush1.xpose.msra.mxu0 0.0
      %2112 = vmatprep.subr.mxu0 0.0
      %2113 = vmatpush1.xpose.msra.mxu0 0.0
      %2114 = vmatprep.subr.mxu0 0.0
      %2115 = vmatpush1.xpose.msra.mxu0 0.0
      %2116 = vmatprep.subr.mxu0 0.0
      %2117 = vmatpush1.xpose.msra.mxu0 0.0
      %2118 = vmatprep.subr.mxu0 0.0
      %2119 = vmatpush1.xpose.msra.mxu0 0.0
      %2120 = vmatprep.subr.mxu0 0.0
      %2121 = vmatpush1.xpose.msra.mxu0 0.0
      %2122 = vmatprep.subr.mxu0 0.0
      %2123 = vmatpush1.xpose.msra.mxu0 0.0
      %2124 = vmatprep.subr.mxu0 0.0
      %2125 = vmatpush1.xpose.msra.mxu0 0.0
      %2126 = vmatprep.subr.mxu0 0.0
      %2127 = vmatpush1.xpose.msra.mxu0 0.0
      %2128 = vmatprep.subr.mxu0 0.0
      %2129 = vmatpush1.xpose.msra.mxu0 0.0
      %2130 = vmatprep.subr.mxu0 0.0
      %2131 = vmatpush1.xpose.msra.mxu0 0.0
      %2132 = vmatprep.subr.mxu0 0.0
      %2133 = vmatpush1.xpose.msra.mxu0 0.0
      %2134 = vmatprep.subr.mxu0 0.0
      %2135 = vmatpush1.xpose.msra.mxu0 0.0
      %2136 = vmatprep.subr.mxu0 0.0
      %2137 = vmatpush1.xpose.msra.mxu0 0.0
      %2138 = vmatprep.subr.mxu0 0.0
      %2139 = vmatpush1.xpose.msra.mxu0 0.0
      %2140 = vmatprep.subr.mxu0 0.0
      %2141 = vmatpush1.xpose.msra.mxu0 0.0
      %2142 = vmatprep.subr.mxu0 0.0
      %2143 = vmatpush1.xpose.msra.mxu0 0.0
      %2144 = vmatprep.subr.mxu0 0.0
      %2145 = vmatpush1.xpose.msra.mxu0 0.0
      %2146 = vmatprep.subr.mxu0 0.0
      %2147 = vmatpush1.xpose.msra.mxu0 0.0
      %2148 = vmatprep.subr.mxu0 0.0
      %2149 = vmatpush1.xpose.msra.mxu0 0.0
      %2150 = vmatprep.subr.mxu0 0.0
      %2151 = vmatpush1.xpose.msra.mxu0 0.0
      %2152 = vmatprep.subr.mxu0 0.0
      %2153 = vmatpush1.xpose.msra.mxu0 0.0
      %2154 = vmatprep.subr.mxu0 0.0
      %2155 = vmatpush1.xpose.msra.mxu0 0.0
      %2156 = vmatprep.subr.mxu0 0.0
      %2157 = vmatpush1.xpose.msra.mxu0 0.0
      %2158 = vmatprep.subr.mxu0 0.0
      %2159 = vmatpush1.xpose.msra.mxu0 0.0
      %2160 = vmatprep.subr.mxu0 0.0
      %2161 = vmatpush1.xpose.msra.mxu0 0.0
      %2162 = vmatprep.subr.mxu0 0.0
      %2163 = vmatpush1.xpose.msra.mxu0 0.0
      %2164 = vmatprep.mubr.f32.mxu0 0.0
      %2165 = vmatmul.mubr.f32.gmra.mrb[0].mxu0 %v2094
      %v2166 = vpop.f32.mrb[0].mxu0
      %v2167 = vadd.f32 0.0, %v2166
      %v2168 = vpop.f32.mrb[0].mxu0
      %2169 = vdwg.mxu0
      %v2170 = vmul.f32 %v2167, 0.35355338
      %v2171 = vsel %vm1318, %v2170, -inf
      %2172 = vmax.xlane.f32.xlu0 %v2171
      %v2173 = vpop.xlane.xlu0 %2172
      %v2174 = vsub.f32 %v2170, %v2173
      %v2175 = vmul.f32 %v2174, 1.442695
      %v2176 = vpow.pop %v2175
      %v2177 = vsel %vm1318, %v2176, 0.0
      %2178 = vadd.xlane.f32.xlu0 %v2177
      %v2179 = vpop.xlane.xlu0 %2178
      %2182 = vrot.lane.b32.xlu0 %v1919, 120
      %v2183 = vpop.permute.xlu0 %2182
      %2184 = vrot.lane.b32.xlu0 %v1920, 120
      %v2185 = vpop.permute.xlu0 %2184
      %v2189 = vsel %vm1318, %v2176, 0
      %2191 = vmatprep.subr.mxu0 0.0
      %2192 = vmatpush1.msra.mxu0 %v2183
      %2193 = vmatprep.subr.mxu0 0.0
      %2194 = vmatpush1.msra.mxu0 %v2185
      %2195 = vmatprep.subr.mxu0 0.0
      %2196 = vmatpush1.msra.mxu0 0.0
      %2197 = vmatprep.subr.mxu0 0.0
      %2198 = vmatpush1.msra.mxu0 0.0
      %2199 = vmatprep.subr.mxu0 0.0
      %2200 = vmatpush1.msra.mxu0 0.0
      %2201 = vmatprep.subr.mxu0 0.0
      %2202 = vmatpush1.msra.mxu0 0.0
      %2203 = vmatprep.subr.mxu0 0.0
      %2204 = vmatpush1.msra.mxu0 0.0
      %2205 = vmatprep.subr.mxu0 0.0
      %2206 = vmatpush1.msra.mxu0 0.0
      %2207 = vmatprep.subr.mxu0 0.0
      %2208 = vmatpush1.msra.mxu0 0.0
      %2209 = vmatprep.subr.mxu0 0.0
      %2210 = vmatpush1.msra.mxu0 0.0
      %2211 = vmatprep.subr.mxu0 0.0
      %2212 = vmatpush1.msra.mxu0 0.0
      %2213 = vmatprep.subr.mxu0 0.0
      %2214 = vmatpush1.msra.mxu0 0.0
      %2215 = vmatprep.subr.mxu0 0.0
      %2216 = vmatpush1.msra.mxu0 0.0
      %2217 = vmatprep.subr.mxu0 0.0
      %2218 = vmatpush1.msra.mxu0 0.0
      %2219 = vmatprep.subr.mxu0 0.0
      %2220 = vmatpush1.msra.mxu0 0.0
      %2221 = vmatprep.subr.mxu0 0.0
      %2222 = vmatpush1.msra.mxu0 0.0
      %2223 = vmatprep.subr.mxu0 0.0
      %2224 = vmatpush1.msra.mxu0 0.0
      %2225 = vmatprep.subr.mxu0 0.0
      %2226 = vmatpush1.msra.mxu0 0.0
      %2227 = vmatprep.subr.mxu0 0.0
      %2228 = vmatpush1.msra.mxu0 0.0
      %2229 = vmatprep.subr.mxu0 0.0
      %2230 = vmatpush1.msra.mxu0 0.0
      %2231 = vmatprep.subr.mxu0 0.0
      %2232 = vmatpush1.msra.mxu0 0.0
      %2233 = vmatprep.subr.mxu0 0.0
      %2234 = vmatpush1.msra.mxu0 0.0
      %2235 = vmatprep.subr.mxu0 0.0
      %2236 = vmatpush1.msra.mxu0 0.0
      %2237 = vmatprep.subr.mxu0 0.0
      %2238 = vmatpush1.msra.mxu0 0.0
      %2239 = vmatprep.subr.mxu0 0.0
      %2240 = vmatpush1.msra.mxu0 0.0
      %2241 = vmatprep.subr.mxu0 0.0
      %2242 = vmatpush1.msra.mxu0 0.0
      %2243 = vmatprep.subr.mxu0 0.0
      %2244 = vmatpush1.msra.mxu0 0.0
      %2245 = vmatprep.subr.mxu0 0.0
      %2246 = vmatpush1.msra.mxu0 0.0
      %2247 = vmatprep.subr.mxu0 0.0
      %2248 = vmatpush1.msra.mxu0 0.0
      %2249 = vmatprep.subr.mxu0 0.0
      %2250 = vmatpush1.msra.mxu0 0.0
      %2251 = vmatprep.subr.mxu0 0.0
      %2252 = vmatpush1.msra.mxu0 0.0
      %2253 = vmatprep.subr.mxu0 0.0
      %2254 = vmatpush1.msra.mxu0 0.0
      %2255 = vmatprep.mubr.f32.mxu0 0.0
      %2256 = vmatmul.mubr.f32.gmra.mrb[0].mxu0 %v2189
      %v2257 = vpop.f32.mrb[0].mxu0
      %v2258 = vadd.f32 0.0, %v2257
      %v2259 = vpop.f32.mrb[0].mxu0
      %2260 = vdwg.mxu0
      %v2261 = vrcp.pop %v2179
      %v2262 = vmul.f32 %v2258, %v2261
      %v2264 = vsel %vm1396, %v2262, 0
      %2266 = vmatprep.subr.mxu0 0.0
      %2267 = vmatpush1.msra.mxu0 %v1922
      %2268 = vmatprep.subr.mxu0 0.0
      %2269 = vmatpush1.msra.mxu0 0.0
      %2270 = vmatprep.subr.mxu0 0.0
      %2271 = vmatpush1.msra.mxu0 0.0
      %2272 = vmatprep.subr.mxu0 0.0
      %2273 = vmatpush1.msra.mxu0 0.0
      %2274 = vmatprep.subr.mxu0 0.0
      %2275 = vmatpush1.msra.mxu0 0.0
      %2276 = vmatprep.subr.mxu0 0.0
      %2277 = vmatpush1.msra.mxu0 0.0
      %2278 = vmatprep.subr.mxu0 0.0
      %2279 = vmatpush1.msra.mxu0 0.0
      %2280 = vmatprep.subr.mxu0 0.0
      %2281 = vmatpush1.msra.mxu0 0.0
      %2282 = vmatprep.subr.mxu0 0.0
      %2283 = vmatpush1.msra.mxu0 0.0
      %2284 = vmatprep.subr.mxu0 0.0
      %2285 = vmatpush1.msra.mxu0 0.0
      %2286 = vmatprep.subr.mxu0 0.0
      %2287 = vmatpush1.msra.mxu0 0.0
      %2288 = vmatprep.subr.mxu0 0.0
      %2289 = vmatpush1.msra.mxu0 0.0
      %2290 = vmatprep.subr.mxu0 0.0
      %2291 = vmatpush1.msra.mxu0 0.0
      %2292 = vmatprep.subr.mxu0 0.0
      %2293 = vmatpush1.msra.mxu0 0.0
      %2294 = vmatprep.subr.mxu0 0.0
      %2295 = vmatpush1.msra.mxu0 0.0
      %2296 = vmatprep.subr.mxu0 0.0
      %2297 = vmatpush1.msra.mxu0 0.0
      %2298 = vmatprep.subr.mxu0 0.0
      %2299 = vmatpush1.msra.mxu0 0.0
      %2300 = vmatprep.subr.mxu0 0.0
      %2301 = vmatpush1.msra.mxu0 0.0
      %2302 = vmatprep.subr.mxu0 0.0
      %2303 = vmatpush1.msra.mxu0 0.0
      %2304 = vmatprep.subr.mxu0 0.0
      %2305 = vmatpush1.msra.mxu0 0.0
      %2306 = vmatprep.subr.mxu0 0.0
      %2307 = vmatpush1.msra.mxu0 0.0
      %2308 = vmatprep.subr.mxu0 0.0
      %2309 = vmatpush1.msra.mxu0 0.0
      %2310 = vmatprep.subr.mxu0 0.0
      %2311 = vmatpush1.msra.mxu0 0.0
      %2312 = vmatprep.subr.mxu0 0.0
      %2313 = vmatpush1.msra.mxu0 0.0
      %2314 = vmatprep.subr.mxu0 0.0
      %2315 = vmatpush1.msra.mxu0 0.0
      %2316 = vmatprep.subr.mxu0 0.0
      %2317 = vmatpush1.msra.mxu0 0.0
      %2318 = vmatprep.subr.mxu0 0.0
      %2319 = vmatpush1.msra.mxu0 0.0
      %2320 = vmatprep.subr.mxu0 0.0
      %2321 = vmatpush1.msra.mxu0 0.0
      %2322 = vmatprep.subr.mxu0 0.0
      %2323 = vmatpush1.msra.mxu0 0.0
      %2324 = vmatprep.subr.mxu0 0.0
      %2325 = vmatpush1.msra.mxu0 0.0
      %2326 = vmatprep.subr.mxu0 0.0
      %2327 = vmatpush1.msra.mxu0 0.0
      %2328 = vmatprep.subr.mxu0 0.0
      %2329 = vmatpush1.msra.mxu0 0.0
      %2330 = vmatprep.mubr.f32.mxu0 0.0
      %2331 = vmatmul.mubr.f32.gmra.mrb[0].mxu0 %v2264
      %v2332 = vpop.f32.mrb[0].mxu0
      %v2333 = vadd.f32 0.0, %v2332
      %v2334 = vpop.f32.mrb[0].mxu0
      %2335 = vdwg.mxu0
      %v2337 = vsel %vm1396, %v2087, 0
      %2339 = vmatprep.subr.mxu0 0.0
      %2340 = vmatpush1.msra.mxu0 %v1921
      %2341 = vmatprep.subr.mxu0 0.0
      %2342 = vmatpush1.msra.mxu0 0.0
      %2343 = vmatprep.subr.mxu0 0.0
      %2344 = vmatpush1.msra.mxu0 0.0
      %2345 = vmatprep.subr.mxu0 0.0
      %2346 = vmatpush1.msra.mxu0 0.0
      %2347 = vmatprep.subr.mxu0 0.0
      %2348 = vmatpush1.msra.mxu0 0.0
      %2349 = vmatprep.subr.mxu0 0.0
      %2350 = vmatpush1.msra.mxu0 0.0
      %2351 = vmatprep.subr.mxu0 0.0
      %2352 = vmatpush1.msra.mxu0 0.0
      %2353 = vmatprep.subr.mxu0 0.0
      %2354 = vmatpush1.msra.mxu0 0.0
      %2355 = vmatprep.subr.mxu0 0.0
      %2356 = vmatpush1.msra.mxu0 0.0
      %2357 = vmatprep.subr.mxu0 0.0
      %2358 = vmatpush1.msra.mxu0 0.0
      %2359 = vmatprep.subr.mxu0 0.0
      %2360 = vmatpush1.msra.mxu0 0.0
      %2361 = vmatprep.subr.mxu0 0.0
      %2362 = vmatpush1.msra.mxu0 0.0
      %2363 = vmatprep.subr.mxu0 0.0
      %2364 = vmatpush1.msra.mxu0 0.0
      %2365 = vmatprep.subr.mxu0 0.0
      %2366 = vmatpush1.msra.mxu0 0.0
      %2367 = vmatprep.subr.mxu0 0.0
      %2368 = vmatpush1.msra.mxu0 0.0
      %2369 = vmatprep.subr.mxu0 0.0
      %2370 = vmatpush1.msra.mxu0 0.0
      %2371 = vmatprep.subr.mxu0 0.0
      %2372 = vmatpush1.msra.mxu0 0.0
      %2373 = vmatprep.subr.mxu0 0.0
      %2374 = vmatpush1.msra.mxu0 0.0
      %2375 = vmatprep.subr.mxu0 0.0
      %2376 = vmatpush1.msra.mxu0 0.0
      %2377 = vmatprep.subr.mxu0 0.0
      %2378 = vmatpush1.msra.mxu0 0.0
      %2379 = vmatprep.subr.mxu0 0.0
      %2380 = vmatpush1.msra.mxu0 0.0
      %2381 = vmatprep.subr.mxu0 0.0
      %2382 = vmatpush1.msra.mxu0 0.0
      %2383 = vmatprep.subr.mxu0 0.0
      %2384 = vmatpush1.msra.mxu0 0.0
      %2385 = vmatprep.subr.mxu0 0.0
      %2386 = vmatpush1.msra.mxu0 0.0
      %2387 = vmatprep.subr.mxu0 0.0
      %2388 = vmatpush1.msra.mxu0 0.0
      %2389 = vmatprep.subr.mxu0 0.0
      %2390 = vmatpush1.msra.mxu0 0.0
      %2391 = vmatprep.subr.mxu0 0.0
      %2392 = vmatpush1.msra.mxu0 0.0
      %2393 = vmatprep.subr.mxu0 0.0
      %2394 = vmatpush1.msra.mxu0 0.0
      %2395 = vmatprep.subr.mxu0 0.0
      %2396 = vmatpush1.msra.mxu0 0.0
      %2397 = vmatprep.subr.mxu0 0.0
      %2398 = vmatpush1.msra.mxu0 0.0
      %2399 = vmatprep.subr.mxu0 0.0
      %2400 = vmatpush1.msra.mxu0 0.0
      %2401 = vmatprep.subr.mxu0 0.0
      %2402 = vmatpush1.msra.mxu0 0.0
      %2403 = vmatprep.mubr.f32.mxu0 0.0
      %2404 = vmatmul.mubr.f32.gmra.mrb[0].mxu0 %v2337
      %v2405 = vpop.f32.mrb[0].mxu0
      %v2406 = vadd.f32 %v2333, %v2405
      %v2407 = vpop.f32.mrb[0].mxu0
      %2408 = vdwg.mxu0
      %v2410 = vlaneseq
      %v2411 = vshrl.u32 %v2410, 7
      %v2412 = vsub.s32 0, %v2411
      %v2413 = vrot.slane %v1923, %v2412
      %v2415 = vadd.f32 %v2406, %v2413
      %v2416 = vadd.f32 %v1831, %v2415
      %v2417 = vld [vmem:[%s37] sm:$0x1]
      %v2418 = vld [vmem:[%s39] sm:$0x1]
      %v2419 = vsel %vm1074, %v2416, 0.0
      %2420 = vadd.xlane.f32.xlu0 %v2419
      %v2421 = vpop.xlane.xlu0 %2420
      %v2422 = vmul.f32 %v2421, %v1807
      %v2423 = vsub.f32 %v2416, %v2422
      %v2424 = vmul.f32 %v2423, %v2423
      %v2425 = vsel %vm1074, %v2424, 0.0
      %2426 = vadd.xlane.f32.xlu0 %v2425
      %v2427 = vpop.xlane.xlu0 %2426
      %v2428 = vmul.f32 %v2427, %v1807
      %v2429 = vadd.f32 %v2428, 1e-05
      %v2430 = vrsqrt.pop %v2429
      %v2431 = vmul.f32 %v2423, %v2430
      %v2433 = vlaneseq
      %v2434 = vshrl.u32 %v2433, 7
      %v2435 = vsub.s32 0, %v2434
      %v2436 = vrot.slane %v2417, %v2435
      %v2438 = vmul.f32 %v2431, %v2436
      %v2440 = vlaneseq
      %v2441 = vshrl.u32 %v2440, 7
      %v2442 = vsub.s32 0, %v2441
      %v2443 = vrot.slane %v2418, %v2442
      %v2445 = vadd.f32 %v2438, %v2443
      %v2446 = vld [vmem:[%s41] sm:$0xff]
      %v2447 = vld [vmem:[%s41 + $0x8] sm:$0xff]
      %v2448 = vld [vmem:[%s41 + $0x10] sm:$0xff]
      %v2449 = vld [vmem:[%s41 + $0x18] sm:$0xff]
      %v2450 = vld [vmem:[%s43] sm:$0x1]
      %v2452 = vlaneseq
      %v2453 = vshrl.u32 %v2452, 7
      %v2454 = vsub.s32 0, %v2453
      %v2455 = vrot.slane %v2450, %v2454
      %v2458 = vsel %vm1074, %v2445, 0
      %2460 = vmatprep.subr.mxu0 0.0
      %2461 = vmatpush1.msra.mxu0 %v2446
      %2462 = vmatprep.subr.mxu0 0.0
      %2463 = vmatpush1.msra.mxu0 %v2447
      %2464 = vmatprep.subr.mxu0 0.0
      %2465 = vmatpush1.msra.mxu0 %v2448
      %2466 = vmatprep.subr.mxu0 0.0
      %2467 = vmatpush1.msra.mxu0 %v2449
      %2468 = vmatprep.subr.mxu0 0.0
      %2469 = vmatpush1.msra.mxu0 0.0
      %2470 = vmatprep.subr.mxu0 0.0
      %2471 = vmatpush1.msra.mxu0 0.0
      %2472 = vmatprep.subr.mxu0 0.0
      %2473 = vmatpush1.msra.mxu0 0.0
      %2474 = vmatprep.subr.mxu0 0.0
      %2475 = vmatpush1.msra.mxu0 0.0
      %2476 = vmatprep.subr.mxu0 0.0
      %2477 = vmatpush1.msra.mxu0 0.0
      %2478 = vmatprep.subr.mxu0 0.0
      %2479 = vmatpush1.msra.mxu0 0.0
      %2480 = vmatprep.subr.mxu0 0.0
      %2481 = vmatpush1.msra.mxu0 0.0
      %2482 = vmatprep.subr.mxu0 0.0
      %2483 = vmatpush1.msra.mxu0 0.0
      %2484 = vmatprep.subr.mxu0 0.0
      %2485 = vmatpush1.msra.mxu0 0.0
      %2486 = vmatprep.subr.mxu0 0.0
      %2487 = vmatpush1.msra.mxu0 0.0
      %2488 = vmatprep.subr.mxu0 0.0
      %2489 = vmatpush1.msra.mxu0 0.0
      %2490 = vmatprep.subr.mxu0 0.0
      %2491 = vmatpush1.msra.mxu0 0.0
      %2492 = vmatprep.subr.mxu0 0.0
      %2493 = vmatpush1.msra.mxu0 0.0
      %2494 = vmatprep.subr.mxu0 0.0
      %2495 = vmatpush1.msra.mxu0 0.0
      %2496 = vmatprep.subr.mxu0 0.0
      %2497 = vmatpush1.msra.mxu0 0.0
      %2498 = vmatprep.subr.mxu0 0.0
      %2499 = vmatpush1.msra.mxu0 0.0
      %2500 = vmatprep.subr.mxu0 0.0
      %2501 = vmatpush1.msra.mxu0 0.0
      %2502 = vmatprep.subr.mxu0 0.0
      %2503 = vmatpush1.msra.mxu0 0.0
      %2504 = vmatprep.subr.mxu0 0.0
      %2505 = vmatpush1.msra.mxu0 0.0
      %2506 = vmatprep.subr.mxu0 0.0
      %2507 = vmatpush1.msra.mxu0 0.0
      %2508 = vmatprep.subr.mxu0 0.0
      %2509 = vmatpush1.msra.mxu0 0.0
      %2510 = vmatprep.subr.mxu0 0.0
      %2511 = vmatpush1.msra.mxu0 0.0
      %2512 = vmatprep.subr.mxu0 0.0
      %2513 = vmatpush1.msra.mxu0 0.0
      %2514 = vmatprep.subr.mxu0 0.0
      %2515 = vmatpush1.msra.mxu0 0.0
      %2516 = vmatprep.subr.mxu0 0.0
      %2517 = vmatpush1.msra.mxu0 0.0
      %2518 = vmatprep.subr.mxu0 0.0
      %2519 = vmatpush1.msra.mxu0 0.0
      %2520 = vmatprep.subr.mxu0 0.0
      %2521 = vmatpush1.msra.mxu0 0.0
      %2522 = vmatprep.subr.mxu0 0.0
      %2523 = vmatpush1.msra.mxu0 0.0
      %2524 = vmatprep.mubr.f32.mxu0 0.0
      %2525 = vmatmul.mubr.f32.gmra.mrb[0].mxu0 %v2458
      %v2526 = vpop.f32.mrb[0].mxu0
      %v2527 = vadd.f32 %v2455, %v2526
      %v2528 = vpop.f32.mrb[0].mxu0
      %2529 = vdwg.mxu0
      %v2530 = vmax.f32 %v2527, 0.0
      %v2531 = vld [vmem:[%s45] sm:$0xff]
      %v2532 = vld [vmem:[%s45 + $0x8] sm:$0xff]
      %v2533 = vld [vmem:[%s45 + $0x10] sm:$0xff]
      %v2534 = vld [vmem:[%s45 + $0x18] sm:$0xff]
      %v2535 = vld [vmem:[%s45 + $0x20] sm:$0xff]
      %v2536 = vld [vmem:[%s45 + $0x28] sm:$0xff]
      %v2537 = vld [vmem:[%s45 + $0x30] sm:$0xff]
      %v2538 = vld [vmem:[%s45 + $0x38] sm:$0xff]
      %v2539 = vld [vmem:[%s47] sm:$0x1]
      %v2541 = vlaneseq
      %v2542 = vshrl.u32 %v2541, 7
      %v2543 = vsub.s32 0, %v2542
      %v2544 = vrot.slane %v2539, %v2543
      %vm2546 = vcmask 523264
      %v2548 = vsel %vm2546, %v2530, 0
      %2550 = vmatprep.subr.mxu0 0.0
      %2551 = vmatpush1.msra.mxu0 %v2531
      %2552 = vmatprep.subr.mxu0 0.0
      %2553 = vmatpush1.msra.mxu0 %v2532
      %2554 = vmatprep.subr.mxu0 0.0
      %2555 = vmatpush1.msra.mxu0 %v2533
      %2556 = vmatprep.subr.mxu0 0.0
      %2557 = vmatpush1.msra.mxu0 %v2534
      %2558 = vmatprep.subr.mxu0 0.0
      %2559 = vmatpush1.msra.mxu0 %v2535
      %2560 = vmatprep.subr.mxu0 0.0
      %2561 = vmatpush1.msra.mxu0 %v2536
      %2562 = vmatprep.subr.mxu0 0.0
      %2563 = vmatpush1.msra.mxu0 %v2537
      %2564 = vmatprep.subr.mxu0 0.0
      %2565 = vmatpush1.msra.mxu0 %v2538
      %2566 = vmatprep.subr.mxu0 0.0
      %2567 = vmatpush1.msra.mxu0 0.0
      %2568 = vmatprep.subr.mxu0 0.0
      %2569 = vmatpush1.msra.mxu0 0.0
      %2570 = vmatprep.subr.mxu0 0.0
      %2571 = vmatpush1.msra.mxu0 0.0
      %2572 = vmatprep.subr.mxu0 0.0
      %2573 = vmatpush1.msra.mxu0 0.0
      %2574 = vmatprep.subr.mxu0 0.0
      %2575 = vmatpush1.msra.mxu0 0.0
      %2576 = vmatprep.subr.mxu0 0.0
      %2577 = vmatpush1.msra.mxu0 0.0
      %2578 = vmatprep.subr.mxu0 0.0
      %2579 = vmatpush1.msra.mxu0 0.0
      %2580 = vmatprep.subr.mxu0 0.0
      %2581 = vmatpush1.msra.mxu0 0.0
      %2582 = vmatprep.subr.mxu0 0.0
      %2583 = vmatpush1.msra.mxu0 0.0
      %2584 = vmatprep.subr.mxu0 0.0
      %2585 = vmatpush1.msra.mxu0 0.0
      %2586 = vmatprep.subr.mxu0 0.0
      %2587 = vmatpush1.msra.mxu0 0.0
      %2588 = vmatprep.subr.mxu0 0.0
      %2589 = vmatpush1.msra.mxu0 0.0
      %2590 = vmatprep.subr.mxu0 0.0
      %2591 = vmatpush1.msra.mxu0 0.0
      %2592 = vmatprep.subr.mxu0 0.0
      %2593 = vmatpush1.msra.mxu0 0.0
      %2594 = vmatprep.subr.mxu0 0.0
      %2595 = vmatpush1.msra.mxu0 0.0
      %2596 = vmatprep.subr.mxu0 0.0
      %2597 = vmatpush1.msra.mxu0 0.0
      %2598 = vmatprep.subr.mxu0 0.0
      %2599 = vmatpush1.msra.mxu0 0.0
      %2600 = vmatprep.subr.mxu0 0.0
      %2601 = vmatpush1.msra.mxu0 0.0
      %2602 = vmatprep.subr.mxu0 0.0
      %2603 = vmatpush1.msra.mxu0 0.0
      %2604 = vmatprep.subr.mxu0 0.0
      %2605 = vmatpush1.msra.mxu0 0.0
      %2606 = vmatprep.subr.mxu0 0.0
      %2607 = vmatpush1.msra.mxu0 0.0
      %2608 = vmatprep.subr.mxu0 0.0
      %2609 = vmatpush1.msra.mxu0 0.0
      %2610 = vmatprep.subr.mxu0 0.0
      %2611 = vmatpush1.msra.mxu0 0.0
      %2612 = vmatprep.subr.mxu0 0.0
      %2613 = vmatpush1.msra.mxu0 0.0
      %2614 = vmatprep.mubr.f32.mxu0 0.0
      %2615 = vmatmul.mubr.f32.gmra.mrb[0].mxu0 %v2548
      %v2616 = vpop.f32.mrb[0].mxu0
      %v2617 = vadd.f32 %v2544, %v2616
      %v2618 = vpop.f32.mrb[0].mxu0
      %2619 = vdwg.mxu0
      %v2620 = vadd.f32 %v2445, %v2617
      %v2621 = vld [vmem:[%s49] sm:$0x1]
      %v2622 = vld [vmem:[%s51] sm:$0x1]
      %v2623 = vsel %vm1074, %v2620, 0.0
      %2624 = vadd.xlane.f32.xlu0 %v2623
      %v2625 = vpop.xlane.xlu0 %2624
      %v2626 = vmul.f32 %v2625, %v1807
      %v2627 = vsub.f32 %v2620, %v2626
      %v2628 = vmul.f32 %v2627, %v2627
      %v2629 = vsel %vm1074, %v2628, 0.0
      %2630 = vadd.xlane.f32.xlu0 %v2629
      %v2631 = vpop.xlane.xlu0 %2630
      %v2632 = vmul.f32 %v2631, %v1807
      %v2633 = vadd.f32 %v2632, 1e-05
      %v2634 = vrsqrt.pop %v2633
      %v2635 = vmul.f32 %v2627, %v2634
      %v2637 = vlaneseq
      %v2638 = vshrl.u32 %v2637, 7
      %v2639 = vsub.s32 0, %v2638
      %v2640 = vrot.slane %v2621, %v2639
      %v2642 = vmul.f32 %v2635, %v2640
      %v2644 = vlaneseq
      %v2645 = vshrl.u32 %v2644, 7
      %v2646 = vsub.s32 0, %v2645
      %v2647 = vrot.slane %v2622, %v2646
      %v2649 = vadd.f32 %v2642, %v2647
      %2650 = vst.msk [vmem:[%s1051] sm:$0xff] %vm1074, %v2649
      %v2651 = vadd.f32 %v2649, %v1061
      %v2652 = vld [vmem:[%s53] sm:$0xff]
      %v2653 = vld [vmem:[%s53 + $0x8] sm:$0xff]
      %v2654 = vld [vmem:[%s53 + $0x10] sm:$0xff]
      %v2655 = vld [vmem:[%s53 + $0x18] sm:$0xff]
      %v2656 = vld [vmem:[%s55] sm:$0x1]
      %v2658 = vlaneseq
      %v2659 = vshrl.u32 %v2658, 7
      %v2660 = vsub.s32 0, %v2659
      %v2661 = vrot.slane %v2656, %v2660
      %v2664 = vsel %vm1074, %v2651, 0
      %2666 = vmatprep.subr.mxu0 0.0
      %2667 = vmatpush1.msra.mxu0 %v2652
      %2668 = vmatprep.subr.mxu0 0.0
      %2669 = vmatpush1.msra.mxu0 %v2653
      %2670 = vmatprep.subr.mxu0 0.0
      %2671 = vmatpush1.msra.mxu0 %v2654
      %2672 = vmatprep.subr.mxu0 0.0
      %2673 = vmatpush1.msra.mxu0 %v2655
      %2674 = vmatprep.subr.mxu0 0.0
      %2675 = vmatpush1.msra.mxu0 0.0
      %2676 = vmatprep.subr.mxu0 0.0
      %2677 = vmatpush1.msra.mxu0 0.0
      %2678 = vmatprep.subr.mxu0 0.0
      %2679 = vmatpush1.msra.mxu0 0.0
      %2680 = vmatprep.subr.mxu0 0.0
      %2681 = vmatpush1.msra.mxu0 0.0
      %2682 = vmatprep.subr.mxu0 0.0
      %2683 = vmatpush1.msra.mxu0 0.0
      %2684 = vmatprep.subr.mxu0 0.0
      %2685 = vmatpush1.msra.mxu0 0.0
      %2686 = vmatprep.subr.mxu0 0.0
      %2687 = vmatpush1.msra.mxu0 0.0
      %2688 = vmatprep.subr.mxu0 0.0
      %2689 = vmatpush1.msra.mxu0 0.0
      %2690 = vmatprep.subr.mxu0 0.0
      %2691 = vmatpush1.msra.mxu0 0.0
      %2692 = vmatprep.subr.mxu0 0.0
      %2693 = vmatpush1.msra.mxu0 0.0
      %2694 = vmatprep.subr.mxu0 0.0
      %2695 = vmatpush1.msra.mxu0 0.0
      %2696 = vmatprep.subr.mxu0 0.0
      %2697 = vmatpush1.msra.mxu0 0.0
      %2698 = vmatprep.subr.mxu0 0.0
      %2699 = vmatpush1.msra.mxu0 0.0
      %2700 = vmatprep.subr.mxu0 0.0
      %2701 = vmatpush1.msra.mxu0 0.0
      %2702 = vmatprep.subr.mxu0 0.0
      %2703 = vmatpush1.msra.mxu0 0.0
      %2704 = vmatprep.subr.mxu0 0.0
      %2705 = vmatpush1.msra.mxu0 0.0
      %2706 = vmatprep.subr.mxu0 0.0
      %2707 = vmatpush1.msra.mxu0 0.0
      %2708 = vmatprep.subr.mxu0 0.0
      %2709 = vmatpush1.msra.mxu0 0.0
      %2710 = vmatprep.subr.mxu0 0.0
      %2711 = vmatpush1.msra.mxu0 0.0
      %2712 = vmatprep.subr.mxu0 0.0
      %2713 = vmatpush1.msra.mxu0 0.0
      %2714 = vmatprep.subr.mxu0 0.0
      %2715 = vmatpush1.msra.mxu0 0.0
      %2716 = vmatprep.subr.mxu0 0.0
      %2717 = vmatpush1.msra.mxu0 0.0
      %2718 = vmatprep.subr.mxu0 0.0
      %2719 = vmatpush1.msra.mxu0 0.0
      %2720 = vmatprep.subr.mxu0 0.0
      %2721 = vmatpush1.msra.mxu0 0.0
      %2722 = vmatprep.subr.mxu0 0.0
      %2723 = vmatpush1.msra.mxu0 0.0
      %2724 = vmatprep.subr.mxu0 0.0
      %2725 = vmatpush1.msra.mxu0 0.0
      %2726 = vmatprep.subr.mxu0 0.0
      %2727 = vmatpush1.msra.mxu0 0.0
      %2728 = vmatprep.subr.mxu0 0.0
      %2729 = vmatpush1.msra.mxu0 0.0
      %2730 = vmatprep.mubr.f32.mxu0 0.0
      %2731 = vmatmul.mubr.f32.gmra.mrb[0].mxu0 %v2664
      %v2732 = vpop.f32.mrb[0].mxu0
      %v2733 = vadd.f32 %v2661, %v2732
      %v2734 = vpop.f32.mrb[0].mxu0
      %2735 = vdwg.mxu0
      %v2736 = vld [vmem:[%s57] sm:$0xff]
      %v2737 = vld [vmem:[%s57 + $0x8] sm:$0xff]
      %v2738 = vld [vmem:[%s57 + $0x10] sm:$0xff]
      %v2739 = vld [vmem:[%s57 + $0x18] sm:$0xff]
      %v2740 = vld [vmem:[%s59] sm:$0x1]
      %v2742 = vlaneseq
      %v2743 = vshrl.u32 %v2742, 7
      %v2744 = vsub.s32 0, %v2743
      %v2745 = vrot.slane %v2740, %v2744
      %v2748 = vsel %vm1074, %v2649, 0
      %2750 = vmatprep.subr.mxu0 0.0
      %2751 = vmatpush1.msra.mxu0 %v2736
      %2752 = vmatprep.subr.mxu0 0.0
      %2753 = vmatpush1.msra.mxu0 %v2737
      %2754 = vmatprep.subr.mxu0 0.0
      %2755 = vmatpush1.msra.mxu0 %v2738
      %2756 = vmatprep.subr.mxu0 0.0
      %2757 = vmatpush1.msra.mxu0 %v2739
      %2758 = vmatprep.subr.mxu0 0.0
      %2759 = vmatpush1.msra.mxu0 0.0
      %2760 = vmatprep.subr.mxu0 0.0
      %2761 = vmatpush1.msra.mxu0 0.0
      %2762 = vmatprep.subr.mxu0 0.0
      %2763 = vmatpush1.msra.mxu0 0.0
      %2764 = vmatprep.subr.mxu0 0.0
      %2765 = vmatpush1.msra.mxu0 0.0
      %2766 = vmatprep.subr.mxu0 0.0
      %2767 = vmatpush1.msra.mxu0 0.0
      %2768 = vmatprep.subr.mxu0 0.0
      %2769 = vmatpush1.msra.mxu0 0.0
      %2770 = vmatprep.subr.mxu0 0.0
      %2771 = vmatpush1.msra.mxu0 0.0
      %2772 = vmatprep.subr.mxu0 0.0
      %2773 = vmatpush1.msra.mxu0 0.0
      %2774 = vmatprep.subr.mxu0 0.0
      %2775 = vmatpush1.msra.mxu0 0.0
      %2776 = vmatprep.subr.mxu0 0.0
      %2777 = vmatpush1.msra.mxu0 0.0
      %2778 = vmatprep.subr.mxu0 0.0
      %2779 = vmatpush1.msra.mxu0 0.0
      %2780 = vmatprep.subr.mxu0 0.0
      %2781 = vmatpush1.msra.mxu0 0.0
      %2782 = vmatprep.subr.mxu0 0.0
      %2783 = vmatpush1.msra.mxu0 0.0
      %2784 = vmatprep.subr.mxu0 0.0
      %2785 = vmatpush1.msra.mxu0 0.0
      %2786 = vmatprep.subr.mxu0 0.0
      %2787 = vmatpush1.msra.mxu0 0.0
      %2788 = vmatprep.subr.mxu0 0.0
      %2789 = vmatpush1.msra.mxu0 0.0
      %2790 = vmatprep.subr.mxu0 0.0
      %2791 = vmatpush1.msra.mxu0 0.0
      %2792 = vmatprep.subr.mxu0 0.0
      %2793 = vmatpush1.msra.mxu0 0.0
      %2794 = vmatprep.subr.mxu0 0.0
      %2795 = vmatpush1.msra.mxu0 0.0
      %2796 = vmatprep.subr.mxu0 0.0
      %2797 = vmatpush1.msra.mxu0 0.0
      %2798 = vmatprep.subr.mxu0 0.0
      %2799 = vmatpush1.msra.mxu0 0.0
      %2800 = vmatprep.subr.mxu0 0.0
      %2801 = vmatpush1.msra.mxu0 0.0
      %2802 = vmatprep.subr.mxu0 0.0
      %2803 = vmatpush1.msra.mxu0 0.0
      %2804 = vmatprep.subr.mxu0 0.0
      %2805 = vmatpush1.msra.mxu0 0.0
      %2806 = vmatprep.subr.mxu0 0.0
      %2807 = vmatpush1.msra.mxu0 0.0
      %2808 = vmatprep.subr.mxu0 0.0
      %2809 = vmatpush1.msra.mxu0 0.0
      %2810 = vmatprep.subr.mxu0 0.0
      %2811 = vmatpush1.msra.mxu0 0.0
      %2812 = vmatprep.subr.mxu0 0.0
      %2813 = vmatpush1.msra.mxu0 0.0
      %2814 = vmatprep.mubr.f32.mxu0 0.0
      %2815 = vmatmul.mubr.f32.gmra.mrb[0].mxu0 %v2748
      %v2816 = vpop.f32.mrb[0].mxu0
      %v2817 = vadd.f32 %v2745, %v2816
      %v2818 = vpop.f32.mrb[0].mxu0
      %2819 = vdwg.mxu0
      %2820 = vst.msk [vmem:[%s1055] sm:$0xff] %vm1318, %v2733
      %2821 = vst.msk [vmem:[%s1059] sm:$0xff] %vm1318, %v2817
      %p2822 = scmp.lt.s32.totalorder %s77, 1
      %s2823 = scalar_select %p2822, %s77, 1
      %s2824 = smul.addr %s2823, 8
      %s2825 = scalar_lea.vmem %s61, %s2824
      %p2826 = scmp.lt.s32.totalorder %s77, 1
      %s2827 = scalar_select %p2826, %s77, 1
      %s2828 = smul.addr %s2827, 8
      %s2829 = scalar_lea.vmem %s63, %s2828
      %p2830 = scmp.lt.s32.totalorder %s77, 1
      %s2831 = scalar_select %p2830, %s77, 1
      %s2832 = smul.addr %s2831, 8
      %s2833 = scalar_lea.vmem %s65, %s2832
      // Predicated region
      $region141: #{two_way_transformer.12} parent=139 // pred_check
        %p2834 = pneg %p745
      $region142: #{two_way_transformer.12} parent=139 // pred_check_branch
        %2836 = sbr.rel (%p2834) target = $region144
      $region143: #{two_way_transformer.12} parent=139 // pred_region
        _
      $region144: #{two_way_transformer.12} parent=139 // pred_fallthru
        _
      // Predicated region
      $region145: #{two_way_transformer.12} parent=139 // pred_check
        %p2837 = pneg %p771
      $region146: #{two_way_transformer.12} parent=139 // pred_check_branch
        %2839 = sbr.rel (%p2837) target = $region148
      $region147: #{two_way_transformer.12} parent=139 // pred_region
        _
      $region148: #{two_way_transformer.12} parent=139 // pred_fallthru
        _
      // Predicated region
      $region149: #{two_way_transformer.12} parent=139 // pred_check
        %p2840 = pneg %p797
      $region150: #{two_way_transformer.12} parent=139 // pred_check_branch
        %2842 = sbr.rel (%p2840) target = $region152
      $region151: #{two_way_transformer.12} parent=139 // pred_region
        _
      $region152: #{two_way_transformer.12} parent=139 // pred_fallthru
        _
    $region140: #{two_way_transformer.12} parent=5 // pred_fallthru
      _
    %p2843 = scmp.le.s32.totalorder 2, %s72
    // Predicated region
    $region153: #{two_way_transformer.12} parent=5 // pred_check
      %p2844 = pneg %p2843
    $region154: #{two_way_transformer.12} parent=5 // pred_check_branch
      %2846 = sbr.rel (%p2844) target = $region156
    $region155: #{two_way_transformer.12} parent=5 // pred_region
      %s2847 = ssub.s32 %s72, 2
      // Predicated region
      $region157: #{two_way_transformer.12} parent=155 // pred_check
        %p2848 = pneg %p751
      $region158: #{two_way_transformer.12} parent=155 // pred_check_branch
        %2850 = sbr.rel (%p2848) target = $region160
      $region159: #{two_way_transformer.12} parent=155 // pred_region
        %p2851 = scmp.lt.s32.totalorder %s78, 1
        %s2852 = scalar_select %p2851, %s78, 1
        %s2853 = smul.addr %s2852, 8
        %s2854 = scalar_lea.vmem %s61, %s2853
      $region160: #{two_way_transformer.12} parent=155 // pred_fallthru
        _
      // Predicated region
      $region161: #{two_way_transformer.12} parent=155 // pred_check
        %p2855 = pneg %p777
      $region162: #{two_way_transformer.12} parent=155 // pred_check_branch
        %2857 = sbr.rel (%p2855) target = $region164
      $region163: #{two_way_transformer.12} parent=155 // pred_region
        %p2858 = scmp.lt.s32.totalorder %s78, 1
        %s2859 = scalar_select %p2858, %s78, 1
        %s2860 = smul.addr %s2859, 8
        %s2861 = scalar_lea.vmem %s63, %s2860
      $region164: #{two_way_transformer.12} parent=155 // pred_fallthru
        _
      // Predicated region
      $region165: #{two_way_transformer.12} parent=155 // pred_check
        %p2862 = pneg %p803
      $region166: #{two_way_transformer.12} parent=155 // pred_check_branch
        %2864 = sbr.rel (%p2862) target = $region168
      $region167: #{two_way_transformer.12} parent=155 // pred_region
        %p2865 = scmp.lt.s32.totalorder %s78, 1
        %s2866 = scalar_select %p2865, %s78, 1
        %s2867 = smul.addr %s2866, 8
        %s2868 = scalar_lea.vmem %s65, %s2867
      $region168: #{two_way_transformer.12} parent=155 // pred_fallthru
        _
    $region156: #{two_way_transformer.12} parent=5 // pred_fallthru
      _
  $region6: #{two_way_transformer.12} parent=0 // loop_footer
    %s76 = sadd.s32 1, %s72
  $region7: #{two_way_transformer.12} parent=0 // loop_footer_branch
    %71 = sbr.rel target = $region3
  $region8: #{two_way_transformer.12} parent=0 // loop_exit
    _

// kernel: two_way_transformer.15
$region0: #{two_way_transformer.15}
  #allocation0 [shape = 'u32[]', space=smem, size = 0x4, offset = 0x4, fixed_abs, tag = 'smem constant byte address 0x4 - core index']
  #allocation1 [shape = 'u32[144,128]{1,0:T(1,128)}', space=vmem, size = 0x12000, scoped, tag = 'internal scratch']
  %s0 = inlined_call_operand.vmem [shape: f32[2,8,32], index: 0, kind: input, shape index: {}]
  %s1 = inlined_call_operand.vmem [shape: f32[2,8,32], index: 1, kind: input, shape index: {}]
  %s2 = inlined_call_operand.vmem [shape: f32[2,16,16], index: 2, kind: input, shape index: {}]
  %s3 = inlined_call_operand.vmem [shape: f32[2,16,16], index: 3, kind: input, shape index: {}]
  %s4 = inlined_call_operand.vmem [shape: f32[32,16], index: 4, kind: input, shape index: {}]
  %s5 = inlined_call_operand.vmem [shape: f32[1,16], index: 5, kind: input, shape index: {}]
  %s6 = inlined_call_operand.vmem [shape: f32[16,32], index: 6, kind: input, shape index: {}]
  %s7 = inlined_call_operand.vmem [shape: f32[1,32], index: 7, kind: input, shape index: {}]
  %s8 = inlined_call_operand.vmem [shape: f32[1,32], index: 8, kind: input, shape index: {}]
  %s9 = inlined_call_operand.vmem [shape: f32[1,32], index: 9, kind: input, shape index: {}]
  %s10 = inlined_call_operand.hbm [shape: f32[2,8,32], index: 10, kind: output, shape index: {}]
  %s11 = sld [smem:[#allocation0]]
  $region73: #{two_way_transformer.15} parent=0
    _
  %s13 = ssub.s32 1, %s11
  %s14 = scalar_select 0, %s13, %s11
  $region1: #{two_way_transformer.15} parent=0
    #allocation2 [shape = 'u8[8192]{0}', space=vmem, size = 0x2000, scoped, tag = 'output window, operand 0']
    #allocation3 [shape = 's32[2]{0}', space=sflag, size = 0x8, scoped, tag = 'scoped memory for two_way_transformer.15']
    %15 = vsyncpa [#allocation3], 0
    %s16 = scalar_lea.sflag [#allocation3], 1
    %17 = vsyncpa %s16, 0
    loop: start=0, step=1, limit=4
    $region2: #{two_way_transformer.15} parent=1 // loop_pre_header
      _
    $region3: #{two_way_transformer.15} parent=1 // loop_header
      %s19 = sphi 0, %s23
      %p20 = scmp.ge.s32.totalorder %s19, 4
      %s29 = sphi 0, %s31
      %s32 = sphi 0, %s29
      %s33 = sphi 0, %s32
      %s49 = sphi 0, %s33
      %s55 = sphi 0, %s57
      %s58 = sphi 0, %s55
      %s59 = sphi 0, %s58
      %s75 = sphi 0, %s59
      %s81 = sphi 0, %s83
      %s84 = sphi 0, %s81
      %s85 = sphi 0, %s84
      %s101 = sphi 0, %s85
      %s107 = sphi 0, %s109
      %s110 = sphi 0, %s107
      %s111 = sphi 0, %s110
      %s127 = sphi 0, %s111
      %s131 = sphi 0, %s131
      %s133 = sphi 0, %s131
      %s134 = sphi 0, %s133
      %s148 = sphi 0, %s134
      %s152 = sphi 0, %s152
      %s154 = sphi 0, %s152
      %s155 = sphi 0, %s154
      %s169 = sphi 0, %s155
      %s173 = sphi 0, %s173
      %s175 = sphi 0, %s173
      %s176 = sphi 0, %s175
      %s190 = sphi 0, %s176
      %s194 = sphi 0, %s194
      %s196 = sphi 0, %s194
      %s197 = sphi 0, %s196
      %s211 = sphi 0, %s197
      %s215 = sphi 0, %s215
      %s217 = sphi 0, %s215
      %s218 = sphi 0, %s217
      %s232 = sphi 0, %s218
      %s236 = sphi 0, %s236
      %s238 = sphi 0, %s236
      %s239 = sphi 0, %s238
      %s253 = sphi 0, %s239
      %s259 = sphi 0, %s261
      %s262 = sphi 0, %s259
      %s263 = sphi 0, %s262
      %s279 = sphi 0, %s263
    $region4: #{two_way_transformer.15} parent=1 // loop_header_branch
      %22 = sbr.rel (%p20) target = $region8
    $region5: #{two_way_transformer.15} parent=1 // loop_body
      %s24 = ssub.s32 %s19, 1
      %s25 = ssub.s32 %s19, 2
      %s26 = sadd.s32 %s19, 1
      %s27 = ssub.s32 %s19, %s26
      %p28 = scmp.eq.s32.totalorder %s27, 0
      %s30 = sadd.s32 %s29, 1
      %s31 = scalar_select %p28, %s29, %s30
      %p34 = pneg %p28
      %p35 = scmp.eq.s32.totalorder %s19, 1
      %p36 = por %p34, %p35
      %p37 = scmp.ne.s32.totalorder %s29, %s32
      %p38 = scmp.eq.s32.totalorder %s19, 0
      %p39 = por %p37, %p38
      %p40 = scmp.ne.s32.totalorder %s29, %s32
      %p41 = scmp.eq.s32.totalorder %s24, 1
      %p42 = por %p40, %p41
      %p43 = scmp.ne.s32.totalorder %s32, %s33
      %p44 = scmp.eq.s32.totalorder %s24, 0
      %p45 = por %p43, %p44
      %p46 = scmp.ne.s32.totalorder %s32, %s33
      %p47 = scmp.eq.s32.totalorder %s25, 1
      %p48 = por %p46, %p47
      %p50 = scmp.ne.s32.totalorder %s33, %s49
      %p51 = scmp.eq.s32.totalorder %s25, 0
      %p52 = por %p50, %p51
      %s53 = ssub.s32 %s19, %s26
      %p54 = scmp.eq.s32.totalorder %s53, 0
      %s56 = sadd.s32 %s55, 1
      %s57 = scalar_select %p54, %s55, %s56
      %p60 = pneg %p54
      %p61 = scmp.eq.s32.totalorder %s19, 1
      %p62 = por %p60, %p61
      %p63 = scmp.ne.s32.totalorder %s55, %s58
      %p64 = scmp.eq.s32.totalorder %s19, 0
      %p65 = por %p63, %p64
      %p66 = scmp.ne.s32.totalorder %s55, %s58
      %p67 = scmp.eq.s32.totalorder %s24, 1
      %p68 = por %p66, %p67
      %p69 = scmp.ne.s32.totalorder %s58, %s59
      %p70 = scmp.eq.s32.totalorder %s24, 0
      %p71 = por %p69, %p70
      %p72 = scmp.ne.s32.totalorder %s58, %s59
      %p73 = scmp.eq.s32.totalorder %s25, 1
      %p74 = por %p72, %p73
      %p76 = scmp.ne.s32.totalorder %s59, %s75
      %p77 = scmp.eq.s32.totalorder %s25, 0
      %p78 = por %p76, %p77
      %s79 = ssub.s32 %s19, %s26
      %p80 = scmp.eq.s32.totalorder %s79, 0
      %s82 = sadd.s32 %s81, 1
      %s83 = scalar_select %p80, %s81, %s82
      %p86 = pneg %p80
      %p87 = scmp.eq.s32.totalorder %s19, 1
      %p88 = por %p86, %p87
      %p89 = scmp.ne.s32.totalorder %s81, %s84
      %p90 = scmp.eq.s32.totalorder %s19, 0
      %p91 = por %p89, %p90
      %p92 = scmp.ne.s32.totalorder %s81, %s84
      %p93 = scmp.eq.s32.totalorder %s24, 1
      %p94 = por %p92, %p93
      %p95 = scmp.ne.s32.totalorder %s84, %s85
      %p96 = scmp.eq.s32.totalorder %s24, 0
      %p97 = por %p95, %p96
      %p98 = scmp.ne.s32.totalorder %s84, %s85
      %p99 = scmp.eq.s32.totalorder %s25, 1
      %p100 = por %p98, %p99
      %p102 = scmp.ne.s32.totalorder %s85, %s101
      %p103 = scmp.eq.s32.totalorder %s25, 0
      %p104 = por %p102, %p103
      %s105 = ssub.s32 %s19, %s26
      %p106 = scmp.eq.s32.totalorder %s105, 0
      %s108 = sadd.s32 %s107, 1
      %s109 = scalar_select %p106, %s107, %s108
      %p112 = pneg %p106
      %p113 = scmp.eq.s32.totalorder %s19, 1
      %p114 = por %p112, %p113
      %p115 = scmp.ne.s32.totalorder %s107, %s110
      %p116 = scmp.eq.s32.totalorder %s19, 0
      %p117 = por %p115, %p116
      %p118 = scmp.ne.s32.totalorder %s107, %s110
      %p119 = scmp.eq.s32.totalorder %s24, 1
      %p120 = por %p118, %p119
      %p121 = scmp.ne.s32.totalorder %s110, %s111
      %p122 = scmp.eq.s32.totalorder %s24, 0
      %p123 = por %p121, %p122
      %p124 = scmp.ne.s32.totalorder %s110, %s111
      %p125 = scmp.eq.s32.totalorder %s25, 1
      %p126 = por %p124, %p125
      %p128 = scmp.ne.s32.totalorder %s111, %s127
      %p129 = scmp.eq.s32.totalorder %s25, 0
      %p130 = por %p128, %p129
      %s132 = sadd.s32 %s131, 1
      %p135 = scmp.eq.s32.totalorder %s19, 1
      %p136 = scmp.ne.s32.totalorder %s131, %s133
      %p137 = scmp.eq.s32.totalorder %s19, 0
      %p138 = por %p136, %p137
      %p139 = scmp.ne.s32.totalorder %s131, %s133
      %p140 = scmp.eq.s32.totalorder %s24, 1
      %p141 = por %p139, %p140
      %p142 = scmp.ne.s32.totalorder %s133, %s134
      %p143 = scmp.eq.s32.totalorder %s24, 0
      %p144 = por %p142, %p143
      %p145 = scmp.ne.s32.totalorder %s133, %s134
      %p146 = scmp.eq.s32.totalorder %s25, 1
      %p147 = por %p145, %p146
      %p149 = scmp.ne.s32.totalorder %s134, %s148
      %p150 = scmp.eq.s32.totalorder %s25, 0
      %p151 = por %p149, %p150
      %s153 = sadd.s32 %s152, 1
      %p156 = scmp.eq.s32.totalorder %s19, 1
      %p157 = scmp.ne.s32.totalorder %s152, %s154
      %p158 = scmp.eq.s32.totalorder %s19, 0
      %p159 = por %p157, %p158
      %p160 = scmp.ne.s32.totalorder %s152, %s154
      %p161 = scmp.eq.s32.totalorder %s24, 1
      %p162 = por %p160, %p161
      %p163 = scmp.ne.s32.totalorder %s154, %s155
      %p164 = scmp.eq.s32.totalorder %s24, 0
      %p165 = por %p163, %p164
      %p166 = scmp.ne.s32.totalorder %s154, %s155
      %p167 = scmp.eq.s32.totalorder %s25, 1
      %p168 = por %p166, %p167
      %p170 = scmp.ne.s32.totalorder %s155, %s169
      %p171 = scmp.eq.s32.totalorder %s25, 0
      %p172 = por %p170, %p171
      %s174 = sadd.s32 %s173, 1
      %p177 = scmp.eq.s32.totalorder %s19, 1
      %p178 = scmp.ne.s32.totalorder %s173, %s175
      %p179 = scmp.eq.s32.totalorder %s19, 0
      %p180 = por %p178, %p179
      %p181 = scmp.ne.s32.totalorder %s173, %s175
      %p182 = scmp.eq.s32.totalorder %s24, 1
      %p183 = por %p181, %p182
      %p184 = scmp.ne.s32.totalorder %s175, %s176
      %p185 = scmp.eq.s32.totalorder %s24, 0
      %p186 = por %p184, %p185
      %p187 = scmp.ne.s32.totalorder %s175, %s176
      %p188 = scmp.eq.s32.totalorder %s25, 1
      %p189 = por %p187, %p188
      %p191 = scmp.ne.s32.totalorder %s176, %s190
      %p192 = scmp.eq.s32.totalorder %s25, 0
      %p193 = por %p191, %p192
      %s195 = sadd.s32 %s194, 1
      %p198 = scmp.eq.s32.totalorder %s19, 1
      %p199 = scmp.ne.s32.totalorder %s194, %s196
      %p200 = scmp.eq.s32.totalorder %s19, 0
      %p201 = por %p199, %p200
      %p202 = scmp.ne.s32.totalorder %s194, %s196
      %p203 = scmp.eq.s32.totalorder %s24, 1
      %p204 = por %p202, %p203
      %p205 = scmp.ne.s32.totalorder %s196, %s197
      %p206 = scmp.eq.s32.totalorder %s24, 0
      %p207 = por %p205, %p206
      %p208 = scmp.ne.s32.totalorder %s196, %s197
      %p209 = scmp.eq.s32.totalorder %s25, 1
      %p210 = por %p208, %p209
      %p212 = scmp.ne.s32.totalorder %s197, %s211
      %p213 = scmp.eq.s32.totalorder %s25, 0
      %p214 = por %p212, %p213
      %s216 = sadd.s32 %s215, 1
      %p219 = scmp.eq.s32.totalorder %s19, 1
      %p220 = scmp.ne.s32.totalorder %s215, %s217
      %p221 = scmp.eq.s32.totalorder %s19, 0
      %p222 = por %p220, %p221
      %p223 = scmp.ne.s32.totalorder %s215, %s217
      %p224 = scmp.eq.s32.totalorder %s24, 1
      %p225 = por %p223, %p224
      %p226 = scmp.ne.s32.totalorder %s217, %s218
      %p227 = scmp.eq.s32.totalorder %s24, 0
      %p228 = por %p226, %p227
      %p229 = scmp.ne.s32.totalorder %s217, %s218
      %p230 = scmp.eq.s32.totalorder %s25, 1
      %p231 = por %p229, %p230
      %p233 = scmp.ne.s32.totalorder %s218, %s232
      %p234 = scmp.eq.s32.totalorder %s25, 0
      %p235 = por %p233, %p234
      %s237 = sadd.s32 %s236, 1
      %p240 = scmp.eq.s32.totalorder %s19, 1
      %p241 = scmp.ne.s32.totalorder %s236, %s238
      %p242 = scmp.eq.s32.totalorder %s19, 0
      %p243 = por %p241, %p242
      %p244 = scmp.ne.s32.totalorder %s236, %s238
      %p245 = scmp.eq.s32.totalorder %s24, 1
      %p246 = por %p244, %p245
      %p247 = scmp.ne.s32.totalorder %s238, %s239
      %p248 = scmp.eq.s32.totalorder %s24, 0
      %p249 = por %p247, %p248
      %p250 = scmp.ne.s32.totalorder %s238, %s239
      %p251 = scmp.eq.s32.totalorder %s25, 1
      %p252 = por %p250, %p251
      %p254 = scmp.ne.s32.totalorder %s239, %s253
      %p255 = scmp.eq.s32.totalorder %s25, 0
      %p256 = por %p254, %p255
      %s257 = ssub.s32 %s19, %s26
      %p258 = scmp.eq.s32.totalorder %s257, 0
      %s260 = sadd.s32 %s259, 1
      %s261 = scalar_select %p258, %s259, %s260
      %p264 = pneg %p258
      %p265 = scmp.eq.s32.totalorder %s19, 1
      %p266 = por %p264, %p265
      %p267 = scmp.ne.s32.totalorder %s259, %s262
      %p268 = scmp.eq.s32.totalorder %s19, 0
      %p269 = por %p267, %p268
      %p270 = scmp.ne.s32.totalorder %s259, %s262
      %p271 = scmp.eq.s32.totalorder %s24, 1
      %p272 = por %p270, %p271
      %p273 = scmp.ne.s32.totalorder %s262, %s263
      %p274 = scmp.eq.s32.totalorder %s24, 0
      %p275 = por %p273, %p274
      %p276 = scmp.ne.s32.totalorder %s262, %s263
      %p277 = scmp.eq.s32.totalorder %s25, 1
      %p278 = por %p276, %p277
      %p280 = scmp.ne.s32.totalorder %s263, %s279
      %p281 = scmp.eq.s32.totalorder %s25, 0
      %p282 = por %p280, %p281
      %p283 = scmp.le.s32.totalorder 1, %s19
      %p284 = scmp.lt.s32.totalorder %s19, 3
      %p285 = pnand %p283, %p284
      %p286 = pneg %p285
      // Predicated region
      $region9: #{two_way_transformer.15} parent=5 // pred_check
        _
      $region10: #{two_way_transformer.15} parent=5 // pred_check_branch
        %288 = sbr.rel (%p285) target = $region12
      $region11: #{two_way_transformer.15} parent=5 // pred_region
        %s289 = ssub.s32 %s19, 1
        // Predicated region
        $region13: #{two_way_transformer.15} parent=11 // pred_check
          %p290 = pneg %p144
        $region14: #{two_way_transformer.15} parent=11 // pred_check_branch
          %292 = sbr.rel (%p290) target = $region16
        $region15: #{two_way_transformer.15} parent=11 // pred_region
          _
        $region16: #{two_way_transformer.15} parent=11 // pred_fallthru
          _
        // Predicated region
        $region17: #{two_way_transformer.15} parent=11 // pred_check
          %p293 = pneg %p165
        $region18: #{two_way_transformer.15} parent=11 // pred_check_branch
          %295 = sbr.rel (%p293) target = $region20
        $region19: #{two_way_transformer.15} parent=11 // pred_region
          _
        $region20: #{two_way_transformer.15} parent=11 // pred_fallthru
          _
        // Predicated region
        $region21: #{two_way_transformer.15} parent=11 // pred_check
          %p296 = pneg %p186
        $region22: #{two_way_transformer.15} parent=11 // pred_check_branch
          %298 = sbr.rel (%p296) target = $region24
        $region23: #{two_way_transformer.15} parent=11 // pred_region
          _
        $region24: #{two_way_transformer.15} parent=11 // pred_fallthru
          _
        // Predicated region
        $region25: #{two_way_transformer.15} parent=11 // pred_check
          %p299 = pneg %p207
        $region26: #{two_way_transformer.15} parent=11 // pred_check_branch
          %301 = sbr.rel (%p299) target = $region28
        $region27: #{two_way_transformer.15} parent=11 // pred_region
          _
        $region28: #{two_way_transformer.15} parent=11 // pred_fallthru
          _
        // Predicated region
        $region29: #{two_way_transformer.15} parent=11 // pred_check
          %p302 = pneg %p228
        $region30: #{two_way_transformer.15} parent=11 // pred_check_branch
          %304 = sbr.rel (%p302) target = $region32
        $region31: #{two_way_transformer.15} parent=11 // pred_region
          _
        $region32: #{two_way_transformer.15} parent=11 // pred_fallthru
          _
        // Predicated region
        $region33: #{two_way_transformer.15} parent=11 // pred_check
          %p305 = pneg %p249
        $region34: #{two_way_transformer.15} parent=11 // pred_check_branch
          %307 = sbr.rel (%p305) target = $region36
        $region35: #{two_way_transformer.15} parent=11 // pred_region
          _
        $region36: #{two_way_transformer.15} parent=11 // pred_fallthru
          _
      $region12: #{two_way_transformer.15} parent=5 // pred_fallthru
        _
      %p308 = scmp.lt.s32.totalorder %s19, 2
      // Predicated region
      $region37: #{two_way_transformer.15} parent=5 // pred_check
        %p309 = pneg %p308
      $region38: #{two_way_transformer.15} parent=5 // pred_check_branch
        %311 = sbr.rel (%p309) target = $region40
      $region39: #{two_way_transformer.15} parent=5 // pred_region
        // Predicated region
        $region41: #{two_way_transformer.15} parent=39 // pred_check
          %p312 = pneg %p39
        $region42: #{two_way_transformer.15} parent=39 // pred_check_branch
          %314 = sbr.rel (%p312) target = $region44
        $region43: #{two_way_transformer.15} parent=39 // pred_region
          %p315 = scmp.lt.s32.totalorder %s19, 1
          %s316 = scalar_select %p315, %s19, 1
          %s317 = smul.addr %s316, 8
          %s318 = scalar_lea.vmem %s0, %s317
        $region44: #{two_way_transformer.15} parent=39 // pred_fallthru
          _
        // Predicated region
        $region45: #{two_way_transformer.15} parent=39 // pred_check
          %p319 = pneg %p65
        $region46: #{two_way_transformer.15} parent=39 // pred_check_branch
          %321 = sbr.rel (%p319) target = $region48
        $region47: #{two_way_transformer.15} parent=39 // pred_region
          %p322 = scmp.lt.s32.totalorder %s19, 1
          %s323 = scalar_select %p322, %s19, 1
          %s324 = smul.addr %s323, 8
          %s325 = scalar_lea.vmem %s1, %s324
        $region48: #{two_way_transformer.15} parent=39 // pred_fallthru
          _
        // Predicated region
        $region49: #{two_way_transformer.15} parent=39 // pred_check
          %p326 = pneg %p91
        $region50: #{two_way_transformer.15} parent=39 // pred_check_branch
          %328 = sbr.rel (%p326) target = $region52
        $region51: #{two_way_transformer.15} parent=39 // pred_region
          %p329 = scmp.lt.s32.totalorder %s19, 1
          %s330 = scalar_select %p329, %s19, 1
          %s331 = smul.addr %s330, 2
          %s332 = smul.addr %s331, 8
          %s333 = scalar_lea.vmem %s2, %s332
        $region52: #{two_way_transformer.15} parent=39 // pred_fallthru
          _
        // Predicated region
        $region53: #{two_way_transformer.15} parent=39 // pred_check
          %p334 = pneg %p117
        $region54: #{two_way_transformer.15} parent=39 // pred_check_branch
          %336 = sbr.rel (%p334) target = $region56
        $region55: #{two_way_transformer.15} parent=39 // pred_region
          %p337 = scmp.lt.s32.totalorder %s19, 1
          %s338 = scalar_select %p337, %s19, 1
          %s339 = smul.addr %s338, 2
          %s340 = smul.addr %s339, 8
          %s341 = scalar_lea.vmem %s3, %s340
        $region56: #{two_way_transformer.15} parent=39 // pred_fallthru
          _
      $region40: #{two_way_transformer.15} parent=5 // pred_fallthru
        _
      %p342 = scmp.le.s32.totalorder 1, %s19
      %p343 = scmp.lt.s32.totalorder %s19, 3
      %p344 = pnand %p342, %p343
      %p345 = pneg %p344
      // Predicated region
      $region57: #{two_way_transformer.15} parent=5 // pred_check
        _
      $region58: #{two_way_transformer.15} parent=5 // pred_check_branch
        %347 = sbr.rel (%p344) target = $region60
      $region59: #{two_way_transformer.15} parent=5 // pred_region
        %s348 = ssub.s32 %s19, 1
        %p349 = scmp.lt.s32.totalorder %s24, 1
        %s350 = scalar_select %p349, %s24, 1
        %s351 = smul.addr %s350, 8
        %s352 = scalar_lea.vmem %s0, %s351
        %p353 = pneg %p45
        %p354 = pneg %p42
        %p355 = scmp.lt.s32.totalorder %s24, 1
        %s356 = scalar_select %p355, %s24, 1
        %s357 = smul.addr %s356, 8
        %s358 = scalar_lea.vmem %s1, %s357
        %p359 = pneg %p71
        %p360 = pneg %p68
        %p361 = scmp.lt.s32.totalorder %s24, 1
        %s362 = scalar_select %p361, %s24, 1
        %s363 = smul.addr %s362, 2
        %s364 = smul.addr %s363, 8
        %s365 = scalar_lea.vmem %s2, %s364
        %p366 = pneg %p97
        %p367 = pneg %p94
        %p368 = scmp.lt.s32.totalorder %s24, 1
        %s369 = scalar_select %p368, %s24, 1
        %s370 = smul.addr %s369, 2
        %s371 = smul.addr %s370, 8
        %s372 = scalar_lea.vmem %s3, %s371
        %p373 = pneg %p123
        %p374 = pneg %p120
        %p375 = pneg %p144
        %p376 = pneg %p141
        %p377 = pneg %p165
        %p378 = pneg %p162
        %p379 = pneg %p186
        %p380 = pneg %p183
        %p381 = pneg %p207
        %p382 = pneg %p204
        %p383 = pneg %p228
        %p384 = pneg %p225
        %p385 = pneg %p249
        %p386 = pneg %p246
        %p387 = pneg %p275
        %p388 = pneg %p272
        %s389 = sand.u32 %s262, 1
        %s390 = scalar_lea.sflag [#allocation3], %s389
        %s391 = sand.u32 %s262, 1
        %s392 = smul.addr %s391, 8
        %s393 = scalar_lea.vmem [#allocation2], %s392
        %p394 = scmp.lt.s32.totalorder %s24, 1
        %s395 = scalar_select %p394, %s24, 1
        %s396 = smul.addr %s395, 8
        %s397 = scalar_lea.vmem %s0, %s396
        %p398 = scmp.lt.s32.totalorder %s24, 1
        %s399 = scalar_select %p398, %s24, 1
        %s400 = smul.addr %s399, 8
        %s401 = scalar_lea.vmem %s1, %s400
        %p402 = scmp.lt.s32.totalorder %s24, 1
        %s403 = scalar_select %p402, %s24, 1
        %s404 = smul.addr %s403, 2
        %s405 = smul.addr %s404, 8
        %s406 = scalar_lea.vmem %s2, %s405
        %p407 = scmp.lt.s32.totalorder %s24, 1
        %s408 = scalar_select %p407, %s24, 1
        %s409 = smul.addr %s408, 2
        %s410 = smul.addr %s409, 8
        %s411 = scalar_lea.vmem %s3, %s410
        %v412 = vld [vmem:[%s397] sm:$0xff]
        %v413 = vld [vmem:[%s401] sm:$0xff]
        %v414 = vadd.f32 %v412, %v413
        %v415 = vld [vmem:[%s4] sm:$0xff]
        %v416 = vld [vmem:[%s4 + $0x8] sm:$0xff]
        %v417 = vld [vmem:[%s4 + $0x10] sm:$0xff]
        %v418 = vld [vmem:[%s4 + $0x18] sm:$0xff]
        %v419 = vld [vmem:[%s5] sm:$0x1]
        %v421 = vlaneseq
        %v422 = vshrl.u32 %v421, 7
        %v423 = vsub.s32 0, %v422
        %v424 = vrot.slane %v419, %v423
        %vm426 = vcmask 261120
        %v428 = vsel %vm426, %v414, 0
        %430 = vmatprep.subr.mxu0 0.0
        %431 = vmatpush1.msra.mxu0 %v415
        %432 = vmatprep.subr.mxu0 0.0
        %433 = vmatpush1.msra.mxu0 %v416
        %434 = vmatprep.subr.mxu0 0.0
        %435 = vmatpush1.msra.mxu0 %v417
        %436 = vmatprep.subr.mxu0 0.0
        %437 = vmatpush1.msra.mxu0 %v418
        %438 = vmatprep.subr.mxu0 0.0
        %439 = vmatpush1.msra.mxu0 0.0
        %440 = vmatprep.subr.mxu0 0.0
        %441 = vmatpush1.msra.mxu0 0.0
        %442 = vmatprep.subr.mxu0 0.0
        %443 = vmatpush1.msra.mxu0 0.0
        %444 = vmatprep.subr.mxu0 0.0
        %445 = vmatpush1.msra.mxu0 0.0
        %446 = vmatprep.subr.mxu0 0.0
        %447 = vmatpush1.msra.mxu0 0.0
        %448 = vmatprep.subr.mxu0 0.0
        %449 = vmatpush1.msra.mxu0 0.0
        %450 = vmatprep.subr.mxu0 0.0
        %451 = vmatpush1.msra.mxu0 0.0
        %452 = vmatprep.subr.mxu0 0.0
        %453 = vmatpush1.msra.mxu0 0.0
        %454 = vmatprep.subr.mxu0 0.0
        %455 = vmatpush1.msra.mxu0 0.0
        %456 = vmatprep.subr.mxu0 0.0
        %457 = vmatpush1.msra.mxu0 0.0
        %458 = vmatprep.subr.mxu0 0.0
        %459 = vmatpush1.msra.mxu0 0.0
        %460 = vmatprep.subr.mxu0 0.0
        %461 = vmatpush1.msra.mxu0 0.0
        %462 = vmatprep.subr.mxu0 0.0
        %463 = vmatpush1.msra.mxu0 0.0
        %464 = vmatprep.subr.mxu0 0.0
        %465 = vmatpush1.msra.mxu0 0.0
        %466 = vmatprep.subr.mxu0 0.0
        %467 = vmatpush1.msra.mxu0 0.0
        %468 = vmatprep.subr.mxu0 0.0
        %469 = vmatpush1.msra.mxu0 0.0
        %470 = vmatprep.subr.mxu0 0.0
        %471 = vmatpush1.msra.mxu0 0.0
        %472 = vmatprep.subr.mxu0 0.0
        %473 = vmatpush1.msra.mxu0 0.0
        %474 = vmatprep.subr.mxu0 0.0
        %475 = vmatpush1.msra.mxu0 0.0
        %476 = vmatprep.subr.mxu0 0.0
        %477 = vmatpush1.msra.mxu0 0.0
        %478 = vmatprep.subr.mxu0 0.0
        %479 = vmatpush1.msra.mxu0 0.0
        %480 = vmatprep.subr.mxu0 0.0
        %481 = vmatpush1.msra.mxu0 0.0
        %482 = vmatprep.subr.mxu0 0.0
        %483 = vmatpush1.msra.mxu0 0.0
        %484 = vmatprep.subr.mxu0 0.0
        %485 = vmatpush1.msra.mxu0 0.0
        %486 = vmatprep.subr.mxu0 0.0
        %487 = vmatpush1.msra.mxu0 0.0
        %488 = vmatprep.subr.mxu0 0.0
        %489 = vmatpush1.msra.mxu0 0.0
        %490 = vmatprep.subr.mxu0 0.0
        %491 = vmatpush1.msra.mxu0 0.0
        %492 = vmatprep.subr.mxu0 0.0
        %493 = vmatpush1.msra.mxu0 0.0
        %494 = vmatprep.mubr.f32.mxu0 0.0
        %495 = vmatmul.mubr.f32.gmra.mrb[0].mxu0 %v428
        %v496 = vpop.f32.mrb[0].mxu0
        %v497 = vadd.f32 %v424, %v496
        %v498 = vpop.f32.mrb[0].mxu0
        %499 = vdwg.mxu0
        %v500 = vld [vmem:[%s406] sm:$0xff]
        %v501 = vld [vmem:[%s406 + $0x8] sm:$0xff]
        %v502 = vld [vmem:[%s411] sm:$0xff]
        %v503 = vld [vmem:[%s411 + $0x8] sm:$0xff]
        %v504 = vld [vmem:[%s6] sm:$0xff]
        %v505 = vld [vmem:[%s6 + $0x8] sm:$0xff]
        %v506 = vld [vmem:[%s7] sm:$0x1]
        %vm507 = vcmask 64512
        %v509 = vsel %vm507, %v497, 0
        %v512 = vsel %vm507, %v500, 0
        %v515 = vsel %vm507, %v501, 0
        %517 = vmatprep.subr.mxu0 0.0
        %518 = vmatpush1.xpose.msra.mxu0 %v512
        %519 = vmatprep.subr.mxu0 0.0
        %520 = vmatpush1.xpose.msra.mxu0 %v515
        %521 = vmatprep.subr.mxu0 0.0
        %522 = vmatpush1.xpose.msra.mxu0 0.0
        %523 = vmatprep.subr.mxu0 0.0
        %524 = vmatpush1.xpose.msra.mxu0 0.0
        %525 = vmatprep.subr.mxu0 0.0
        %526 = vmatpush1.xpose.msra.mxu0 0.0
        %527 = vmatprep.subr.mxu0 0.0
        %528 = vmatpush1.xpose.msra.mxu0 0.0
        %529 = vmatprep.subr.mxu0 0.0
        %530 = vmatpush1.xpose.msra.mxu0 0.0
        %531 = vmatprep.subr.mxu0 0.0
        %532 = vmatpush1.xpose.msra.mxu0 0.0
        %533 = vmatprep.subr.mxu0 0.0
        %534 = vmatpush1.xpose.msra.mxu0 0.0
        %535 = vmatprep.subr.mxu0 0.0
        %536 = vmatpush1.xpose.msra.mxu0 0.0
        %537 = vmatprep.subr.mxu0 0.0
        %538 = vmatpush1.xpose.msra.mxu0 0.0
        %539 = vmatprep.subr.mxu0 0.0
        %540 = vmatpush1.xpose.msra.mxu0 0.0
        %541 = vmatprep.subr.mxu0 0.0
        %542 = vmatpush1.xpose.msra.mxu0 0.0
        %543 = vmatprep.subr.mxu0 0.0
        %544 = vmatpush1.xpose.msra.mxu0 0.0
        %545 = vmatprep.subr.mxu0 0.0
        %546 = vmatpush1.xpose.msra.mxu0 0.0
        %547 = vmatprep.subr.mxu0 0.0
        %548 = vmatpush1.xpose.msra.mxu0 0.0
        %549 = vmatprep.subr.mxu0 0.0
        %550 = vmatpush1.xpose.msra.mxu0 0.0
        %551 = vmatprep.subr.mxu0 0.0
        %552 = vmatpush1.xpose.msra.mxu0 0.0
        %553 = vmatprep.subr.mxu0 0.0
        %554 = vmatpush1.xpose.msra.mxu0 0.0
        %555 = vmatprep.subr.mxu0 0.0
        %556 = vmatpush1.xpose.msra.mxu0 0.0
        %557 = vmatprep.subr.mxu0 0.0
        %558 = vmatpush1.xpose.msra.mxu0 0.0
        %559 = vmatprep.subr.mxu0 0.0
        %560 = vmatpush1.xpose.msra.mxu0 0.0
        %561 = vmatprep.subr.mxu0 0.0
        %562 = vmatpush1.xpose.msra.mxu0 0.0
        %563 = vmatprep.subr.mxu0 0.0
        %564 = vmatpush1.xpose.msra.mxu0 0.0
        %565 = vmatprep.subr.mxu0 0.0
        %566 = vmatpush1.xpose.msra.mxu0 0.0
        %567 = vmatprep.subr.mxu0 0.0
        %568 = vmatpush1.xpose.msra.mxu0 0.0
        %569 = vmatprep.subr.mxu0 0.0
        %570 = vmatpush1.xpose.msra.mxu0 0.0
        %571 = vmatprep.subr.mxu0 0.0
        %572 = vmatpush1.xpose.msra.mxu0 0.0
        %573 = vmatprep.subr.mxu0 0.0
        %574 = vmatpush1.xpose.msra.mxu0 0.0
        %575 = vmatprep.subr.mxu0 0.0
        %576 = vmatpush1.xpose.msra.mxu0 0.0
        %577 = vmatprep.subr.mxu0 0.0
        %578 = vmatpush1.xpose.msra.mxu0 0.0
        %579 = vmatprep.subr.mxu0 0.0
        %580 = vmatpush1.xpose.msra.mxu0 0.0
        %581 = vmatprep.mubr.f32.mxu0 0.0
        %582 = vmatmul.mubr.f32.gmra.mrb[0].mxu0 %v509
        %v583 = vpop.f32.mrb[0].mxu0
        %v584 = vadd.f32 0.0, %v583
        %v585 = vpop.f32.mrb[0].mxu0
        %586 = vdwg.mxu0
        %v587 = vmul.f32 %v584, 0.35355338
        %vm588 = vcmask 130048
        %v589 = vsel %vm588, %v587, -inf
        %590 = vmax.xlane.f32.xlu0 %v589
        %v591 = vpop.xlane.xlu0 %590
        %v592 = vsub.f32 %v587, %v591
        %v593 = vmul.f32 %v592, 1.442695
        %v594 = vpow.pop %v593
        %v595 = vsel %vm588, %v594, 0.0
        %596 = vadd.xlane.f32.xlu0 %v595
        %v597 = vpop.xlane.xlu0 %596
        %v599 = vsel %vm588, %v594, 0
        %601 = vmatprep.subr.mxu0 0.0
        %602 = vmatpush1.msra.mxu0 %v502
        %603 = vmatprep.subr.mxu0 0.0
        %604 = vmatpush1.msra.mxu0 %v503
        %605 = vmatprep.subr.mxu0 0.0
        %606 = vmatpush1.msra.mxu0 0.0
        %607 = vmatprep.subr.mxu0 0.0
        %608 = vmatpush1.msra.mxu0 0.0
        %609 = vmatprep.subr.mxu0 0.0
        %610 = vmatpush1.msra.mxu0 0.0
        %611 = vmatprep.subr.mxu0 0.0
        %612 = vmatpush1.msra.mxu0 0.0
        %613 = vmatprep.subr.mxu0 0.0
        %614 = vmatpush1.msra.mxu0 0.0
        %615 = vmatprep.subr.mxu0 0.0
        %616 = vmatpush1.msra.mxu0 0.0
        %617 = vmatprep.subr.mxu0 0.0
        %618 = vmatpush1.msra.mxu0 0.0
        %619 = vmatprep.subr.mxu0 0.0
        %620 = vmatpush1.msra.mxu0 0.0
        %621 = vmatprep.subr.mxu0 0.0
        %622 = vmatpush1.msra.mxu0 0.0
        %623 = vmatprep.subr.mxu0 0.0
        %624 = vmatpush1.msra.mxu0 0.0
        %625 = vmatprep.subr.mxu0 0.0
        %626 = vmatpush1.msra.mxu0 0.0
        %627 = vmatprep.subr.mxu0 0.0
        %628 = vmatpush1.msra.mxu0 0.0
        %629 = vmatprep.subr.mxu0 0.0
        %630 = vmatpush1.msra.mxu0 0.0
        %631 = vmatprep.subr.mxu0 0.0
        %632 = vmatpush1.msra.mxu0 0.0
        %633 = vmatprep.subr.mxu0 0.0
        %634 = vmatpush1.msra.mxu0 0.0
        %635 = vmatprep.subr.mxu0 0.0
        %636 = vmatpush1.msra.mxu0 0.0
        %637 = vmatprep.subr.mxu0 0.0
        %638 = vmatpush1.msra.mxu0 0.0
        %639 = vmatprep.subr.mxu0 0.0
        %640 = vmatpush1.msra.mxu0 0.0
        %641 = vmatprep.subr.mxu0 0.0
        %642 = vmatpush1.msra.mxu0 0.0
        %643 = vmatprep.subr.mxu0 0.0
        %644 = vmatpush1.msra.mxu0 0.0
        %645 = vmatprep.subr.mxu0 0.0
        %646 = vmatpush1.msra.mxu0 0.0
        %647 = vmatprep.subr.mxu0 0.0
        %648 = vmatpush1.msra.mxu0 0.0
        %649 = vmatprep.subr.mxu0 0.0
        %650 = vmatpush1.msra.mxu0 0.0
        %651 = vmatprep.subr.mxu0 0.0
        %652 = vmatpush1.msra.mxu0 0.0
        %653 = vmatprep.subr.mxu0 0.0
        %654 = vmatpush1.msra.mxu0 0.0
        %655 = vmatprep.subr.mxu0 0.0
        %656 = vmatpush1.msra.mxu0 0.0
        %657 = vmatprep.subr.mxu0 0.0
        %658 = vmatpush1.msra.mxu0 0.0
        %659 = vmatprep.subr.mxu0 0.0
        %660 = vmatpush1.msra.mxu0 0.0
        %661 = vmatprep.subr.mxu0 0.0
        %662 = vmatpush1.msra.mxu0 0.0
        %663 = vmatprep.subr.mxu0 0.0
        %664 = vmatpush1.msra.mxu0 0.0
        %665 = vmatprep.mubr.f32.mxu0 0.0
        %666 = vmatmul.mubr.f32.gmra.mrb[0].mxu0 %v599
        %v667 = vpop.f32.mrb[0].mxu0
        %v668 = vadd.f32 0.0, %v667
        %v669 = vpop.f32.mrb[0].mxu0
        %670 = vdwg.mxu0
        %v671 = vrcp.pop %v597
        %v672 = vmul.f32 %v668, %v671
        %673 = vrot.lane.b32.xlu0 %v497, 120
        %v674 = vpop.permute.xlu0 %673
        %675 = vrot.lane.b32.xlu0 %v500, 120
        %v676 = vpop.permute.xlu0 %675
        %677 = vrot.lane.b32.xlu0 %v501, 120
        %v678 = vpop.permute.xlu0 %677
        %v679 = vsel %vm507, %v674, 0
        %v681 = vsel %vm507, %v676, 0
        %v683 = vsel %vm507, %v678, 0
        %685 = vmatprep.subr.mxu0 0.0
        %686 = vmatpush1.xpose.msra.mxu0 %v681
        %687 = vmatprep.subr.mxu0 0.0
        %688 = vmatpush1.xpose.msra.mxu0 %v683
        %689 = vmatprep.subr.mxu0 0.0
        %690 = vmatpush1.xpose.msra.mxu0 0.0
        %691 = vmatprep.subr.mxu0 0.0
        %692 = vmatpush1.xpose.msra.mxu0 0.0
        %693 = vmatprep.subr.mxu0 0.0
        %694 = vmatpush1.xpose.msra.mxu0 0.0
        %695 = vmatprep.subr.mxu0 0.0
        %696 = vmatpush1.xpose.msra.mxu0 0.0
        %697 = vmatprep.subr.mxu0 0.0
        %698 = vmatpush1.xpose.msra.mxu0 0.0
        %699 = vmatprep.subr.mxu0 0.0
        %700 = vmatpush1.xpose.msra.mxu0 0.0
        %701 = vmatprep.subr.mxu0 0.0
        %702 = vmatpush1.xpose.msra.mxu0 0.0
        %703 = vmatprep.subr.mxu0 0.0
        %704 = vmatpush1.xpose.msra.mxu0 0.0
        %705 = vmatprep.subr.mxu0 0.0
        %706 = vmatpush1.xpose.msra.mxu0 0.0
        %707 = vmatprep.subr.mxu0 0.0
        %708 = vmatpush1.xpose.msra.mxu0 0.0
        %709 = vmatprep.subr.mxu0 0.0
        %710 = vmatpush1.xpose.msra.mxu0 0.0
        %711 = vmatprep.subr.mxu0 0.0
        %712 = vmatpush1.xpose.msra.mxu0 0.0
        %713 = vmatprep.subr.mxu0 0.0
        %714 = vmatpush1.xpose.msra.mxu0 0.0
        %715 = vmatprep.subr.mxu0 0.0
        %716 = vmatpush1.xpose.msra.mxu0 0.0
        %717 = vmatprep.subr.mxu0 0.0
        %718 = vmatpush1.xpose.msra.mxu0 0.0
        %719 = vmatprep.subr.mxu0 0.0
        %720 = vmatpush1.xpose.msra.mxu0 0.0
        %721 = vmatprep.subr.mxu0 0.0
        %722 = vmatpush1.xpose.msra.mxu0 0.0
        %723 = vmatprep.subr.mxu0 0.0
        %724 = vmatpush1.xpose.msra.mxu0 0.0
        %725 = vmatprep.subr.mxu0 0.0
        %726 = vmatpush1.xpose.msra.mxu0 0.0
        %727 = vmatprep.subr.mxu0 0.0
        %728 = vmatpush1.xpose.msra.mxu0 0.0
        %729 = vmatprep.subr.mxu0 0.0
        %730 = vmatpush1.xpose.msra.mxu0 0.0
        %731 = vmatprep.subr.mxu0 0.0
        %732 = vmatpush1.xpose.msra.mxu0 0.0
        %733 = vmatprep.subr.mxu0 0.0
        %734 = vmatpush1.xpose.msra.mxu0 0.0
        %735 = vmatprep.subr.mxu0 0.0
        %736 = vmatpush1.xpose.msra.mxu0 0.0
        %737 = vmatprep.subr.mxu0 0.0
        %738 = vmatpush1.xpose.msra.mxu0 0.0
        %739 = vmatprep.subr.mxu0 0.0
        %740 = vmatpush1.xpose.msra.mxu0 0.0
        %741 = vmatprep.subr.mxu0 0.0
        %742 = vmatpush1.xpose.msra.mxu0 0.0
        %743 = vmatprep.subr.mxu0 0.0
        %744 = vmatpush1.xpose.msra.mxu0 0.0
        %745 = vmatprep.subr.mxu0 0.0
        %746 = vmatpush1.xpose.msra.mxu0 0.0
        %747 = vmatprep.subr.mxu0 0.0
        %748 = vmatpush1.xpose.msra.mxu0 0.0
        %749 = vmatprep.mubr.f32.mxu0 0.0
        %750 = vmatmul.mubr.f32.gmra.mrb[0].mxu0 %v679
        %v751 = vpop.f32.mrb[0].mxu0
        %v752 = vadd.f32 0.0, %v751
        %v753 = vpop.f32.mrb[0].mxu0
        %754 = vdwg.mxu0
        %v755 = vmul.f32 %v752, 0.35355338
        %v756 = vsel %vm588, %v755, -inf
        %757 = vmax.xlane.f32.xlu0 %v756
        %v758 = vpop.xlane.xlu0 %757
        %v759 = vsub.f32 %v755, %v758
        %v760 = vmul.f32 %v759, 1.442695
        %v761 = vpow.pop %v760
        %v762 = vsel %vm588, %v761, 0.0
        %763 = vadd.xlane.f32.xlu0 %v762
        %v764 = vpop.xlane.xlu0 %763
        %767 = vrot.lane.b32.xlu0 %v502, 120
        %v768 = vpop.permute.xlu0 %767
        %769 = vrot.lane.b32.xlu0 %v503, 120
        %v770 = vpop.permute.xlu0 %769
        %v774 = vsel %vm588, %v761, 0
        %776 = vmatprep.subr.mxu0 0.0
        %777 = vmatpush1.msra.mxu0 %v768
        %778 = vmatprep.subr.mxu0 0.0
        %779 = vmatpush1.msra.mxu0 %v770
        %780 = vmatprep.subr.mxu0 0.0
        %781 = vmatpush1.msra.mxu0 0.0
        %782 = vmatprep.subr.mxu0 0.0
        %783 = vmatpush1.msra.mxu0 0.0
        %784 = vmatprep.subr.mxu0 0.0
        %785 = vmatpush1.msra.mxu0 0.0
        %786 = vmatprep.subr.mxu0 0.0
        %787 = vmatpush1.msra.mxu0 0.0
        %788 = vmatprep.subr.mxu0 0.0
        %789 = vmatpush1.msra.mxu0 0.0
        %790 = vmatprep.subr.mxu0 0.0
        %791 = vmatpush1.msra.mxu0 0.0
        %792 = vmatprep.subr.mxu0 0.0
        %793 = vmatpush1.msra.mxu0 0.0
        %794 = vmatprep.subr.mxu0 0.0
        %795 = vmatpush1.msra.mxu0 0.0
        %796 = vmatprep.subr.mxu0 0.0
        %797 = vmatpush1.msra.mxu0 0.0
        %798 = vmatprep.subr.mxu0 0.0
        %799 = vmatpush1.msra.mxu0 0.0
        %800 = vmatprep.subr.mxu0 0.0
        %801 = vmatpush1.msra.mxu0 0.0
        %802 = vmatprep.subr.mxu0 0.0
        %803 = vmatpush1.msra.mxu0 0.0
        %804 = vmatprep.subr.mxu0 0.0
        %805 = vmatpush1.msra.mxu0 0.0
        %806 = vmatprep.subr.mxu0 0.0
        %807 = vmatpush1.msra.mxu0 0.0
        %808 = vmatprep.subr.mxu0 0.0
        %809 = vmatpush1.msra.mxu0 0.0
        %810 = vmatprep.subr.mxu0 0.0
        %811 = vmatpush1.msra.mxu0 0.0
        %812 = vmatprep.subr.mxu0 0.0
        %813 = vmatpush1.msra.mxu0 0.0
        %814 = vmatprep.subr.mxu0 0.0
        %815 = vmatpush1.msra.mxu0 0.0
        %816 = vmatprep.subr.mxu0 0.0
        %817 = vmatpush1.msra.mxu0 0.0
        %818 = vmatprep.subr.mxu0 0.0
        %819 = vmatpush1.msra.mxu0 0.0
        %820 = vmatprep.subr.mxu0 0.0
        %821 = vmatpush1.msra.mxu0 0.0
        %822 = vmatprep.subr.mxu0 0.0
        %823 = vmatpush1.msra.mxu0 0.0
        %824 = vmatprep.subr.mxu0 0.0
        %825 = vmatpush1.msra.mxu0 0.0
        %826 = vmatprep.subr.mxu0 0.0
        %827 = vmatpush1.msra.mxu0 0.0
        %828 = vmatprep.subr.mxu0 0.0
        %829 = vmatpush1.msra.mxu0 0.0
        %830 = vmatprep.subr.mxu0 0.0
        %831 = vmatpush1.msra.mxu0 0.0
        %832 = vmatprep.subr.mxu0 0.0
        %833 = vmatpush1.msra.mxu0 0.0
        %834 = vmatprep.subr.mxu0 0.0
        %835 = vmatpush1.msra.mxu0 0.0
        %836 = vmatprep.subr.mxu0 0.0
        %837 = vmatpush1.msra.mxu0 0.0
        %838 = vmatprep.subr.mxu0 0.0
        %839 = vmatpush1.msra.mxu0 0.0
        %840 = vmatprep.mubr.f32.mxu0 0.0
        %841 = vmatmul.mubr.f32.gmra.mrb[0].mxu0 %v774
        %v842 = vpop.f32.mrb[0].mxu0
        %v843 = vadd.f32 0.0, %v842
        %v844 = vpop.f32.mrb[0].mxu0
        %845 = vdwg.mxu0
        %v846 = vrcp.pop %v764
        %v847 = vmul.f32 %v843, %v846
        %v849 = vsel %vm507, %v847, 0
        %851 = vmatprep.subr.mxu0 0.0
        %852 = vmatpush1.msra.mxu0 %v505
        %853 = vmatprep.subr.mxu0 0.0
        %854 = vmatpush1.msra.mxu0 0.0
        %855 = vmatprep.subr.mxu0 0.0
        %856 = vmatpush1.msra.mxu0 0.0
        %857 = vmatprep.subr.mxu0 0.0
        %858 = vmatpush1.msra.mxu0 0.0
        %859 = vmatprep.subr.mxu0 0.0
        %860 = vmatpush1.msra.mxu0 0.0
        %861 = vmatprep.subr.mxu0 0.0
        %862 = vmatpush1.msra.mxu0 0.0
        %863 = vmatprep.subr.mxu0 0.0
        %864 = vmatpush1.msra.mxu0 0.0
        %865 = vmatprep.subr.mxu0 0.0
        %866 = vmatpush1.msra.mxu0 0.0
        %867 = vmatprep.subr.mxu0 0.0
        %868 = vmatpush1.msra.mxu0 0.0
        %869 = vmatprep.subr.mxu0 0.0
        %870 = vmatpush1.msra.mxu0 0.0
        %871 = vmatprep.subr.mxu0 0.0
        %872 = vmatpush1.msra.mxu0 0.0
        %873 = vmatprep.subr.mxu0 0.0
        %874 = vmatpush1.msra.mxu0 0.0
        %875 = vmatprep.subr.mxu0 0.0
        %876 = vmatpush1.msra.mxu0 0.0
        %877 = vmatprep.subr.mxu0 0.0
        %878 = vmatpush1.msra.mxu0 0.0
        %879 = vmatprep.subr.mxu0 0.0
        %880 = vmatpush1.msra.mxu0 0.0
        %881 = vmatprep.subr.mxu0 0.0
        %882 = vmatpush1.msra.mxu0 0.0
        %883 = vmatprep.subr.mxu0 0.0
        %884 = vmatpush1.msra.mxu0 0.0
        %885 = vmatprep.subr.mxu0 0.0
        %886 = vmatpush1.msra.mxu0 0.0
        %887 = vmatprep.subr.mxu0 0.0
        %888 = vmatpush1.msra.mxu0 0.0
        %889 = vmatprep.subr.mxu0 0.0
        %890 = vmatpush1.msra.mxu0 0.0
        %891 = vmatprep.subr.mxu0 0.0
        %892 = vmatpush1.msra.mxu0 0.0
        %893 = vmatprep.subr.mxu0 0.0
        %894 = vmatpush1.msra.mxu0 0.0
        %895 = vmatprep.subr.mxu0 0.0
        %896 = vmatpush1.msra.mxu0 0.0
        %897 = vmatprep.subr.mxu0 0.0
        %898 = vmatpush1.msra.mxu0 0.0
        %899 = vmatprep.subr.mxu0 0.0
        %900 = vmatpush1.msra.mxu0 0.0
        %901 = vmatprep.subr.mxu0 0.0
        %902 = vmatpush1.msra.mxu0 0.0
        %903 = vmatprep.subr.mxu0 0.0
        %904 = vmatpush1.msra.mxu0 0.0
        %905 = vmatprep.subr.mxu0 0.0
        %906 = vmatpush1.msra.mxu0 0.0
        %907 = vmatprep.subr.mxu0 0.0
        %908 = vmatpush1.msra.mxu0 0.0
        %909 = vmatprep.subr.mxu0 0.0
        %910 = vmatpush1.msra.mxu0 0.0
        %911 = vmatprep.subr.mxu0 0.0
        %912 = vmatpush1.msra.mxu0 0.0
        %913 = vmatprep.subr.mxu0 0.0
        %914 = vmatpush1.msra.mxu0 0.0
        %915 = vmatprep.mubr.f32.mxu0 0.0
        %916 = vmatmul.mubr.f32.gmra.mrb[0].mxu0 %v849
        %v917 = vpop.f32.mrb[0].mxu0
        %v918 = vadd.f32 0.0, %v917
        %v919 = vpop.f32.mrb[0].mxu0
        %920 = vdwg.mxu0
        %v922 = vsel %vm507, %v672, 0
        %924 = vmatprep.subr.mxu0 0.0
        %925 = vmatpush1.msra.mxu0 %v504
        %926 = vmatprep.subr.mxu0 0.0
        %927 = vmatpush1.msra.mxu0 0.0
        %928 = vmatprep.subr.mxu0 0.0
        %929 = vmatpush1.msra.mxu0 0.0
        %930 = vmatprep.subr.mxu0 0.0
        %931 = vmatpush1.msra.mxu0 0.0
        %932 = vmatprep.subr.mxu0 0.0
        %933 = vmatpush1.msra.mxu0 0.0
        %934 = vmatprep.subr.mxu0 0.0
        %935 = vmatpush1.msra.mxu0 0.0
        %936 = vmatprep.subr.mxu0 0.0
        %937 = vmatpush1.msra.mxu0 0.0
        %938 = vmatprep.subr.mxu0 0.0
        %939 = vmatpush1.msra.mxu0 0.0
        %940 = vmatprep.subr.mxu0 0.0
        %941 = vmatpush1.msra.mxu0 0.0
        %942 = vmatprep.subr.mxu0 0.0
        %943 = vmatpush1.msra.mxu0 0.0
        %944 = vmatprep.subr.mxu0 0.0
        %945 = vmatpush1.msra.mxu0 0.0
        %946 = vmatprep.subr.mxu0 0.0
        %947 = vmatpush1.msra.mxu0 0.0
        %948 = vmatprep.subr.mxu0 0.0
        %949 = vmatpush1.msra.mxu0 0.0
        %950 = vmatprep.subr.mxu0 0.0
        %951 = vmatpush1.msra.mxu0 0.0
        %952 = vmatprep.subr.mxu0 0.0
        %953 = vmatpush1.msra.mxu0 0.0
        %954 = vmatprep.subr.mxu0 0.0
        %955 = vmatpush1.msra.mxu0 0.0
        %956 = vmatprep.subr.mxu0 0.0
        %957 = vmatpush1.msra.mxu0 0.0
        %958 = vmatprep.subr.mxu0 0.0
        %959 = vmatpush1.msra.mxu0 0.0
        %960 = vmatprep.subr.mxu0 0.0
        %961 = vmatpush1.msra.mxu0 0.0
        %962 = vmatprep.subr.mxu0 0.0
        %963 = vmatpush1.msra.mxu0 0.0
        %964 = vmatprep.subr.mxu0 0.0
        %965 = vmatpush1.msra.mxu0 0.0
        %966 = vmatprep.subr.mxu0 0.0
        %967 = vmatpush1.msra.mxu0 0.0
        %968 = vmatprep.subr.mxu0 0.0
        %969 = vmatpush1.msra.mxu0 0.0
        %970 = vmatprep.subr.mxu0 0.0
        %971 = vmatpush1.msra.mxu0 0.0
        %972 = vmatprep.subr.mxu0 0.0
        %973 = vmatpush1.msra.mxu0 0.0
        %974 = vmatprep.subr.mxu0 0.0
        %975 = vmatpush1.msra.mxu0 0.0
        %976 = vmatprep.subr.mxu0 0.0
        %977 = vmatpush1.msra.mxu0 0.0
        %978 = vmatprep.subr.mxu0 0.0
        %979 = vmatpush1.msra.mxu0 0.0
        %980 = vmatprep.subr.mxu0 0.0
        %981 = vmatpush1.msra.mxu0 0.0
        %982 = vmatprep.subr.mxu0 0.0
        %983 = vmatpush1.msra.mxu0 0.0
        %984 = vmatprep.subr.mxu0 0.0
        %985 = vmatpush1.msra.mxu0 0.0
        %986 = vmatprep.subr.mxu0 0.0
        %987 = vmatpush1.msra.mxu0 0.0
        %988 = vmatprep.mubr.f32.mxu0 0.0
        %989 = vmatmul.mubr.f32.gmra.mrb[0].mxu0 %v922
        %v990 = vpop.f32.mrb[0].mxu0
        %v991 = vadd.f32 %v918, %v990
        %v992 = vpop.f32.mrb[0].mxu0
        %993 = vdwg.mxu0
        %v995 = vlaneseq
        %v996 = vshrl.u32 %v995, 7
        %v997 = vsub.s32 0, %v996
        %v998 = vrot.slane %v506, %v997
        %v1000 = vadd.f32 %v991, %v998
        %v1001 = vadd.f32 %v412, %v1000
        %v1002 = vld [vmem:[%s8] sm:$0x1]
        %v1003 = vld [vmem:[%s9] sm:$0x1]
        %v1004 = vsel %vm426, %v1001, 0.0
        %1005 = vadd.xlane.f32.xlu0 %v1004
        %v1006 = vpop.xlane.xlu0 %1005
        %v1007 = vrcp.pop 32.0
        %v1008 = vmul.f32 %v1006, %v1007
        %v1009 = vsub.f32 %v1001, %v1008
        %v1010 = vmul.f32 %v1009, %v1009
        %v1011 = vsel %vm426, %v1010, 0.0
        %1012 = vadd.xlane.f32.xlu0 %v1011
        %v1013 = vpop.xlane.xlu0 %1012
        %v1014 = vmul.f32 %v1013, %v1007
        %v1015 = vadd.f32 %v1014, 1e-05
        %v1016 = vrsqrt.pop %v1015
        %v1017 = vmul.f32 %v1009, %v1016
        %v1019 = vlaneseq
        %v1020 = vshrl.u32 %v1019, 7
        %v1021 = vsub.s32 0, %v1020
        %v1022 = vrot.slane %v1002, %v1021
        %v1024 = vmul.f32 %v1017, %v1022
        %v1026 = vlaneseq
        %v1027 = vshrl.u32 %v1026, 7
        %v1028 = vsub.s32 0, %v1027
        %v1029 = vrot.slane %v1003, %v1028
        %v1031 = vadd.f32 %v1024, %v1029
        %1032 = vst.msk [vmem:[%s393] sm:$0xff] %vm426, %v1031
        %s1033 = sand.u32 %s262, 1
        %s1034 = scalar_lea.sflag [#allocation3], %s1033
        %s1035 = sand.u32 %s262, 1
        %s1036 = smul.addr %s1035, 8
        %s1037 = scalar_lea.vmem [#allocation2], %s1036
        // Predicated region
        $region61: #{two_way_transformer.15} parent=59 // pred_check
          %p1038 = pneg %p272
        $region62: #{two_way_transformer.15} parent=59 // pred_check_branch
          %1040 = sbr.rel (%p1038) target = $region64
        $region63: #{two_way_transformer.15} parent=59 // pred_region
          %s1042 = ssub.s32 128, 128
          %1043 = vsyncadd %s1034, %s1042
          %s1044 = smul.addr %s24, 128
          %s1045 = scalar_lea.hbm %s10, %s1044
          %s1047 = sshll.u32 %s1037, 4
          %s1048 = int_to_ptr.vmem [resolvable:$true] %s1047
          %1050 = dma.vmem_to_hbm [thread:$0]  %s1048, 128, %s1045, %s1034
        $region64: #{two_way_transformer.15} parent=59 // pred_fallthru
          _
      $region60: #{two_way_transformer.15} parent=5 // pred_fallthru
        _
      %p1051 = scmp.le.s32.totalorder 2, %s19
      // Predicated region
      $region65: #{two_way_transformer.15} parent=5 // pred_check
        %p1052 = pneg %p1051
      $region66: #{two_way_transformer.15} parent=5 // pred_check_branch
        %1054 = sbr.rel (%p1052) target = $region68
      $region67: #{two_way_transformer.15} parent=5 // pred_region
        %s1055 = ssub.s32 %s19, 2
        // Predicated region
        $region69: #{two_way_transformer.15} parent=67 // pred_check
          %p1056 = pneg %p278
        $region70: #{two_way_transformer.15} parent=67 // pred_check_branch
          %1058 = sbr.rel (%p1056) target = $region72
        $region71: #{two_way_transformer.15} parent=67 // pred_region
          %s1059 = sand.u32 %s263, 1
          %s1060 = scalar_lea.sflag [#allocation3], %s1059
          %s1061 = sand.u32 %s263, 1
          %s1062 = smul.addr %s1061, 8
          %s1063 = scalar_lea.vmem [#allocation2], %s1062
          %1064 = dma.done %s1060, 128
        $region72: #{two_way_transformer.15} parent=67 // pred_fallthru
          _
      $region68: #{two_way_transformer.15} parent=5 // pred_fallthru
        _
    $region6: #{two_way_transformer.15} parent=1 // loop_footer
      %s23 = sadd.s32 1, %s19
    $region7: #{two_way_transformer.15} parent=1 // loop_footer_branch
      %18 = sbr.rel target = $region3
    $region8: #{two_way_transformer.15} parent=1 // loop_exit
      _
    %1065 = vsyncpa [#allocation3], 1
    %s1066 = scalar_lea.sflag [#allocation3], 1
    %1067 = vsyncpa %s1066, 1

// kernel: two_way_transformer.14
$region0: #{two_way_transformer.14}
  #allocation0 [shape = 'u32[]', space=smem, size = 0x4, offset = 0x4, fixed_abs, tag = 'smem constant byte address 0x4 - core index']
  #allocation1 [shape = 'u32[144,128]{1,0:T(1,128)}', space=vmem, size = 0x12000, scoped, tag = 'internal scratch']
  %s0 = inlined_call_operand.vmem [shape: f32[32,32], index: 0, kind: input, shape index: {}]
  %s1 = inlined_call_operand.vmem [shape: f32[32,32], index: 1, kind: input, shape index: {}]
  %s2 = inlined_call_operand.vmem [shape: f32[32,16], index: 2, kind: input, shape index: {}]
  %s3 = inlined_call_operand.vmem [shape: f32[1,16], index: 3, kind: input, shape index: {}]
  %s4 = inlined_call_operand.vmem [shape: f32[32,16], index: 4, kind: input, shape index: {}]
  %s5 = inlined_call_operand.vmem [shape: f32[1,16], index: 5, kind: input, shape index: {}]
  %s6 = inlined_call_operand.vmem [shape: f32[32,16], index: 6, kind: output, shape index: {0}]
  %s7 = inlined_call_operand.vmem [shape: f32[32,16], index: 7, kind: output, shape index: {1}]
  %8 = xla_tuple %s6, %s7
  %s9 = sld [smem:[#allocation0]]
  $region42: #{two_way_transformer.14} parent=0
    _
  %s11 = ssub.s32 1, %s9
  %s12 = scalar_select 0, %s11, %s9
  // Predicated region
  $region2: #{two_way_transformer.14} parent=0 // pred_check
    _
  $region3: #{two_way_transformer.14} parent=0 // pred_check_branch
    %14 = sbr.rel (0) target = $region5
  $region4: #{two_way_transformer.14} parent=0 // pred_region
    _
  $region5: #{two_way_transformer.14} parent=0 // pred_fallthru
    _
  // Predicated region
  $region6: #{two_way_transformer.14} parent=0 // pred_check
    _
  $region7: #{two_way_transformer.14} parent=0 // pred_check_branch
    %16 = sbr.rel (0) target = $region9
  $region8: #{two_way_transformer.14} parent=0 // pred_region
    _
  $region9: #{two_way_transformer.14} parent=0 // pred_fallthru
    _
  // Predicated region
  $region10: #{two_way_transformer.14} parent=0 // pred_check
    _
  $region11: #{two_way_transformer.14} parent=0 // pred_check_branch
    %18 = sbr.rel (0) target = $region13
  $region12: #{two_way_transformer.14} parent=0 // pred_region
    _
  $region13: #{two_way_transformer.14} parent=0 // pred_fallthru
    _
  // Predicated region
  $region14: #{two_way_transformer.14} parent=0 // pred_check
    _
  $region15: #{two_way_transformer.14} parent=0 // pred_check_branch
    %20 = sbr.rel (0) target = $region17
  $region16: #{two_way_transformer.14} parent=0 // pred_region
    _
  $region17: #{two_way_transformer.14} parent=0 // pred_fallthru
    _
  // Predicated region
  $region18: #{two_way_transformer.14} parent=0 // pred_check
    _
  $region19: #{two_way_transformer.14} parent=0 // pred_check_branch
    %22 = sbr.rel (0) target = $region21
  $region20: #{two_way_transformer.14} parent=0 // pred_region
    _
  $region21: #{two_way_transformer.14} parent=0 // pred_fallthru
    _
  // Predicated region
  $region22: #{two_way_transformer.14} parent=0 // pred_check
    _
  $region23: #{two_way_transformer.14} parent=0 // pred_check_branch
    %24 = sbr.rel (0) target = $region25
  $region24: #{two_way_transformer.14} parent=0 // pred_region
    _
  $region25: #{two_way_transformer.14} parent=0 // pred_fallthru
    _
  %v25 = vld [vmem:[%s0] sm:$0xff]
  %v26 = vld [vmem:[%s0 + $0x8] sm:$0xff]
  %v27 = vld [vmem:[%s0 + $0x10] sm:$0xff]
  %v28 = vld [vmem:[%s0 + $0x18] sm:$0xff]
  %v29 = vld [vmem:[%s1] sm:$0xff]
  %v30 = vld [vmem:[%s1 + $0x8] sm:$0xff]
  %v31 = vld [vmem:[%s1 + $0x10] sm:$0xff]
  %v32 = vld [vmem:[%s1 + $0x18] sm:$0xff]
  %v33 = vadd.f32 %v25, %v29
  %v34 = vadd.f32 %v26, %v30
  %v35 = vadd.f32 %v27, %v31
  %v36 = vadd.f32 %v28, %v32
  %v37 = vld [vmem:[%s2] sm:$0xff]
  %v38 = vld [vmem:[%s2 + $0x8] sm:$0xff]
  %v39 = vld [vmem:[%s2 + $0x10] sm:$0xff]
  %v40 = vld [vmem:[%s2 + $0x18] sm:$0xff]
  %v41 = vld [vmem:[%s3] sm:$0x1]
  %v43 = vlaneseq
  %v44 = vshrl.u32 %v43, 7
  %v45 = vsub.s32 0, %v44
  %v46 = vrot.slane %v41, %v45
  %vm48 = vcmask 261120
  %v50 = vsel %vm48, %v33, 0
  %v53 = vsel %vm48, %v34, 0
  %v56 = vsel %vm48, %v35, 0
  %v59 = vsel %vm48, %v36, 0
  %61 = vmatprep.subr.mxu0 0.0
  %62 = vmatpush1.msra.mxu0 %v37
  %63 = vmatprep.subr.mxu0 0.0
  %64 = vmatpush1.msra.mxu0 %v38
  %65 = vmatprep.subr.mxu0 0.0
  %66 = vmatpush1.msra.mxu0 %v39
  %67 = vmatprep.subr.mxu0 0.0
  %68 = vmatpush1.msra.mxu0 %v40
  %69 = vmatprep.subr.mxu0 0.0
  %70 = vmatpush1.msra.mxu0 0.0
  %71 = vmatprep.subr.mxu0 0.0
  %72 = vmatpush1.msra.mxu0 0.0
  %73 = vmatprep.subr.mxu0 0.0
  %74 = vmatpush1.msra.mxu0 0.0
  %75 = vmatprep.subr.mxu0 0.0
  %76 = vmatpush1.msra.mxu0 0.0
  %77 = vmatprep.subr.mxu0 0.0
  %78 = vmatpush1.msra.mxu0 0.0
  %79 = vmatprep.subr.mxu0 0.0
  %80 = vmatpush1.msra.mxu0 0.0
  %81 = vmatprep.subr.mxu0 0.0
  %82 = vmatpush1.msra.mxu0 0.0
  %83 = vmatprep.subr.mxu0 0.0
  %84 = vmatpush1.msra.mxu0 0.0
  %85 = vmatprep.subr.mxu0 0.0
  %86 = vmatpush1.msra.mxu0 0.0
  %87 = vmatprep.subr.mxu0 0.0
  %88 = vmatpush1.msra.mxu0 0.0
  %89 = vmatprep.subr.mxu0 0.0
  %90 = vmatpush1.msra.mxu0 0.0
  %91 = vmatprep.subr.mxu0 0.0
  %92 = vmatpush1.msra.mxu0 0.0
  %93 = vmatprep.subr.mxu0 0.0
  %94 = vmatpush1.msra.mxu0 0.0
  %95 = vmatprep.subr.mxu0 0.0
  %96 = vmatpush1.msra.mxu0 0.0
  %97 = vmatprep.subr.mxu0 0.0
  %98 = vmatpush1.msra.mxu0 0.0
  %99 = vmatprep.subr.mxu0 0.0
  %100 = vmatpush1.msra.mxu0 0.0
  %101 = vmatprep.subr.mxu0 0.0
  %102 = vmatpush1.msra.mxu0 0.0
  %103 = vmatprep.subr.mxu0 0.0
  %104 = vmatpush1.msra.mxu0 0.0
  %105 = vmatprep.subr.mxu0 0.0
  %106 = vmatpush1.msra.mxu0 0.0
  %107 = vmatprep.subr.mxu0 0.0
  %108 = vmatpush1.msra.mxu0 0.0
  %109 = vmatprep.subr.mxu0 0.0
  %110 = vmatpush1.msra.mxu0 0.0
  %111 = vmatprep.subr.mxu0 0.0
  %112 = vmatpush1.msra.mxu0 0.0
  %113 = vmatprep.subr.mxu0 0.0
  %114 = vmatpush1.msra.mxu0 0.0
  %115 = vmatprep.subr.mxu0 0.0
  %116 = vmatpush1.msra.mxu0 0.0
  %117 = vmatprep.subr.mxu0 0.0
  %118 = vmatpush1.msra.mxu0 0.0
  %119 = vmatprep.subr.mxu0 0.0
  %120 = vmatpush1.msra.mxu0 0.0
  %121 = vmatprep.subr.mxu0 0.0
  %122 = vmatpush1.msra.mxu0 0.0
  %123 = vmatprep.subr.mxu0 0.0
  %124 = vmatpush1.msra.mxu0 0.0
  %125 = vmatprep.mubr.f32.mxu0 0.0
  %126 = vmatmul.mubr.f32.gmra.mrb[0].mxu0 %v50
  %v127 = vpop.f32.mrb[0].mxu0
  %v128 = vadd.f32 %v46, %v127
  %v129 = vpop.f32.mrb[0].mxu0
  %130 = vmatprep.mubr.f32.mxu0 0.0
  %131 = vmatmul.mubr.f32.gmra.mrb[0].mxu0 %v53
  %v132 = vpop.f32.mrb[0].mxu0
  %v133 = vadd.f32 %v46, %v132
  %v134 = vpop.f32.mrb[0].mxu0
  %135 = vmatprep.mubr.f32.mxu0 0.0
  %136 = vmatmul.mubr.f32.gmra.mrb[0].mxu0 %v56
  %v137 = vpop.f32.mrb[0].mxu0
  %v138 = vadd.f32 %v46, %v137
  %v139 = vpop.f32.mrb[0].mxu0
  %140 = vmatprep.mubr.f32.mxu0 0.0
  %141 = vmatmul.mubr.f32.gmra.mrb[0].mxu0 %v59
  %v142 = vpop.f32.mrb[0].mxu0
  %v143 = vadd.f32 %v46, %v142
  %v144 = vpop.f32.mrb[0].mxu0
  %145 = vdwg.mxu0
  %vm146 = vcmask 130048
  %147 = vst.msk [vmem:[%s6] sm:$0xff] %vm146, %v128
  %148 = vst.msk [vmem:[%s6 + $0x8] sm:$0xff] %vm146, %v133
  %149 = vst.msk [vmem:[%s6 + $0x10] sm:$0xff] %vm146, %v138
  %150 = vst.msk [vmem:[%s6 + $0x18] sm:$0xff] %vm146, %v143
  %v151 = vld [vmem:[%s4] sm:$0xff]
  %v152 = vld [vmem:[%s4 + $0x8] sm:$0xff]
  %v153 = vld [vmem:[%s4 + $0x10] sm:$0xff]
  %v154 = vld [vmem:[%s4 + $0x18] sm:$0xff]
  %v155 = vld [vmem:[%s5] sm:$0x1]
  %v157 = vlaneseq
  %v158 = vshrl.u32 %v157, 7
  %v159 = vsub.s32 0, %v158
  %v160 = vrot.slane %v155, %v159
  %v163 = vsel %vm48, %v25, 0
  %v166 = vsel %vm48, %v26, 0
  %v169 = vsel %vm48, %v27, 0
  %v172 = vsel %vm48, %v28, 0
  %174 = vmatprep.subr.mxu0 0.0
  %175 = vmatpush1.msra.mxu0 %v151
  %176 = vmatprep.subr.mxu0 0.0
  %177 = vmatpush1.msra.mxu0 %v152
  %178 = vmatprep.subr.mxu0 0.0
  %179 = vmatpush1.msra.mxu0 %v153
  %180 = vmatprep.subr.mxu0 0.0
  %181 = vmatpush1.msra.mxu0 %v154
  %182 = vmatprep.subr.mxu0 0.0
  %183 = vmatpush1.msra.mxu0 0.0
  %184 = vmatprep.subr.mxu0 0.0
  %185 = vmatpush1.msra.mxu0 0.0
  %186 = vmatprep.subr.mxu0 0.0
  %187 = vmatpush1.msra.mxu0 0.0
  %188 = vmatprep.subr.mxu0 0.0
  %189 = vmatpush1.msra.mxu0 0.0
  %190 = vmatprep.subr.mxu0 0.0
  %191 = vmatpush1.msra.mxu0 0.0
  %192 = vmatprep.subr.mxu0 0.0
  %193 = vmatpush1.msra.mxu0 0.0
  %194 = vmatprep.subr.mxu0 0.0
  %195 = vmatpush1.msra.mxu0 0.0
  %196 = vmatprep.subr.mxu0 0.0
  %197 = vmatpush1.msra.mxu0 0.0
  %198 = vmatprep.subr.mxu0 0.0
  %199 = vmatpush1.msra.mxu0 0.0
  %200 = vmatprep.subr.mxu0 0.0
  %201 = vmatpush1.msra.mxu0 0.0
  %202 = vmatprep.subr.mxu0 0.0
  %203 = vmatpush1.msra.mxu0 0.0
  %204 = vmatprep.subr.mxu0 0.0
  %205 = vmatpush1.msra.mxu0 0.0
  %206 = vmatprep.subr.mxu0 0.0
  %207 = vmatpush1.msra.mxu0 0.0
  %208 = vmatprep.subr.mxu0 0.0
  %209 = vmatpush1.msra.mxu0 0.0
  %210 = vmatprep.subr.mxu0 0.0
  %211 = vmatpush1.msra.mxu0 0.0
  %212 = vmatprep.subr.mxu0 0.0
  %213 = vmatpush1.msra.mxu0 0.0
  %214 = vmatprep.subr.mxu0 0.0
  %215 = vmatpush1.msra.mxu0 0.0
  %216 = vmatprep.subr.mxu0 0.0
  %217 = vmatpush1.msra.mxu0 0.0
  %218 = vmatprep.subr.mxu0 0.0
  %219 = vmatpush1.msra.mxu0 0.0
  %220 = vmatprep.subr.mxu0 0.0
  %221 = vmatpush1.msra.mxu0 0.0
  %222 = vmatprep.subr.mxu0 0.0
  %223 = vmatpush1.msra.mxu0 0.0
  %224 = vmatprep.subr.mxu0 0.0
  %225 = vmatpush1.msra.mxu0 0.0
  %226 = vmatprep.subr.mxu0 0.0
  %227 = vmatpush1.msra.mxu0 0.0
  %228 = vmatprep.subr.mxu0 0.0
  %229 = vmatpush1.msra.mxu0 0.0
  %230 = vmatprep.subr.mxu0 0.0
  %231 = vmatpush1.msra.mxu0 0.0
  %232 = vmatprep.subr.mxu0 0.0
  %233 = vmatpush1.msra.mxu0 0.0
  %234 = vmatprep.subr.mxu0 0.0
  %235 = vmatpush1.msra.mxu0 0.0
  %236 = vmatprep.subr.mxu0 0.0
  %237 = vmatpush1.msra.mxu0 0.0
  %238 = vmatprep.mubr.f32.mxu0 0.0
  %239 = vmatmul.mubr.f32.gmra.mrb[0].mxu0 %v163
  %v240 = vpop.f32.mrb[0].mxu0
  %v241 = vadd.f32 %v160, %v240
  %v242 = vpop.f32.mrb[0].mxu0
  %243 = vmatprep.mubr.f32.mxu0 0.0
  %244 = vmatmul.mubr.f32.gmra.mrb[0].mxu0 %v166
  %v245 = vpop.f32.mrb[0].mxu0
  %v246 = vadd.f32 %v160, %v245
  %v247 = vpop.f32.mrb[0].mxu0
  %248 = vmatprep.mubr.f32.mxu0 0.0
  %249 = vmatmul.mubr.f32.gmra.mrb[0].mxu0 %v169
  %v250 = vpop.f32.mrb[0].mxu0
  %v251 = vadd.f32 %v160, %v250
  %v252 = vpop.f32.mrb[0].mxu0
  %253 = vmatprep.mubr.f32.mxu0 0.0
  %254 = vmatmul.mubr.f32.gmra.mrb[0].mxu0 %v172
  %v255 = vpop.f32.mrb[0].mxu0
  %v256 = vadd.f32 %v160, %v255
  %v257 = vpop.f32.mrb[0].mxu0
  %258 = vdwg.mxu0
  %259 = vst.msk [vmem:[%s7] sm:$0xff] %vm146, %v241
  %260 = vst.msk [vmem:[%s7 + $0x8] sm:$0xff] %vm146, %v246
  %261 = vst.msk [vmem:[%s7 + $0x10] sm:$0xff] %vm146, %v251
  %262 = vst.msk [vmem:[%s7 + $0x18] sm:$0xff] %vm146, %v256
  // Predicated region
  $region26: #{two_way_transformer.14} parent=0 // pred_check
    _
  $region27: #{two_way_transformer.14} parent=0 // pred_check_branch
    %264 = sbr.rel (0) target = $region29
  $region28: #{two_way_transformer.14} parent=0 // pred_region
    _
  $region29: #{two_way_transformer.14} parent=0 // pred_fallthru
    _
  // Predicated region
  $region30: #{two_way_transformer.14} parent=0 // pred_check
    _
  $region31: #{two_way_transformer.14} parent=0 // pred_check_branch
    %266 = sbr.rel (0) target = $region33
  $region32: #{two_way_transformer.14} parent=0 // pred_region
    _
  $region33: #{two_way_transformer.14} parent=0 // pred_fallthru
    _
  // Predicated region
  $region34: #{two_way_transformer.14} parent=0 // pred_check
    _
  $region35: #{two_way_transformer.14} parent=0 // pred_check_branch
    %268 = sbr.rel (0) target = $region37
  $region36: #{two_way_transformer.14} parent=0 // pred_region
    _
  $region37: #{two_way_transformer.14} parent=0 // pred_fallthru
    _
  // Predicated region
  $region38: #{two_way_transformer.14} parent=0 // pred_check
    _
  $region39: #{two_way_transformer.14} parent=0 // pred_check_branch
    %270 = sbr.rel (0) target = $region41
  $region40: #{two_way_transformer.14} parent=0 // pred_region
    _
  $region41: #{two_way_transformer.14} parent=0 // pred_fallthru
    _

</llo_original>
